<compile_context>
chip_gen: v7x
topology: tpu7x:2x2x1
jax: 0.10.0
libtpu: 0.0.40
codegen_flags: <defaults>
</compile_context>

<pallas_src>
import functools

import jax
import jax.numpy as jnp
from jax.experimental import pallas as pl
from jax.experimental.pallas import tpu as pltpu


_TM, _TN, _TK = 512, 1024, 512         # ~9-10 MiB double-buffered working set
_VMEM_LIMIT = 32 * 1024 * 1024         # safe on v5e/v6e (128 MiB) and v7x (64 MiB)


def _round_up(x, m):
    return (x + m - 1) // m * m


def _pick_tile(dim, cap, align):
    """Largest usable tile <= cap: full dim if it fits (full-extent blocks are
    exempt from the (8,128) rule), else the largest `align`-multiple divisor,
    else `cap` (caller pads the remainder)."""
    if dim <= cap:
        return dim
    for t in range(cap - cap % align, 0, -align):
        if dim % t == 0:
            return t
    return cap


# ----------------------------------------------------------------------------
# Fused tiled matmul kernel: out = maybe_relu((A @ B) * scale + shift)
# A, B are bf16 (MXU-native); accumulation + epilogue in f32.
# ----------------------------------------------------------------------------
def _fused_matmul_kernel(a_ref, b_ref, scale_ref, shift_ref, o_ref, acc_ref,
                         *, relu):
    @pl.when(pl.program_id(2) == 0)
    def _():
        acc_ref[...] = jnp.zeros_like(acc_ref)

    acc_ref[...] += jnp.dot(a_ref[...], b_ref[...],
                            preferred_element_type=jnp.float32)

    @pl.when(pl.program_id(2) == pl.num_programs(2) - 1)
    def _():
        out = acc_ref[...] * scale_ref[...] + shift_ref[...]
        if relu:
            out = jnp.maximum(out, 0.0)
        o_ref[...] = out.astype(o_ref.dtype)


def fused_matmul(a, b, scale=None, shift=None, relu=False,
                 out_dtype=jnp.float32):
    M, K = a.shape
    K2, N = b.shape
    assert K == K2
    if scale is None:
        scale = jnp.ones((N,), jnp.float32)
    if shift is None:
        shift = jnp.zeros((N,), jnp.float32)

    # bf16 operands for the MXU.  These are no-ops when the producer already
    # emits bf16 (the common case now that activations are plumbed in bf16).
    a = a.astype(jnp.bfloat16)
    b = b.astype(jnp.bfloat16)

    m8 = _round_up(M, 8)
    tm = _pick_tile(m8, _TM, 8)
    tk = _pick_tile(K, _TK, 128)
    tn = _pick_tile(N, _TN, 128)
    # v7x has 2 TensorCores: if this call would compile to a single-block
    # parallel grid, split the N tile so both cores get a block.
    if m8 // tm == 1 and N // tn == 1 and tn >= 512 and tn % 256 == 0:
        tn //= 2
    Mp = _round_up(m8, tm)
    Kp = _round_up(K, tk)
    Np = _round_up(N, tn)

    # Pad only when a dimension is not already tileable (no call in this net
    # needs any operand padding at the test shapes).
    if (Mp, Kp) != (M, K):
        a = jnp.pad(a, ((0, Mp - M), (0, Kp - K)))
    if (Kp, Np) != (K, N):
        b = jnp.pad(b, ((0, Kp - K), (0, Np - N)))
    sc = scale.astype(jnp.float32).reshape(1, N)
    sh = shift.astype(jnp.float32).reshape(1, N)
    if Np != N:
        sc = jnp.pad(sc, ((0, 0), (0, Np - N)))
        sh = jnp.pad(sh, ((0, 0), (0, Np - N)))

    gm, gn, gk = Mp // tm, Np // tn, Kp // tk
    out_bytes = jnp.dtype(out_dtype).itemsize
    out = pl.pallas_call(
        functools.partial(_fused_matmul_kernel, relu=relu),
        out_shape=jax.ShapeDtypeStruct((Mp, Np), out_dtype),
        grid=(gm, gn, gk),
        in_specs=[
            pl.BlockSpec((tm, tk), lambda i, j, k: (i, k)),
            pl.BlockSpec((tk, tn), lambda i, j, k: (k, j)),
            pl.BlockSpec((1, tn), lambda i, j, k: (0, j)),
            pl.BlockSpec((1, tn), lambda i, j, k: (0, j)),
        ],
        out_specs=pl.BlockSpec((tm, tn), lambda i, j, k: (i, j)),
        scratch_shapes=[pltpu.VMEM((tm, tn), jnp.float32)],
        compiler_params=pltpu.CompilerParams(
            dimension_semantics=("parallel", "parallel", "arbitrary"),
            vmem_limit_bytes=_VMEM_LIMIT),
        cost_estimate=pl.CostEstimate(
            flops=2 * Mp * Np * Kp, transcendentals=0,
            # account for operand revisits across the grid
            bytes_accessed=Mp * Kp * 2 * gn + Kp * Np * 2 * gm
                           + Mp * Np * out_bytes),
    )(a, b, sc, sh)
    if (Mp, Np) != (M, N):
        out = out[:M, :N]
    return out


# ----------------------------------------------------------------------------
# Direct stride-1 KxK conv kernel (no HBM im2col, no edge masks): the
# activation is zero-padded in H and W and flattened, so each of the kh*kw
# taps is a contiguous slice; padded output columns are discarded afterwards.
# ----------------------------------------------------------------------------
def _direct_conv_kernel(x_ref, w_ref, scale_ref, shift_ref, o_ref,
                        *, kh, kw, wp, relu):
    hwp = o_ref.shape[1]
    xall = x_ref[0]                                   # (L, Cin) bf16, one load
    acc = jnp.zeros((hwp, o_ref.shape[2]), jnp.float32)
    for di in range(kh):
        for dj in range(kw):
            start = di * wp + dj
            slab = xall[start:start + hwp, :]         # (hwp, Cin) bf16
            acc = acc + jnp.dot(slab, w_ref[di * kw + dj],
                                preferred_element_type=jnp.float32)
    out = acc * scale_ref[...] + shift_ref[...]
    if relu:
        out = jnp.maximum(out, 0.0)
    o_ref[0] = out.astype(o_ref.dtype)


def conv2d_direct(x, w, scale=None, shift=None, relu=False):
    """Stride-1 'same' conv.  x: (N, H, W, Cin) NHWC; w: (kh, kw, Cin, Cout).
    Output: (N, H, W, Cout) float32."""
    N, H, W, Cin = x.shape
    kh, kw, _, Cout = w.shape
    assert kh == kw and kh % 2 == 1 and kh <= min(H, W)
    pad = kh // 2
    Wp = W + 2 * pad                                  # padded row width
    hwp = H * Wp                                      # outputs per image (incl. pad cols)
    L = (H + 2 * pad) * Wp + (kw - 1)                 # flat slab length per image
    Cout_p = max(_round_up(Cout, 128), 128)           # lane-dense output channels

    xb = x.astype(jnp.bfloat16)                       # no-op when producer is bf16
    xp = jnp.pad(xb, ((0, 0), (pad, pad), (pad, pad), (0, 0)))
    xf = jnp.pad(xp.reshape(N, (H + 2 * pad) * Wp, Cin),
                 ((0, 0), (0, kw - 1), (0, 0)))

    wf = jnp.pad(w.astype(jnp.bfloat16).reshape(kh * kw, Cin, Cout),
                 ((0, 0), (0, 0), (0, Cout_p - Cout)))
    if scale is None:
        scale = jnp.ones((Cout,), jnp.float32)
    if shift is None:
        shift = jnp.zeros((Cout,), jnp.float32)
    sc = jnp.pad(scale.astype(jnp.float32), (0, Cout_p - Cout)).reshape(1, Cout_p)
    sh = jnp.pad(shift.astype(jnp.float32), (0, Cout_p - Cout)).reshape(1, Cout_p)

    # TODO(synk): at real PSPNet resolutions additionally tile the output rows
    # (manual DMA for the overlapping halo) so the per-image slab stays inside
    # v7x's 64 MiB VMEM; at this resolution one image fits comfortably.
    out = pl.pallas_call(
        functools.partial(_direct_conv_kernel, kh=kh, kw=kw, wp=Wp, relu=relu),
        out_shape=jax.ShapeDtypeStruct((N, hwp, Cout_p), jnp.float32),
        grid=(N,),
        in_specs=[
            pl.BlockSpec((1, L, Cin), lambda n: (n, 0, 0)),
            pl.BlockSpec((kh * kw, Cin, Cout_p), lambda n: (0, 0, 0)),
            pl.BlockSpec((1, Cout_p), lambda n: (0, 0)),
            pl.BlockSpec((1, Cout_p), lambda n: (0, 0)),
        ],
        out_specs=pl.BlockSpec((1, hwp, Cout_p), lambda n: (n, 0, 0)),
        compiler_params=pltpu.CompilerParams(
            dimension_semantics=("parallel",),
            vmem_limit_bytes=_VMEM_LIMIT),
        cost_estimate=pl.CostEstimate(
            flops=2 * N * hwp * kh * kw * Cin * Cout_p,
            transcendentals=0,
            bytes_accessed=N * L * Cin * 2 + kh * kw * Cin * Cout_p * 2
                           + N * hwp * Cout_p * 4),
    )(xf, wf, sc, sh)
    return out.reshape(N, H, Wp, Cout_p)[:, :, :W, :Cout]


# ----------------------------------------------------------------------------
# Strided conv via im2col + the tiled matmul (only used by the small synthetic
# encoder stand-in; channel counts are 3/16/32 so im2col here is cheap).
# ----------------------------------------------------------------------------
def conv2d_im2col(x, w, stride, scale=None, shift=None, relu=False,
                  out_dtype=jnp.float32):
    N, H, W, C = x.shape
    kh, kw, _, Cout = w.shape
    pad = kh // 2
    xp = jnp.pad(x, ((0, 0), (pad, pad), (pad, pad), (0, 0)))
    Ho = (H + 2 * pad - kh) // stride + 1
    Wo = (W + 2 * pad - kw) // stride + 1
    patches = []
    for di in range(kh):
        for dj in range(kw):
            patches.append(
                xp[:, di:di + stride * Ho:stride, dj:dj + stride * Wo:stride, :])
    a = jnp.concatenate(patches, axis=-1).reshape(N * Ho * Wo, kh * kw * C)
    b = w.reshape(kh * kw * C, Cout)
    out = fused_matmul(a, b, scale=scale, shift=shift, relu=relu,
                       out_dtype=out_dtype)
    return out.reshape(N, Ho, Wo, Cout)


# ----------------------------------------------------------------------------
# Separable bilinear resize (align_corners=True, matching smp's PSPBlock
# interpolate and nn.UpsamplingBilinear2d head) -- one fused per-(n,c) Pallas
# kernel, written directly in NCHW so no HBM transpose of the large upsampled
# tensor is ever needed.  Interpolation matrices stay in f32.
# ----------------------------------------------------------------------------
def _bilinear_1d(out_n, in_n):
    if in_n == 1:
        return jnp.ones((out_n, 1), jnp.float32)
    src = jnp.arange(out_n, dtype=jnp.float32) * (in_n - 1) / (out_n - 1)
    i0 = jnp.clip(jnp.floor(src).astype(jnp.int32), 0, in_n - 2)
    frac = src - i0.astype(jnp.float32)
    rows = jnp.arange(out_n)
    m = jnp.zeros((out_n, in_n), jnp.float32)
    m = m.at[rows, i0].add(1.0 - frac)
    m = m.at[rows, i0 + 1].add(frac)
    return m


def _upsample_kernel(rh_ref, rwt_ref, x_ref, o_ref):
    # x: (H, W) f32  ->  (H, Wout)  ->  (Hout, Wout), all in VMEM.
    t = jnp.dot(x_ref[0], rwt_ref[...], preferred_element_type=jnp.float32)
    o_ref[0] = jnp.dot(rh_ref[...], t, preferred_element_type=jnp.float32)


def upsample_bilinear_nchw(x, hout, wout):
    """x: (N, C, H, W) float32 -> (N, C, hout, wout) float32."""
    n, c, h, w = x.shape
    rh = _bilinear_1d(hout, h)                         # (hout, h) f32
    rwt = _bilinear_1d(wout, w).T                      # (w, wout) f32
    xf = x.reshape(n * c, h, w).astype(jnp.float32)
    out = pl.pallas_call(
        _upsample_kernel,
        out_shape=jax.ShapeDtypeStruct((n * c, hout, wout), jnp.float32),
        grid=(n * c,),
        in_specs=[
            pl.BlockSpec((hout, h), lambda b: (0, 0)),
            pl.BlockSpec((w, wout), lambda b: (0, 0)),
            pl.BlockSpec((1, h, w), lambda b: (b, 0, 0)),
        ],
        out_specs=pl.BlockSpec((1, hout, wout), lambda b: (b, 0, 0)),
        compiler_params=pltpu.CompilerParams(
            dimension_semantics=("parallel",),
            vmem_limit_bytes=_VMEM_LIMIT),
        cost_estimate=pl.CostEstimate(
            flops=2 * n * c * (h * w * wout + hout * wout * h),
            transcendentals=0,
            bytes_accessed=n * c * (h * w + hout * wout) * 4
                           + n * c * (hout * h + w * wout) * 4),
    )(rh, rwt, xf)
    return out.reshape(n, c, hout, wout)


def bn_fold(gamma, beta, mean, var, eps=1e-5):
    scale = gamma / jnp.sqrt(var + eps)
    shift = beta - mean * scale
    return scale, shift


# ----------------------------------------------------------------------------
# Parameters (deterministic synthetic init).  PSP pool sizes are STATIC module
# constants, not stored in the traced params pytree.
# ----------------------------------------------------------------------------
PSP_SIZES = (1, 2, 3, 6)
ENC_OUT_CH = 48          # efficientnet-b3 @ encoder_depth=3 -> 48 ch, stride 8
PSP_OUT_CH = 512
NUM_CLASSES = 12


def init_params(key, num_classes=NUM_CLASSES):
    keys = iter(jax.random.split(key, 64))

    def w(shape, std=0.1):
        return std * jax.random.normal(next(keys), shape, jnp.float32)

    def bn(c):
        return {
            "gamma": 1.0 + w((c,), 0.02),
            "beta": w((c,), 0.02),
            "mean": w((c,), 0.02),
            "var": 1.0 + jnp.abs(w((c,), 0.02)),
        }

    params = {
        # TODO(synk): EfficientNet-B3 ImageNet encoder replaced by a 3-stage
        # stride-2 conv/BN/ReLU stand-in producing the same stride-8,
        # 48-channel feature map consumed by the PSP decoder.
        "enc": [
            {"w": w((3, 3, 3, 16)), "bn": bn(16)},
            {"w": w((3, 3, 16, 32)), "bn": bn(32)},
            {"w": w((3, 3, 32, ENC_OUT_CH)), "bn": bn(ENC_OUT_CH)},
        ],
        "psp": [],
        "dec_conv": {"w": w((2 * ENC_OUT_CH, PSP_OUT_CH)), "bn": bn(PSP_OUT_CH)},
        "seg_head": {"w": w((3, 3, PSP_OUT_CH, num_classes)),
                     "bias": w((num_classes,), 0.02)},
    }
    branch_ch = ENC_OUT_CH // len(PSP_SIZES)  # 12
    for s in PSP_SIZES:
        branch = {"w": w((ENC_OUT_CH, branch_ch))}
        if s == 1:   # smp PSPBlock disables BN (conv has a bias) for pool_size==1
            branch["bias"] = w((branch_ch,), 0.02)
        else:
            branch["bn"] = bn(branch_ch)
        params["psp"].append(branch)
    return params


# ----------------------------------------------------------------------------
# PSP branch: tiny (<= N*36 x 48 x 12) ops -> deliberately left to XLA; a
# dedicated pallas_call per branch would be dominated by launch/tile overhead.
# `s` is a static Python int (pool size).
# ----------------------------------------------------------------------------
def psp_branch(x, branch, s):
    N, H, W, C = x.shape
    assert H % s == 0 and W % s == 0, "PSP pool size must divide the feature map"
    # TODO(synk): adaptive average pooling implemented only for pool sizes that
    # divide H and W (true for stride-8 features of 48-divisible inputs).
    pooled = x.astype(jnp.float32).reshape(N, s, H // s, s, W // s, C).mean(axis=(2, 4))
    y = jnp.einsum('nhwc,co->nhwo', pooled, branch["w"])
    if "bn" in branch:
        sc, sh = bn_fold(**branch["bn"])
        y = y * sc + sh
    else:
        y = y + branch["bias"]
    y = jnp.maximum(y, 0.0)
    rh = _bilinear_1d(H, s)
    rw = _bilinear_1d(W, s)
    y = jnp.einsum('ph,nhwc->npwc', rh, y)
    y = jnp.einsum('qw,npwc->npqc', rw, y)
    return y.astype(jnp.bfloat16)


# ----------------------------------------------------------------------------
# Forward pass.
# ----------------------------------------------------------------------------
def pspnet_forward(params, x_nchw):
    x = jnp.transpose(x_nchw, (0, 2, 3, 1)).astype(jnp.bfloat16)  # NHWC, bf16
    N, Hin, Win, _ = x.shape

    # --- encoder (stride-8 feature extractor stand-in), bf16 activations ---
    for layer in params["enc"]:
        sc, sh = bn_fold(**layer["bn"])
        x = conv2d_im2col(x, layer["w"], stride=2, scale=sc, shift=sh,
                          relu=True, out_dtype=jnp.bfloat16)
    _, H, W, _ = x.shape  # (N, Hin/8, Win/8, 48)

    # --- PSP pyramid pooling module (sizes 1,2,3,6) ---
    branches = [psp_branch(x, br, s) for s, br in zip(PSP_SIZES, params["psp"])]
    x = jnp.concatenate(branches + [x], axis=-1)                 # bf16 (N,H,W,96)

    # --- decoder 1x1 Conv2dReLU(96 -> 512) + BN + ReLU (pure matmul) ---
    sc, sh = bn_fold(**params["dec_conv"]["bn"])
    x = fused_matmul(x.reshape(N * H * W, 2 * ENC_OUT_CH),
                     params["dec_conv"]["w"], scale=sc, shift=sh, relu=True,
                     out_dtype=jnp.bfloat16)
    x = x.reshape(N, H, W, PSP_OUT_CH)
    # TODO(synk): nn.Dropout2d(p=0.2) is identity at inference; omitted.

    # --- segmentation head: direct 3x3 conv (bf16 in, lane-dense f32 out) ---
    logits = conv2d_direct(x, params["seg_head"]["w"],
                           shift=params["seg_head"]["bias"], relu=False)

    # --- x8 bilinear upsample (align_corners=True), fused separable kernel.
    # The NHWC->NCHW transpose happens on the SMALL stride-8 logits; the big
    # upsampled tensor is produced directly in NCHW by the kernel. ---
    logits = jnp.transpose(logits, (0, 3, 1, 2))                 # (N, classes, H, W)
    return upsample_bilinear_nchw(logits, Hin, Win)


# ----------------------------------------------------------------------------
if __name__ == "__main__":
    key = jax.random.PRNGKey(0)
    pkey, xkey = jax.random.split(key)
    params = init_params(pkey, num_classes=NUM_CLASSES)

    # NCHW input, in_channels=3; spatial 48 -> stride-8 features are 6x6 so all
    # PSP pool sizes (1,2,3,6) divide evenly.
    x = jax.random.normal(xkey, (2, 3, 48, 48), jnp.float32)

    fwd = jax.jit(pspnet_forward)
    out = jax.block_until_ready(fwd(params, x))
    assert out.shape == (2, NUM_CLASSES, 48, 48), out.shape
    assert bool(jnp.all(jnp.isfinite(out)))
    print("KERNEL_OK")
</pallas_src>

<mosaic_0001>
module attributes {stable_mosaic.version = 11 : i64} {
  func.func private @main(%arg0: i32) attributes {dimension_semantics = [#tpu.dimension_semantics<core_parallel>], iteration_bounds = array<i64: 2>, tpu.core_type = #tpu.core_type<sc_scalar_subcore>, window_params = []} {
    return
  }
}

module attributes {stable_mosaic.version = 11 : i64} {
  func.func private @main(%arg0: i32) attributes {dimension_semantics = [#tpu.dimension_semantics<core_parallel>], iteration_bounds = array<i64: 2>, tpu.core_type = #tpu.core_type<sc_scalar_subcore>, window_params = []} {
    return
  }
}

module attributes {stable_mosaic.version = 11 : i64} {
  func.func @_fused_matmul_kernel(%arg0: i32, %arg1: i32, %arg2: i32, %arg3: memref<384x27xbf16, #tpu.memory_space<vmem>>, %arg4: memref<27x16xbf16, #tpu.memory_space<vmem>>, %arg5: memref<1x16xf32, #tpu.memory_space<vmem>>, %arg6: memref<1x16xf32, #tpu.memory_space<vmem>>, %arg7: memref<384x16xbf16, #tpu.memory_space<vmem>>, %arg8: memref<384x16xf32, #tpu.memory_space<vmem>>) attributes {dimension_semantics = [#tpu.dimension_semantics<parallel>, #tpu.dimension_semantics<parallel>, #tpu.dimension_semantics<arbitrary>], iteration_bounds = array<i64: 3, 1, 1>, scalar_prefetch = 0 : i64, scratch_operands = 1 : i64, tpu.core_type = #tpu.core_type<tc>, window_params = [{transform_indices = @transform_0, window_bounds = array<i64: 384, 27>}, {transform_indices = @transform_1, window_bounds = array<i64: 27, 16>}, {transform_indices = @transform_2, window_bounds = array<i64: 1, 16>}, {transform_indices = @transform_3, window_bounds = array<i64: 1, 16>}, {transform_indices = @transform_4, window_bounds = array<i64: 384, 16>}]} {
    %c0_i32 = arith.constant 0 : i32
    %0 = arith.cmpi eq, %arg2, %c0_i32 : i32
    %1 = arith.extui %0 : i1 to i32
    %c0_i32_0 = arith.constant 0 : i32
    %2 = arith.cmpi ne, %1, %c0_i32_0 : i32
    scf.if %2 {
      %cst_10 = arith.constant 0.000000e+00 : f32
      %12 = vector.broadcast %cst_10 : f32 to vector<384x16xf32>
      %c0_11 = arith.constant 0 : index
      %c0_12 = arith.constant 0 : index
      %13 = vector.load %arg8[%c0_11, %c0_12] : memref<384x16xf32, #tpu.memory_space<vmem>>, vector<384x16xf32>
      tpu.vector_store %arg8[%c0_11, %c0_12], %12 {strides = array<i32>} : memref<384x16xf32, #tpu.memory_space<vmem>>, vector<384x16xf32>,
    } else {
    }
    %c0 = arith.constant 0 : index
    %c0_1 = arith.constant 0 : index
    %3 = vector.load %arg8[%c0, %c0_1] : memref<384x16xf32, #tpu.memory_space<vmem>>, vector<384x16xf32>
    %c0_2 = arith.constant 0 : index
    %c0_3 = arith.constant 0 : index
    %4 = vector.load %arg3[%c0_2, %c0_3] : memref<384x27xbf16, #tpu.memory_space<vmem>>, vector<384x27xbf16>
    %c0_4 = arith.constant 0 : index
    %c0_5 = arith.constant 0 : index
    %5 = vector.load %arg4[%c0_4, %c0_5] : memref<27x16xbf16, #tpu.memory_space<vmem>>, vector<27x16xbf16>
    %cst = arith.constant dense<0.000000e+00> : vector<384x16xf32>
    %6 = tpu.matmul %4, %5, %cst {dimension_numbers = #tpu.dot_dimension_numbers<[1], [0], [0], [1], [0, 0, 1, 1], [], []>} : vector<384x27xbf16>, vector<27x16xbf16>, vector<384x16xf32> -> vector<384x16xf32>
    %7 = arith.addf %3, %6 : vector<384x16xf32>
    %c0_6 = arith.constant 0 : index
    %c0_7 = arith.constant 0 : index
    %8 = vector.load %arg8[%c0_6, %c0_7] : memref<384x16xf32, #tpu.memory_space<vmem>>, vector<384x16xf32>
    tpu.vector_store %arg8[%c0_6, %c0_7], %7 {strides = array<i32>} : memref<384x16xf32, #tpu.memory_space<vmem>>, vector<384x16xf32>,
    %c0_i32_8 = arith.constant 0 : i32
    %9 = arith.cmpi eq, %arg2, %c0_i32_8 : i32
    %10 = arith.extui %9 : i1 to i32
    %c0_i32_9 = arith.constant 0 : i32
    %11 = arith.cmpi ne, %10, %c0_i32_9 : i32
    scf.if %11 {
      %c0_10 = arith.constant 0 : index
      %c0_11 = arith.constant 0 : index
      %12 = vector.load %arg8[%c0_10, %c0_11] : memref<384x16xf32, #tpu.memory_space<vmem>>, vector<384x16xf32>
      %c0_12 = arith.constant 0 : index
      %c0_13 = arith.constant 0 : index
      %13 = vector.load %arg5[%c0_12, %c0_13] : memref<1x16xf32, #tpu.memory_space<vmem>>, vector<1x16xf32>
      %14 = vector.broadcast %13 : vector<1x16xf32> to vector<384x16xf32>
      %15 = arith.mulf %12, %14 : vector<384x16xf32>
      %c0_14 = arith.constant 0 : index
      %c0_15 = arith.constant 0 : index
      %16 = vector.load %arg6[%c0_14, %c0_15] : memref<1x16xf32, #tpu.memory_space<vmem>>, vector<1x16xf32>
      %17 = vector.broadcast %16 : vector<1x16xf32> to vector<384x16xf32>
      %18 = arith.addf %15, %17 : vector<384x16xf32>
      %cst_16 = arith.constant 0.000000e+00 : f32
      %19 = vector.broadcast %cst_16 : f32 to vector<384x16xf32>
      %20 = arith.maximumf %18, %19 : vector<384x16xf32>
      %21 = arith.truncf %20 : vector<384x16xf32> to vector<384x16xbf16>
      %c0_17 = arith.constant 0 : index
      %c0_18 = arith.constant 0 : index
      %22 = vector.load %arg7[%c0_17, %c0_18] : memref<384x16xbf16, #tpu.memory_space<vmem>>, vector<384x16xbf16>
      tpu.vector_store %arg7[%c0_17, %c0_18], %21 {strides = array<i32>} : memref<384x16xbf16, #tpu.memory_space<vmem>>, vector<384x16xbf16>,
    } else {
    }
    return
  }
  func.func @transform_0(%arg0: i32, %arg1: i32, %arg2: i32) -> (i32, i32) {
    %c0_i32 = arith.constant 0 : i32
    return %arg0, %arg2 : i32, i32
  }
  func.func @transform_1(%arg0: i32, %arg1: i32, %arg2: i32) -> (i32, i32) {
    %c0_i32 = arith.constant 0 : i32
    return %arg2, %arg1 : i32, i32
  }
  func.func @transform_2(%arg0: i32, %arg1: i32, %arg2: i32) -> (i32, i32) {
    %c0_i32 = arith.constant 0 : i32
    %c0_i32_0 = arith.constant 0 : i32
    return %c0_i32, %arg1 : i32, i32
  }
  func.func @transform_3(%arg0: i32, %arg1: i32, %arg2: i32) -> (i32, i32) {
    %c0_i32 = arith.constant 0 : i32
    %c0_i32_0 = arith.constant 0 : i32
    return %c0_i32, %arg1 : i32, i32
  }
  func.func @transform_4(%arg0: i32, %arg1: i32, %arg2: i32) -> (i32, i32) {
    %c0_i32 = arith.constant 0 : i32
    return %arg0, %arg1 : i32, i32
  }
}

module attributes {stable_mosaic.version = 11 : i64} {
  func.func @_fused_matmul_kernel(%arg0: i32, %arg1: i32, %arg2: i32, %arg3: memref<288x144xbf16, #tpu.memory_space<vmem>>, %arg4: memref<144x32xbf16, #tpu.memory_space<vmem>>, %arg5: memref<1x32xf32, #tpu.memory_space<vmem>>, %arg6: memref<1x32xf32, #tpu.memory_space<vmem>>, %arg7: memref<288x32xbf16, #tpu.memory_space<vmem>>, %arg8: memref<288x32xf32, #tpu.memory_space<vmem>>) attributes {dimension_semantics = [#tpu.dimension_semantics<parallel>, #tpu.dimension_semantics<parallel>, #tpu.dimension_semantics<arbitrary>], iteration_bounds = array<i64: 1, 1, 1>, scalar_prefetch = 0 : i64, scratch_operands = 1 : i64, tpu.core_type = #tpu.core_type<tc>, window_params = [{transform_indices = @transform_0, window_bounds = array<i64: 288, 144>}, {transform_indices = @transform_1, window_bounds = array<i64: 144, 32>}, {transform_indices = @transform_2, window_bounds = array<i64: 1, 32>}, {transform_indices = @transform_3, window_bounds = array<i64: 1, 32>}, {transform_indices = @transform_4, window_bounds = array<i64: 288, 32>}]} {
    %c0_i32 = arith.constant 0 : i32
    %0 = arith.cmpi eq, %arg2, %c0_i32 : i32
    %1 = arith.extui %0 : i1 to i32
    %c0_i32_0 = arith.constant 0 : i32
    %2 = arith.cmpi ne, %1, %c0_i32_0 : i32
    scf.if %2 {
      %cst_10 = arith.constant 0.000000e+00 : f32
      %12 = vector.broadcast %cst_10 : f32 to vector<288x32xf32>
      %c0_11 = arith.constant 0 : index
      %c0_12 = arith.constant 0 : index
      %13 = vector.load %arg8[%c0_11, %c0_12] : memref<288x32xf32, #tpu.memory_space<vmem>>, vector<288x32xf32>
      tpu.vector_store %arg8[%c0_11, %c0_12], %12 {strides = array<i32>} : memref<288x32xf32, #tpu.memory_space<vmem>>, vector<288x32xf32>,
    } else {
    }
    %c0 = arith.constant 0 : index
    %c0_1 = arith.constant 0 : index
    %3 = vector.load %arg8[%c0, %c0_1] : memref<288x32xf32, #tpu.memory_space<vmem>>, vector<288x32xf32>
    %c0_2 = arith.constant 0 : index
    %c0_3 = arith.constant 0 : index
    %4 = vector.load %arg3[%c0_2, %c0_3] : memref<288x144xbf16, #tpu.memory_space<vmem>>, vector<288x144xbf16>
    %c0_4 = arith.constant 0 : index
    %c0_5 = arith.constant 0 : index
    %5 = vector.load %arg4[%c0_4, %c0_5] : memref<144x32xbf16, #tpu.memory_space<vmem>>, vector<144x32xbf16>
    %cst = arith.constant dense<0.000000e+00> : vector<288x32xf32>
    %6 = tpu.matmul %4, %5, %cst {dimension_numbers = #tpu.dot_dimension_numbers<[1], [0], [0], [1], [0, 0, 1, 1], [], []>} : vector<288x144xbf16>, vector<144x32xbf16>, vector<288x32xf32> -> vector<288x32xf32>
    %7 = arith.addf %3, %6 : vector<288x32xf32>
    %c0_6 = arith.constant 0 : index
    %c0_7 = arith.constant 0 : index
    %8 = vector.load %arg8[%c0_6, %c0_7] : memref<288x32xf32, #tpu.memory_space<vmem>>, vector<288x32xf32>
    tpu.vector_store %arg8[%c0_6, %c0_7], %7 {strides = array<i32>} : memref<288x32xf32, #tpu.memory_space<vmem>>, vector<288x32xf32>,
    %c0_i32_8 = arith.constant 0 : i32
    %9 = arith.cmpi eq, %arg2, %c0_i32_8 : i32
    %10 = arith.extui %9 : i1 to i32
    %c0_i32_9 = arith.constant 0 : i32
    %11 = arith.cmpi ne, %10, %c0_i32_9 : i32
    scf.if %11 {
      %c0_10 = arith.constant 0 : index
      %c0_11 = arith.constant 0 : index
      %12 = vector.load %arg8[%c0_10, %c0_11] : memref<288x32xf32, #tpu.memory_space<vmem>>, vector<288x32xf32>
      %c0_12 = arith.constant 0 : index
      %c0_13 = arith.constant 0 : index
      %13 = vector.load %arg5[%c0_12, %c0_13] : memref<1x32xf32, #tpu.memory_space<vmem>>, vector<1x32xf32>
      %14 = vector.broadcast %13 : vector<1x32xf32> to vector<288x32xf32>
      %15 = arith.mulf %12, %14 : vector<288x32xf32>
      %c0_14 = arith.constant 0 : index
      %c0_15 = arith.constant 0 : index
      %16 = vector.load %arg6[%c0_14, %c0_15] : memref<1x32xf32, #tpu.memory_space<vmem>>, vector<1x32xf32>
      %17 = vector.broadcast %16 : vector<1x32xf32> to vector<288x32xf32>
      %18 = arith.addf %15, %17 : vector<288x32xf32>
      %cst_16 = arith.constant 0.000000e+00 : f32
      %19 = vector.broadcast %cst_16 : f32 to vector<288x32xf32>
      %20 = arith.maximumf %18, %19 : vector<288x32xf32>
      %21 = arith.truncf %20 : vector<288x32xf32> to vector<288x32xbf16>
      %c0_17 = arith.constant 0 : index
      %c0_18 = arith.constant 0 : index
      %22 = vector.load %arg7[%c0_17, %c0_18] : memref<288x32xbf16, #tpu.memory_space<vmem>>, vector<288x32xbf16>
      tpu.vector_store %arg7[%c0_17, %c0_18], %21 {strides = array<i32>} : memref<288x32xbf16, #tpu.memory_space<vmem>>, vector<288x32xbf16>,
    } else {
    }
    return
  }
  func.func @transform_0(%arg0: i32, %arg1: i32, %arg2: i32) -> (i32, i32) {
    %c0_i32 = arith.constant 0 : i32
    return %arg0, %arg2 : i32, i32
  }
  func.func @transform_1(%arg0: i32, %arg1: i32, %arg2: i32) -> (i32, i32) {
    %c0_i32 = arith.constant 0 : i32
    return %arg2, %arg1 : i32, i32
  }
  func.func @transform_2(%arg0: i32, %arg1: i32, %arg2: i32) -> (i32, i32) {
    %c0_i32 = arith.constant 0 : i32
    %c0_i32_0 = arith.constant 0 : i32
    return %c0_i32, %arg1 : i32, i32
  }
  func.func @transform_3(%arg0: i32, %arg1: i32, %arg2: i32) -> (i32, i32) {
    %c0_i32 = arith.constant 0 : i32
    %c0_i32_0 = arith.constant 0 : i32
    return %c0_i32, %arg1 : i32, i32
  }
  func.func @transform_4(%arg0: i32, %arg1: i32, %arg2: i32) -> (i32, i32) {
    %c0_i32 = arith.constant 0 : i32
    return %arg0, %arg1 : i32, i32
  }
}

module attributes {stable_mosaic.version = 11 : i64} {
  func.func @_fused_matmul_kernel(%arg0: i32, %arg1: i32, %arg2: i32, %arg3: memref<72x288xbf16, #tpu.memory_space<vmem>>, %arg4: memref<288x48xbf16, #tpu.memory_space<vmem>>, %arg5: memref<1x48xf32, #tpu.memory_space<vmem>>, %arg6: memref<1x48xf32, #tpu.memory_space<vmem>>, %arg7: memref<72x48xbf16, #tpu.memory_space<vmem>>, %arg8: memref<72x48xf32, #tpu.memory_space<vmem>>) attributes {dimension_semantics = [#tpu.dimension_semantics<parallel>, #tpu.dimension_semantics<parallel>, #tpu.dimension_semantics<arbitrary>], iteration_bounds = array<i64: 1, 1, 1>, scalar_prefetch = 0 : i64, scratch_operands = 1 : i64, tpu.core_type = #tpu.core_type<tc>, window_params = [{transform_indices = @transform_0, window_bounds = array<i64: 72, 288>}, {transform_indices = @transform_1, window_bounds = array<i64: 288, 48>}, {transform_indices = @transform_2, window_bounds = array<i64: 1, 48>}, {transform_indices = @transform_3, window_bounds = array<i64: 1, 48>}, {transform_indices = @transform_4, window_bounds = array<i64: 72, 48>}]} {
    %c0_i32 = arith.constant 0 : i32
    %0 = arith.cmpi eq, %arg2, %c0_i32 : i32
    %1 = arith.extui %0 : i1 to i32
    %c0_i32_0 = arith.constant 0 : i32
    %2 = arith.cmpi ne, %1, %c0_i32_0 : i32
    scf.if %2 {
      %cst_10 = arith.constant 0.000000e+00 : f32
      %12 = vector.broadcast %cst_10 : f32 to vector<72x48xf32>
      %c0_11 = arith.constant 0 : index
      %c0_12 = arith.constant 0 : index
      %13 = vector.load %arg8[%c0_11, %c0_12] : memref<72x48xf32, #tpu.memory_space<vmem>>, vector<72x48xf32>
      tpu.vector_store %arg8[%c0_11, %c0_12], %12 {strides = array<i32>} : memref<72x48xf32, #tpu.memory_space<vmem>>, vector<72x48xf32>,
    } else {
    }
    %c0 = arith.constant 0 : index
    %c0_1 = arith.constant 0 : index
    %3 = vector.load %arg8[%c0, %c0_1] : memref<72x48xf32, #tpu.memory_space<vmem>>, vector<72x48xf32>
    %c0_2 = arith.constant 0 : index
    %c0_3 = arith.constant 0 : index
    %4 = vector.load %arg3[%c0_2, %c0_3] : memref<72x288xbf16, #tpu.memory_space<vmem>>, vector<72x288xbf16>
    %c0_4 = arith.constant 0 : index
    %c0_5 = arith.constant 0 : index
    %5 = vector.load %arg4[%c0_4, %c0_5] : memref<288x48xbf16, #tpu.memory_space<vmem>>, vector<288x48xbf16>
    %cst = arith.constant dense<0.000000e+00> : vector<72x48xf32>
    %6 = tpu.matmul %4, %5, %cst {dimension_numbers = #tpu.dot_dimension_numbers<[1], [0], [0], [1], [0, 0, 1, 1], [], []>} : vector<72x288xbf16>, vector<288x48xbf16>, vector<72x48xf32> -> vector<72x48xf32>
    %7 = arith.addf %3, %6 : vector<72x48xf32>
    %c0_6 = arith.constant 0 : index
    %c0_7 = arith.constant 0 : index
    %8 = vector.load %arg8[%c0_6, %c0_7] : memref<72x48xf32, #tpu.memory_space<vmem>>, vector<72x48xf32>
    tpu.vector_store %arg8[%c0_6, %c0_7], %7 {strides = array<i32>} : memref<72x48xf32, #tpu.memory_space<vmem>>, vector<72x48xf32>,
    %c0_i32_8 = arith.constant 0 : i32
    %9 = arith.cmpi eq, %arg2, %c0_i32_8 : i32
    %10 = arith.extui %9 : i1 to i32
    %c0_i32_9 = arith.constant 0 : i32
    %11 = arith.cmpi ne, %10, %c0_i32_9 : i32
    scf.if %11 {
      %c0_10 = arith.constant 0 : index
      %c0_11 = arith.constant 0 : index
      %12 = vector.load %arg8[%c0_10, %c0_11] : memref<72x48xf32, #tpu.memory_space<vmem>>, vector<72x48xf32>
      %c0_12 = arith.constant 0 : index
      %c0_13 = arith.constant 0 : index
      %13 = vector.load %arg5[%c0_12, %c0_13] : memref<1x48xf32, #tpu.memory_space<vmem>>, vector<1x48xf32>
      %14 = vector.broadcast %13 : vector<1x48xf32> to vector<72x48xf32>
      %15 = arith.mulf %12, %14 : vector<72x48xf32>
      %c0_14 = arith.constant 0 : index
      %c0_15 = arith.constant 0 : index
      %16 = vector.load %arg6[%c0_14, %c0_15] : memref<1x48xf32, #tpu.memory_space<vmem>>, vector<1x48xf32>
      %17 = vector.broadcast %16 : vector<1x48xf32> to vector<72x48xf32>
      %18 = arith.addf %15, %17 : vector<72x48xf32>
      %cst_16 = arith.constant 0.000000e+00 : f32
      %19 = vector.broadcast %cst_16 : f32 to vector<72x48xf32>
      %20 = arith.maximumf %18, %19 : vector<72x48xf32>
      %21 = arith.truncf %20 : vector<72x48xf32> to vector<72x48xbf16>
      %c0_17 = arith.constant 0 : index
      %c0_18 = arith.constant 0 : index
      %22 = vector.load %arg7[%c0_17, %c0_18] : memref<72x48xbf16, #tpu.memory_space<vmem>>, vector<72x48xbf16>
      tpu.vector_store %arg7[%c0_17, %c0_18], %21 {strides = array<i32>} : memref<72x48xbf16, #tpu.memory_space<vmem>>, vector<72x48xbf16>,
    } else {
    }
    return
  }
  func.func @transform_0(%arg0: i32, %arg1: i32, %arg2: i32) -> (i32, i32) {
    %c0_i32 = arith.constant 0 : i32
    return %arg0, %arg2 : i32, i32
  }
  func.func @transform_1(%arg0: i32, %arg1: i32, %arg2: i32) -> (i32, i32) {
    %c0_i32 = arith.constant 0 : i32
    return %arg2, %arg1 : i32, i32
  }
  func.func @transform_2(%arg0: i32, %arg1: i32, %arg2: i32) -> (i32, i32) {
    %c0_i32 = arith.constant 0 : i32
    %c0_i32_0 = arith.constant 0 : i32
    return %c0_i32, %arg1 : i32, i32
  }
  func.func @transform_3(%arg0: i32, %arg1: i32, %arg2: i32) -> (i32, i32) {
    %c0_i32 = arith.constant 0 : i32
    %c0_i32_0 = arith.constant 0 : i32
    return %c0_i32, %arg1 : i32, i32
  }
  func.func @transform_4(%arg0: i32, %arg1: i32, %arg2: i32) -> (i32, i32) {
    %c0_i32 = arith.constant 0 : i32
    return %arg0, %arg1 : i32, i32
  }
}

module attributes {stable_mosaic.version = 11 : i64} {
  func.func @_fused_matmul_kernel(%arg0: i32, %arg1: i32, %arg2: i32, %arg3: memref<72x96xbf16, #tpu.memory_space<vmem>>, %arg4: memref<96x256xbf16, #tpu.memory_space<vmem>>, %arg5: memref<1x256xf32, #tpu.memory_space<vmem>>, %arg6: memref<1x256xf32, #tpu.memory_space<vmem>>, %arg7: memref<72x256xbf16, #tpu.memory_space<vmem>>, %arg8: memref<72x256xf32, #tpu.memory_space<vmem>>) attributes {dimension_semantics = [#tpu.dimension_semantics<parallel>, #tpu.dimension_semantics<parallel>, #tpu.dimension_semantics<arbitrary>], iteration_bounds = array<i64: 1, 2, 1>, scalar_prefetch = 0 : i64, scratch_operands = 1 : i64, tpu.core_type = #tpu.core_type<tc>, window_params = [{transform_indices = @transform_0, window_bounds = array<i64: 72, 96>}, {transform_indices = @transform_1, window_bounds = array<i64: 96, 256>}, {transform_indices = @transform_2, window_bounds = array<i64: 1, 256>}, {transform_indices = @transform_3, window_bounds = array<i64: 1, 256>}, {transform_indices = @transform_4, window_bounds = array<i64: 72, 256>}]} {
    %c0_i32 = arith.constant 0 : i32
    %0 = arith.cmpi eq, %arg2, %c0_i32 : i32
    %1 = arith.extui %0 : i1 to i32
    %c0_i32_0 = arith.constant 0 : i32
    %2 = arith.cmpi ne, %1, %c0_i32_0 : i32
    scf.if %2 {
      %cst_10 = arith.constant 0.000000e+00 : f32
      %12 = vector.broadcast %cst_10 : f32 to vector<72x256xf32>
      %c0_11 = arith.constant 0 : index
      %c0_12 = arith.constant 0 : index
      %13 = vector.load %arg8[%c0_11, %c0_12] : memref<72x256xf32, #tpu.memory_space<vmem>>, vector<72x256xf32>
      tpu.vector_store %arg8[%c0_11, %c0_12], %12 {strides = array<i32>} : memref<72x256xf32, #tpu.memory_space<vmem>>, vector<72x256xf32>,
    } else {
    }
    %c0 = arith.constant 0 : index
    %c0_1 = arith.constant 0 : index
    %3 = vector.load %arg8[%c0, %c0_1] : memref<72x256xf32, #tpu.memory_space<vmem>>, vector<72x256xf32>
    %c0_2 = arith.constant 0 : index
    %c0_3 = arith.constant 0 : index
    %4 = vector.load %arg3[%c0_2, %c0_3] : memref<72x96xbf16, #tpu.memory_space<vmem>>, vector<72x96xbf16>
    %c0_4 = arith.constant 0 : index
    %c0_5 = arith.constant 0 : index
    %5 = vector.load %arg4[%c0_4, %c0_5] : memref<96x256xbf16, #tpu.memory_space<vmem>>, vector<96x256xbf16>
    %cst = arith.constant dense<0.000000e+00> : vector<72x256xf32>
    %6 = tpu.matmul %4, %5, %cst {dimension_numbers = #tpu.dot_dimension_numbers<[1], [0], [0], [1], [0, 0, 1, 1], [], []>} : vector<72x96xbf16>, vector<96x256xbf16>, vector<72x256xf32> -> vector<72x256xf32>
    %7 = arith.addf %3, %6 : vector<72x256xf32>
    %c0_6 = arith.constant 0 : index
    %c0_7 = arith.constant 0 : index
    %8 = vector.load %arg8[%c0_6, %c0_7] : memref<72x256xf32, #tpu.memory_space<vmem>>, vector<72x256xf32>
    tpu.vector_store %arg8[%c0_6, %c0_7], %7 {strides = array<i32>} : memref<72x256xf32, #tpu.memory_space<vmem>>, vector<72x256xf32>,
    %c0_i32_8 = arith.constant 0 : i32
    %9 = arith.cmpi eq, %arg2, %c0_i32_8 : i32
    %10 = arith.extui %9 : i1 to i32
    %c0_i32_9 = arith.constant 0 : i32
    %11 = arith.cmpi ne, %10, %c0_i32_9 : i32
    scf.if %11 {
      %c0_10 = arith.constant 0 : index
      %c0_11 = arith.constant 0 : index
      %12 = vector.load %arg8[%c0_10, %c0_11] : memref<72x256xf32, #tpu.memory_space<vmem>>, vector<72x256xf32>
      %c0_12 = arith.constant 0 : index
      %c0_13 = arith.constant 0 : index
      %13 = vector.load %arg5[%c0_12, %c0_13] : memref<1x256xf32, #tpu.memory_space<vmem>>, vector<1x256xf32>
      %14 = vector.broadcast %13 : vector<1x256xf32> to vector<72x256xf32>
      %15 = arith.mulf %12, %14 : vector<72x256xf32>
      %c0_14 = arith.constant 0 : index
      %c0_15 = arith.constant 0 : index
      %16 = vector.load %arg6[%c0_14, %c0_15] : memref<1x256xf32, #tpu.memory_space<vmem>>, vector<1x256xf32>
      %17 = vector.broadcast %16 : vector<1x256xf32> to vector<72x256xf32>
      %18 = arith.addf %15, %17 : vector<72x256xf32>
      %cst_16 = arith.constant 0.000000e+00 : f32
      %19 = vector.broadcast %cst_16 : f32 to vector<72x256xf32>
      %20 = arith.maximumf %18, %19 : vector<72x256xf32>
      %21 = arith.truncf %20 : vector<72x256xf32> to vector<72x256xbf16>
      %c0_17 = arith.constant 0 : index
      %c0_18 = arith.constant 0 : index
      %22 = vector.load %arg7[%c0_17, %c0_18] : memref<72x256xbf16, #tpu.memory_space<vmem>>, vector<72x256xbf16>
      tpu.vector_store %arg7[%c0_17, %c0_18], %21 {strides = array<i32>} : memref<72x256xbf16, #tpu.memory_space<vmem>>, vector<72x256xbf16>,
    } else {
    }
    return
  }
  func.func @transform_0(%arg0: i32, %arg1: i32, %arg2: i32) -> (i32, i32) {
    %c0_i32 = arith.constant 0 : i32
    return %arg0, %arg2 : i32, i32
  }
  func.func @transform_1(%arg0: i32, %arg1: i32, %arg2: i32) -> (i32, i32) {
    %c0_i32 = arith.constant 0 : i32
    return %arg2, %arg1 : i32, i32
  }
  func.func @transform_2(%arg0: i32, %arg1: i32, %arg2: i32) -> (i32, i32) {
    %c0_i32 = arith.constant 0 : i32
    %c0_i32_0 = arith.constant 0 : i32
    return %c0_i32, %arg1 : i32, i32
  }
  func.func @transform_3(%arg0: i32, %arg1: i32, %arg2: i32) -> (i32, i32) {
    %c0_i32 = arith.constant 0 : i32
    %c0_i32_0 = arith.constant 0 : i32
    return %c0_i32, %arg1 : i32, i32
  }
  func.func @transform_4(%arg0: i32, %arg1: i32, %arg2: i32) -> (i32, i32) {
    %c0_i32 = arith.constant 0 : i32
    return %arg0, %arg1 : i32, i32
  }
}

module attributes {stable_mosaic.version = 11 : i64} {
  func.func @_direct_conv_kernel(%arg0: i32, %arg1: memref<1x66x512xbf16, #tpu.memory_space<vmem>>, %arg2: memref<9x512x128xbf16, #tpu.memory_space<vmem>>, %arg3: memref<1x128xf32, #tpu.memory_space<vmem>>, %arg4: memref<1x128xf32, #tpu.memory_space<vmem>>, %arg5: memref<1x48x128xf32, #tpu.memory_space<vmem>>) attributes {dimension_semantics = [#tpu.dimension_semantics<parallel>], iteration_bounds = array<i64: 2>, scalar_prefetch = 0 : i64, scratch_operands = 0 : i64, tpu.core_type = #tpu.core_type<tc>, window_params = [{transform_indices = @transform_0, window_bounds = array<i64: 1, 66, 512>}, {pipeline_mode = #tpu.pipeline_mode<synchronous>, transform_indices = @transform_1, window_bounds = array<i64: 9, 512, 128>}, {pipeline_mode = #tpu.pipeline_mode<synchronous>, transform_indices = @transform_2, window_bounds = array<i64: 1, 128>}, {pipeline_mode = #tpu.pipeline_mode<synchronous>, transform_indices = @transform_3, window_bounds = array<i64: 1, 128>}, {transform_indices = @transform_4, window_bounds = array<i64: 1, 48, 128>}]} {
    %c0 = arith.constant 0 : index
    %c0_0 = arith.constant 0 : index
    %c0_1 = arith.constant 0 : index
    %0 = vector.load %arg1[%c0, %c0_0, %c0_1] : memref<1x66x512xbf16, #tpu.memory_space<vmem>>, vector<1x66x512xbf16>
    %1 = vector.shape_cast %0 : vector<1x66x512xbf16> to vector<66x512xbf16>
    %cst = arith.constant 0.000000e+00 : f32
    %2 = vector.broadcast %cst : f32 to vector<48x128xf32>
    %3 = vector.extract_strided_slice %1 {offsets = [0, 0], sizes = [48, 512], strides = [1, 1]} : vector<66x512xbf16> to vector<48x512xbf16>
    %c0_2 = arith.constant 0 : index
    %c0_3 = arith.constant 0 : index
    %c0_4 = arith.constant 0 : index
    %4 = vector.load %arg2[%c0_2, %c0_3, %c0_4] : memref<9x512x128xbf16, #tpu.memory_space<vmem>>, vector<1x512x128xbf16>
    %5 = vector.shape_cast %4 : vector<1x512x128xbf16> to vector<512x128xbf16>
    %cst_5 = arith.constant dense<0.000000e+00> : vector<48x128xf32>
    %6 = tpu.matmul %3, %5, %cst_5 {dimension_numbers = #tpu.dot_dimension_numbers<[1], [0], [0], [1], [0, 0, 1, 1], [], []>} : vector<48x512xbf16>, vector<512x128xbf16>, vector<48x128xf32> -> vector<48x128xf32>
    %7 = arith.addf %2, %6 : vector<48x128xf32>
    %8 = vector.extract_strided_slice %1 {offsets = [1, 0], sizes = [48, 512], strides = [1, 1]} : vector<66x512xbf16> to vector<48x512xbf16>
    %c1 = arith.constant 1 : index
    %c0_6 = arith.constant 0 : index
    %c0_7 = arith.constant 0 : index
    %9 = vector.load %arg2[%c1, %c0_6, %c0_7] : memref<9x512x128xbf16, #tpu.memory_space<vmem>>, vector<1x512x128xbf16>
    %10 = vector.shape_cast %9 : vector<1x512x128xbf16> to vector<512x128xbf16>
    %cst_8 = arith.constant dense<0.000000e+00> : vector<48x128xf32>
    %11 = tpu.matmul %8, %10, %cst_8 {dimension_numbers = #tpu.dot_dimension_numbers<[1], [0], [0], [1], [0, 0, 1, 1], [], []>} : vector<48x512xbf16>, vector<512x128xbf16>, vector<48x128xf32> -> vector<48x128xf32>
    %12 = arith.addf %7, %11 : vector<48x128xf32>
    %13 = vector.extract_strided_slice %1 {offsets = [2, 0], sizes = [48, 512], strides = [1, 1]} : vector<66x512xbf16> to vector<48x512xbf16>
    %c2 = arith.constant 2 : index
    %c0_9 = arith.constant 0 : index
    %c0_10 = arith.constant 0 : index
    %14 = vector.load %arg2[%c2, %c0_9, %c0_10] : memref<9x512x128xbf16, #tpu.memory_space<vmem>>, vector<1x512x128xbf16>
    %15 = vector.shape_cast %14 : vector<1x512x128xbf16> to vector<512x128xbf16>
    %cst_11 = arith.constant dense<0.000000e+00> : vector<48x128xf32>
    %16 = tpu.matmul %13, %15, %cst_11 {dimension_numbers = #tpu.dot_dimension_numbers<[1], [0], [0], [1], [0, 0, 1, 1], [], []>} : vector<48x512xbf16>, vector<512x128xbf16>, vector<48x128xf32> -> vector<48x128xf32>
    %17 = arith.addf %12, %16 : vector<48x128xf32>
    %18 = vector.extract_strided_slice %1 {offsets = [8, 0], sizes = [48, 512], strides = [1, 1]} : vector<66x512xbf16> to vector<48x512xbf16>
    %c3 = arith.constant 3 : index
    %c0_12 = arith.constant 0 : index
    %c0_13 = arith.constant 0 : index
    %19 = vector.load %arg2[%c3, %c0_12, %c0_13] : memref<9x512x128xbf16, #tpu.memory_space<vmem>>, vector<1x512x128xbf16>
    %20 = vector.shape_cast %19 : vector<1x512x128xbf16> to vector<512x128xbf16>
    %cst_14 = arith.constant dense<0.000000e+00> : vector<48x128xf32>
    %21 = tpu.matmul %18, %20, %cst_14 {dimension_numbers = #tpu.dot_dimension_numbers<[1], [0], [0], [1], [0, 0, 1, 1], [], []>} : vector<48x512xbf16>, vector<512x128xbf16>, vector<48x128xf32> -> vector<48x128xf32>
    %22 = arith.addf %17, %21 : vector<48x128xf32>
    %23 = vector.extract_strided_slice %1 {offsets = [9, 0], sizes = [48, 512], strides = [1, 1]} : vector<66x512xbf16> to vector<48x512xbf16>
    %c4 = arith.constant 4 : index
    %c0_15 = arith.constant 0 : index
    %c0_16 = arith.constant 0 : index
    %24 = vector.load %arg2[%c4, %c0_15, %c0_16] : memref<9x512x128xbf16, #tpu.memory_space<vmem>>, vector<1x512x128xbf16>
    %25 = vector.shape_cast %24 : vector<1x512x128xbf16> to vector<512x128xbf16>
    %cst_17 = arith.constant dense<0.000000e+00> : vector<48x128xf32>
    %26 = tpu.matmul %23, %25, %cst_17 {dimension_numbers = #tpu.dot_dimension_numbers<[1], [0], [0], [1], [0, 0, 1, 1], [], []>} : vector<48x512xbf16>, vector<512x128xbf16>, vector<48x128xf32> -> vector<48x128xf32>
    %27 = arith.addf %22, %26 : vector<48x128xf32>
    %28 = vector.extract_strided_slice %1 {offsets = [10, 0], sizes = [48, 512], strides = [1, 1]} : vector<66x512xbf16> to vector<48x512xbf16>
    %c5 = arith.constant 5 : index
    %c0_18 = arith.constant 0 : index
    %c0_19 = arith.constant 0 : index
    %29 = vector.load %arg2[%c5, %c0_18, %c0_19] : memref<9x512x128xbf16, #tpu.memory_space<vmem>>, vector<1x512x128xbf16>
    %30 = vector.shape_cast %29 : vector<1x512x128xbf16> to vector<512x128xbf16>
    %cst_20 = arith.constant dense<0.000000e+00> : vector<48x128xf32>
    %31 = tpu.matmul %28, %30, %cst_20 {dimension_numbers = #tpu.dot_dimension_numbers<[1], [0], [0], [1], [0, 0, 1, 1], [], []>} : vector<48x512xbf16>, vector<512x128xbf16>, vector<48x128xf32> -> vector<48x128xf32>
    %32 = arith.addf %27, %31 : vector<48x128xf32>
    %33 = vector.extract_strided_slice %1 {offsets = [16, 0], sizes = [48, 512], strides = [1, 1]} : vector<66x512xbf16> to vector<48x512xbf16>
    %c6 = arith.constant 6 : index
    %c0_21 = arith.constant 0 : index
    %c0_22 = arith.constant 0 : index
    %34 = vector.load %arg2[%c6, %c0_21, %c0_22] : memref<9x512x128xbf16, #tpu.memory_space<vmem>>, vector<1x512x128xbf16>
    %35 = vector.shape_cast %34 : vector<1x512x128xbf16> to vector<512x128xbf16>
    %cst_23 = arith.constant dense<0.000000e+00> : vector<48x128xf32>
    %36 = tpu.matmul %33, %35, %cst_23 {dimension_numbers = #tpu.dot_dimension_numbers<[1], [0], [0], [1], [0, 0, 1, 1], [], []>} : vector<48x512xbf16>, vector<512x128xbf16>, vector<48x128xf32> -> vector<48x128xf32>
    %37 = arith.addf %32, %36 : vector<48x128xf32>
    %38 = vector.extract_strided_slice %1 {offsets = [17, 0], sizes = [48, 512], strides = [1, 1]} : vector<66x512xbf16> to vector<48x512xbf16>
    %c7 = arith.constant 7 : index
    %c0_24 = arith.constant 0 : index
    %c0_25 = arith.constant 0 : index
    %39 = vector.load %arg2[%c7, %c0_24, %c0_25] : memref<9x512x128xbf16, #tpu.memory_space<vmem>>, vector<1x512x128xbf16>
    %40 = vector.shape_cast %39 : vector<1x512x128xbf16> to vector<512x128xbf16>
    %cst_26 = arith.constant dense<0.000000e+00> : vector<48x128xf32>
    %41 = tpu.matmul %38, %40, %cst_26 {dimension_numbers = #tpu.dot_dimension_numbers<[1], [0], [0], [1], [0, 0, 1, 1], [], []>} : vector<48x512xbf16>, vector<512x128xbf16>, vector<48x128xf32> -> vector<48x128xf32>
    %42 = arith.addf %37, %41 : vector<48x128xf32>
    %43 = vector.extract_strided_slice %1 {offsets = [18, 0], sizes = [48, 512], strides = [1, 1]} : vector<66x512xbf16> to vector<48x512xbf16>
    %c8 = arith.constant 8 : index
    %c0_27 = arith.constant 0 : index
    %c0_28 = arith.constant 0 : index
    %44 = vector.load %arg2[%c8, %c0_27, %c0_28] : memref<9x512x128xbf16, #tpu.memory_space<vmem>>, vector<1x512x128xbf16>
    %45 = vector.shape_cast %44 : vector<1x512x128xbf16> to vector<512x128xbf16>
    %cst_29 = arith.constant dense<0.000000e+00> : vector<48x128xf32>
    %46 = tpu.matmul %43, %45, %cst_29 {dimension_numbers = #tpu.dot_dimension_numbers<[1], [0], [0], [1], [0, 0, 1, 1], [], []>} : vector<48x512xbf16>, vector<512x128xbf16>, vector<48x128xf32> -> vector<48x128xf32>
    %47 = arith.addf %42, %46 : vector<48x128xf32>
    %c0_30 = arith.constant 0 : index
    %c0_31 = arith.constant 0 : index
    %48 = vector.load %arg3[%c0_30, %c0_31] : memref<1x128xf32, #tpu.memory_space<vmem>>, vector<1x128xf32>
    %49 = vector.broadcast %48 : vector<1x128xf32> to vector<48x128xf32>
    %50 = arith.mulf %47, %49 : vector<48x128xf32>
    %c0_32 = arith.constant 0 : index
    %c0_33 = arith.constant 0 : index
    %51 = vector.load %arg4[%c0_32, %c0_33] : memref<1x128xf32, #tpu.memory_space<vmem>>, vector<1x128xf32>
    %52 = vector.broadcast %51 : vector<1x128xf32> to vector<48x128xf32>
    %53 = arith.addf %50, %52 : vector<48x128xf32>
    %c0_34 = arith.constant 0 : index
    %c0_35 = arith.constant 0 : index
    %c0_36 = arith.constant 0 : index
    %54 = vector.load %arg5[%c0_34, %c0_35, %c0_36] : memref<1x48x128xf32, #tpu.memory_space<vmem>>, vector<1x48x128xf32>
    %55 = vector.shape_cast %54 : vector<1x48x128xf32> to vector<48x128xf32>
    %56 = vector.shape_cast %53 : vector<48x128xf32> to vector<1x48x128xf32>
    tpu.vector_store %arg5[%c0_34, %c0_35, %c0_36], %56 {strides = array<i32>} : memref<1x48x128xf32, #tpu.memory_space<vmem>>, vector<1x48x128xf32>,
    return
  }
  func.func @transform_0(%arg0: i32) -> (i32, i32, i32) {
    %c0_i32 = arith.constant 0 : i32
    %c0_i32_0 = arith.constant 0 : i32
    %c0_i32_1 = arith.constant 0 : i32
    return %arg0, %c0_i32, %c0_i32_0 : i32, i32, i32
  }
  func.func @transform_1(%arg0: i32) -> (i32, i32, i32) {
    %c0_i32 = arith.constant 0 : i32
    %c0_i32_0 = arith.constant 0 : i32
    %c0_i32_1 = arith.constant 0 : i32
    %c0_i32_2 = arith.constant 0 : i32
    return %c0_i32, %c0_i32_0, %c0_i32_1 : i32, i32, i32
  }
  func.func @transform_2(%arg0: i32) -> (i32, i32) {
    %c0_i32 = arith.constant 0 : i32
    %c0_i32_0 = arith.constant 0 : i32
    %c0_i32_1 = arith.constant 0 : i32
    return %c0_i32, %c0_i32_0 : i32, i32
  }
  func.func @transform_3(%arg0: i32) -> (i32, i32) {
    %c0_i32 = arith.constant 0 : i32
    %c0_i32_0 = arith.constant 0 : i32
    %c0_i32_1 = arith.constant 0 : i32
    return %c0_i32, %c0_i32_0 : i32, i32
  }
  func.func @transform_4(%arg0: i32) -> (i32, i32, i32) {
    %c0_i32 = arith.constant 0 : i32
    %c0_i32_0 = arith.constant 0 : i32
    %c0_i32_1 = arith.constant 0 : i32
    return %arg0, %c0_i32, %c0_i32_0 : i32, i32, i32
  }
}

module attributes {stable_mosaic.version = 11 : i64} {
  func.func @_upsample_kernel(%arg0: i32, %arg1: memref<48x6xf32, #tpu.memory_space<vmem>>, %arg2: memref<6x48xf32, #tpu.memory_space<vmem>>, %arg3: memref<1x6x6xf32, #tpu.memory_space<vmem>>, %arg4: memref<1x48x48xf32, #tpu.memory_space<vmem>>) attributes {dimension_semantics = [#tpu.dimension_semantics<parallel>], iteration_bounds = array<i64: 24>, scalar_prefetch = 0 : i64, scratch_operands = 0 : i64, tpu.core_type = #tpu.core_type<tc>, window_params = [{pipeline_mode = #tpu.pipeline_mode<synchronous>, transform_indices = @transform_0, window_bounds = array<i64: 48, 6>}, {pipeline_mode = #tpu.pipeline_mode<synchronous>, transform_indices = @transform_1, window_bounds = array<i64: 6, 48>}, {transform_indices = @transform_2, window_bounds = array<i64: 1, 6, 6>}, {transform_indices = @transform_3, window_bounds = array<i64: 1, 48, 48>}]} {
    %c0 = arith.constant 0 : index
    %c0_0 = arith.constant 0 : index
    %c0_1 = arith.constant 0 : index
    %0 = vector.load %arg3[%c0, %c0_0, %c0_1] : memref<1x6x6xf32, #tpu.memory_space<vmem>>, vector<1x6x6xf32>
    %1 = vector.shape_cast %0 : vector<1x6x6xf32> to vector<6x6xf32>
    %c0_2 = arith.constant 0 : index
    %c0_3 = arith.constant 0 : index
    %2 = vector.load %arg2[%c0_2, %c0_3] : memref<6x48xf32, #tpu.memory_space<vmem>>, vector<6x48xf32>
    %cst = arith.constant dense<0.000000e+00> : vector<6x48xf32>
    %3 = tpu.matmul %1, %2, %cst {dimension_numbers = #tpu.dot_dimension_numbers<[1], [0], [0], [1], [0, 0, 1, 1], [], []>} : vector<6x6xf32>, vector<6x48xf32>, vector<6x48xf32> -> vector<6x48xf32>
    %c0_4 = arith.constant 0 : index
    %c0_5 = arith.constant 0 : index
    %4 = vector.load %arg1[%c0_4, %c0_5] : memref<48x6xf32, #tpu.memory_space<vmem>>, vector<48x6xf32>
    %cst_6 = arith.constant dense<0.000000e+00> : vector<48x48xf32>
    %5 = tpu.matmul %4, %3, %cst_6 {dimension_numbers = #tpu.dot_dimension_numbers<[1], [0], [0], [1], [0, 0, 1, 1], [], []>} : vector<48x6xf32>, vector<6x48xf32>, vector<48x48xf32> -> vector<48x48xf32>
    %c0_7 = arith.constant 0 : index
    %c0_8 = arith.constant 0 : index
    %c0_9 = arith.constant 0 : index
    %6 = vector.load %arg4[%c0_7, %c0_8, %c0_9] : memref<1x48x48xf32, #tpu.memory_space<vmem>>, vector<1x48x48xf32>
    %7 = vector.shape_cast %6 : vector<1x48x48xf32> to vector<48x48xf32>
    %8 = vector.shape_cast %5 : vector<48x48xf32> to vector<1x48x48xf32>
    tpu.vector_store %arg4[%c0_7, %c0_8, %c0_9], %8 {strides = array<i32>} : memref<1x48x48xf32, #tpu.memory_space<vmem>>, vector<1x48x48xf32>,
    return
  }
  func.func @transform_0(%arg0: i32) -> (i32, i32) {
    %c0_i32 = arith.constant 0 : i32
    %c0_i32_0 = arith.constant 0 : i32
    %c0_i32_1 = arith.constant 0 : i32
    return %c0_i32, %c0_i32_0 : i32, i32
  }
  func.func @transform_1(%arg0: i32) -> (i32, i32) {
    %c0_i32 = arith.constant 0 : i32
    %c0_i32_0 = arith.constant 0 : i32
    %c0_i32_1 = arith.constant 0 : i32
    return %c0_i32, %c0_i32_0 : i32, i32
  }
  func.func @transform_2(%arg0: i32) -> (i32, i32, i32) {
    %c0_i32 = arith.constant 0 : i32
    %c0_i32_0 = arith.constant 0 : i32
    %c0_i32_1 = arith.constant 0 : i32
    return %arg0, %c0_i32, %c0_i32_0 : i32, i32, i32
  }
  func.func @transform_3(%arg0: i32) -> (i32, i32, i32) {
    %c0_i32 = arith.constant 0 : i32
    %c0_i32_0 = arith.constant 0 : i32
    %c0_i32_1 = arith.constant 0 : i32
    return %arg0, %c0_i32, %c0_i32_0 : i32, i32, i32
  }
}

</mosaic_0001>

<llo_original>
// kernel: pspnet_forward.6
$region0: #{pspnet_forward.6}
  #allocation0 [shape = 'u32[]', space=smem, size = 0x4, offset = 0x4, fixed_abs, tag = 'smem constant byte address 0x4 - core index']
  #allocation1 [shape = 'u32[144,128]{1,0:T(1,128)}', space=vmem, size = 0x12000, scoped, tag = 'internal scratch']
  #allocation2 [shape = 'f32[384,16]{1,0:T(8,128)}', space=vmem, size = 0x30000, scoped, tag = 'scratch operand']
  %s0 = inlined_call_operand.vmem [shape: bf16[1152,27], index: 0, kind: input, shape index: {}]
  %s1 = inlined_call_operand.vmem [shape: bf16[27,16], index: 1, kind: input, shape index: {}]
  %s2 = inlined_call_operand.vmem [shape: f32[1,16], index: 2, kind: input, shape index: {}]
  %s3 = inlined_call_operand.vmem [shape: f32[1,16], index: 3, kind: input, shape index: {}]
  %s4 = inlined_call_operand.vmem [shape: bf16[1152,16], index: 4, kind: output, shape index: {}]
  %s5 = sld [smem:[#allocation0]]
  $region57: #{pspnet_forward.6} parent=0
    _
  %s7 = ssub.s32 1, %s5
  %s8 = scalar_select 0, %s7, %s5
  loop: start=0, step=1, limit=5
  $region2: #{pspnet_forward.6} parent=0 // loop_pre_header
    _
  $region3: #{pspnet_forward.6} parent=0 // loop_header
    %s10 = sphi 0, %s14
    %p11 = scmp.ge.s32.totalorder %s10, 5
    %s17 = sphi 0, %s36
    %s18 = sphi 0, %s32
    %s19 = sphi 0, %s28
    %s20 = sphi 0, %s17
    %s21 = sphi 0, %s18
    %s22 = sphi 0, %s19
    %s23 = sphi 0, %s20
    %s24 = sphi 0, %s21
    %s25 = sphi 0, %s22
    %s41 = sphi 0, %s43
    %s44 = sphi 0, %s41
    %s45 = sphi 0, %s44
    %s61 = sphi 0, %s45
    %s69 = sphi 0, %s71
    %s72 = sphi 0, %s69
    %s73 = sphi 0, %s72
    %s89 = sphi 0, %s73
    %s95 = sphi 0, %s97
    %s98 = sphi 0, %s95
    %s99 = sphi 0, %s98
    %s115 = sphi 0, %s99
    %s121 = sphi 0, %s123
    %s124 = sphi 0, %s121
    %s125 = sphi 0, %s124
    %s141 = sphi 0, %s125
    %s149 = sphi 0, %s151
    %s152 = sphi 0, %s149
    %s153 = sphi 0, %s152
    %s169 = sphi 0, %s153
  $region4: #{pspnet_forward.6} parent=0 // loop_header_branch
    %13 = sbr.rel (%p11) target = $region8
  $region5: #{pspnet_forward.6} parent=0 // loop_body
    %s15 = ssub.s32 %s10, 1
    %s16 = ssub.s32 %s10, 2
    %s26 = sadd.s32 1, %s19
    %p27 = scmp.ge.s32.totalorder %s26, 1
    %s28 = scalar_select %p27, 0, %s26
    %s29 = sadd.s32 1, %s18
    %s30 = scalar_select %p27, %s29, %s18
    %p31 = scmp.ge.s32.totalorder %s30, 1
    %s32 = scalar_select %p31, 0, %s30
    %s33 = sadd.s32 1, %s17
    %s34 = scalar_select %p31, %s33, %s17
    %p35 = scmp.ge.s32.totalorder %s34, 3
    %s36 = scalar_select %p35, 0, %s34
    %s37 = ssub.s32 %s17, %s36
    %s38 = ssub.s32 %s19, %s28
    %s39 = sor.u32 %s37, %s38
    %p40 = scmp.eq.s32.totalorder %s39, 0
    %s42 = sadd.s32 %s41, 1
    %s43 = scalar_select %p40, %s41, %s42
    %p46 = pneg %p40
    %p47 = scmp.eq.s32.totalorder %s10, 2
    %p48 = por %p46, %p47
    %p49 = scmp.ne.s32.totalorder %s41, %s44
    %p50 = scmp.eq.s32.totalorder %s10, 0
    %p51 = por %p49, %p50
    %p52 = scmp.ne.s32.totalorder %s41, %s44
    %p53 = scmp.eq.s32.totalorder %s15, 2
    %p54 = por %p52, %p53
    %p55 = scmp.ne.s32.totalorder %s44, %s45
    %p56 = scmp.eq.s32.totalorder %s15, 0
    %p57 = por %p55, %p56
    %p58 = scmp.ne.s32.totalorder %s44, %s45
    %p59 = scmp.eq.s32.totalorder %s16, 2
    %p60 = por %p58, %p59
    %p62 = scmp.ne.s32.totalorder %s45, %s61
    %p63 = scmp.eq.s32.totalorder %s16, 0
    %p64 = por %p62, %p63
    %s65 = ssub.s32 %s19, %s28
    %s66 = ssub.s32 %s18, %s32
    %s67 = sor.u32 %s65, %s66
    %p68 = scmp.eq.s32.totalorder %s67, 0
    %s70 = sadd.s32 %s69, 1
    %s71 = scalar_select %p68, %s69, %s70
    %p74 = pneg %p68
    %p75 = scmp.eq.s32.totalorder %s10, 2
    %p76 = por %p74, %p75
    %p77 = scmp.ne.s32.totalorder %s69, %s72
    %p78 = scmp.eq.s32.totalorder %s10, 0
    %p79 = por %p77, %p78
    %p80 = scmp.ne.s32.totalorder %s69, %s72
    %p81 = scmp.eq.s32.totalorder %s15, 2
    %p82 = por %p80, %p81
    %p83 = scmp.ne.s32.totalorder %s72, %s73
    %p84 = scmp.eq.s32.totalorder %s15, 0
    %p85 = por %p83, %p84
    %p86 = scmp.ne.s32.totalorder %s72, %s73
    %p87 = scmp.eq.s32.totalorder %s16, 2
    %p88 = por %p86, %p87
    %p90 = scmp.ne.s32.totalorder %s73, %s89
    %p91 = scmp.eq.s32.totalorder %s16, 0
    %p92 = por %p90, %p91
    %s93 = ssub.s32 %s18, %s32
    %p94 = scmp.eq.s32.totalorder %s93, 0
    %s96 = sadd.s32 %s95, 1
    %s97 = scalar_select %p94, %s95, %s96
    %p100 = pneg %p94
    %p101 = scmp.eq.s32.totalorder %s10, 2
    %p102 = por %p100, %p101
    %p103 = scmp.ne.s32.totalorder %s95, %s98
    %p104 = scmp.eq.s32.totalorder %s10, 0
    %p105 = por %p103, %p104
    %p106 = scmp.ne.s32.totalorder %s95, %s98
    %p107 = scmp.eq.s32.totalorder %s15, 2
    %p108 = por %p106, %p107
    %p109 = scmp.ne.s32.totalorder %s98, %s99
    %p110 = scmp.eq.s32.totalorder %s15, 0
    %p111 = por %p109, %p110
    %p112 = scmp.ne.s32.totalorder %s98, %s99
    %p113 = scmp.eq.s32.totalorder %s16, 2
    %p114 = por %p112, %p113
    %p116 = scmp.ne.s32.totalorder %s99, %s115
    %p117 = scmp.eq.s32.totalorder %s16, 0
    %p118 = por %p116, %p117
    %s119 = ssub.s32 %s18, %s32
    %p120 = scmp.eq.s32.totalorder %s119, 0
    %s122 = sadd.s32 %s121, 1
    %s123 = scalar_select %p120, %s121, %s122
    %p126 = pneg %p120
    %p127 = scmp.eq.s32.totalorder %s10, 2
    %p128 = por %p126, %p127
    %p129 = scmp.ne.s32.totalorder %s121, %s124
    %p130 = scmp.eq.s32.totalorder %s10, 0
    %p131 = por %p129, %p130
    %p132 = scmp.ne.s32.totalorder %s121, %s124
    %p133 = scmp.eq.s32.totalorder %s15, 2
    %p134 = por %p132, %p133
    %p135 = scmp.ne.s32.totalorder %s124, %s125
    %p136 = scmp.eq.s32.totalorder %s15, 0
    %p137 = por %p135, %p136
    %p138 = scmp.ne.s32.totalorder %s124, %s125
    %p139 = scmp.eq.s32.totalorder %s16, 2
    %p140 = por %p138, %p139
    %p142 = scmp.ne.s32.totalorder %s125, %s141
    %p143 = scmp.eq.s32.totalorder %s16, 0
    %p144 = por %p142, %p143
    %s145 = ssub.s32 %s17, %s36
    %s146 = ssub.s32 %s18, %s32
    %s147 = sor.u32 %s145, %s146
    %p148 = scmp.eq.s32.totalorder %s147, 0
    %s150 = sadd.s32 %s149, 1
    %s151 = scalar_select %p148, %s149, %s150
    %p154 = pneg %p148
    %p155 = scmp.eq.s32.totalorder %s10, 2
    %p156 = por %p154, %p155
    %p157 = scmp.ne.s32.totalorder %s149, %s152
    %p158 = scmp.eq.s32.totalorder %s10, 0
    %p159 = por %p157, %p158
    %p160 = scmp.ne.s32.totalorder %s149, %s152
    %p161 = scmp.eq.s32.totalorder %s15, 2
    %p162 = por %p160, %p161
    %p163 = scmp.ne.s32.totalorder %s152, %s153
    %p164 = scmp.eq.s32.totalorder %s15, 0
    %p165 = por %p163, %p164
    %p166 = scmp.ne.s32.totalorder %s152, %s153
    %p167 = scmp.eq.s32.totalorder %s16, 2
    %p168 = por %p166, %p167
    %p170 = scmp.ne.s32.totalorder %s153, %s169
    %p171 = scmp.eq.s32.totalorder %s16, 0
    %p172 = por %p170, %p171
    %p173 = scmp.le.s32.totalorder 1, %s10
    %p174 = scmp.lt.s32.totalorder %s10, 4
    %p175 = pnand %p173, %p174
    %p176 = pneg %p175
    // Predicated region
    $region9: #{pspnet_forward.6} parent=5 // pred_check
      _
    $region10: #{pspnet_forward.6} parent=5 // pred_check_branch
      %178 = sbr.rel (%p175) target = $region12
    $region11: #{pspnet_forward.6} parent=5 // pred_region
      %s179 = ssub.s32 %s10, 1
      // Predicated region
      $region13: #{pspnet_forward.6} parent=11 // pred_check
        %p180 = pneg %p85
      $region14: #{pspnet_forward.6} parent=11 // pred_check_branch
        %182 = sbr.rel (%p180) target = $region16
      $region15: #{pspnet_forward.6} parent=11 // pred_region
        %s183 = smul.u32 4, %s22
        %p184 = scmp.lt.s32.totalorder %s183, 3
        %s185 = scalar_select %p184, %s183, 3
        %p186 = scmp.lt.s32.totalorder %s21, 0
        %s187 = scalar_select %p186, %s21, 0
        %s188 = sadd.s32 %s187, %s185
        %s189 = smul.addr %s188, 4
        %s190 = scalar_lea.vmem %s1, %s189
        %s191 = smul.u32 4, %s22
      $region16: #{pspnet_forward.6} parent=11 // pred_fallthru
        _
      // Predicated region
      $region17: #{pspnet_forward.6} parent=11 // pred_check
        %p192 = pneg %p111
      $region18: #{pspnet_forward.6} parent=11 // pred_check_branch
        %194 = sbr.rel (%p192) target = $region20
      $region19: #{pspnet_forward.6} parent=11 // pred_region
        %p195 = scmp.lt.s32.totalorder %s21, 0
        %s196 = scalar_select %p195, %s21, 0
        %s197 = scalar_lea.vmem %s2, %s196
      $region20: #{pspnet_forward.6} parent=11 // pred_fallthru
        _
      // Predicated region
      $region21: #{pspnet_forward.6} parent=11 // pred_check
        %p198 = pneg %p137
      $region22: #{pspnet_forward.6} parent=11 // pred_check_branch
        %200 = sbr.rel (%p198) target = $region24
      $region23: #{pspnet_forward.6} parent=11 // pred_region
        %p201 = scmp.lt.s32.totalorder %s21, 0
        %s202 = scalar_select %p201, %s21, 0
        %s203 = scalar_lea.vmem %s3, %s202
      $region24: #{pspnet_forward.6} parent=11 // pred_fallthru
        _
    $region12: #{pspnet_forward.6} parent=5 // pred_fallthru
      _
    %p204 = scmp.lt.s32.totalorder %s10, 3
    // Predicated region
    $region25: #{pspnet_forward.6} parent=5 // pred_check
      %p205 = pneg %p204
    $region26: #{pspnet_forward.6} parent=5 // pred_check_branch
      %207 = sbr.rel (%p205) target = $region28
    $region27: #{pspnet_forward.6} parent=5 // pred_region
      // Predicated region
      $region29: #{pspnet_forward.6} parent=27 // pred_check
        %p208 = pneg %p51
      $region30: #{pspnet_forward.6} parent=27 // pred_check_branch
        %210 = sbr.rel (%p208) target = $region32
      $region31: #{pspnet_forward.6} parent=27 // pred_region
        %s211 = smul.u32 48, %s17
        %p212 = scmp.lt.s32.totalorder %s211, 143
        %s213 = scalar_select %p212, %s211, 143
        %p214 = scmp.lt.s32.totalorder %s19, 0
        %s215 = scalar_select %p214, %s19, 0
        %s216 = sadd.s32 %s215, %s213
        %s217 = smul.addr %s216, 4
        %s218 = scalar_lea.vmem %s0, %s217
        %s219 = smul.u32 48, %s17
      $region32: #{pspnet_forward.6} parent=27 // pred_fallthru
        _
    $region28: #{pspnet_forward.6} parent=5 // pred_fallthru
      _
    %p220 = scmp.le.s32.totalorder 1, %s10
    %p221 = scmp.lt.s32.totalorder %s10, 4
    %p222 = pnand %p220, %p221
    %p223 = pneg %p222
    // Predicated region
    $region33: #{pspnet_forward.6} parent=5 // pred_check
      _
    $region34: #{pspnet_forward.6} parent=5 // pred_check_branch
      %225 = sbr.rel (%p222) target = $region36
    $region35: #{pspnet_forward.6} parent=5 // pred_region
      %s226 = ssub.s32 %s10, 1
      %s227 = smul.u32 48, %s20
      %p228 = scmp.lt.s32.totalorder %s227, 143
      %s229 = scalar_select %p228, %s227, 143
      %p230 = scmp.lt.s32.totalorder %s22, 0
      %s231 = scalar_select %p230, %s22, 0
      %s232 = sadd.s32 %s231, %s229
      %s233 = smul.addr %s232, 4
      %s234 = scalar_lea.vmem %s0, %s233
      %p235 = pneg %p57
      %p236 = pneg %p54
      %s237 = smul.u32 4, %s22
      %p238 = scmp.lt.s32.totalorder %s237, 3
      %s239 = scalar_select %p238, %s237, 3
      %p240 = scmp.lt.s32.totalorder %s21, 0
      %s241 = scalar_select %p240, %s21, 0
      %s242 = sadd.s32 %s241, %s239
      %s243 = smul.addr %s242, 4
      %s244 = scalar_lea.vmem %s1, %s243
      %p245 = pneg %p85
      %p246 = pneg %p82
      %p247 = scmp.lt.s32.totalorder %s21, 0
      %s248 = scalar_select %p247, %s21, 0
      %s249 = scalar_lea.vmem %s2, %s248
      %p250 = pneg %p111
      %p251 = pneg %p108
      %p252 = scmp.lt.s32.totalorder %s21, 0
      %s253 = scalar_select %p252, %s21, 0
      %s254 = scalar_lea.vmem %s3, %s253
      %p255 = pneg %p137
      %p256 = pneg %p134
      %p257 = pneg %p165
      %p258 = pneg %p162
      %s259 = smul.u32 48, %s20
      %p260 = scmp.lt.s32.totalorder %s259, 143
      %s261 = scalar_select %p260, %s259, 143
      %p262 = scmp.lt.s32.totalorder %s21, 0
      %s263 = scalar_select %p262, %s21, 0
      %s264 = sadd.s32 %s263, %s261
      %s265 = smul.addr %s264, 4
      %s266 = scalar_lea.vmem %s4, %s265
      %s267 = smul.u32 48, %s20
      %p268 = scmp.lt.s32.totalorder %s267, 143
      %s269 = scalar_select %p268, %s267, 143
      %p270 = scmp.lt.s32.totalorder %s22, 0
      %s271 = scalar_select %p270, %s22, 0
      %s272 = sadd.s32 %s271, %s269
      %s273 = smul.addr %s272, 4
      %s274 = scalar_lea.vmem %s0, %s273
      %s275 = smul.u32 48, %s20
      %s276 = smul.u32 4, %s22
      %p277 = scmp.lt.s32.totalorder %s276, 3
      %s278 = scalar_select %p277, %s276, 3
      %p279 = scmp.lt.s32.totalorder %s21, 0
      %s280 = scalar_select %p279, %s21, 0
      %s281 = sadd.s32 %s280, %s278
      %s282 = smul.addr %s281, 4
      %s283 = scalar_lea.vmem %s1, %s282
      %s284 = smul.u32 4, %s22
      %p285 = scmp.lt.s32.totalorder %s21, 0
      %s286 = scalar_select %p285, %s21, 0
      %s287 = scalar_lea.vmem %s2, %s286
      %p288 = scmp.lt.s32.totalorder %s21, 0
      %s289 = scalar_select %p288, %s21, 0
      %s290 = scalar_lea.vmem %s3, %s289
      %s291 = smul.u32 48, %s20
      %p292 = scmp.lt.s32.totalorder %s291, 143
      %s293 = scalar_select %p292, %s291, 143
      %p294 = scmp.lt.s32.totalorder %s21, 0
      %s295 = scalar_select %p294, %s21, 0
      %s296 = sadd.s32 %s295, %s293
      %s297 = smul.addr %s296, 4
      %s298 = scalar_lea.vmem %s4, %s297
      %s299 = smul.u32 48, %s20
      %p301 = scmp.eq.s32.totalorder %s22, 0
      // Predicated region
      $region37: #{pspnet_forward.6} parent=35 // pred_check
        %p302 = pneg %p301
      $region38: #{pspnet_forward.6} parent=35 // pred_check_branch
        %304 = sbr.rel (%p302) target = $region40
      $region39: #{pspnet_forward.6} parent=35 // pred_region
        %vm305 = vcmask 130048
        %306 = vst.msk [vmem:[#allocation2] sm:$0xff] %vm305, 0.0
        %307 = vst.msk [vmem:[#allocation2 + $0x8] sm:$0xff] %vm305, 0.0
        %308 = vst.msk [vmem:[#allocation2 + $0x10] sm:$0xff] %vm305, 0.0
        %309 = vst.msk [vmem:[#allocation2 + $0x18] sm:$0xff] %vm305, 0.0
        %310 = vst.msk [vmem:[#allocation2 + $0x20] sm:$0xff] %vm305, 0.0
        %311 = vst.msk [vmem:[#allocation2 + $0x28] sm:$0xff] %vm305, 0.0
        %312 = vst.msk [vmem:[#allocation2 + $0x30] sm:$0xff] %vm305, 0.0
        %313 = vst.msk [vmem:[#allocation2 + $0x38] sm:$0xff] %vm305, 0.0
        %314 = vst.msk [vmem:[#allocation2 + $0x40] sm:$0xff] %vm305, 0.0
        %315 = vst.msk [vmem:[#allocation2 + $0x48] sm:$0xff] %vm305, 0.0
        %316 = vst.msk [vmem:[#allocation2 + $0x50] sm:$0xff] %vm305, 0.0
        %317 = vst.msk [vmem:[#allocation2 + $0x58] sm:$0xff] %vm305, 0.0
        %318 = vst.msk [vmem:[#allocation2 + $0x60] sm:$0xff] %vm305, 0.0
        %319 = vst.msk [vmem:[#allocation2 + $0x68] sm:$0xff] %vm305, 0.0
        %320 = vst.msk [vmem:[#allocation2 + $0x70] sm:$0xff] %vm305, 0.0
        %321 = vst.msk [vmem:[#allocation2 + $0x78] sm:$0xff] %vm305, 0.0
        %322 = vst.msk [vmem:[#allocation2 + $0x80] sm:$0xff] %vm305, 0.0
        %323 = vst.msk [vmem:[#allocation2 + $0x88] sm:$0xff] %vm305, 0.0
        %324 = vst.msk [vmem:[#allocation2 + $0x90] sm:$0xff] %vm305, 0.0
        %325 = vst.msk [vmem:[#allocation2 + $0x98] sm:$0xff] %vm305, 0.0
        %326 = vst.msk [vmem:[#allocation2 + $0xa0] sm:$0xff] %vm305, 0.0
        %327 = vst.msk [vmem:[#allocation2 + $0xa8] sm:$0xff] %vm305, 0.0
        %328 = vst.msk [vmem:[#allocation2 + $0xb0] sm:$0xff] %vm305, 0.0
        %329 = vst.msk [vmem:[#allocation2 + $0xb8] sm:$0xff] %vm305, 0.0
        %330 = vst.msk [vmem:[#allocation2 + $0xc0] sm:$0xff] %vm305, 0.0
        %331 = vst.msk [vmem:[#allocation2 + $0xc8] sm:$0xff] %vm305, 0.0
        %332 = vst.msk [vmem:[#allocation2 + $0xd0] sm:$0xff] %vm305, 0.0
        %333 = vst.msk [vmem:[#allocation2 + $0xd8] sm:$0xff] %vm305, 0.0
        %334 = vst.msk [vmem:[#allocation2 + $0xe0] sm:$0xff] %vm305, 0.0
        %335 = vst.msk [vmem:[#allocation2 + $0xe8] sm:$0xff] %vm305, 0.0
        %336 = vst.msk [vmem:[#allocation2 + $0xf0] sm:$0xff] %vm305, 0.0
        %337 = vst.msk [vmem:[#allocation2 + $0xf8] sm:$0xff] %vm305, 0.0
        %338 = vst.msk [vmem:[#allocation2 + $0x100] sm:$0xff] %vm305, 0.0
        %339 = vst.msk [vmem:[#allocation2 + $0x108] sm:$0xff] %vm305, 0.0
        %340 = vst.msk [vmem:[#allocation2 + $0x110] sm:$0xff] %vm305, 0.0
        %341 = vst.msk [vmem:[#allocation2 + $0x118] sm:$0xff] %vm305, 0.0
        %342 = vst.msk [vmem:[#allocation2 + $0x120] sm:$0xff] %vm305, 0.0
        %343 = vst.msk [vmem:[#allocation2 + $0x128] sm:$0xff] %vm305, 0.0
        %344 = vst.msk [vmem:[#allocation2 + $0x130] sm:$0xff] %vm305, 0.0
        %345 = vst.msk [vmem:[#allocation2 + $0x138] sm:$0xff] %vm305, 0.0
        %346 = vst.msk [vmem:[#allocation2 + $0x140] sm:$0xff] %vm305, 0.0
        %347 = vst.msk [vmem:[#allocation2 + $0x148] sm:$0xff] %vm305, 0.0
        %348 = vst.msk [vmem:[#allocation2 + $0x150] sm:$0xff] %vm305, 0.0
        %349 = vst.msk [vmem:[#allocation2 + $0x158] sm:$0xff] %vm305, 0.0
        %350 = vst.msk [vmem:[#allocation2 + $0x160] sm:$0xff] %vm305, 0.0
        %351 = vst.msk [vmem:[#allocation2 + $0x168] sm:$0xff] %vm305, 0.0
        %352 = vst.msk [vmem:[#allocation2 + $0x170] sm:$0xff] %vm305, 0.0
        %353 = vst.msk [vmem:[#allocation2 + $0x178] sm:$0xff] %vm305, 0.0
      $region40: #{pspnet_forward.6} parent=35 // pred_fallthru
        _
      %v354 = vld [vmem:[#allocation2] sm:$0xff]
      %v355 = vld [vmem:[#allocation2 + $0x8] sm:$0xff]
      %v356 = vld [vmem:[#allocation2 + $0x10] sm:$0xff]
      %v357 = vld [vmem:[#allocation2 + $0x18] sm:$0xff]
      %v358 = vld [vmem:[#allocation2 + $0x20] sm:$0xff]
      %v359 = vld [vmem:[#allocation2 + $0x28] sm:$0xff]
      %v360 = vld [vmem:[#allocation2 + $0x30] sm:$0xff]
      %v361 = vld [vmem:[#allocation2 + $0x38] sm:$0xff]
      %v362 = vld [vmem:[#allocation2 + $0x40] sm:$0xff]
      %v363 = vld [vmem:[#allocation2 + $0x48] sm:$0xff]
      %v364 = vld [vmem:[#allocation2 + $0x50] sm:$0xff]
      %v365 = vld [vmem:[#allocation2 + $0x58] sm:$0xff]
      %v366 = vld [vmem:[#allocation2 + $0x60] sm:$0xff]
      %v367 = vld [vmem:[#allocation2 + $0x68] sm:$0xff]
      %v368 = vld [vmem:[#allocation2 + $0x70] sm:$0xff]
      %v369 = vld [vmem:[#allocation2 + $0x78] sm:$0xff]
      %v370 = vld [vmem:[#allocation2 + $0x80] sm:$0xff]
      %v371 = vld [vmem:[#allocation2 + $0x88] sm:$0xff]
      %v372 = vld [vmem:[#allocation2 + $0x90] sm:$0xff]
      %v373 = vld [vmem:[#allocation2 + $0x98] sm:$0xff]
      %v374 = vld [vmem:[#allocation2 + $0xa0] sm:$0xff]
      %v375 = vld [vmem:[#allocation2 + $0xa8] sm:$0xff]
      %v376 = vld [vmem:[#allocation2 + $0xb0] sm:$0xff]
      %v377 = vld [vmem:[#allocation2 + $0xb8] sm:$0xff]
      %v378 = vld [vmem:[#allocation2 + $0xc0] sm:$0xff]
      %v379 = vld [vmem:[#allocation2 + $0xc8] sm:$0xff]
      %v380 = vld [vmem:[#allocation2 + $0xd0] sm:$0xff]
      %v381 = vld [vmem:[#allocation2 + $0xd8] sm:$0xff]
      %v382 = vld [vmem:[#allocation2 + $0xe0] sm:$0xff]
      %v383 = vld [vmem:[#allocation2 + $0xe8] sm:$0xff]
      %v384 = vld [vmem:[#allocation2 + $0xf0] sm:$0xff]
      %v385 = vld [vmem:[#allocation2 + $0xf8] sm:$0xff]
      %v386 = vld [vmem:[#allocation2 + $0x100] sm:$0xff]
      %v387 = vld [vmem:[#allocation2 + $0x108] sm:$0xff]
      %v388 = vld [vmem:[#allocation2 + $0x110] sm:$0xff]
      %v389 = vld [vmem:[#allocation2 + $0x118] sm:$0xff]
      %v390 = vld [vmem:[#allocation2 + $0x120] sm:$0xff]
      %v391 = vld [vmem:[#allocation2 + $0x128] sm:$0xff]
      %v392 = vld [vmem:[#allocation2 + $0x130] sm:$0xff]
      %v393 = vld [vmem:[#allocation2 + $0x138] sm:$0xff]
      %v394 = vld [vmem:[#allocation2 + $0x140] sm:$0xff]
      %v395 = vld [vmem:[#allocation2 + $0x148] sm:$0xff]
      %v396 = vld [vmem:[#allocation2 + $0x150] sm:$0xff]
      %v397 = vld [vmem:[#allocation2 + $0x158] sm:$0xff]
      %v398 = vld [vmem:[#allocation2 + $0x160] sm:$0xff]
      %v399 = vld [vmem:[#allocation2 + $0x168] sm:$0xff]
      %v400 = vld [vmem:[#allocation2 + $0x170] sm:$0xff]
      %v401 = vld [vmem:[#allocation2 + $0x178] sm:$0xff]
      %v402 = vld [vmem:[%s274] sm:$0xf]
      %v403 = vld [vmem:[%s274 + $0x4] sm:$0xf]
      %v404 = vld [vmem:[%s274 + $0x8] sm:$0xf]
      %v405 = vld [vmem:[%s274 + $0xc] sm:$0xf]
      %v406 = vld [vmem:[%s274 + $0x10] sm:$0xf]
      %v407 = vld [vmem:[%s274 + $0x14] sm:$0xf]
      %v408 = vld [vmem:[%s274 + $0x18] sm:$0xf]
      %v409 = vld [vmem:[%s274 + $0x1c] sm:$0xf]
      %v410 = vld [vmem:[%s274 + $0x20] sm:$0xf]
      %v411 = vld [vmem:[%s274 + $0x24] sm:$0xf]
      %v412 = vld [vmem:[%s274 + $0x28] sm:$0xf]
      %v413 = vld [vmem:[%s274 + $0x2c] sm:$0xf]
      %v414 = vld [vmem:[%s274 + $0x30] sm:$0xf]
      %v415 = vld [vmem:[%s274 + $0x34] sm:$0xf]
      %v416 = vld [vmem:[%s274 + $0x38] sm:$0xf]
      %v417 = vld [vmem:[%s274 + $0x3c] sm:$0xf]
      %v418 = vld [vmem:[%s274 + $0x40] sm:$0xf]
      %v419 = vld [vmem:[%s274 + $0x44] sm:$0xf]
      %v420 = vld [vmem:[%s274 + $0x48] sm:$0xf]
      %v421 = vld [vmem:[%s274 + $0x4c] sm:$0xf]
      %v422 = vld [vmem:[%s274 + $0x50] sm:$0xf]
      %v423 = vld [vmem:[%s274 + $0x54] sm:$0xf]
      %v424 = vld [vmem:[%s274 + $0x58] sm:$0xf]
      %v425 = vld [vmem:[%s274 + $0x5c] sm:$0xf]
      %v426 = vld [vmem:[%s274 + $0x60] sm:$0xf]
      %v427 = vld [vmem:[%s274 + $0x64] sm:$0xf]
      %v428 = vld [vmem:[%s274 + $0x68] sm:$0xf]
      %v429 = vld [vmem:[%s274 + $0x6c] sm:$0xf]
      %v430 = vld [vmem:[%s274 + $0x70] sm:$0xf]
      %v431 = vld [vmem:[%s274 + $0x74] sm:$0xf]
      %v432 = vld [vmem:[%s274 + $0x78] sm:$0xf]
      %v433 = vld [vmem:[%s274 + $0x7c] sm:$0xf]
      %v434 = vld [vmem:[%s274 + $0x80] sm:$0xf]
      %v435 = vld [vmem:[%s274 + $0x84] sm:$0xf]
      %v436 = vld [vmem:[%s274 + $0x88] sm:$0xf]
      %v437 = vld [vmem:[%s274 + $0x8c] sm:$0xf]
      %v438 = vld [vmem:[%s274 + $0x90] sm:$0xf]
      %v439 = vld [vmem:[%s274 + $0x94] sm:$0xf]
      %v440 = vld [vmem:[%s274 + $0x98] sm:$0xf]
      %v441 = vld [vmem:[%s274 + $0x9c] sm:$0xf]
      %v442 = vld [vmem:[%s274 + $0xa0] sm:$0xf]
      %v443 = vld [vmem:[%s274 + $0xa4] sm:$0xf]
      %v444 = vld [vmem:[%s274 + $0xa8] sm:$0xf]
      %v445 = vld [vmem:[%s274 + $0xac] sm:$0xf]
      %v446 = vld [vmem:[%s274 + $0xb0] sm:$0xf]
      %v447 = vld [vmem:[%s274 + $0xb4] sm:$0xf]
      %v448 = vld [vmem:[%s274 + $0xb8] sm:$0xf]
      %v449 = vld [vmem:[%s274 + $0xbc] sm:$0xf]
      %v450 = vld [vmem:[%s283] sm:$0xf]
      %v451 = vld [vmem:[%s283 + $0x4] sm:$0xf]
      %v452 = vld [vmem:[%s283 + $0x8] sm:$0xf]
      %v453 = vld [vmem:[%s283 + $0xc] sm:$0x3]
      %v502 = vunpack.c.l.b16 %v402
      %v503 = vunpack.c.l.b16 %v403
      %v504 = vunpack.c.l.b16 %v404
      %v505 = vunpack.c.l.b16 %v405
      %v506 = vunpack.c.l.b16 %v406
      %v507 = vunpack.c.l.b16 %v407
      %v508 = vunpack.c.l.b16 %v408
      %v509 = vunpack.c.l.b16 %v409
      %v510 = vunpack.c.l.b16 %v410
      %v511 = vunpack.c.l.b16 %v411
      %v512 = vunpack.c.l.b16 %v412
      %v513 = vunpack.c.l.b16 %v413
      %v514 = vunpack.c.l.b16 %v414
      %v515 = vunpack.c.l.b16 %v415
      %v516 = vunpack.c.l.b16 %v416
      %v517 = vunpack.c.l.b16 %v417
      %v518 = vunpack.c.l.b16 %v418
      %v519 = vunpack.c.l.b16 %v419
      %v520 = vunpack.c.l.b16 %v420
      %v521 = vunpack.c.l.b16 %v421
      %v522 = vunpack.c.l.b16 %v422
      %v523 = vunpack.c.l.b16 %v423
      %v524 = vunpack.c.l.b16 %v424
      %v525 = vunpack.c.l.b16 %v425
      %v526 = vunpack.c.l.b16 %v426
      %v527 = vunpack.c.l.b16 %v427
      %v528 = vunpack.c.l.b16 %v428
      %v529 = vunpack.c.l.b16 %v429
      %v530 = vunpack.c.l.b16 %v430
      %v531 = vunpack.c.l.b16 %v431
      %v532 = vunpack.c.l.b16 %v432
      %v533 = vunpack.c.l.b16 %v433
      %v534 = vunpack.c.l.b16 %v434
      %v535 = vunpack.c.l.b16 %v435
      %v536 = vunpack.c.l.b16 %v436
      %v537 = vunpack.c.l.b16 %v437
      %v538 = vunpack.c.l.b16 %v438
      %v539 = vunpack.c.l.b16 %v439
      %v540 = vunpack.c.l.b16 %v440
      %v541 = vunpack.c.l.b16 %v441
      %v542 = vunpack.c.l.b16 %v442
      %v543 = vunpack.c.l.b16 %v443
      %v544 = vunpack.c.l.b16 %v444
      %v545 = vunpack.c.l.b16 %v445
      %v546 = vunpack.c.l.b16 %v446
      %v547 = vunpack.c.l.b16 %v447
      %v548 = vunpack.c.l.b16 %v448
      %v549 = vunpack.c.l.b16 %v449
      %v550 = vpack.c.b16 %v503, %v502
      %v551 = vpack.c.b16 %v505, %v504
      %v552 = vpack.c.b16 %v507, %v506
      %v553 = vpack.c.b16 %v509, %v508
      %v554 = vpack.c.b16 %v511, %v510
      %v555 = vpack.c.b16 %v513, %v512
      %v556 = vpack.c.b16 %v515, %v514
      %v557 = vpack.c.b16 %v517, %v516
      %v558 = vpack.c.b16 %v519, %v518
      %v559 = vpack.c.b16 %v521, %v520
      %v560 = vpack.c.b16 %v523, %v522
      %v561 = vpack.c.b16 %v525, %v524
      %v562 = vpack.c.b16 %v527, %v526
      %v563 = vpack.c.b16 %v529, %v528
      %v564 = vpack.c.b16 %v531, %v530
      %v565 = vpack.c.b16 %v533, %v532
      %v566 = vpack.c.b16 %v535, %v534
      %v567 = vpack.c.b16 %v537, %v536
      %v568 = vpack.c.b16 %v539, %v538
      %v569 = vpack.c.b16 %v541, %v540
      %v570 = vpack.c.b16 %v543, %v542
      %v571 = vpack.c.b16 %v545, %v544
      %v572 = vpack.c.b16 %v547, %v546
      %v573 = vpack.c.b16 %v549, %v548
      %v578 = vunpack.c.l.b16 %v450
      %v579 = vunpack.c.l.b16 %v451
      %v580 = vunpack.c.l.b16 %v452
      %v581 = vunpack.c.l.b16 %v453
      %v582 = vpack.c.b16 %v579, %v578
      %v583 = vpack.c.b16 %v581, %v580
      %vm585 = vcmask 220160
      %v587 = vsel %vm585, %v550, 0
      %v590 = vsel %vm585, %v551, 0
      %v593 = vsel %vm585, %v552, 0
      %v596 = vsel %vm585, %v553, 0
      %v599 = vsel %vm585, %v554, 0
      %v602 = vsel %vm585, %v555, 0
      %v605 = vsel %vm585, %v556, 0
      %v608 = vsel %vm585, %v557, 0
      %v611 = vsel %vm585, %v558, 0
      %v614 = vsel %vm585, %v559, 0
      %v617 = vsel %vm585, %v560, 0
      %v620 = vsel %vm585, %v561, 0
      %v623 = vsel %vm585, %v562, 0
      %v626 = vsel %vm585, %v563, 0
      %v629 = vsel %vm585, %v564, 0
      %v632 = vsel %vm585, %v565, 0
      %v635 = vsel %vm585, %v566, 0
      %v638 = vsel %vm585, %v567, 0
      %v641 = vsel %vm585, %v568, 0
      %v644 = vsel %vm585, %v569, 0
      %v647 = vsel %vm585, %v570, 0
      %v650 = vsel %vm585, %v571, 0
      %v653 = vsel %vm585, %v572, 0
      %v656 = vsel %vm585, %v573, 0
      %vm658 = vcmask 1044480
      %vm659 = vcmask 1045504
      %v660 = vsel %vm658, 4294967295, 65535
      %v661 = vsel %vm659, %v660, 0
      %v663 = vand.u32 %v583, %v661
      %665 = vmatprep.subr.bf16.mxu0 0
      %666 = vmatpush1.bf16.msra.mxu0 %v582
      %667 = vmatprep.subr.bf16.mxu0 0
      %668 = vmatpush1.bf16.msra.mxu0 %v663
      %669 = vmatprep.subr.bf16.mxu0 0
      %670 = vmatpush1.bf16.msra.mxu0 0
      %671 = vmatprep.subr.bf16.mxu0 0
      %672 = vmatpush1.bf16.msra.mxu0 0
      %673 = vmatprep.subr.bf16.mxu0 0
      %674 = vmatpush1.bf16.msra.mxu0 0
      %675 = vmatprep.subr.bf16.mxu0 0
      %676 = vmatpush1.bf16.msra.mxu0 0
      %677 = vmatprep.subr.bf16.mxu0 0
      %678 = vmatpush1.bf16.msra.mxu0 0
      %679 = vmatprep.subr.bf16.mxu0 0
      %680 = vmatpush1.bf16.msra.mxu0 0
      %681 = vmatprep.subr.bf16.mxu0 0
      %682 = vmatpush1.bf16.msra.mxu0 0
      %683 = vmatprep.subr.bf16.mxu0 0
      %684 = vmatpush1.bf16.msra.mxu0 0
      %685 = vmatprep.subr.bf16.mxu0 0
      %686 = vmatpush1.bf16.msra.mxu0 0
      %687 = vmatprep.subr.bf16.mxu0 0
      %688 = vmatpush1.bf16.msra.mxu0 0
      %689 = vmatprep.subr.bf16.mxu0 0
      %690 = vmatpush1.bf16.msra.mxu0 0
      %691 = vmatprep.subr.bf16.mxu0 0
      %692 = vmatpush1.bf16.msra.mxu0 0
      %693 = vmatprep.subr.bf16.mxu0 0
      %694 = vmatpush1.bf16.msra.mxu0 0
      %695 = vmatprep.subr.bf16.mxu0 0
      %696 = vmatpush1.bf16.msra.mxu0 0
      %697 = vmatprep.mubr.bf16.mxu0 0
      %698 = vmatmul.mubr.bf16.gmra.mrb[0].mxu0 %v587
      %v699 = vpop.f32.mrb[0].mxu0
      %v700 = vadd.f32 0.0, %v699
      %v701 = vpop.f32.mrb[0].mxu0
      %v702 = vpop.f32.mrb[0].mxu0
      %v703 = vadd.f32 0.0, %v702
      %v704 = vpop.f32.mrb[0].mxu0
      %705 = vmatprep.mubr.bf16.mxu0 0
      %706 = vmatmul.mubr.bf16.gmra.mrb[0].mxu0 %v590
      %v707 = vpop.f32.mrb[0].mxu0
      %v708 = vadd.f32 0.0, %v707
      %v709 = vpop.f32.mrb[0].mxu0
      %v710 = vpop.f32.mrb[0].mxu0
      %v711 = vadd.f32 0.0, %v710
      %v712 = vpop.f32.mrb[0].mxu0
      %713 = vmatprep.mubr.bf16.mxu0 0
      %714 = vmatmul.mubr.bf16.gmra.mrb[0].mxu0 %v593
      %v715 = vpop.f32.mrb[0].mxu0
      %v716 = vadd.f32 0.0, %v715
      %v717 = vpop.f32.mrb[0].mxu0
      %v718 = vpop.f32.mrb[0].mxu0
      %v719 = vadd.f32 0.0, %v718
      %v720 = vpop.f32.mrb[0].mxu0
      %721 = vmatprep.mubr.bf16.mxu0 0
      %722 = vmatmul.mubr.bf16.gmra.mrb[0].mxu0 %v596
      %v723 = vpop.f32.mrb[0].mxu0
      %v724 = vadd.f32 0.0, %v723
      %v725 = vpop.f32.mrb[0].mxu0
      %v726 = vpop.f32.mrb[0].mxu0
      %v727 = vadd.f32 0.0, %v726
      %v728 = vpop.f32.mrb[0].mxu0
      %729 = vmatprep.mubr.bf16.mxu0 0
      %730 = vmatmul.mubr.bf16.gmra.mrb[0].mxu0 %v599
      %v731 = vpop.f32.mrb[0].mxu0
      %v732 = vadd.f32 0.0, %v731
      %v733 = vpop.f32.mrb[0].mxu0
      %v734 = vpop.f32.mrb[0].mxu0
      %v735 = vadd.f32 0.0, %v734
      %v736 = vpop.f32.mrb[0].mxu0
      %737 = vmatprep.mubr.bf16.mxu0 0
      %738 = vmatmul.mubr.bf16.gmra.mrb[0].mxu0 %v602
      %v739 = vpop.f32.mrb[0].mxu0
      %v740 = vadd.f32 0.0, %v739
      %v741 = vpop.f32.mrb[0].mxu0
      %v742 = vpop.f32.mrb[0].mxu0
      %v743 = vadd.f32 0.0, %v742
      %v744 = vpop.f32.mrb[0].mxu0
      %745 = vmatprep.mubr.bf16.mxu0 0
      %746 = vmatmul.mubr.bf16.gmra.mrb[0].mxu0 %v605
      %v747 = vpop.f32.mrb[0].mxu0
      %v748 = vadd.f32 0.0, %v747
      %v749 = vpop.f32.mrb[0].mxu0
      %v750 = vpop.f32.mrb[0].mxu0
      %v751 = vadd.f32 0.0, %v750
      %v752 = vpop.f32.mrb[0].mxu0
      %753 = vmatprep.mubr.bf16.mxu0 0
      %754 = vmatmul.mubr.bf16.gmra.mrb[0].mxu0 %v608
      %v755 = vpop.f32.mrb[0].mxu0
      %v756 = vadd.f32 0.0, %v755
      %v757 = vpop.f32.mrb[0].mxu0
      %v758 = vpop.f32.mrb[0].mxu0
      %v759 = vadd.f32 0.0, %v758
      %v760 = vpop.f32.mrb[0].mxu0
      %761 = vmatprep.mubr.bf16.mxu0 0
      %762 = vmatmul.mubr.bf16.gmra.mrb[0].mxu0 %v611
      %v763 = vpop.f32.mrb[0].mxu0
      %v764 = vadd.f32 0.0, %v763
      %v765 = vpop.f32.mrb[0].mxu0
      %v766 = vpop.f32.mrb[0].mxu0
      %v767 = vadd.f32 0.0, %v766
      %v768 = vpop.f32.mrb[0].mxu0
      %769 = vmatprep.mubr.bf16.mxu0 0
      %770 = vmatmul.mubr.bf16.gmra.mrb[0].mxu0 %v614
      %v771 = vpop.f32.mrb[0].mxu0
      %v772 = vadd.f32 0.0, %v771
      %v773 = vpop.f32.mrb[0].mxu0
      %v774 = vpop.f32.mrb[0].mxu0
      %v775 = vadd.f32 0.0, %v774
      %v776 = vpop.f32.mrb[0].mxu0
      %777 = vmatprep.mubr.bf16.mxu0 0
      %778 = vmatmul.mubr.bf16.gmra.mrb[0].mxu0 %v617
      %v779 = vpop.f32.mrb[0].mxu0
      %v780 = vadd.f32 0.0, %v779
      %v781 = vpop.f32.mrb[0].mxu0
      %v782 = vpop.f32.mrb[0].mxu0
      %v783 = vadd.f32 0.0, %v782
      %v784 = vpop.f32.mrb[0].mxu0
      %785 = vmatprep.mubr.bf16.mxu0 0
      %786 = vmatmul.mubr.bf16.gmra.mrb[0].mxu0 %v620
      %v787 = vpop.f32.mrb[0].mxu0
      %v788 = vadd.f32 0.0, %v787
      %v789 = vpop.f32.mrb[0].mxu0
      %v790 = vpop.f32.mrb[0].mxu0
      %v791 = vadd.f32 0.0, %v790
      %v792 = vpop.f32.mrb[0].mxu0
      %793 = vmatprep.mubr.bf16.mxu0 0
      %794 = vmatmul.mubr.bf16.gmra.mrb[0].mxu0 %v623
      %v795 = vpop.f32.mrb[0].mxu0
      %v796 = vadd.f32 0.0, %v795
      %v797 = vpop.f32.mrb[0].mxu0
      %v798 = vpop.f32.mrb[0].mxu0
      %v799 = vadd.f32 0.0, %v798
      %v800 = vpop.f32.mrb[0].mxu0
      %801 = vmatprep.mubr.bf16.mxu0 0
      %802 = vmatmul.mubr.bf16.gmra.mrb[0].mxu0 %v626
      %v803 = vpop.f32.mrb[0].mxu0
      %v804 = vadd.f32 0.0, %v803
      %v805 = vpop.f32.mrb[0].mxu0
      %v806 = vpop.f32.mrb[0].mxu0
      %v807 = vadd.f32 0.0, %v806
      %v808 = vpop.f32.mrb[0].mxu0
      %809 = vmatprep.mubr.bf16.mxu0 0
      %810 = vmatmul.mubr.bf16.gmra.mrb[0].mxu0 %v629
      %v811 = vpop.f32.mrb[0].mxu0
      %v812 = vadd.f32 0.0, %v811
      %v813 = vpop.f32.mrb[0].mxu0
      %v814 = vpop.f32.mrb[0].mxu0
      %v815 = vadd.f32 0.0, %v814
      %v816 = vpop.f32.mrb[0].mxu0
      %817 = vmatprep.mubr.bf16.mxu0 0
      %818 = vmatmul.mubr.bf16.gmra.mrb[0].mxu0 %v632
      %v819 = vpop.f32.mrb[0].mxu0
      %v820 = vadd.f32 0.0, %v819
      %v821 = vpop.f32.mrb[0].mxu0
      %v822 = vpop.f32.mrb[0].mxu0
      %v823 = vadd.f32 0.0, %v822
      %v824 = vpop.f32.mrb[0].mxu0
      %825 = vmatprep.mubr.bf16.mxu0 0
      %826 = vmatmul.mubr.bf16.gmra.mrb[0].mxu0 %v635
      %v827 = vpop.f32.mrb[0].mxu0
      %v828 = vadd.f32 0.0, %v827
      %v829 = vpop.f32.mrb[0].mxu0
      %v830 = vpop.f32.mrb[0].mxu0
      %v831 = vadd.f32 0.0, %v830
      %v832 = vpop.f32.mrb[0].mxu0
      %833 = vmatprep.mubr.bf16.mxu0 0
      %834 = vmatmul.mubr.bf16.gmra.mrb[0].mxu0 %v638
      %v835 = vpop.f32.mrb[0].mxu0
      %v836 = vadd.f32 0.0, %v835
      %v837 = vpop.f32.mrb[0].mxu0
      %v838 = vpop.f32.mrb[0].mxu0
      %v839 = vadd.f32 0.0, %v838
      %v840 = vpop.f32.mrb[0].mxu0
      %841 = vmatprep.mubr.bf16.mxu0 0
      %842 = vmatmul.mubr.bf16.gmra.mrb[0].mxu0 %v641
      %v843 = vpop.f32.mrb[0].mxu0
      %v844 = vadd.f32 0.0, %v843
      %v845 = vpop.f32.mrb[0].mxu0
      %v846 = vpop.f32.mrb[0].mxu0
      %v847 = vadd.f32 0.0, %v846
      %v848 = vpop.f32.mrb[0].mxu0
      %849 = vmatprep.mubr.bf16.mxu0 0
      %850 = vmatmul.mubr.bf16.gmra.mrb[0].mxu0 %v644
      %v851 = vpop.f32.mrb[0].mxu0
      %v852 = vadd.f32 0.0, %v851
      %v853 = vpop.f32.mrb[0].mxu0
      %v854 = vpop.f32.mrb[0].mxu0
      %v855 = vadd.f32 0.0, %v854
      %v856 = vpop.f32.mrb[0].mxu0
      %857 = vmatprep.mubr.bf16.mxu0 0
      %858 = vmatmul.mubr.bf16.gmra.mrb[0].mxu0 %v647
      %v859 = vpop.f32.mrb[0].mxu0
      %v860 = vadd.f32 0.0, %v859
      %v861 = vpop.f32.mrb[0].mxu0
      %v862 = vpop.f32.mrb[0].mxu0
      %v863 = vadd.f32 0.0, %v862
      %v864 = vpop.f32.mrb[0].mxu0
      %865 = vmatprep.mubr.bf16.mxu0 0
      %866 = vmatmul.mubr.bf16.gmra.mrb[0].mxu0 %v650
      %v867 = vpop.f32.mrb[0].mxu0
      %v868 = vadd.f32 0.0, %v867
      %v869 = vpop.f32.mrb[0].mxu0
      %v870 = vpop.f32.mrb[0].mxu0
      %v871 = vadd.f32 0.0, %v870
      %v872 = vpop.f32.mrb[0].mxu0
      %873 = vmatprep.mubr.bf16.mxu0 0
      %874 = vmatmul.mubr.bf16.gmra.mrb[0].mxu0 %v653
      %v875 = vpop.f32.mrb[0].mxu0
      %v876 = vadd.f32 0.0, %v875
      %v877 = vpop.f32.mrb[0].mxu0
      %v878 = vpop.f32.mrb[0].mxu0
      %v879 = vadd.f32 0.0, %v878
      %v880 = vpop.f32.mrb[0].mxu0
      %881 = vmatprep.mubr.bf16.mxu0 0
      %882 = vmatmul.mubr.bf16.gmra.mrb[0].mxu0 %v656
      %v883 = vpop.f32.mrb[0].mxu0
      %v884 = vadd.f32 0.0, %v883
      %v885 = vpop.f32.mrb[0].mxu0
      %v886 = vpop.f32.mrb[0].mxu0
      %v887 = vadd.f32 0.0, %v886
      %v888 = vpop.f32.mrb[0].mxu0
      %889 = vdwg.mxu0
      %v890 = vadd.f32 %v354, %v700
      %v891 = vadd.f32 %v355, %v703
      %v892 = vadd.f32 %v356, %v708
      %v893 = vadd.f32 %v357, %v711
      %v894 = vadd.f32 %v358, %v716
      %v895 = vadd.f32 %v359, %v719
      %v896 = vadd.f32 %v360, %v724
      %v897 = vadd.f32 %v361, %v727
      %v898 = vadd.f32 %v362, %v732
      %v899 = vadd.f32 %v363, %v735
      %v900 = vadd.f32 %v364, %v740
      %v901 = vadd.f32 %v365, %v743
      %v902 = vadd.f32 %v366, %v748
      %v903 = vadd.f32 %v367, %v751
      %v904 = vadd.f32 %v368, %v756
      %v905 = vadd.f32 %v369, %v759
      %v906 = vadd.f32 %v370, %v764
      %v907 = vadd.f32 %v371, %v767
      %v908 = vadd.f32 %v372, %v772
      %v909 = vadd.f32 %v373, %v775
      %v910 = vadd.f32 %v374, %v780
      %v911 = vadd.f32 %v375, %v783
      %v912 = vadd.f32 %v376, %v788
      %v913 = vadd.f32 %v377, %v791
      %v914 = vadd.f32 %v378, %v796
      %v915 = vadd.f32 %v379, %v799
      %v916 = vadd.f32 %v380, %v804
      %v917 = vadd.f32 %v381, %v807
      %v918 = vadd.f32 %v382, %v812
      %v919 = vadd.f32 %v383, %v815
      %v920 = vadd.f32 %v384, %v820
      %v921 = vadd.f32 %v385, %v823
      %v922 = vadd.f32 %v386, %v828
      %v923 = vadd.f32 %v387, %v831
      %v924 = vadd.f32 %v388, %v836
      %v925 = vadd.f32 %v389, %v839
      %v926 = vadd.f32 %v390, %v844
      %v927 = vadd.f32 %v391, %v847
      %v928 = vadd.f32 %v392, %v852
      %v929 = vadd.f32 %v393, %v855
      %v930 = vadd.f32 %v394, %v860
      %v931 = vadd.f32 %v395, %v863
      %v932 = vadd.f32 %v396, %v868
      %v933 = vadd.f32 %v397, %v871
      %v934 = vadd.f32 %v398, %v876
      %v935 = vadd.f32 %v399, %v879
      %v936 = vadd.f32 %v400, %v884
      %v937 = vadd.f32 %v401, %v887
      %vm938 = vcmask 130048
      %939 = vst.msk [vmem:[#allocation2] sm:$0xff] %vm938, %v890
      %940 = vst.msk [vmem:[#allocation2 + $0x8] sm:$0xff] %vm938, %v891
      %941 = vst.msk [vmem:[#allocation2 + $0x10] sm:$0xff] %vm938, %v892
      %942 = vst.msk [vmem:[#allocation2 + $0x18] sm:$0xff] %vm938, %v893
      %943 = vst.msk [vmem:[#allocation2 + $0x20] sm:$0xff] %vm938, %v894
      %944 = vst.msk [vmem:[#allocation2 + $0x28] sm:$0xff] %vm938, %v895
      %945 = vst.msk [vmem:[#allocation2 + $0x30] sm:$0xff] %vm938, %v896
      %946 = vst.msk [vmem:[#allocation2 + $0x38] sm:$0xff] %vm938, %v897
      %947 = vst.msk [vmem:[#allocation2 + $0x40] sm:$0xff] %vm938, %v898
      %948 = vst.msk [vmem:[#allocation2 + $0x48] sm:$0xff] %vm938, %v899
      %949 = vst.msk [vmem:[#allocation2 + $0x50] sm:$0xff] %vm938, %v900
      %950 = vst.msk [vmem:[#allocation2 + $0x58] sm:$0xff] %vm938, %v901
      %951 = vst.msk [vmem:[#allocation2 + $0x60] sm:$0xff] %vm938, %v902
      %952 = vst.msk [vmem:[#allocation2 + $0x68] sm:$0xff] %vm938, %v903
      %953 = vst.msk [vmem:[#allocation2 + $0x70] sm:$0xff] %vm938, %v904
      %954 = vst.msk [vmem:[#allocation2 + $0x78] sm:$0xff] %vm938, %v905
      %955 = vst.msk [vmem:[#allocation2 + $0x80] sm:$0xff] %vm938, %v906
      %956 = vst.msk [vmem:[#allocation2 + $0x88] sm:$0xff] %vm938, %v907
      %957 = vst.msk [vmem:[#allocation2 + $0x90] sm:$0xff] %vm938, %v908
      %958 = vst.msk [vmem:[#allocation2 + $0x98] sm:$0xff] %vm938, %v909
      %959 = vst.msk [vmem:[#allocation2 + $0xa0] sm:$0xff] %vm938, %v910
      %960 = vst.msk [vmem:[#allocation2 + $0xa8] sm:$0xff] %vm938, %v911
      %961 = vst.msk [vmem:[#allocation2 + $0xb0] sm:$0xff] %vm938, %v912
      %962 = vst.msk [vmem:[#allocation2 + $0xb8] sm:$0xff] %vm938, %v913
      %963 = vst.msk [vmem:[#allocation2 + $0xc0] sm:$0xff] %vm938, %v914
      %964 = vst.msk [vmem:[#allocation2 + $0xc8] sm:$0xff] %vm938, %v915
      %965 = vst.msk [vmem:[#allocation2 + $0xd0] sm:$0xff] %vm938, %v916
      %966 = vst.msk [vmem:[#allocation2 + $0xd8] sm:$0xff] %vm938, %v917
      %967 = vst.msk [vmem:[#allocation2 + $0xe0] sm:$0xff] %vm938, %v918
      %968 = vst.msk [vmem:[#allocation2 + $0xe8] sm:$0xff] %vm938, %v919
      %969 = vst.msk [vmem:[#allocation2 + $0xf0] sm:$0xff] %vm938, %v920
      %970 = vst.msk [vmem:[#allocation2 + $0xf8] sm:$0xff] %vm938, %v921
      %971 = vst.msk [vmem:[#allocation2 + $0x100] sm:$0xff] %vm938, %v922
      %972 = vst.msk [vmem:[#allocation2 + $0x108] sm:$0xff] %vm938, %v923
      %973 = vst.msk [vmem:[#allocation2 + $0x110] sm:$0xff] %vm938, %v924
      %974 = vst.msk [vmem:[#allocation2 + $0x118] sm:$0xff] %vm938, %v925
      %975 = vst.msk [vmem:[#allocation2 + $0x120] sm:$0xff] %vm938, %v926
      %976 = vst.msk [vmem:[#allocation2 + $0x128] sm:$0xff] %vm938, %v927
      %977 = vst.msk [vmem:[#allocation2 + $0x130] sm:$0xff] %vm938, %v928
      %978 = vst.msk [vmem:[#allocation2 + $0x138] sm:$0xff] %vm938, %v929
      %979 = vst.msk [vmem:[#allocation2 + $0x140] sm:$0xff] %vm938, %v930
      %980 = vst.msk [vmem:[#allocation2 + $0x148] sm:$0xff] %vm938, %v931
      %981 = vst.msk [vmem:[#allocation2 + $0x150] sm:$0xff] %vm938, %v932
      %982 = vst.msk [vmem:[#allocation2 + $0x158] sm:$0xff] %vm938, %v933
      %983 = vst.msk [vmem:[#allocation2 + $0x160] sm:$0xff] %vm938, %v934
      %984 = vst.msk [vmem:[#allocation2 + $0x168] sm:$0xff] %vm938, %v935
      %985 = vst.msk [vmem:[#allocation2 + $0x170] sm:$0xff] %vm938, %v936
      %986 = vst.msk [vmem:[#allocation2 + $0x178] sm:$0xff] %vm938, %v937
      // Predicated region
      $region41: #{pspnet_forward.6} parent=35 // pred_check
        %p987 = pneg %p301
      $region42: #{pspnet_forward.6} parent=35 // pred_check_branch
        %989 = sbr.rel (%p987) target = $region44
      $region43: #{pspnet_forward.6} parent=35 // pred_region
        %v990 = vld [vmem:[#allocation2] sm:$0xff]
        %v991 = vld [vmem:[#allocation2 + $0x8] sm:$0xff]
        %v992 = vld [vmem:[#allocation2 + $0x10] sm:$0xff]
        %v993 = vld [vmem:[#allocation2 + $0x18] sm:$0xff]
        %v994 = vld [vmem:[#allocation2 + $0x20] sm:$0xff]
        %v995 = vld [vmem:[#allocation2 + $0x28] sm:$0xff]
        %v996 = vld [vmem:[#allocation2 + $0x30] sm:$0xff]
        %v997 = vld [vmem:[#allocation2 + $0x38] sm:$0xff]
        %v998 = vld [vmem:[#allocation2 + $0x40] sm:$0xff]
        %v999 = vld [vmem:[#allocation2 + $0x48] sm:$0xff]
        %v1000 = vld [vmem:[#allocation2 + $0x50] sm:$0xff]
        %v1001 = vld [vmem:[#allocation2 + $0x58] sm:$0xff]
        %v1002 = vld [vmem:[#allocation2 + $0x60] sm:$0xff]
        %v1003 = vld [vmem:[#allocation2 + $0x68] sm:$0xff]
        %v1004 = vld [vmem:[#allocation2 + $0x70] sm:$0xff]
        %v1005 = vld [vmem:[#allocation2 + $0x78] sm:$0xff]
        %v1006 = vld [vmem:[#allocation2 + $0x80] sm:$0xff]
        %v1007 = vld [vmem:[#allocation2 + $0x88] sm:$0xff]
        %v1008 = vld [vmem:[#allocation2 + $0x90] sm:$0xff]
        %v1009 = vld [vmem:[#allocation2 + $0x98] sm:$0xff]
        %v1010 = vld [vmem:[#allocation2 + $0xa0] sm:$0xff]
        %v1011 = vld [vmem:[#allocation2 + $0xa8] sm:$0xff]
        %v1012 = vld [vmem:[#allocation2 + $0xb0] sm:$0xff]
        %v1013 = vld [vmem:[#allocation2 + $0xb8] sm:$0xff]
        %v1014 = vld [vmem:[#allocation2 + $0xc0] sm:$0xff]
        %v1015 = vld [vmem:[#allocation2 + $0xc8] sm:$0xff]
        %v1016 = vld [vmem:[#allocation2 + $0xd0] sm:$0xff]
        %v1017 = vld [vmem:[#allocation2 + $0xd8] sm:$0xff]
        %v1018 = vld [vmem:[#allocation2 + $0xe0] sm:$0xff]
        %v1019 = vld [vmem:[#allocation2 + $0xe8] sm:$0xff]
        %v1020 = vld [vmem:[#allocation2 + $0xf0] sm:$0xff]
        %v1021 = vld [vmem:[#allocation2 + $0xf8] sm:$0xff]
        %v1022 = vld [vmem:[#allocation2 + $0x100] sm:$0xff]
        %v1023 = vld [vmem:[#allocation2 + $0x108] sm:$0xff]
        %v1024 = vld [vmem:[#allocation2 + $0x110] sm:$0xff]
        %v1025 = vld [vmem:[#allocation2 + $0x118] sm:$0xff]
        %v1026 = vld [vmem:[#allocation2 + $0x120] sm:$0xff]
        %v1027 = vld [vmem:[#allocation2 + $0x128] sm:$0xff]
        %v1028 = vld [vmem:[#allocation2 + $0x130] sm:$0xff]
        %v1029 = vld [vmem:[#allocation2 + $0x138] sm:$0xff]
        %v1030 = vld [vmem:[#allocation2 + $0x140] sm:$0xff]
        %v1031 = vld [vmem:[#allocation2 + $0x148] sm:$0xff]
        %v1032 = vld [vmem:[#allocation2 + $0x150] sm:$0xff]
        %v1033 = vld [vmem:[#allocation2 + $0x158] sm:$0xff]
        %v1034 = vld [vmem:[#allocation2 + $0x160] sm:$0xff]
        %v1035 = vld [vmem:[#allocation2 + $0x168] sm:$0xff]
        %v1036 = vld [vmem:[#allocation2 + $0x170] sm:$0xff]
        %v1037 = vld [vmem:[#allocation2 + $0x178] sm:$0xff]
        %v1038 = vld [vmem:[%s287] sm:$0x1]
        %v1040 = vlaneseq
        %v1041 = vshrl.u32 %v1040, 7
        %v1042 = vsub.s32 0, %v1041
        %v1043 = vrot.slane %v1038, %v1042
        %v1045 = vmul.f32 %v990, %v1043
        %v1046 = vmul.f32 %v991, %v1043
        %v1047 = vmul.f32 %v992, %v1043
        %v1048 = vmul.f32 %v993, %v1043
        %v1049 = vmul.f32 %v994, %v1043
        %v1050 = vmul.f32 %v995, %v1043
        %v1051 = vmul.f32 %v996, %v1043
        %v1052 = vmul.f32 %v997, %v1043
        %v1053 = vmul.f32 %v998, %v1043
        %v1054 = vmul.f32 %v999, %v1043
        %v1055 = vmul.f32 %v1000, %v1043
        %v1056 = vmul.f32 %v1001, %v1043
        %v1057 = vmul.f32 %v1002, %v1043
        %v1058 = vmul.f32 %v1003, %v1043
        %v1059 = vmul.f32 %v1004, %v1043
        %v1060 = vmul.f32 %v1005, %v1043
        %v1061 = vmul.f32 %v1006, %v1043
        %v1062 = vmul.f32 %v1007, %v1043
        %v1063 = vmul.f32 %v1008, %v1043
        %v1064 = vmul.f32 %v1009, %v1043
        %v1065 = vmul.f32 %v1010, %v1043
        %v1066 = vmul.f32 %v1011, %v1043
        %v1067 = vmul.f32 %v1012, %v1043
        %v1068 = vmul.f32 %v1013, %v1043
        %v1069 = vmul.f32 %v1014, %v1043
        %v1070 = vmul.f32 %v1015, %v1043
        %v1071 = vmul.f32 %v1016, %v1043
        %v1072 = vmul.f32 %v1017, %v1043
        %v1073 = vmul.f32 %v1018, %v1043
        %v1074 = vmul.f32 %v1019, %v1043
        %v1075 = vmul.f32 %v1020, %v1043
        %v1076 = vmul.f32 %v1021, %v1043
        %v1077 = vmul.f32 %v1022, %v1043
        %v1078 = vmul.f32 %v1023, %v1043
        %v1079 = vmul.f32 %v1024, %v1043
        %v1080 = vmul.f32 %v1025, %v1043
        %v1081 = vmul.f32 %v1026, %v1043
        %v1082 = vmul.f32 %v1027, %v1043
        %v1083 = vmul.f32 %v1028, %v1043
        %v1084 = vmul.f32 %v1029, %v1043
        %v1085 = vmul.f32 %v1030, %v1043
        %v1086 = vmul.f32 %v1031, %v1043
        %v1087 = vmul.f32 %v1032, %v1043
        %v1088 = vmul.f32 %v1033, %v1043
        %v1089 = vmul.f32 %v1034, %v1043
        %v1090 = vmul.f32 %v1035, %v1043
        %v1091 = vmul.f32 %v1036, %v1043
        %v1092 = vmul.f32 %v1037, %v1043
        %v1093 = vld [vmem:[%s290] sm:$0x1]
        %v1095 = vlaneseq
        %v1096 = vshrl.u32 %v1095, 7
        %v1097 = vsub.s32 0, %v1096
        %v1098 = vrot.slane %v1093, %v1097
        %v1100 = vadd.f32 %v1045, %v1098
        %v1101 = vadd.f32 %v1046, %v1098
        %v1102 = vadd.f32 %v1047, %v1098
        %v1103 = vadd.f32 %v1048, %v1098
        %v1104 = vadd.f32 %v1049, %v1098
        %v1105 = vadd.f32 %v1050, %v1098
        %v1106 = vadd.f32 %v1051, %v1098
        %v1107 = vadd.f32 %v1052, %v1098
        %v1108 = vadd.f32 %v1053, %v1098
        %v1109 = vadd.f32 %v1054, %v1098
        %v1110 = vadd.f32 %v1055, %v1098
        %v1111 = vadd.f32 %v1056, %v1098
        %v1112 = vadd.f32 %v1057, %v1098
        %v1113 = vadd.f32 %v1058, %v1098
        %v1114 = vadd.f32 %v1059, %v1098
        %v1115 = vadd.f32 %v1060, %v1098
        %v1116 = vadd.f32 %v1061, %v1098
        %v1117 = vadd.f32 %v1062, %v1098
        %v1118 = vadd.f32 %v1063, %v1098
        %v1119 = vadd.f32 %v1064, %v1098
        %v1120 = vadd.f32 %v1065, %v1098
        %v1121 = vadd.f32 %v1066, %v1098
        %v1122 = vadd.f32 %v1067, %v1098
        %v1123 = vadd.f32 %v1068, %v1098
        %v1124 = vadd.f32 %v1069, %v1098
        %v1125 = vadd.f32 %v1070, %v1098
        %v1126 = vadd.f32 %v1071, %v1098
        %v1127 = vadd.f32 %v1072, %v1098
        %v1128 = vadd.f32 %v1073, %v1098
        %v1129 = vadd.f32 %v1074, %v1098
        %v1130 = vadd.f32 %v1075, %v1098
        %v1131 = vadd.f32 %v1076, %v1098
        %v1132 = vadd.f32 %v1077, %v1098
        %v1133 = vadd.f32 %v1078, %v1098
        %v1134 = vadd.f32 %v1079, %v1098
        %v1135 = vadd.f32 %v1080, %v1098
        %v1136 = vadd.f32 %v1081, %v1098
        %v1137 = vadd.f32 %v1082, %v1098
        %v1138 = vadd.f32 %v1083, %v1098
        %v1139 = vadd.f32 %v1084, %v1098
        %v1140 = vadd.f32 %v1085, %v1098
        %v1141 = vadd.f32 %v1086, %v1098
        %v1142 = vadd.f32 %v1087, %v1098
        %v1143 = vadd.f32 %v1088, %v1098
        %v1144 = vadd.f32 %v1089, %v1098
        %v1145 = vadd.f32 %v1090, %v1098
        %v1146 = vadd.f32 %v1091, %v1098
        %v1147 = vadd.f32 %v1092, %v1098
        %v1148 = vmax.f32 %v1100, 0.0
        %v1149 = vmax.f32 %v1101, 0.0
        %v1150 = vmax.f32 %v1102, 0.0
        %v1151 = vmax.f32 %v1103, 0.0
        %v1152 = vmax.f32 %v1104, 0.0
        %v1153 = vmax.f32 %v1105, 0.0
        %v1154 = vmax.f32 %v1106, 0.0
        %v1155 = vmax.f32 %v1107, 0.0
        %v1156 = vmax.f32 %v1108, 0.0
        %v1157 = vmax.f32 %v1109, 0.0
        %v1158 = vmax.f32 %v1110, 0.0
        %v1159 = vmax.f32 %v1111, 0.0
        %v1160 = vmax.f32 %v1112, 0.0
        %v1161 = vmax.f32 %v1113, 0.0
        %v1162 = vmax.f32 %v1114, 0.0
        %v1163 = vmax.f32 %v1115, 0.0
        %v1164 = vmax.f32 %v1116, 0.0
        %v1165 = vmax.f32 %v1117, 0.0
        %v1166 = vmax.f32 %v1118, 0.0
        %v1167 = vmax.f32 %v1119, 0.0
        %v1168 = vmax.f32 %v1120, 0.0
        %v1169 = vmax.f32 %v1121, 0.0
        %v1170 = vmax.f32 %v1122, 0.0
        %v1171 = vmax.f32 %v1123, 0.0
        %v1172 = vmax.f32 %v1124, 0.0
        %v1173 = vmax.f32 %v1125, 0.0
        %v1174 = vmax.f32 %v1126, 0.0
        %v1175 = vmax.f32 %v1127, 0.0
        %v1176 = vmax.f32 %v1128, 0.0
        %v1177 = vmax.f32 %v1129, 0.0
        %v1178 = vmax.f32 %v1130, 0.0
        %v1179 = vmax.f32 %v1131, 0.0
        %v1180 = vmax.f32 %v1132, 0.0
        %v1181 = vmax.f32 %v1133, 0.0
        %v1182 = vmax.f32 %v1134, 0.0
        %v1183 = vmax.f32 %v1135, 0.0
        %v1184 = vmax.f32 %v1136, 0.0
        %v1185 = vmax.f32 %v1137, 0.0
        %v1186 = vmax.f32 %v1138, 0.0
        %v1187 = vmax.f32 %v1139, 0.0
        %v1188 = vmax.f32 %v1140, 0.0
        %v1189 = vmax.f32 %v1141, 0.0
        %v1190 = vmax.f32 %v1142, 0.0
        %v1191 = vmax.f32 %v1143, 0.0
        %v1192 = vmax.f32 %v1144, 0.0
        %v1193 = vmax.f32 %v1145, 0.0
        %v1194 = vmax.f32 %v1146, 0.0
        %v1195 = vmax.f32 %v1147, 0.0
        %v1196 = vpack.c.bf16 %v1149, %v1148
        %v1197 = vpack.c.bf16 %v1151, %v1150
        %v1198 = vpack.c.bf16 %v1153, %v1152
        %v1199 = vpack.c.bf16 %v1155, %v1154
        %v1200 = vpack.c.bf16 %v1157, %v1156
        %v1201 = vpack.c.bf16 %v1159, %v1158
        %v1202 = vpack.c.bf16 %v1161, %v1160
        %v1203 = vpack.c.bf16 %v1163, %v1162
        %v1204 = vpack.c.bf16 %v1165, %v1164
        %v1205 = vpack.c.bf16 %v1167, %v1166
        %v1206 = vpack.c.bf16 %v1169, %v1168
        %v1207 = vpack.c.bf16 %v1171, %v1170
        %v1208 = vpack.c.bf16 %v1173, %v1172
        %v1209 = vpack.c.bf16 %v1175, %v1174
        %v1210 = vpack.c.bf16 %v1177, %v1176
        %v1211 = vpack.c.bf16 %v1179, %v1178
        %v1212 = vpack.c.bf16 %v1181, %v1180
        %v1213 = vpack.c.bf16 %v1183, %v1182
        %v1214 = vpack.c.bf16 %v1185, %v1184
        %v1215 = vpack.c.bf16 %v1187, %v1186
        %v1216 = vpack.c.bf16 %v1189, %v1188
        %v1217 = vpack.c.bf16 %v1191, %v1190
        %v1218 = vpack.c.bf16 %v1193, %v1192
        %v1219 = vpack.c.bf16 %v1195, %v1194
        %v1244 = vunpack.c.l.b16 %v1196
        %v1245 = vunpack.c.h.b16 %v1196
        %v1246 = vunpack.c.l.b16 %v1197
        %v1247 = vunpack.c.h.b16 %v1197
        %v1248 = vunpack.c.l.b16 %v1198
        %v1249 = vunpack.c.h.b16 %v1198
        %v1250 = vunpack.c.l.b16 %v1199
        %v1251 = vunpack.c.h.b16 %v1199
        %v1252 = vunpack.c.l.b16 %v1200
        %v1253 = vunpack.c.h.b16 %v1200
        %v1254 = vunpack.c.l.b16 %v1201
        %v1255 = vunpack.c.h.b16 %v1201
        %v1256 = vunpack.c.l.b16 %v1202
        %v1257 = vunpack.c.h.b16 %v1202
        %v1258 = vunpack.c.l.b16 %v1203
        %v1259 = vunpack.c.h.b16 %v1203
        %v1260 = vunpack.c.l.b16 %v1204
        %v1261 = vunpack.c.h.b16 %v1204
        %v1262 = vunpack.c.l.b16 %v1205
        %v1263 = vunpack.c.h.b16 %v1205
        %v1264 = vunpack.c.l.b16 %v1206
        %v1265 = vunpack.c.h.b16 %v1206
        %v1266 = vunpack.c.l.b16 %v1207
        %v1267 = vunpack.c.h.b16 %v1207
        %v1268 = vunpack.c.l.b16 %v1208
        %v1269 = vunpack.c.h.b16 %v1208
        %v1270 = vunpack.c.l.b16 %v1209
        %v1271 = vunpack.c.h.b16 %v1209
        %v1272 = vunpack.c.l.b16 %v1210
        %v1273 = vunpack.c.h.b16 %v1210
        %v1274 = vunpack.c.l.b16 %v1211
        %v1275 = vunpack.c.h.b16 %v1211
        %v1276 = vunpack.c.l.b16 %v1212
        %v1277 = vunpack.c.h.b16 %v1212
        %v1278 = vunpack.c.l.b16 %v1213
        %v1279 = vunpack.c.h.b16 %v1213
        %v1280 = vunpack.c.l.b16 %v1214
        %v1281 = vunpack.c.h.b16 %v1214
        %v1282 = vunpack.c.l.b16 %v1215
        %v1283 = vunpack.c.h.b16 %v1215
        %v1284 = vunpack.c.l.b16 %v1216
        %v1285 = vunpack.c.h.b16 %v1216
        %v1286 = vunpack.c.l.b16 %v1217
        %v1287 = vunpack.c.h.b16 %v1217
        %v1288 = vunpack.c.l.b16 %v1218
        %v1289 = vunpack.c.h.b16 %v1218
        %v1290 = vunpack.c.l.b16 %v1219
        %v1291 = vunpack.c.h.b16 %v1219
        %v1292 = vpack.c.b16 %v1244, %v1244
        %v1293 = vpack.c.b16 %v1245, %v1245
        %v1294 = vpack.c.b16 %v1246, %v1246
        %v1295 = vpack.c.b16 %v1247, %v1247
        %v1296 = vpack.c.b16 %v1248, %v1248
        %v1297 = vpack.c.b16 %v1249, %v1249
        %v1298 = vpack.c.b16 %v1250, %v1250
        %v1299 = vpack.c.b16 %v1251, %v1251
        %v1300 = vpack.c.b16 %v1252, %v1252
        %v1301 = vpack.c.b16 %v1253, %v1253
        %v1302 = vpack.c.b16 %v1254, %v1254
        %v1303 = vpack.c.b16 %v1255, %v1255
        %v1304 = vpack.c.b16 %v1256, %v1256
        %v1305 = vpack.c.b16 %v1257, %v1257
        %v1306 = vpack.c.b16 %v1258, %v1258
        %v1307 = vpack.c.b16 %v1259, %v1259
        %v1308 = vpack.c.b16 %v1260, %v1260
        %v1309 = vpack.c.b16 %v1261, %v1261
        %v1310 = vpack.c.b16 %v1262, %v1262
        %v1311 = vpack.c.b16 %v1263, %v1263
        %v1312 = vpack.c.b16 %v1264, %v1264
        %v1313 = vpack.c.b16 %v1265, %v1265
        %v1314 = vpack.c.b16 %v1266, %v1266
        %v1315 = vpack.c.b16 %v1267, %v1267
        %v1316 = vpack.c.b16 %v1268, %v1268
        %v1317 = vpack.c.b16 %v1269, %v1269
        %v1318 = vpack.c.b16 %v1270, %v1270
        %v1319 = vpack.c.b16 %v1271, %v1271
        %v1320 = vpack.c.b16 %v1272, %v1272
        %v1321 = vpack.c.b16 %v1273, %v1273
        %v1322 = vpack.c.b16 %v1274, %v1274
        %v1323 = vpack.c.b16 %v1275, %v1275
        %v1324 = vpack.c.b16 %v1276, %v1276
        %v1325 = vpack.c.b16 %v1277, %v1277
        %v1326 = vpack.c.b16 %v1278, %v1278
        %v1327 = vpack.c.b16 %v1279, %v1279
        %v1328 = vpack.c.b16 %v1280, %v1280
        %v1329 = vpack.c.b16 %v1281, %v1281
        %v1330 = vpack.c.b16 %v1282, %v1282
        %v1331 = vpack.c.b16 %v1283, %v1283
        %v1332 = vpack.c.b16 %v1284, %v1284
        %v1333 = vpack.c.b16 %v1285, %v1285
        %v1334 = vpack.c.b16 %v1286, %v1286
        %v1335 = vpack.c.b16 %v1287, %v1287
        %v1336 = vpack.c.b16 %v1288, %v1288
        %v1337 = vpack.c.b16 %v1289, %v1289
        %v1338 = vpack.c.b16 %v1290, %v1290
        %v1339 = vpack.c.b16 %v1291, %v1291
        %vm1388 = vcmask 125952
        %1389 = vst.msk [vmem:[%s298] sm:$0xf] %vm1388, %v1292
        %1390 = vst.msk [vmem:[%s298 + $0x4] sm:$0xf] %vm1388, %v1293
        %1391 = vst.msk [vmem:[%s298 + $0x8] sm:$0xf] %vm1388, %v1294
        %1392 = vst.msk [vmem:[%s298 + $0xc] sm:$0xf] %vm1388, %v1295
        %1393 = vst.msk [vmem:[%s298 + $0x10] sm:$0xf] %vm1388, %v1296
        %1394 = vst.msk [vmem:[%s298 + $0x14] sm:$0xf] %vm1388, %v1297
        %1395 = vst.msk [vmem:[%s298 + $0x18] sm:$0xf] %vm1388, %v1298
        %1396 = vst.msk [vmem:[%s298 + $0x1c] sm:$0xf] %vm1388, %v1299
        %1397 = vst.msk [vmem:[%s298 + $0x20] sm:$0xf] %vm1388, %v1300
        %1398 = vst.msk [vmem:[%s298 + $0x24] sm:$0xf] %vm1388, %v1301
        %1399 = vst.msk [vmem:[%s298 + $0x28] sm:$0xf] %vm1388, %v1302
        %1400 = vst.msk [vmem:[%s298 + $0x2c] sm:$0xf] %vm1388, %v1303
        %1401 = vst.msk [vmem:[%s298 + $0x30] sm:$0xf] %vm1388, %v1304
        %1402 = vst.msk [vmem:[%s298 + $0x34] sm:$0xf] %vm1388, %v1305
        %1403 = vst.msk [vmem:[%s298 + $0x38] sm:$0xf] %vm1388, %v1306
        %1404 = vst.msk [vmem:[%s298 + $0x3c] sm:$0xf] %vm1388, %v1307
        %1405 = vst.msk [vmem:[%s298 + $0x40] sm:$0xf] %vm1388, %v1308
        %1406 = vst.msk [vmem:[%s298 + $0x44] sm:$0xf] %vm1388, %v1309
        %1407 = vst.msk [vmem:[%s298 + $0x48] sm:$0xf] %vm1388, %v1310
        %1408 = vst.msk [vmem:[%s298 + $0x4c] sm:$0xf] %vm1388, %v1311
        %1409 = vst.msk [vmem:[%s298 + $0x50] sm:$0xf] %vm1388, %v1312
        %1410 = vst.msk [vmem:[%s298 + $0x54] sm:$0xf] %vm1388, %v1313
        %1411 = vst.msk [vmem:[%s298 + $0x58] sm:$0xf] %vm1388, %v1314
        %1412 = vst.msk [vmem:[%s298 + $0x5c] sm:$0xf] %vm1388, %v1315
        %1413 = vst.msk [vmem:[%s298 + $0x60] sm:$0xf] %vm1388, %v1316
        %1414 = vst.msk [vmem:[%s298 + $0x64] sm:$0xf] %vm1388, %v1317
        %1415 = vst.msk [vmem:[%s298 + $0x68] sm:$0xf] %vm1388, %v1318
        %1416 = vst.msk [vmem:[%s298 + $0x6c] sm:$0xf] %vm1388, %v1319
        %1417 = vst.msk [vmem:[%s298 + $0x70] sm:$0xf] %vm1388, %v1320
        %1418 = vst.msk [vmem:[%s298 + $0x74] sm:$0xf] %vm1388, %v1321
        %1419 = vst.msk [vmem:[%s298 + $0x78] sm:$0xf] %vm1388, %v1322
        %1420 = vst.msk [vmem:[%s298 + $0x7c] sm:$0xf] %vm1388, %v1323
        %1421 = vst.msk [vmem:[%s298 + $0x80] sm:$0xf] %vm1388, %v1324
        %1422 = vst.msk [vmem:[%s298 + $0x84] sm:$0xf] %vm1388, %v1325
        %1423 = vst.msk [vmem:[%s298 + $0x88] sm:$0xf] %vm1388, %v1326
        %1424 = vst.msk [vmem:[%s298 + $0x8c] sm:$0xf] %vm1388, %v1327
        %1425 = vst.msk [vmem:[%s298 + $0x90] sm:$0xf] %vm1388, %v1328
        %1426 = vst.msk [vmem:[%s298 + $0x94] sm:$0xf] %vm1388, %v1329
        %1427 = vst.msk [vmem:[%s298 + $0x98] sm:$0xf] %vm1388, %v1330
        %1428 = vst.msk [vmem:[%s298 + $0x9c] sm:$0xf] %vm1388, %v1331
        %1429 = vst.msk [vmem:[%s298 + $0xa0] sm:$0xf] %vm1388, %v1332
        %1430 = vst.msk [vmem:[%s298 + $0xa4] sm:$0xf] %vm1388, %v1333
        %1431 = vst.msk [vmem:[%s298 + $0xa8] sm:$0xf] %vm1388, %v1334
        %1432 = vst.msk [vmem:[%s298 + $0xac] sm:$0xf] %vm1388, %v1335
        %1433 = vst.msk [vmem:[%s298 + $0xb0] sm:$0xf] %vm1388, %v1336
        %1434 = vst.msk [vmem:[%s298 + $0xb4] sm:$0xf] %vm1388, %v1337
        %1435 = vst.msk [vmem:[%s298 + $0xb8] sm:$0xf] %vm1388, %v1338
        %1436 = vst.msk [vmem:[%s298 + $0xbc] sm:$0xf] %vm1388, %v1339
      $region44: #{pspnet_forward.6} parent=35 // pred_fallthru
        _
      %s1437 = smul.u32 48, %s20
      %p1438 = scmp.lt.s32.totalorder %s1437, 143
      %s1439 = scalar_select %p1438, %s1437, 143
      %p1440 = scmp.lt.s32.totalorder %s21, 0
      %s1441 = scalar_select %p1440, %s21, 0
      %s1442 = sadd.s32 %s1441, %s1439
      %s1443 = smul.addr %s1442, 4
      %s1444 = scalar_lea.vmem %s4, %s1443
      // Predicated region
      $region45: #{pspnet_forward.6} parent=35 // pred_check
        %p1445 = pneg %p162
      $region46: #{pspnet_forward.6} parent=35 // pred_check_branch
        %1447 = sbr.rel (%p1445) target = $region48
      $region47: #{pspnet_forward.6} parent=35 // pred_region
        %s1448 = smul.u32 48, %s20
      $region48: #{pspnet_forward.6} parent=35 // pred_fallthru
        _
    $region36: #{pspnet_forward.6} parent=5 // pred_fallthru
      _
    %p1449 = scmp.le.s32.totalorder 2, %s10
    // Predicated region
    $region49: #{pspnet_forward.6} parent=5 // pred_check
      %p1450 = pneg %p1449
    $region50: #{pspnet_forward.6} parent=5 // pred_check_branch
      %1452 = sbr.rel (%p1450) target = $region52
    $region51: #{pspnet_forward.6} parent=5 // pred_region
      %s1453 = ssub.s32 %s10, 2
      // Predicated region
      $region53: #{pspnet_forward.6} parent=51 // pred_check
        %p1454 = pneg %p168
      $region54: #{pspnet_forward.6} parent=51 // pred_check_branch
        %1456 = sbr.rel (%p1454) target = $region56
      $region55: #{pspnet_forward.6} parent=51 // pred_region
        %s1457 = smul.u32 48, %s23
        %p1458 = scmp.lt.s32.totalorder %s1457, 143
        %s1459 = scalar_select %p1458, %s1457, 143
        %p1460 = scmp.lt.s32.totalorder %s24, 0
        %s1461 = scalar_select %p1460, %s24, 0
        %s1462 = sadd.s32 %s1461, %s1459
        %s1463 = smul.addr %s1462, 4
        %s1464 = scalar_lea.vmem %s4, %s1463
      $region56: #{pspnet_forward.6} parent=51 // pred_fallthru
        _
    $region52: #{pspnet_forward.6} parent=5 // pred_fallthru
      _
  $region6: #{pspnet_forward.6} parent=0 // loop_footer
    %s14 = sadd.s32 1, %s10
  $region7: #{pspnet_forward.6} parent=0 // loop_footer_branch
    %9 = sbr.rel target = $region3
  $region8: #{pspnet_forward.6} parent=0 // loop_exit
    _

// kernel: pspnet_forward.7
$region0: #{pspnet_forward.7}
  #allocation0 [shape = 'u32[]', space=smem, size = 0x4, offset = 0x4, fixed_abs, tag = 'smem constant byte address 0x4 - core index']
  #allocation1 [shape = 'u32[144,128]{1,0:T(1,128)}', space=vmem, size = 0x12000, scoped, tag = 'internal scratch']
  #allocation2 [shape = 'f32[288,32]{1,0:T(8,128)}', space=vmem, size = 0x24000, scoped, tag = 'scratch operand']
  %s0 = inlined_call_operand.vmem [shape: bf16[288,144], index: 0, kind: input, shape index: {}]
  %s1 = inlined_call_operand.vmem [shape: bf16[144,32], index: 1, kind: input, shape index: {}]
  %s2 = inlined_call_operand.vmem [shape: f32[1,32], index: 2, kind: input, shape index: {}]
  %s3 = inlined_call_operand.vmem [shape: f32[1,32], index: 3, kind: input, shape index: {}]
  %s4 = inlined_call_operand.vmem [shape: bf16[288,32], index: 4, kind: output, shape index: {}]
  %s5 = sld [smem:[#allocation0]]
  $region34: #{pspnet_forward.7} parent=0
    _
  %s7 = ssub.s32 1, %s5
  %s8 = scalar_select 0, %s7, %s5
  // Predicated region
  $region2: #{pspnet_forward.7} parent=0 // pred_check
    _
  $region3: #{pspnet_forward.7} parent=0 // pred_check_branch
    %10 = sbr.rel (0) target = $region5
  $region4: #{pspnet_forward.7} parent=0 // pred_region
    _
  $region5: #{pspnet_forward.7} parent=0 // pred_fallthru
    _
  // Predicated region
  $region6: #{pspnet_forward.7} parent=0 // pred_check
    _
  $region7: #{pspnet_forward.7} parent=0 // pred_check_branch
    %12 = sbr.rel (0) target = $region9
  $region8: #{pspnet_forward.7} parent=0 // pred_region
    _
  $region9: #{pspnet_forward.7} parent=0 // pred_fallthru
    _
  // Predicated region
  $region10: #{pspnet_forward.7} parent=0 // pred_check
    _
  $region11: #{pspnet_forward.7} parent=0 // pred_check_branch
    %14 = sbr.rel (0) target = $region13
  $region12: #{pspnet_forward.7} parent=0 // pred_region
    _
  $region13: #{pspnet_forward.7} parent=0 // pred_fallthru
    _
  // Predicated region
  $region14: #{pspnet_forward.7} parent=0 // pred_check
    _
  $region15: #{pspnet_forward.7} parent=0 // pred_check_branch
    %16 = sbr.rel (0) target = $region17
  $region16: #{pspnet_forward.7} parent=0 // pred_region
    _
  $region17: #{pspnet_forward.7} parent=0 // pred_fallthru
    _
  %p18 = scmp.eq.s32.totalorder 0, 0
  // Predicated region
  $region18: #{pspnet_forward.7} parent=0 // pred_check
    %p19 = pneg %p18
  $region19: #{pspnet_forward.7} parent=0 // pred_check_branch
    %21 = sbr.rel (%p19) target = $region21
  $region20: #{pspnet_forward.7} parent=0 // pred_region
    %vm22 = vcmask 261120
    %23 = vst.msk [vmem:[#allocation2] sm:$0xff] %vm22, 0.0
    %24 = vst.msk [vmem:[#allocation2 + $0x8] sm:$0xff] %vm22, 0.0
    %25 = vst.msk [vmem:[#allocation2 + $0x10] sm:$0xff] %vm22, 0.0
    %26 = vst.msk [vmem:[#allocation2 + $0x18] sm:$0xff] %vm22, 0.0
    %27 = vst.msk [vmem:[#allocation2 + $0x20] sm:$0xff] %vm22, 0.0
    %28 = vst.msk [vmem:[#allocation2 + $0x28] sm:$0xff] %vm22, 0.0
    %29 = vst.msk [vmem:[#allocation2 + $0x30] sm:$0xff] %vm22, 0.0
    %30 = vst.msk [vmem:[#allocation2 + $0x38] sm:$0xff] %vm22, 0.0
    %31 = vst.msk [vmem:[#allocation2 + $0x40] sm:$0xff] %vm22, 0.0
    %32 = vst.msk [vmem:[#allocation2 + $0x48] sm:$0xff] %vm22, 0.0
    %33 = vst.msk [vmem:[#allocation2 + $0x50] sm:$0xff] %vm22, 0.0
    %34 = vst.msk [vmem:[#allocation2 + $0x58] sm:$0xff] %vm22, 0.0
    %35 = vst.msk [vmem:[#allocation2 + $0x60] sm:$0xff] %vm22, 0.0
    %36 = vst.msk [vmem:[#allocation2 + $0x68] sm:$0xff] %vm22, 0.0
    %37 = vst.msk [vmem:[#allocation2 + $0x70] sm:$0xff] %vm22, 0.0
    %38 = vst.msk [vmem:[#allocation2 + $0x78] sm:$0xff] %vm22, 0.0
    %39 = vst.msk [vmem:[#allocation2 + $0x80] sm:$0xff] %vm22, 0.0
    %40 = vst.msk [vmem:[#allocation2 + $0x88] sm:$0xff] %vm22, 0.0
    %41 = vst.msk [vmem:[#allocation2 + $0x90] sm:$0xff] %vm22, 0.0
    %42 = vst.msk [vmem:[#allocation2 + $0x98] sm:$0xff] %vm22, 0.0
    %43 = vst.msk [vmem:[#allocation2 + $0xa0] sm:$0xff] %vm22, 0.0
    %44 = vst.msk [vmem:[#allocation2 + $0xa8] sm:$0xff] %vm22, 0.0
    %45 = vst.msk [vmem:[#allocation2 + $0xb0] sm:$0xff] %vm22, 0.0
    %46 = vst.msk [vmem:[#allocation2 + $0xb8] sm:$0xff] %vm22, 0.0
    %47 = vst.msk [vmem:[#allocation2 + $0xc0] sm:$0xff] %vm22, 0.0
    %48 = vst.msk [vmem:[#allocation2 + $0xc8] sm:$0xff] %vm22, 0.0
    %49 = vst.msk [vmem:[#allocation2 + $0xd0] sm:$0xff] %vm22, 0.0
    %50 = vst.msk [vmem:[#allocation2 + $0xd8] sm:$0xff] %vm22, 0.0
    %51 = vst.msk [vmem:[#allocation2 + $0xe0] sm:$0xff] %vm22, 0.0
    %52 = vst.msk [vmem:[#allocation2 + $0xe8] sm:$0xff] %vm22, 0.0
    %53 = vst.msk [vmem:[#allocation2 + $0xf0] sm:$0xff] %vm22, 0.0
    %54 = vst.msk [vmem:[#allocation2 + $0xf8] sm:$0xff] %vm22, 0.0
    %55 = vst.msk [vmem:[#allocation2 + $0x100] sm:$0xff] %vm22, 0.0
    %56 = vst.msk [vmem:[#allocation2 + $0x108] sm:$0xff] %vm22, 0.0
    %57 = vst.msk [vmem:[#allocation2 + $0x110] sm:$0xff] %vm22, 0.0
    %58 = vst.msk [vmem:[#allocation2 + $0x118] sm:$0xff] %vm22, 0.0
  $region21: #{pspnet_forward.7} parent=0 // pred_fallthru
    _
  %v59 = vld [vmem:[#allocation2] sm:$0xff]
  %v60 = vld [vmem:[#allocation2 + $0x8] sm:$0xff]
  %v61 = vld [vmem:[#allocation2 + $0x10] sm:$0xff]
  %v62 = vld [vmem:[#allocation2 + $0x18] sm:$0xff]
  %v63 = vld [vmem:[#allocation2 + $0x20] sm:$0xff]
  %v64 = vld [vmem:[#allocation2 + $0x28] sm:$0xff]
  %v65 = vld [vmem:[#allocation2 + $0x30] sm:$0xff]
  %v66 = vld [vmem:[#allocation2 + $0x38] sm:$0xff]
  %v67 = vld [vmem:[#allocation2 + $0x40] sm:$0xff]
  %v68 = vld [vmem:[#allocation2 + $0x48] sm:$0xff]
  %v69 = vld [vmem:[#allocation2 + $0x50] sm:$0xff]
  %v70 = vld [vmem:[#allocation2 + $0x58] sm:$0xff]
  %v71 = vld [vmem:[#allocation2 + $0x60] sm:$0xff]
  %v72 = vld [vmem:[#allocation2 + $0x68] sm:$0xff]
  %v73 = vld [vmem:[#allocation2 + $0x70] sm:$0xff]
  %v74 = vld [vmem:[#allocation2 + $0x78] sm:$0xff]
  %v75 = vld [vmem:[#allocation2 + $0x80] sm:$0xff]
  %v76 = vld [vmem:[#allocation2 + $0x88] sm:$0xff]
  %v77 = vld [vmem:[#allocation2 + $0x90] sm:$0xff]
  %v78 = vld [vmem:[#allocation2 + $0x98] sm:$0xff]
  %v79 = vld [vmem:[#allocation2 + $0xa0] sm:$0xff]
  %v80 = vld [vmem:[#allocation2 + $0xa8] sm:$0xff]
  %v81 = vld [vmem:[#allocation2 + $0xb0] sm:$0xff]
  %v82 = vld [vmem:[#allocation2 + $0xb8] sm:$0xff]
  %v83 = vld [vmem:[#allocation2 + $0xc0] sm:$0xff]
  %v84 = vld [vmem:[#allocation2 + $0xc8] sm:$0xff]
  %v85 = vld [vmem:[#allocation2 + $0xd0] sm:$0xff]
  %v86 = vld [vmem:[#allocation2 + $0xd8] sm:$0xff]
  %v87 = vld [vmem:[#allocation2 + $0xe0] sm:$0xff]
  %v88 = vld [vmem:[#allocation2 + $0xe8] sm:$0xff]
  %v89 = vld [vmem:[#allocation2 + $0xf0] sm:$0xff]
  %v90 = vld [vmem:[#allocation2 + $0xf8] sm:$0xff]
  %v91 = vld [vmem:[#allocation2 + $0x100] sm:$0xff]
  %v92 = vld [vmem:[#allocation2 + $0x108] sm:$0xff]
  %v93 = vld [vmem:[#allocation2 + $0x110] sm:$0xff]
  %v94 = vld [vmem:[#allocation2 + $0x118] sm:$0xff]
  %v95 = vld [vmem:[%s0] sm:$0xff]
  %v96 = vld [vmem:[%s0 + $0x8] sm:$0xff]
  %v97 = vld [vmem:[%s0 + $0x10] sm:$0xff]
  %v98 = vld [vmem:[%s0 + $0x18] sm:$0xff]
  %v99 = vld [vmem:[%s0 + $0x20] sm:$0xff]
  %v100 = vld [vmem:[%s0 + $0x28] sm:$0xff]
  %v101 = vld [vmem:[%s0 + $0x30] sm:$0xff]
  %v102 = vld [vmem:[%s0 + $0x38] sm:$0xff]
  %v103 = vld [vmem:[%s0 + $0x40] sm:$0xff]
  %v104 = vld [vmem:[%s0 + $0x48] sm:$0xff]
  %v105 = vld [vmem:[%s0 + $0x50] sm:$0xff]
  %v106 = vld [vmem:[%s0 + $0x58] sm:$0xff]
  %v107 = vld [vmem:[%s0 + $0x60] sm:$0xff]
  %v108 = vld [vmem:[%s0 + $0x68] sm:$0xff]
  %v109 = vld [vmem:[%s0 + $0x70] sm:$0xff]
  %v110 = vld [vmem:[%s0 + $0x78] sm:$0xff]
  %v111 = vld [vmem:[%s0 + $0x80] sm:$0xff]
  %v112 = vld [vmem:[%s0 + $0x88] sm:$0xff]
  %v113 = vld [vmem:[%s0 + $0x90] sm:$0xff]
  %v114 = vld [vmem:[%s0 + $0x98] sm:$0xff]
  %v115 = vld [vmem:[%s0 + $0xa0] sm:$0xff]
  %v116 = vld [vmem:[%s0 + $0xa8] sm:$0xff]
  %v117 = vld [vmem:[%s0 + $0xb0] sm:$0xff]
  %v118 = vld [vmem:[%s0 + $0xb8] sm:$0xff]
  %v119 = vld [vmem:[%s0 + $0xc0] sm:$0xff]
  %v120 = vld [vmem:[%s0 + $0xc8] sm:$0xff]
  %v121 = vld [vmem:[%s0 + $0xd0] sm:$0xff]
  %v122 = vld [vmem:[%s0 + $0xd8] sm:$0xff]
  %v123 = vld [vmem:[%s0 + $0xe0] sm:$0xff]
  %v124 = vld [vmem:[%s0 + $0xe8] sm:$0xff]
  %v125 = vld [vmem:[%s0 + $0xf0] sm:$0xff]
  %v126 = vld [vmem:[%s0 + $0xf8] sm:$0xff]
  %v127 = vld [vmem:[%s0 + $0x100] sm:$0xff]
  %v128 = vld [vmem:[%s0 + $0x108] sm:$0xff]
  %v129 = vld [vmem:[%s0 + $0x110] sm:$0xff]
  %v130 = vld [vmem:[%s0 + $0x118] sm:$0xff]
  %v131 = vld [vmem:[%s1] sm:$0xf]
  %v132 = vld [vmem:[%s1 + $0x4] sm:$0xf]
  %v133 = vld [vmem:[%s1 + $0x8] sm:$0xf]
  %v134 = vld [vmem:[%s1 + $0xc] sm:$0xf]
  %v135 = vld [vmem:[%s1 + $0x10] sm:$0xf]
  %v136 = vld [vmem:[%s1 + $0x14] sm:$0xf]
  %v137 = vld [vmem:[%s1 + $0x18] sm:$0xf]
  %v138 = vld [vmem:[%s1 + $0x1c] sm:$0xf]
  %v139 = vld [vmem:[%s1 + $0x20] sm:$0xf]
  %v140 = vld [vmem:[%s1 + $0x24] sm:$0xf]
  %v141 = vld [vmem:[%s1 + $0x28] sm:$0xf]
  %v142 = vld [vmem:[%s1 + $0x2c] sm:$0xf]
  %v143 = vld [vmem:[%s1 + $0x30] sm:$0xf]
  %v144 = vld [vmem:[%s1 + $0x34] sm:$0xf]
  %v145 = vld [vmem:[%s1 + $0x38] sm:$0xf]
  %v146 = vld [vmem:[%s1 + $0x3c] sm:$0xf]
  %v147 = vld [vmem:[%s1 + $0x40] sm:$0xf]
  %v148 = vld [vmem:[%s1 + $0x44] sm:$0xf]
  %v185 = vunpack.c.l.b16 %v95
  %v186 = vunpack.c.h.b16 %v95
  %v187 = vunpack.c.l.b16 %v96
  %v188 = vunpack.c.h.b16 %v96
  %v189 = vunpack.c.l.b16 %v97
  %v190 = vunpack.c.h.b16 %v97
  %v191 = vunpack.c.l.b16 %v98
  %v192 = vunpack.c.h.b16 %v98
  %v193 = vunpack.c.l.b16 %v99
  %v194 = vunpack.c.h.b16 %v99
  %v195 = vunpack.c.l.b16 %v100
  %v196 = vunpack.c.h.b16 %v100
  %v197 = vunpack.c.l.b16 %v101
  %v198 = vunpack.c.h.b16 %v101
  %v199 = vunpack.c.l.b16 %v102
  %v200 = vunpack.c.h.b16 %v102
  %v201 = vunpack.c.l.b16 %v103
  %v202 = vunpack.c.h.b16 %v103
  %v203 = vunpack.c.l.b16 %v104
  %v204 = vunpack.c.h.b16 %v104
  %v205 = vunpack.c.l.b16 %v105
  %v206 = vunpack.c.h.b16 %v105
  %v207 = vunpack.c.l.b16 %v106
  %v208 = vunpack.c.h.b16 %v106
  %v209 = vunpack.c.l.b16 %v107
  %v210 = vunpack.c.h.b16 %v107
  %v211 = vunpack.c.l.b16 %v108
  %v212 = vunpack.c.h.b16 %v108
  %v213 = vunpack.c.l.b16 %v109
  %v214 = vunpack.c.h.b16 %v109
  %v215 = vunpack.c.l.b16 %v110
  %v216 = vunpack.c.h.b16 %v110
  %v217 = vunpack.c.l.b16 %v111
  %v218 = vunpack.c.h.b16 %v111
  %v219 = vunpack.c.l.b16 %v112
  %v220 = vunpack.c.h.b16 %v112
  %v221 = vunpack.c.l.b16 %v113
  %v222 = vunpack.c.h.b16 %v113
  %v223 = vunpack.c.l.b16 %v114
  %v224 = vunpack.c.h.b16 %v114
  %v225 = vunpack.c.l.b16 %v115
  %v226 = vunpack.c.h.b16 %v115
  %v227 = vunpack.c.l.b16 %v116
  %v228 = vunpack.c.h.b16 %v116
  %v229 = vunpack.c.l.b16 %v117
  %v230 = vunpack.c.h.b16 %v117
  %v231 = vunpack.c.l.b16 %v118
  %v232 = vunpack.c.h.b16 %v118
  %v233 = vunpack.c.l.b16 %v119
  %v234 = vunpack.c.h.b16 %v119
  %v235 = vunpack.c.l.b16 %v120
  %v236 = vunpack.c.h.b16 %v120
  %v237 = vunpack.c.l.b16 %v121
  %v238 = vunpack.c.h.b16 %v121
  %v239 = vunpack.c.l.b16 %v122
  %v240 = vunpack.c.h.b16 %v122
  %v241 = vunpack.c.l.b16 %v123
  %v242 = vunpack.c.h.b16 %v123
  %v243 = vunpack.c.l.b16 %v124
  %v244 = vunpack.c.h.b16 %v124
  %v245 = vunpack.c.l.b16 %v125
  %v246 = vunpack.c.h.b16 %v125
  %v247 = vunpack.c.l.b16 %v126
  %v248 = vunpack.c.h.b16 %v126
  %v249 = vunpack.c.l.b16 %v127
  %v250 = vunpack.c.h.b16 %v127
  %v251 = vunpack.c.l.b16 %v128
  %v252 = vunpack.c.h.b16 %v128
  %v253 = vunpack.c.l.b16 %v129
  %v254 = vunpack.c.h.b16 %v129
  %v255 = vunpack.c.l.b16 %v130
  %v256 = vunpack.c.h.b16 %v130
  %v257 = vpack.c.b16 %v187, %v185
  %v258 = vpack.c.b16 %v188, %v186
  %v259 = vpack.c.b16 %v191, %v189
  %v260 = vpack.c.b16 %v192, %v190
  %v261 = vpack.c.b16 %v195, %v193
  %v262 = vpack.c.b16 %v196, %v194
  %v263 = vpack.c.b16 %v199, %v197
  %v264 = vpack.c.b16 %v200, %v198
  %v265 = vpack.c.b16 %v203, %v201
  %v266 = vpack.c.b16 %v204, %v202
  %v267 = vpack.c.b16 %v207, %v205
  %v268 = vpack.c.b16 %v208, %v206
  %v269 = vpack.c.b16 %v211, %v209
  %v270 = vpack.c.b16 %v212, %v210
  %v271 = vpack.c.b16 %v215, %v213
  %v272 = vpack.c.b16 %v216, %v214
  %v273 = vpack.c.b16 %v219, %v217
  %v274 = vpack.c.b16 %v220, %v218
  %v275 = vpack.c.b16 %v223, %v221
  %v276 = vpack.c.b16 %v224, %v222
  %v277 = vpack.c.b16 %v227, %v225
  %v278 = vpack.c.b16 %v228, %v226
  %v279 = vpack.c.b16 %v231, %v229
  %v280 = vpack.c.b16 %v232, %v230
  %v281 = vpack.c.b16 %v235, %v233
  %v282 = vpack.c.b16 %v236, %v234
  %v283 = vpack.c.b16 %v239, %v237
  %v284 = vpack.c.b16 %v240, %v238
  %v285 = vpack.c.b16 %v243, %v241
  %v286 = vpack.c.b16 %v244, %v242
  %v287 = vpack.c.b16 %v247, %v245
  %v288 = vpack.c.b16 %v248, %v246
  %v289 = vpack.c.b16 %v251, %v249
  %v290 = vpack.c.b16 %v252, %v250
  %v291 = vpack.c.b16 %v255, %v253
  %v292 = vpack.c.b16 %v256, %v254
  %v329 = vunpack.c.l.b16 %v131
  %v330 = vunpack.c.l.b16 %v132
  %v331 = vunpack.c.l.b16 %v133
  %v332 = vunpack.c.l.b16 %v134
  %v333 = vunpack.c.l.b16 %v135
  %v334 = vunpack.c.l.b16 %v136
  %v335 = vunpack.c.l.b16 %v137
  %v336 = vunpack.c.l.b16 %v138
  %v337 = vunpack.c.l.b16 %v139
  %v338 = vunpack.c.l.b16 %v140
  %v339 = vunpack.c.l.b16 %v141
  %v340 = vunpack.c.l.b16 %v142
  %v341 = vunpack.c.l.b16 %v143
  %v342 = vunpack.c.l.b16 %v144
  %v343 = vunpack.c.l.b16 %v145
  %v344 = vunpack.c.l.b16 %v146
  %v345 = vunpack.c.l.b16 %v147
  %v346 = vunpack.c.l.b16 %v148
  %v347 = vpack.c.b16 %v330, %v329
  %v348 = vpack.c.b16 %v332, %v331
  %v349 = vpack.c.b16 %v334, %v333
  %v350 = vpack.c.b16 %v336, %v335
  %v351 = vpack.c.b16 %v338, %v337
  %v352 = vpack.c.b16 %v340, %v339
  %v353 = vpack.c.b16 %v342, %v341
  %v354 = vpack.c.b16 %v344, %v343
  %v355 = vpack.c.b16 %v346, %v345
  %vm365 = vcmask 130048
  %v367 = vsel %vm365, %v258, 0
  %v370 = vsel %vm365, %v260, 0
  %v373 = vsel %vm365, %v262, 0
  %v376 = vsel %vm365, %v264, 0
  %v379 = vsel %vm365, %v266, 0
  %v382 = vsel %vm365, %v268, 0
  %v385 = vsel %vm365, %v270, 0
  %v388 = vsel %vm365, %v272, 0
  %v391 = vsel %vm365, %v274, 0
  %v394 = vsel %vm365, %v276, 0
  %v397 = vsel %vm365, %v278, 0
  %v400 = vsel %vm365, %v280, 0
  %v403 = vsel %vm365, %v282, 0
  %v406 = vsel %vm365, %v284, 0
  %v409 = vsel %vm365, %v286, 0
  %v412 = vsel %vm365, %v288, 0
  %v415 = vsel %vm365, %v290, 0
  %v418 = vsel %vm365, %v292, 0
  %420 = vmatprep.subr.bf16.mxu0 0
  %421 = vmatpush1.bf16.msra.mxu0 %v347
  %422 = vmatprep.subr.bf16.mxu0 0
  %423 = vmatpush1.bf16.msra.mxu0 %v348
  %424 = vmatprep.subr.bf16.mxu0 0
  %425 = vmatpush1.bf16.msra.mxu0 %v349
  %426 = vmatprep.subr.bf16.mxu0 0
  %427 = vmatpush1.bf16.msra.mxu0 %v350
  %428 = vmatprep.subr.bf16.mxu0 0
  %429 = vmatpush1.bf16.msra.mxu0 %v351
  %430 = vmatprep.subr.bf16.mxu0 0
  %431 = vmatpush1.bf16.msra.mxu0 %v352
  %432 = vmatprep.subr.bf16.mxu0 0
  %433 = vmatpush1.bf16.msra.mxu0 %v353
  %434 = vmatprep.subr.bf16.mxu0 0
  %435 = vmatpush1.bf16.msra.mxu0 %v354
  %436 = vmatprep.subr.bf16.mxu0 0
  %437 = vmatpush1.bf16.msra.mxu0 %v355
  %438 = vmatprep.subr.bf16.mxu0 0
  %439 = vmatpush1.bf16.msra.mxu0 0
  %440 = vmatprep.subr.bf16.mxu0 0
  %441 = vmatpush1.bf16.msra.mxu0 0
  %442 = vmatprep.subr.bf16.mxu0 0
  %443 = vmatpush1.bf16.msra.mxu0 0
  %444 = vmatprep.subr.bf16.mxu0 0
  %445 = vmatpush1.bf16.msra.mxu0 0
  %446 = vmatprep.subr.bf16.mxu0 0
  %447 = vmatpush1.bf16.msra.mxu0 0
  %448 = vmatprep.subr.bf16.mxu0 0
  %449 = vmatpush1.bf16.msra.mxu0 0
  %450 = vmatprep.subr.bf16.mxu0 0
  %451 = vmatpush1.bf16.msra.mxu0 0
  %452 = vmatprep.mubr.bf16.mxu0 %v367
  %453 = vmatmul.mubr.bf16.gmra.mrb[0].mxu0 %v257
  %v454 = vpop.f32.mrb[0].mxu0
  %v455 = vadd.f32 0.0, %v454
  %v456 = vpop.f32.mrb[0].mxu0
  %v457 = vpop.f32.mrb[0].mxu0
  %v458 = vadd.f32 0.0, %v457
  %v459 = vpop.f32.mrb[0].mxu0
  %460 = vmatprep.mubr.bf16.mxu0 %v370
  %461 = vmatmul.mubr.bf16.gmra.mrb[0].mxu0 %v259
  %v462 = vpop.f32.mrb[0].mxu0
  %v463 = vadd.f32 0.0, %v462
  %v464 = vpop.f32.mrb[0].mxu0
  %v465 = vpop.f32.mrb[0].mxu0
  %v466 = vadd.f32 0.0, %v465
  %v467 = vpop.f32.mrb[0].mxu0
  %468 = vmatprep.mubr.bf16.mxu0 %v373
  %469 = vmatmul.mubr.bf16.gmra.mrb[0].mxu0 %v261
  %v470 = vpop.f32.mrb[0].mxu0
  %v471 = vadd.f32 0.0, %v470
  %v472 = vpop.f32.mrb[0].mxu0
  %v473 = vpop.f32.mrb[0].mxu0
  %v474 = vadd.f32 0.0, %v473
  %v475 = vpop.f32.mrb[0].mxu0
  %476 = vmatprep.mubr.bf16.mxu0 %v376
  %477 = vmatmul.mubr.bf16.gmra.mrb[0].mxu0 %v263
  %v478 = vpop.f32.mrb[0].mxu0
  %v479 = vadd.f32 0.0, %v478
  %v480 = vpop.f32.mrb[0].mxu0
  %v481 = vpop.f32.mrb[0].mxu0
  %v482 = vadd.f32 0.0, %v481
  %v483 = vpop.f32.mrb[0].mxu0
  %484 = vmatprep.mubr.bf16.mxu0 %v379
  %485 = vmatmul.mubr.bf16.gmra.mrb[0].mxu0 %v265
  %v486 = vpop.f32.mrb[0].mxu0
  %v487 = vadd.f32 0.0, %v486
  %v488 = vpop.f32.mrb[0].mxu0
  %v489 = vpop.f32.mrb[0].mxu0
  %v490 = vadd.f32 0.0, %v489
  %v491 = vpop.f32.mrb[0].mxu0
  %492 = vmatprep.mubr.bf16.mxu0 %v382
  %493 = vmatmul.mubr.bf16.gmra.mrb[0].mxu0 %v267
  %v494 = vpop.f32.mrb[0].mxu0
  %v495 = vadd.f32 0.0, %v494
  %v496 = vpop.f32.mrb[0].mxu0
  %v497 = vpop.f32.mrb[0].mxu0
  %v498 = vadd.f32 0.0, %v497
  %v499 = vpop.f32.mrb[0].mxu0
  %500 = vmatprep.mubr.bf16.mxu0 %v385
  %501 = vmatmul.mubr.bf16.gmra.mrb[0].mxu0 %v269
  %v502 = vpop.f32.mrb[0].mxu0
  %v503 = vadd.f32 0.0, %v502
  %v504 = vpop.f32.mrb[0].mxu0
  %v505 = vpop.f32.mrb[0].mxu0
  %v506 = vadd.f32 0.0, %v505
  %v507 = vpop.f32.mrb[0].mxu0
  %508 = vmatprep.mubr.bf16.mxu0 %v388
  %509 = vmatmul.mubr.bf16.gmra.mrb[0].mxu0 %v271
  %v510 = vpop.f32.mrb[0].mxu0
  %v511 = vadd.f32 0.0, %v510
  %v512 = vpop.f32.mrb[0].mxu0
  %v513 = vpop.f32.mrb[0].mxu0
  %v514 = vadd.f32 0.0, %v513
  %v515 = vpop.f32.mrb[0].mxu0
  %516 = vmatprep.mubr.bf16.mxu0 %v391
  %517 = vmatmul.mubr.bf16.gmra.mrb[0].mxu0 %v273
  %v518 = vpop.f32.mrb[0].mxu0
  %v519 = vadd.f32 0.0, %v518
  %v520 = vpop.f32.mrb[0].mxu0
  %v521 = vpop.f32.mrb[0].mxu0
  %v522 = vadd.f32 0.0, %v521
  %v523 = vpop.f32.mrb[0].mxu0
  %524 = vmatprep.mubr.bf16.mxu0 %v394
  %525 = vmatmul.mubr.bf16.gmra.mrb[0].mxu0 %v275
  %v526 = vpop.f32.mrb[0].mxu0
  %v527 = vadd.f32 0.0, %v526
  %v528 = vpop.f32.mrb[0].mxu0
  %v529 = vpop.f32.mrb[0].mxu0
  %v530 = vadd.f32 0.0, %v529
  %v531 = vpop.f32.mrb[0].mxu0
  %532 = vmatprep.mubr.bf16.mxu0 %v397
  %533 = vmatmul.mubr.bf16.gmra.mrb[0].mxu0 %v277
  %v534 = vpop.f32.mrb[0].mxu0
  %v535 = vadd.f32 0.0, %v534
  %v536 = vpop.f32.mrb[0].mxu0
  %v537 = vpop.f32.mrb[0].mxu0
  %v538 = vadd.f32 0.0, %v537
  %v539 = vpop.f32.mrb[0].mxu0
  %540 = vmatprep.mubr.bf16.mxu0 %v400
  %541 = vmatmul.mubr.bf16.gmra.mrb[0].mxu0 %v279
  %v542 = vpop.f32.mrb[0].mxu0
  %v543 = vadd.f32 0.0, %v542
  %v544 = vpop.f32.mrb[0].mxu0
  %v545 = vpop.f32.mrb[0].mxu0
  %v546 = vadd.f32 0.0, %v545
  %v547 = vpop.f32.mrb[0].mxu0
  %548 = vmatprep.mubr.bf16.mxu0 %v403
  %549 = vmatmul.mubr.bf16.gmra.mrb[0].mxu0 %v281
  %v550 = vpop.f32.mrb[0].mxu0
  %v551 = vadd.f32 0.0, %v550
  %v552 = vpop.f32.mrb[0].mxu0
  %v553 = vpop.f32.mrb[0].mxu0
  %v554 = vadd.f32 0.0, %v553
  %v555 = vpop.f32.mrb[0].mxu0
  %556 = vmatprep.mubr.bf16.mxu0 %v406
  %557 = vmatmul.mubr.bf16.gmra.mrb[0].mxu0 %v283
  %v558 = vpop.f32.mrb[0].mxu0
  %v559 = vadd.f32 0.0, %v558
  %v560 = vpop.f32.mrb[0].mxu0
  %v561 = vpop.f32.mrb[0].mxu0
  %v562 = vadd.f32 0.0, %v561
  %v563 = vpop.f32.mrb[0].mxu0
  %564 = vmatprep.mubr.bf16.mxu0 %v409
  %565 = vmatmul.mubr.bf16.gmra.mrb[0].mxu0 %v285
  %v566 = vpop.f32.mrb[0].mxu0
  %v567 = vadd.f32 0.0, %v566
  %v568 = vpop.f32.mrb[0].mxu0
  %v569 = vpop.f32.mrb[0].mxu0
  %v570 = vadd.f32 0.0, %v569
  %v571 = vpop.f32.mrb[0].mxu0
  %572 = vmatprep.mubr.bf16.mxu0 %v412
  %573 = vmatmul.mubr.bf16.gmra.mrb[0].mxu0 %v287
  %v574 = vpop.f32.mrb[0].mxu0
  %v575 = vadd.f32 0.0, %v574
  %v576 = vpop.f32.mrb[0].mxu0
  %v577 = vpop.f32.mrb[0].mxu0
  %v578 = vadd.f32 0.0, %v577
  %v579 = vpop.f32.mrb[0].mxu0
  %580 = vmatprep.mubr.bf16.mxu0 %v415
  %581 = vmatmul.mubr.bf16.gmra.mrb[0].mxu0 %v289
  %v582 = vpop.f32.mrb[0].mxu0
  %v583 = vadd.f32 0.0, %v582
  %v584 = vpop.f32.mrb[0].mxu0
  %v585 = vpop.f32.mrb[0].mxu0
  %v586 = vadd.f32 0.0, %v585
  %v587 = vpop.f32.mrb[0].mxu0
  %588 = vmatprep.mubr.bf16.mxu0 %v418
  %589 = vmatmul.mubr.bf16.gmra.mrb[0].mxu0 %v291
  %v590 = vpop.f32.mrb[0].mxu0
  %v591 = vadd.f32 0.0, %v590
  %v592 = vpop.f32.mrb[0].mxu0
  %v593 = vpop.f32.mrb[0].mxu0
  %v594 = vadd.f32 0.0, %v593
  %v595 = vpop.f32.mrb[0].mxu0
  %596 = vdwg.mxu0
  %v597 = vadd.f32 %v59, %v455
  %v598 = vadd.f32 %v60, %v458
  %v599 = vadd.f32 %v61, %v463
  %v600 = vadd.f32 %v62, %v466
  %v601 = vadd.f32 %v63, %v471
  %v602 = vadd.f32 %v64, %v474
  %v603 = vadd.f32 %v65, %v479
  %v604 = vadd.f32 %v66, %v482
  %v605 = vadd.f32 %v67, %v487
  %v606 = vadd.f32 %v68, %v490
  %v607 = vadd.f32 %v69, %v495
  %v608 = vadd.f32 %v70, %v498
  %v609 = vadd.f32 %v71, %v503
  %v610 = vadd.f32 %v72, %v506
  %v611 = vadd.f32 %v73, %v511
  %v612 = vadd.f32 %v74, %v514
  %v613 = vadd.f32 %v75, %v519
  %v614 = vadd.f32 %v76, %v522
  %v615 = vadd.f32 %v77, %v527
  %v616 = vadd.f32 %v78, %v530
  %v617 = vadd.f32 %v79, %v535
  %v618 = vadd.f32 %v80, %v538
  %v619 = vadd.f32 %v81, %v543
  %v620 = vadd.f32 %v82, %v546
  %v621 = vadd.f32 %v83, %v551
  %v622 = vadd.f32 %v84, %v554
  %v623 = vadd.f32 %v85, %v559
  %v624 = vadd.f32 %v86, %v562
  %v625 = vadd.f32 %v87, %v567
  %v626 = vadd.f32 %v88, %v570
  %v627 = vadd.f32 %v89, %v575
  %v628 = vadd.f32 %v90, %v578
  %v629 = vadd.f32 %v91, %v583
  %v630 = vadd.f32 %v92, %v586
  %v631 = vadd.f32 %v93, %v591
  %v632 = vadd.f32 %v94, %v594
  %vm633 = vcmask 261120
  %634 = vst.msk [vmem:[#allocation2] sm:$0xff] %vm633, %v597
  %635 = vst.msk [vmem:[#allocation2 + $0x8] sm:$0xff] %vm633, %v598
  %636 = vst.msk [vmem:[#allocation2 + $0x10] sm:$0xff] %vm633, %v599
  %637 = vst.msk [vmem:[#allocation2 + $0x18] sm:$0xff] %vm633, %v600
  %638 = vst.msk [vmem:[#allocation2 + $0x20] sm:$0xff] %vm633, %v601
  %639 = vst.msk [vmem:[#allocation2 + $0x28] sm:$0xff] %vm633, %v602
  %640 = vst.msk [vmem:[#allocation2 + $0x30] sm:$0xff] %vm633, %v603
  %641 = vst.msk [vmem:[#allocation2 + $0x38] sm:$0xff] %vm633, %v604
  %642 = vst.msk [vmem:[#allocation2 + $0x40] sm:$0xff] %vm633, %v605
  %643 = vst.msk [vmem:[#allocation2 + $0x48] sm:$0xff] %vm633, %v606
  %644 = vst.msk [vmem:[#allocation2 + $0x50] sm:$0xff] %vm633, %v607
  %645 = vst.msk [vmem:[#allocation2 + $0x58] sm:$0xff] %vm633, %v608
  %646 = vst.msk [vmem:[#allocation2 + $0x60] sm:$0xff] %vm633, %v609
  %647 = vst.msk [vmem:[#allocation2 + $0x68] sm:$0xff] %vm633, %v610
  %648 = vst.msk [vmem:[#allocation2 + $0x70] sm:$0xff] %vm633, %v611
  %649 = vst.msk [vmem:[#allocation2 + $0x78] sm:$0xff] %vm633, %v612
  %650 = vst.msk [vmem:[#allocation2 + $0x80] sm:$0xff] %vm633, %v613
  %651 = vst.msk [vmem:[#allocation2 + $0x88] sm:$0xff] %vm633, %v614
  %652 = vst.msk [vmem:[#allocation2 + $0x90] sm:$0xff] %vm633, %v615
  %653 = vst.msk [vmem:[#allocation2 + $0x98] sm:$0xff] %vm633, %v616
  %654 = vst.msk [vmem:[#allocation2 + $0xa0] sm:$0xff] %vm633, %v617
  %655 = vst.msk [vmem:[#allocation2 + $0xa8] sm:$0xff] %vm633, %v618
  %656 = vst.msk [vmem:[#allocation2 + $0xb0] sm:$0xff] %vm633, %v619
  %657 = vst.msk [vmem:[#allocation2 + $0xb8] sm:$0xff] %vm633, %v620
  %658 = vst.msk [vmem:[#allocation2 + $0xc0] sm:$0xff] %vm633, %v621
  %659 = vst.msk [vmem:[#allocation2 + $0xc8] sm:$0xff] %vm633, %v622
  %660 = vst.msk [vmem:[#allocation2 + $0xd0] sm:$0xff] %vm633, %v623
  %661 = vst.msk [vmem:[#allocation2 + $0xd8] sm:$0xff] %vm633, %v624
  %662 = vst.msk [vmem:[#allocation2 + $0xe0] sm:$0xff] %vm633, %v625
  %663 = vst.msk [vmem:[#allocation2 + $0xe8] sm:$0xff] %vm633, %v626
  %664 = vst.msk [vmem:[#allocation2 + $0xf0] sm:$0xff] %vm633, %v627
  %665 = vst.msk [vmem:[#allocation2 + $0xf8] sm:$0xff] %vm633, %v628
  %666 = vst.msk [vmem:[#allocation2 + $0x100] sm:$0xff] %vm633, %v629
  %667 = vst.msk [vmem:[#allocation2 + $0x108] sm:$0xff] %vm633, %v630
  %668 = vst.msk [vmem:[#allocation2 + $0x110] sm:$0xff] %vm633, %v631
  %669 = vst.msk [vmem:[#allocation2 + $0x118] sm:$0xff] %vm633, %v632
  // Predicated region
  $region22: #{pspnet_forward.7} parent=0 // pred_check
    %p670 = pneg %p18
  $region23: #{pspnet_forward.7} parent=0 // pred_check_branch
    %672 = sbr.rel (%p670) target = $region25
  $region24: #{pspnet_forward.7} parent=0 // pred_region
    %v673 = vld [vmem:[#allocation2] sm:$0xff]
    %v674 = vld [vmem:[#allocation2 + $0x8] sm:$0xff]
    %v675 = vld [vmem:[#allocation2 + $0x10] sm:$0xff]
    %v676 = vld [vmem:[#allocation2 + $0x18] sm:$0xff]
    %v677 = vld [vmem:[#allocation2 + $0x20] sm:$0xff]
    %v678 = vld [vmem:[#allocation2 + $0x28] sm:$0xff]
    %v679 = vld [vmem:[#allocation2 + $0x30] sm:$0xff]
    %v680 = vld [vmem:[#allocation2 + $0x38] sm:$0xff]
    %v681 = vld [vmem:[#allocation2 + $0x40] sm:$0xff]
    %v682 = vld [vmem:[#allocation2 + $0x48] sm:$0xff]
    %v683 = vld [vmem:[#allocation2 + $0x50] sm:$0xff]
    %v684 = vld [vmem:[#allocation2 + $0x58] sm:$0xff]
    %v685 = vld [vmem:[#allocation2 + $0x60] sm:$0xff]
    %v686 = vld [vmem:[#allocation2 + $0x68] sm:$0xff]
    %v687 = vld [vmem:[#allocation2 + $0x70] sm:$0xff]
    %v688 = vld [vmem:[#allocation2 + $0x78] sm:$0xff]
    %v689 = vld [vmem:[#allocation2 + $0x80] sm:$0xff]
    %v690 = vld [vmem:[#allocation2 + $0x88] sm:$0xff]
    %v691 = vld [vmem:[#allocation2 + $0x90] sm:$0xff]
    %v692 = vld [vmem:[#allocation2 + $0x98] sm:$0xff]
    %v693 = vld [vmem:[#allocation2 + $0xa0] sm:$0xff]
    %v694 = vld [vmem:[#allocation2 + $0xa8] sm:$0xff]
    %v695 = vld [vmem:[#allocation2 + $0xb0] sm:$0xff]
    %v696 = vld [vmem:[#allocation2 + $0xb8] sm:$0xff]
    %v697 = vld [vmem:[#allocation2 + $0xc0] sm:$0xff]
    %v698 = vld [vmem:[#allocation2 + $0xc8] sm:$0xff]
    %v699 = vld [vmem:[#allocation2 + $0xd0] sm:$0xff]
    %v700 = vld [vmem:[#allocation2 + $0xd8] sm:$0xff]
    %v701 = vld [vmem:[#allocation2 + $0xe0] sm:$0xff]
    %v702 = vld [vmem:[#allocation2 + $0xe8] sm:$0xff]
    %v703 = vld [vmem:[#allocation2 + $0xf0] sm:$0xff]
    %v704 = vld [vmem:[#allocation2 + $0xf8] sm:$0xff]
    %v705 = vld [vmem:[#allocation2 + $0x100] sm:$0xff]
    %v706 = vld [vmem:[#allocation2 + $0x108] sm:$0xff]
    %v707 = vld [vmem:[#allocation2 + $0x110] sm:$0xff]
    %v708 = vld [vmem:[#allocation2 + $0x118] sm:$0xff]
    %v709 = vld [vmem:[%s2] sm:$0x1]
    %v711 = vlaneseq
    %v712 = vshrl.u32 %v711, 7
    %v713 = vsub.s32 0, %v712
    %v714 = vrot.slane %v709, %v713
    %v716 = vmul.f32 %v673, %v714
    %v717 = vmul.f32 %v674, %v714
    %v718 = vmul.f32 %v675, %v714
    %v719 = vmul.f32 %v676, %v714
    %v720 = vmul.f32 %v677, %v714
    %v721 = vmul.f32 %v678, %v714
    %v722 = vmul.f32 %v679, %v714
    %v723 = vmul.f32 %v680, %v714
    %v724 = vmul.f32 %v681, %v714
    %v725 = vmul.f32 %v682, %v714
    %v726 = vmul.f32 %v683, %v714
    %v727 = vmul.f32 %v684, %v714
    %v728 = vmul.f32 %v685, %v714
    %v729 = vmul.f32 %v686, %v714
    %v730 = vmul.f32 %v687, %v714
    %v731 = vmul.f32 %v688, %v714
    %v732 = vmul.f32 %v689, %v714
    %v733 = vmul.f32 %v690, %v714
    %v734 = vmul.f32 %v691, %v714
    %v735 = vmul.f32 %v692, %v714
    %v736 = vmul.f32 %v693, %v714
    %v737 = vmul.f32 %v694, %v714
    %v738 = vmul.f32 %v695, %v714
    %v739 = vmul.f32 %v696, %v714
    %v740 = vmul.f32 %v697, %v714
    %v741 = vmul.f32 %v698, %v714
    %v742 = vmul.f32 %v699, %v714
    %v743 = vmul.f32 %v700, %v714
    %v744 = vmul.f32 %v701, %v714
    %v745 = vmul.f32 %v702, %v714
    %v746 = vmul.f32 %v703, %v714
    %v747 = vmul.f32 %v704, %v714
    %v748 = vmul.f32 %v705, %v714
    %v749 = vmul.f32 %v706, %v714
    %v750 = vmul.f32 %v707, %v714
    %v751 = vmul.f32 %v708, %v714
    %v752 = vld [vmem:[%s3] sm:$0x1]
    %v754 = vlaneseq
    %v755 = vshrl.u32 %v754, 7
    %v756 = vsub.s32 0, %v755
    %v757 = vrot.slane %v752, %v756
    %v759 = vadd.f32 %v716, %v757
    %v760 = vadd.f32 %v717, %v757
    %v761 = vadd.f32 %v718, %v757
    %v762 = vadd.f32 %v719, %v757
    %v763 = vadd.f32 %v720, %v757
    %v764 = vadd.f32 %v721, %v757
    %v765 = vadd.f32 %v722, %v757
    %v766 = vadd.f32 %v723, %v757
    %v767 = vadd.f32 %v724, %v757
    %v768 = vadd.f32 %v725, %v757
    %v769 = vadd.f32 %v726, %v757
    %v770 = vadd.f32 %v727, %v757
    %v771 = vadd.f32 %v728, %v757
    %v772 = vadd.f32 %v729, %v757
    %v773 = vadd.f32 %v730, %v757
    %v774 = vadd.f32 %v731, %v757
    %v775 = vadd.f32 %v732, %v757
    %v776 = vadd.f32 %v733, %v757
    %v777 = vadd.f32 %v734, %v757
    %v778 = vadd.f32 %v735, %v757
    %v779 = vadd.f32 %v736, %v757
    %v780 = vadd.f32 %v737, %v757
    %v781 = vadd.f32 %v738, %v757
    %v782 = vadd.f32 %v739, %v757
    %v783 = vadd.f32 %v740, %v757
    %v784 = vadd.f32 %v741, %v757
    %v785 = vadd.f32 %v742, %v757
    %v786 = vadd.f32 %v743, %v757
    %v787 = vadd.f32 %v744, %v757
    %v788 = vadd.f32 %v745, %v757
    %v789 = vadd.f32 %v746, %v757
    %v790 = vadd.f32 %v747, %v757
    %v791 = vadd.f32 %v748, %v757
    %v792 = vadd.f32 %v749, %v757
    %v793 = vadd.f32 %v750, %v757
    %v794 = vadd.f32 %v751, %v757
    %v795 = vmax.f32 %v759, 0.0
    %v796 = vmax.f32 %v760, 0.0
    %v797 = vmax.f32 %v761, 0.0
    %v798 = vmax.f32 %v762, 0.0
    %v799 = vmax.f32 %v763, 0.0
    %v800 = vmax.f32 %v764, 0.0
    %v801 = vmax.f32 %v765, 0.0
    %v802 = vmax.f32 %v766, 0.0
    %v803 = vmax.f32 %v767, 0.0
    %v804 = vmax.f32 %v768, 0.0
    %v805 = vmax.f32 %v769, 0.0
    %v806 = vmax.f32 %v770, 0.0
    %v807 = vmax.f32 %v771, 0.0
    %v808 = vmax.f32 %v772, 0.0
    %v809 = vmax.f32 %v773, 0.0
    %v810 = vmax.f32 %v774, 0.0
    %v811 = vmax.f32 %v775, 0.0
    %v812 = vmax.f32 %v776, 0.0
    %v813 = vmax.f32 %v777, 0.0
    %v814 = vmax.f32 %v778, 0.0
    %v815 = vmax.f32 %v779, 0.0
    %v816 = vmax.f32 %v780, 0.0
    %v817 = vmax.f32 %v781, 0.0
    %v818 = vmax.f32 %v782, 0.0
    %v819 = vmax.f32 %v783, 0.0
    %v820 = vmax.f32 %v784, 0.0
    %v821 = vmax.f32 %v785, 0.0
    %v822 = vmax.f32 %v786, 0.0
    %v823 = vmax.f32 %v787, 0.0
    %v824 = vmax.f32 %v788, 0.0
    %v825 = vmax.f32 %v789, 0.0
    %v826 = vmax.f32 %v790, 0.0
    %v827 = vmax.f32 %v791, 0.0
    %v828 = vmax.f32 %v792, 0.0
    %v829 = vmax.f32 %v793, 0.0
    %v830 = vmax.f32 %v794, 0.0
    %v831 = vpack.c.bf16 %v796, %v795
    %v832 = vpack.c.bf16 %v798, %v797
    %v833 = vpack.c.bf16 %v800, %v799
    %v834 = vpack.c.bf16 %v802, %v801
    %v835 = vpack.c.bf16 %v804, %v803
    %v836 = vpack.c.bf16 %v806, %v805
    %v837 = vpack.c.bf16 %v808, %v807
    %v838 = vpack.c.bf16 %v810, %v809
    %v839 = vpack.c.bf16 %v812, %v811
    %v840 = vpack.c.bf16 %v814, %v813
    %v841 = vpack.c.bf16 %v816, %v815
    %v842 = vpack.c.bf16 %v818, %v817
    %v843 = vpack.c.bf16 %v820, %v819
    %v844 = vpack.c.bf16 %v822, %v821
    %v845 = vpack.c.bf16 %v824, %v823
    %v846 = vpack.c.bf16 %v826, %v825
    %v847 = vpack.c.bf16 %v828, %v827
    %v848 = vpack.c.bf16 %v830, %v829
    %v867 = vunpack.c.l.b16 %v831
    %v868 = vunpack.c.h.b16 %v831
    %v869 = vunpack.c.l.b16 %v832
    %v870 = vunpack.c.h.b16 %v832
    %v871 = vunpack.c.l.b16 %v833
    %v872 = vunpack.c.h.b16 %v833
    %v873 = vunpack.c.l.b16 %v834
    %v874 = vunpack.c.h.b16 %v834
    %v875 = vunpack.c.l.b16 %v835
    %v876 = vunpack.c.h.b16 %v835
    %v877 = vunpack.c.l.b16 %v836
    %v878 = vunpack.c.h.b16 %v836
    %v879 = vunpack.c.l.b16 %v837
    %v880 = vunpack.c.h.b16 %v837
    %v881 = vunpack.c.l.b16 %v838
    %v882 = vunpack.c.h.b16 %v838
    %v883 = vunpack.c.l.b16 %v839
    %v884 = vunpack.c.h.b16 %v839
    %v885 = vunpack.c.l.b16 %v840
    %v886 = vunpack.c.h.b16 %v840
    %v887 = vunpack.c.l.b16 %v841
    %v888 = vunpack.c.h.b16 %v841
    %v889 = vunpack.c.l.b16 %v842
    %v890 = vunpack.c.h.b16 %v842
    %v891 = vunpack.c.l.b16 %v843
    %v892 = vunpack.c.h.b16 %v843
    %v893 = vunpack.c.l.b16 %v844
    %v894 = vunpack.c.h.b16 %v844
    %v895 = vunpack.c.l.b16 %v845
    %v896 = vunpack.c.h.b16 %v845
    %v897 = vunpack.c.l.b16 %v846
    %v898 = vunpack.c.h.b16 %v846
    %v899 = vunpack.c.l.b16 %v847
    %v900 = vunpack.c.h.b16 %v847
    %v901 = vunpack.c.l.b16 %v848
    %v902 = vunpack.c.h.b16 %v848
    %v903 = vpack.c.b16 %v867, %v867
    %v904 = vpack.c.b16 %v868, %v868
    %v905 = vpack.c.b16 %v869, %v869
    %v906 = vpack.c.b16 %v870, %v870
    %v907 = vpack.c.b16 %v871, %v871
    %v908 = vpack.c.b16 %v872, %v872
    %v909 = vpack.c.b16 %v873, %v873
    %v910 = vpack.c.b16 %v874, %v874
    %v911 = vpack.c.b16 %v875, %v875
    %v912 = vpack.c.b16 %v876, %v876
    %v913 = vpack.c.b16 %v877, %v877
    %v914 = vpack.c.b16 %v878, %v878
    %v915 = vpack.c.b16 %v879, %v879
    %v916 = vpack.c.b16 %v880, %v880
    %v917 = vpack.c.b16 %v881, %v881
    %v918 = vpack.c.b16 %v882, %v882
    %v919 = vpack.c.b16 %v883, %v883
    %v920 = vpack.c.b16 %v884, %v884
    %v921 = vpack.c.b16 %v885, %v885
    %v922 = vpack.c.b16 %v886, %v886
    %v923 = vpack.c.b16 %v887, %v887
    %v924 = vpack.c.b16 %v888, %v888
    %v925 = vpack.c.b16 %v889, %v889
    %v926 = vpack.c.b16 %v890, %v890
    %v927 = vpack.c.b16 %v891, %v891
    %v928 = vpack.c.b16 %v892, %v892
    %v929 = vpack.c.b16 %v893, %v893
    %v930 = vpack.c.b16 %v894, %v894
    %v931 = vpack.c.b16 %v895, %v895
    %v932 = vpack.c.b16 %v896, %v896
    %v933 = vpack.c.b16 %v897, %v897
    %v934 = vpack.c.b16 %v898, %v898
    %v935 = vpack.c.b16 %v899, %v899
    %v936 = vpack.c.b16 %v900, %v900
    %v937 = vpack.c.b16 %v901, %v901
    %v938 = vpack.c.b16 %v902, %v902
    %vm975 = vcmask 257024
    %976 = vst.msk [vmem:[%s4] sm:$0xf] %vm975, %v903
    %977 = vst.msk [vmem:[%s4 + $0x4] sm:$0xf] %vm975, %v904
    %978 = vst.msk [vmem:[%s4 + $0x8] sm:$0xf] %vm975, %v905
    %979 = vst.msk [vmem:[%s4 + $0xc] sm:$0xf] %vm975, %v906
    %980 = vst.msk [vmem:[%s4 + $0x10] sm:$0xf] %vm975, %v907
    %981 = vst.msk [vmem:[%s4 + $0x14] sm:$0xf] %vm975, %v908
    %982 = vst.msk [vmem:[%s4 + $0x18] sm:$0xf] %vm975, %v909
    %983 = vst.msk [vmem:[%s4 + $0x1c] sm:$0xf] %vm975, %v910
    %984 = vst.msk [vmem:[%s4 + $0x20] sm:$0xf] %vm975, %v911
    %985 = vst.msk [vmem:[%s4 + $0x24] sm:$0xf] %vm975, %v912
    %986 = vst.msk [vmem:[%s4 + $0x28] sm:$0xf] %vm975, %v913
    %987 = vst.msk [vmem:[%s4 + $0x2c] sm:$0xf] %vm975, %v914
    %988 = vst.msk [vmem:[%s4 + $0x30] sm:$0xf] %vm975, %v915
    %989 = vst.msk [vmem:[%s4 + $0x34] sm:$0xf] %vm975, %v916
    %990 = vst.msk [vmem:[%s4 + $0x38] sm:$0xf] %vm975, %v917
    %991 = vst.msk [vmem:[%s4 + $0x3c] sm:$0xf] %vm975, %v918
    %992 = vst.msk [vmem:[%s4 + $0x40] sm:$0xf] %vm975, %v919
    %993 = vst.msk [vmem:[%s4 + $0x44] sm:$0xf] %vm975, %v920
    %994 = vst.msk [vmem:[%s4 + $0x48] sm:$0xf] %vm975, %v921
    %995 = vst.msk [vmem:[%s4 + $0x4c] sm:$0xf] %vm975, %v922
    %996 = vst.msk [vmem:[%s4 + $0x50] sm:$0xf] %vm975, %v923
    %997 = vst.msk [vmem:[%s4 + $0x54] sm:$0xf] %vm975, %v924
    %998 = vst.msk [vmem:[%s4 + $0x58] sm:$0xf] %vm975, %v925
    %999 = vst.msk [vmem:[%s4 + $0x5c] sm:$0xf] %vm975, %v926
    %1000 = vst.msk [vmem:[%s4 + $0x60] sm:$0xf] %vm975, %v927
    %1001 = vst.msk [vmem:[%s4 + $0x64] sm:$0xf] %vm975, %v928
    %1002 = vst.msk [vmem:[%s4 + $0x68] sm:$0xf] %vm975, %v929
    %1003 = vst.msk [vmem:[%s4 + $0x6c] sm:$0xf] %vm975, %v930
    %1004 = vst.msk [vmem:[%s4 + $0x70] sm:$0xf] %vm975, %v931
    %1005 = vst.msk [vmem:[%s4 + $0x74] sm:$0xf] %vm975, %v932
    %1006 = vst.msk [vmem:[%s4 + $0x78] sm:$0xf] %vm975, %v933
    %1007 = vst.msk [vmem:[%s4 + $0x7c] sm:$0xf] %vm975, %v934
    %1008 = vst.msk [vmem:[%s4 + $0x80] sm:$0xf] %vm975, %v935
    %1009 = vst.msk [vmem:[%s4 + $0x84] sm:$0xf] %vm975, %v936
    %1010 = vst.msk [vmem:[%s4 + $0x88] sm:$0xf] %vm975, %v937
    %1011 = vst.msk [vmem:[%s4 + $0x8c] sm:$0xf] %vm975, %v938
  $region25: #{pspnet_forward.7} parent=0 // pred_fallthru
    _
  // Predicated region
  $region26: #{pspnet_forward.7} parent=0 // pred_check
    _
  $region27: #{pspnet_forward.7} parent=0 // pred_check_branch
    %1013 = sbr.rel (0) target = $region29
  $region28: #{pspnet_forward.7} parent=0 // pred_region
    _
  $region29: #{pspnet_forward.7} parent=0 // pred_fallthru
    _
  // Predicated region
  $region30: #{pspnet_forward.7} parent=0 // pred_check
    _
  $region31: #{pspnet_forward.7} parent=0 // pred_check_branch
    %1015 = sbr.rel (0) target = $region33
  $region32: #{pspnet_forward.7} parent=0 // pred_region
    _
  $region33: #{pspnet_forward.7} parent=0 // pred_fallthru
    _

// kernel: pspnet_forward.8
$region0: #{pspnet_forward.8}
  #allocation0 [shape = 'u32[]', space=smem, size = 0x4, offset = 0x4, fixed_abs, tag = 'smem constant byte address 0x4 - core index']
  #allocation1 [shape = 'u32[144,128]{1,0:T(1,128)}', space=vmem, size = 0x12000, scoped, tag = 'internal scratch']
  #allocation2 [shape = 'f32[72,48]{1,0:T(8,128)}', space=vmem, size = 0x9000, scoped, tag = 'scratch operand']
  %s0 = inlined_call_operand.vmem [shape: bf16[72,288], index: 0, kind: input, shape index: {}]
  %s1 = inlined_call_operand.vmem [shape: bf16[288,48], index: 1, kind: input, shape index: {}]
  %s2 = inlined_call_operand.vmem [shape: f32[1,48], index: 2, kind: input, shape index: {}]
  %s3 = inlined_call_operand.vmem [shape: f32[1,48], index: 3, kind: input, shape index: {}]
  %s4 = inlined_call_operand.vmem [shape: bf16[72,48], index: 4, kind: output, shape index: {}]
  %s5 = sld [smem:[#allocation0]]
  $region34: #{pspnet_forward.8} parent=0
    _
  %s7 = ssub.s32 1, %s5
  %s8 = scalar_select 0, %s7, %s5
  // Predicated region
  $region2: #{pspnet_forward.8} parent=0 // pred_check
    _
  $region3: #{pspnet_forward.8} parent=0 // pred_check_branch
    %10 = sbr.rel (0) target = $region5
  $region4: #{pspnet_forward.8} parent=0 // pred_region
    _
  $region5: #{pspnet_forward.8} parent=0 // pred_fallthru
    _
  // Predicated region
  $region6: #{pspnet_forward.8} parent=0 // pred_check
    _
  $region7: #{pspnet_forward.8} parent=0 // pred_check_branch
    %12 = sbr.rel (0) target = $region9
  $region8: #{pspnet_forward.8} parent=0 // pred_region
    _
  $region9: #{pspnet_forward.8} parent=0 // pred_fallthru
    _
  // Predicated region
  $region10: #{pspnet_forward.8} parent=0 // pred_check
    _
  $region11: #{pspnet_forward.8} parent=0 // pred_check_branch
    %14 = sbr.rel (0) target = $region13
  $region12: #{pspnet_forward.8} parent=0 // pred_region
    _
  $region13: #{pspnet_forward.8} parent=0 // pred_fallthru
    _
  // Predicated region
  $region14: #{pspnet_forward.8} parent=0 // pred_check
    _
  $region15: #{pspnet_forward.8} parent=0 // pred_check_branch
    %16 = sbr.rel (0) target = $region17
  $region16: #{pspnet_forward.8} parent=0 // pred_region
    _
  $region17: #{pspnet_forward.8} parent=0 // pred_fallthru
    _
  %p18 = scmp.eq.s32.totalorder 0, 0
  // Predicated region
  $region18: #{pspnet_forward.8} parent=0 // pred_check
    %p19 = pneg %p18
  $region19: #{pspnet_forward.8} parent=0 // pred_check_branch
    %21 = sbr.rel (%p19) target = $region21
  $region20: #{pspnet_forward.8} parent=0 // pred_region
    %vm22 = vcmask 392192
    %23 = vst.msk [vmem:[#allocation2] sm:$0xff] %vm22, 0.0
    %24 = vst.msk [vmem:[#allocation2 + $0x8] sm:$0xff] %vm22, 0.0
    %25 = vst.msk [vmem:[#allocation2 + $0x10] sm:$0xff] %vm22, 0.0
    %26 = vst.msk [vmem:[#allocation2 + $0x18] sm:$0xff] %vm22, 0.0
    %27 = vst.msk [vmem:[#allocation2 + $0x20] sm:$0xff] %vm22, 0.0
    %28 = vst.msk [vmem:[#allocation2 + $0x28] sm:$0xff] %vm22, 0.0
    %29 = vst.msk [vmem:[#allocation2 + $0x30] sm:$0xff] %vm22, 0.0
    %30 = vst.msk [vmem:[#allocation2 + $0x38] sm:$0xff] %vm22, 0.0
    %31 = vst.msk [vmem:[#allocation2 + $0x40] sm:$0xff] %vm22, 0.0
  $region21: #{pspnet_forward.8} parent=0 // pred_fallthru
    _
  %v32 = vld [vmem:[#allocation2] sm:$0xff]
  %v33 = vld [vmem:[#allocation2 + $0x8] sm:$0xff]
  %v34 = vld [vmem:[#allocation2 + $0x10] sm:$0xff]
  %v35 = vld [vmem:[#allocation2 + $0x18] sm:$0xff]
  %v36 = vld [vmem:[#allocation2 + $0x20] sm:$0xff]
  %v37 = vld [vmem:[#allocation2 + $0x28] sm:$0xff]
  %v38 = vld [vmem:[#allocation2 + $0x30] sm:$0xff]
  %v39 = vld [vmem:[#allocation2 + $0x38] sm:$0xff]
  %v40 = vld [vmem:[#allocation2 + $0x40] sm:$0xff]
  %v41 = vld [vmem:[%s0] sm:$0xff]
  %v42 = vld [vmem:[%s0 + $0x8] sm:$0xf]
  %v43 = vld [vmem:[%s0 + $0xc] sm:$0xff]
  %v44 = vld [vmem:[%s0 + $0x14] sm:$0xf]
  %v45 = vld [vmem:[%s0 + $0x18] sm:$0xff]
  %v46 = vld [vmem:[%s0 + $0x20] sm:$0xf]
  %v47 = vld [vmem:[%s0 + $0x24] sm:$0xff]
  %v48 = vld [vmem:[%s0 + $0x2c] sm:$0xf]
  %v49 = vld [vmem:[%s0 + $0x30] sm:$0xff]
  %v50 = vld [vmem:[%s0 + $0x38] sm:$0xf]
  %v51 = vld [vmem:[%s0 + $0x3c] sm:$0xff]
  %v52 = vld [vmem:[%s0 + $0x44] sm:$0xf]
  %v53 = vld [vmem:[%s0 + $0x48] sm:$0xff]
  %v54 = vld [vmem:[%s0 + $0x50] sm:$0xf]
  %v55 = vld [vmem:[%s0 + $0x54] sm:$0xff]
  %v56 = vld [vmem:[%s0 + $0x5c] sm:$0xf]
  %v57 = vld [vmem:[%s0 + $0x60] sm:$0xff]
  %v58 = vld [vmem:[%s0 + $0x68] sm:$0xf]
  %v59 = vld [vmem:[%s1] sm:$0xf]
  %v60 = vld [vmem:[%s1 + $0x4] sm:$0xf]
  %v61 = vld [vmem:[%s1 + $0x8] sm:$0xf]
  %v62 = vld [vmem:[%s1 + $0xc] sm:$0xf]
  %v63 = vld [vmem:[%s1 + $0x10] sm:$0xf]
  %v64 = vld [vmem:[%s1 + $0x14] sm:$0xf]
  %v65 = vld [vmem:[%s1 + $0x18] sm:$0xf]
  %v66 = vld [vmem:[%s1 + $0x1c] sm:$0xf]
  %v67 = vld [vmem:[%s1 + $0x20] sm:$0xf]
  %v68 = vld [vmem:[%s1 + $0x24] sm:$0xf]
  %v69 = vld [vmem:[%s1 + $0x28] sm:$0xf]
  %v70 = vld [vmem:[%s1 + $0x2c] sm:$0xf]
  %v71 = vld [vmem:[%s1 + $0x30] sm:$0xf]
  %v72 = vld [vmem:[%s1 + $0x34] sm:$0xf]
  %v73 = vld [vmem:[%s1 + $0x38] sm:$0xf]
  %v74 = vld [vmem:[%s1 + $0x3c] sm:$0xf]
  %v75 = vld [vmem:[%s1 + $0x40] sm:$0xf]
  %v76 = vld [vmem:[%s1 + $0x44] sm:$0xf]
  %v77 = vld [vmem:[%s1 + $0x48] sm:$0xf]
  %v78 = vld [vmem:[%s1 + $0x4c] sm:$0xf]
  %v79 = vld [vmem:[%s1 + $0x50] sm:$0xf]
  %v80 = vld [vmem:[%s1 + $0x54] sm:$0xf]
  %v81 = vld [vmem:[%s1 + $0x58] sm:$0xf]
  %v82 = vld [vmem:[%s1 + $0x5c] sm:$0xf]
  %v83 = vld [vmem:[%s1 + $0x60] sm:$0xf]
  %v84 = vld [vmem:[%s1 + $0x64] sm:$0xf]
  %v85 = vld [vmem:[%s1 + $0x68] sm:$0xf]
  %v86 = vld [vmem:[%s1 + $0x6c] sm:$0xf]
  %v87 = vld [vmem:[%s1 + $0x70] sm:$0xf]
  %v88 = vld [vmem:[%s1 + $0x74] sm:$0xf]
  %v89 = vld [vmem:[%s1 + $0x78] sm:$0xf]
  %v90 = vld [vmem:[%s1 + $0x7c] sm:$0xf]
  %v91 = vld [vmem:[%s1 + $0x80] sm:$0xf]
  %v92 = vld [vmem:[%s1 + $0x84] sm:$0xf]
  %v93 = vld [vmem:[%s1 + $0x88] sm:$0xf]
  %v94 = vld [vmem:[%s1 + $0x8c] sm:$0xf]
  %v113 = vunpack.c.l.b16 %v41
  %v114 = vunpack.c.h.b16 %v41
  %v115 = vunpack.c.l.b16 %v42
  %v116 = vunpack.c.l.b16 %v43
  %v117 = vunpack.c.h.b16 %v43
  %v118 = vunpack.c.l.b16 %v44
  %v119 = vunpack.c.l.b16 %v45
  %v120 = vunpack.c.h.b16 %v45
  %v121 = vunpack.c.l.b16 %v46
  %v122 = vunpack.c.l.b16 %v47
  %v123 = vunpack.c.h.b16 %v47
  %v124 = vunpack.c.l.b16 %v48
  %v125 = vunpack.c.l.b16 %v49
  %v126 = vunpack.c.h.b16 %v49
  %v127 = vunpack.c.l.b16 %v50
  %v128 = vunpack.c.l.b16 %v51
  %v129 = vunpack.c.h.b16 %v51
  %v130 = vunpack.c.l.b16 %v52
  %v131 = vunpack.c.l.b16 %v53
  %v132 = vunpack.c.h.b16 %v53
  %v133 = vunpack.c.l.b16 %v54
  %v134 = vunpack.c.l.b16 %v55
  %v135 = vunpack.c.h.b16 %v55
  %v136 = vunpack.c.l.b16 %v56
  %v137 = vunpack.c.l.b16 %v57
  %v138 = vunpack.c.h.b16 %v57
  %v139 = vunpack.c.l.b16 %v58
  %v140 = vpack.c.b16 %v116, %v113
  %v141 = vpack.c.b16 %v117, %v114
  %v142 = vpack.c.b16 %v118, %v115
  %v143 = vpack.c.b16 %v122, %v119
  %v144 = vpack.c.b16 %v123, %v120
  %v145 = vpack.c.b16 %v124, %v121
  %v146 = vpack.c.b16 %v128, %v125
  %v147 = vpack.c.b16 %v129, %v126
  %v148 = vpack.c.b16 %v130, %v127
  %v149 = vpack.c.b16 %v134, %v131
  %v150 = vpack.c.b16 %v135, %v132
  %v151 = vpack.c.b16 %v136, %v133
  %v152 = vpack.c.b16 %v137, %v137
  %v153 = vpack.c.b16 %v138, %v138
  %v154 = vpack.c.b16 %v139, %v139
  %v201 = vunpack.c.l.b16 %v59
  %v202 = vunpack.c.l.b16 %v60
  %v203 = vunpack.c.l.b16 %v61
  %v204 = vunpack.c.l.b16 %v62
  %v205 = vunpack.c.l.b16 %v63
  %v206 = vunpack.c.l.b16 %v64
  %v207 = vunpack.c.l.b16 %v65
  %v208 = vunpack.c.l.b16 %v66
  %v209 = vunpack.c.l.b16 %v67
  %v210 = vunpack.c.l.b16 %v68
  %v211 = vunpack.c.l.b16 %v69
  %v212 = vunpack.c.l.b16 %v70
  %v213 = vunpack.c.l.b16 %v71
  %v214 = vunpack.c.l.b16 %v72
  %v215 = vunpack.c.l.b16 %v73
  %v216 = vunpack.c.l.b16 %v74
  %v217 = vunpack.c.l.b16 %v75
  %v218 = vunpack.c.l.b16 %v76
  %v219 = vunpack.c.l.b16 %v77
  %v220 = vunpack.c.l.b16 %v78
  %v221 = vunpack.c.l.b16 %v79
  %v222 = vunpack.c.l.b16 %v80
  %v223 = vunpack.c.l.b16 %v81
  %v224 = vunpack.c.l.b16 %v82
  %v225 = vunpack.c.l.b16 %v83
  %v226 = vunpack.c.l.b16 %v84
  %v227 = vunpack.c.l.b16 %v85
  %v228 = vunpack.c.l.b16 %v86
  %v229 = vunpack.c.l.b16 %v87
  %v230 = vunpack.c.l.b16 %v88
  %v231 = vunpack.c.l.b16 %v89
  %v232 = vunpack.c.l.b16 %v90
  %v233 = vunpack.c.l.b16 %v91
  %v234 = vunpack.c.l.b16 %v92
  %v235 = vunpack.c.l.b16 %v93
  %v236 = vunpack.c.l.b16 %v94
  %v237 = vpack.c.b16 %v202, %v201
  %v238 = vpack.c.b16 %v204, %v203
  %v239 = vpack.c.b16 %v206, %v205
  %v240 = vpack.c.b16 %v208, %v207
  %v241 = vpack.c.b16 %v210, %v209
  %v242 = vpack.c.b16 %v212, %v211
  %v243 = vpack.c.b16 %v214, %v213
  %v244 = vpack.c.b16 %v216, %v215
  %v245 = vpack.c.b16 %v218, %v217
  %v246 = vpack.c.b16 %v220, %v219
  %v247 = vpack.c.b16 %v222, %v221
  %v248 = vpack.c.b16 %v224, %v223
  %v249 = vpack.c.b16 %v226, %v225
  %v250 = vpack.c.b16 %v228, %v227
  %v251 = vpack.c.b16 %v230, %v229
  %v252 = vpack.c.b16 %v232, %v231
  %v253 = vpack.c.b16 %v234, %v233
  %v254 = vpack.c.b16 %v236, %v235
  %vm273 = vcmask 261120
  %v275 = vsel %vm273, %v142, 0
  %v278 = vsel %vm273, %v145, 0
  %v281 = vsel %vm273, %v148, 0
  %v284 = vsel %vm273, %v151, 0
  %v287 = vsel %vm273, %v154, 0
  %289 = vmatprep.subr.bf16.mxu0 0
  %290 = vmatpush1.bf16.msra.mxu0 %v237
  %291 = vmatprep.subr.bf16.mxu0 0
  %292 = vmatpush1.bf16.msra.mxu0 %v238
  %293 = vmatprep.subr.bf16.mxu0 0
  %294 = vmatpush1.bf16.msra.mxu0 %v239
  %295 = vmatprep.subr.bf16.mxu0 0
  %296 = vmatpush1.bf16.msra.mxu0 %v240
  %297 = vmatprep.subr.bf16.mxu0 0
  %298 = vmatpush1.bf16.msra.mxu0 %v241
  %299 = vmatprep.subr.bf16.mxu0 0
  %300 = vmatpush1.bf16.msra.mxu0 %v242
  %301 = vmatprep.subr.bf16.mxu0 0
  %302 = vmatpush1.bf16.msra.mxu0 %v243
  %303 = vmatprep.subr.bf16.mxu0 0
  %304 = vmatpush1.bf16.msra.mxu0 %v244
  %305 = vmatprep.subr.bf16.mxu0 0
  %306 = vmatpush1.bf16.msra.mxu0 %v245
  %307 = vmatprep.subr.bf16.mxu0 0
  %308 = vmatpush1.bf16.msra.mxu0 %v246
  %309 = vmatprep.subr.bf16.mxu0 0
  %310 = vmatpush1.bf16.msra.mxu0 %v247
  %311 = vmatprep.subr.bf16.mxu0 0
  %312 = vmatpush1.bf16.msra.mxu0 %v248
  %313 = vmatprep.subr.bf16.mxu0 0
  %314 = vmatpush1.bf16.msra.mxu0 %v249
  %315 = vmatprep.subr.bf16.mxu0 0
  %316 = vmatpush1.bf16.msra.mxu0 %v250
  %317 = vmatprep.subr.bf16.mxu0 0
  %318 = vmatpush1.bf16.msra.mxu0 %v251
  %319 = vmatprep.subr.bf16.mxu0 0
  %320 = vmatpush1.bf16.msra.mxu0 %v252
  %321 = vmatprep.mubr.bf16.mxu0 %v141
  %322 = vmatmul.mubr.bf16.gmra.mrb[0].mxu0 %v140
  %v323 = vpop.f32.mrb[0].mxu0
  %v324 = vadd.f32 0.0, %v323
  %v325 = vpop.f32.mrb[0].mxu0
  %v326 = vpop.f32.mrb[0].mxu0
  %v327 = vadd.f32 0.0, %v326
  %v328 = vpop.f32.mrb[0].mxu0
  %329 = vmatprep.mubr.bf16.mxu0 %v144
  %330 = vmatmul.mubr.bf16.gmra.mrb[0].mxu0 %v143
  %v331 = vpop.f32.mrb[0].mxu0
  %v332 = vadd.f32 0.0, %v331
  %v333 = vpop.f32.mrb[0].mxu0
  %v334 = vpop.f32.mrb[0].mxu0
  %v335 = vadd.f32 0.0, %v334
  %v336 = vpop.f32.mrb[0].mxu0
  %337 = vmatprep.mubr.bf16.mxu0 %v147
  %338 = vmatmul.mubr.bf16.gmra.mrb[0].mxu0 %v146
  %v339 = vpop.f32.mrb[0].mxu0
  %v340 = vadd.f32 0.0, %v339
  %v341 = vpop.f32.mrb[0].mxu0
  %v342 = vpop.f32.mrb[0].mxu0
  %v343 = vadd.f32 0.0, %v342
  %v344 = vpop.f32.mrb[0].mxu0
  %345 = vmatprep.mubr.bf16.mxu0 %v150
  %346 = vmatmul.mubr.bf16.gmra.mrb[0].mxu0 %v149
  %v347 = vpop.f32.mrb[0].mxu0
  %v348 = vadd.f32 0.0, %v347
  %v349 = vpop.f32.mrb[0].mxu0
  %v350 = vpop.f32.mrb[0].mxu0
  %v351 = vadd.f32 0.0, %v350
  %v352 = vpop.f32.mrb[0].mxu0
  %353 = vmatprep.mubr.bf16.mxu0 %v153
  %354 = vmatmul.mubr.bf16.gmra.mrb[0].mxu0 %v152
  %v355 = vpop.f32.mrb[0].mxu0
  %v356 = vadd.f32 0.0, %v355
  %v357 = vpop.f32.mrb[0].mxu0
  %v358 = vpop.f32.mrb[0].mxu0
  %v359 = vpop.f32.mrb[0].mxu0
  %360 = vdwg.mxu0
  %361 = vmatprep.subr.bf16.mxu0 0
  %362 = vmatpush1.bf16.msra.mxu0 %v253
  %363 = vmatprep.subr.bf16.mxu0 0
  %364 = vmatpush1.bf16.msra.mxu0 %v254
  %365 = vmatprep.subr.bf16.mxu0 0
  %366 = vmatpush1.bf16.msra.mxu0 0
  %367 = vmatprep.subr.bf16.mxu0 0
  %368 = vmatpush1.bf16.msra.mxu0 0
  %369 = vmatprep.subr.bf16.mxu0 0
  %370 = vmatpush1.bf16.msra.mxu0 0
  %371 = vmatprep.subr.bf16.mxu0 0
  %372 = vmatpush1.bf16.msra.mxu0 0
  %373 = vmatprep.subr.bf16.mxu0 0
  %374 = vmatpush1.bf16.msra.mxu0 0
  %375 = vmatprep.subr.bf16.mxu0 0
  %376 = vmatpush1.bf16.msra.mxu0 0
  %377 = vmatprep.subr.bf16.mxu0 0
  %378 = vmatpush1.bf16.msra.mxu0 0
  %379 = vmatprep.subr.bf16.mxu0 0
  %380 = vmatpush1.bf16.msra.mxu0 0
  %381 = vmatprep.subr.bf16.mxu0 0
  %382 = vmatpush1.bf16.msra.mxu0 0
  %383 = vmatprep.subr.bf16.mxu0 0
  %384 = vmatpush1.bf16.msra.mxu0 0
  %385 = vmatprep.subr.bf16.mxu0 0
  %386 = vmatpush1.bf16.msra.mxu0 0
  %387 = vmatprep.subr.bf16.mxu0 0
  %388 = vmatpush1.bf16.msra.mxu0 0
  %389 = vmatprep.subr.bf16.mxu0 0
  %390 = vmatpush1.bf16.msra.mxu0 0
  %391 = vmatprep.subr.bf16.mxu0 0
  %392 = vmatpush1.bf16.msra.mxu0 0
  %393 = vmatprep.mubr.bf16.mxu0 0
  %394 = vmatmul.mubr.bf16.gmra.mrb[0].mxu0 %v275
  %v395 = vpop.f32.mrb[0].mxu0
  %v396 = vadd.f32 %v324, %v395
  %v397 = vpop.f32.mrb[0].mxu0
  %v398 = vpop.f32.mrb[0].mxu0
  %v399 = vadd.f32 %v327, %v398
  %v400 = vpop.f32.mrb[0].mxu0
  %401 = vmatprep.mubr.bf16.mxu0 0
  %402 = vmatmul.mubr.bf16.gmra.mrb[0].mxu0 %v278
  %v403 = vpop.f32.mrb[0].mxu0
  %v404 = vadd.f32 %v332, %v403
  %v405 = vpop.f32.mrb[0].mxu0
  %v406 = vpop.f32.mrb[0].mxu0
  %v407 = vadd.f32 %v335, %v406
  %v408 = vpop.f32.mrb[0].mxu0
  %409 = vmatprep.mubr.bf16.mxu0 0
  %410 = vmatmul.mubr.bf16.gmra.mrb[0].mxu0 %v281
  %v411 = vpop.f32.mrb[0].mxu0
  %v412 = vadd.f32 %v340, %v411
  %v413 = vpop.f32.mrb[0].mxu0
  %v414 = vpop.f32.mrb[0].mxu0
  %v415 = vadd.f32 %v343, %v414
  %v416 = vpop.f32.mrb[0].mxu0
  %417 = vmatprep.mubr.bf16.mxu0 0
  %418 = vmatmul.mubr.bf16.gmra.mrb[0].mxu0 %v284
  %v419 = vpop.f32.mrb[0].mxu0
  %v420 = vadd.f32 %v348, %v419
  %v421 = vpop.f32.mrb[0].mxu0
  %v422 = vpop.f32.mrb[0].mxu0
  %v423 = vadd.f32 %v351, %v422
  %v424 = vpop.f32.mrb[0].mxu0
  %425 = vmatprep.mubr.bf16.mxu0 0
  %426 = vmatmul.mubr.bf16.gmra.mrb[0].mxu0 %v287
  %v427 = vpop.f32.mrb[0].mxu0
  %v428 = vadd.f32 %v356, %v427
  %v429 = vpop.f32.mrb[0].mxu0
  %v430 = vpop.f32.mrb[0].mxu0
  %v431 = vpop.f32.mrb[0].mxu0
  %432 = vdwg.mxu0
  %v433 = vadd.f32 %v32, %v396
  %v434 = vadd.f32 %v33, %v399
  %v435 = vadd.f32 %v34, %v404
  %v436 = vadd.f32 %v35, %v407
  %v437 = vadd.f32 %v36, %v412
  %v438 = vadd.f32 %v37, %v415
  %v439 = vadd.f32 %v38, %v420
  %v440 = vadd.f32 %v39, %v423
  %v441 = vadd.f32 %v40, %v428
  %vm442 = vcmask 392192
  %443 = vst.msk [vmem:[#allocation2] sm:$0xff] %vm442, %v433
  %444 = vst.msk [vmem:[#allocation2 + $0x8] sm:$0xff] %vm442, %v434
  %445 = vst.msk [vmem:[#allocation2 + $0x10] sm:$0xff] %vm442, %v435
  %446 = vst.msk [vmem:[#allocation2 + $0x18] sm:$0xff] %vm442, %v436
  %447 = vst.msk [vmem:[#allocation2 + $0x20] sm:$0xff] %vm442, %v437
  %448 = vst.msk [vmem:[#allocation2 + $0x28] sm:$0xff] %vm442, %v438
  %449 = vst.msk [vmem:[#allocation2 + $0x30] sm:$0xff] %vm442, %v439
  %450 = vst.msk [vmem:[#allocation2 + $0x38] sm:$0xff] %vm442, %v440
  %451 = vst.msk [vmem:[#allocation2 + $0x40] sm:$0xff] %vm442, %v441
  // Predicated region
  $region22: #{pspnet_forward.8} parent=0 // pred_check
    %p452 = pneg %p18
  $region23: #{pspnet_forward.8} parent=0 // pred_check_branch
    %454 = sbr.rel (%p452) target = $region25
  $region24: #{pspnet_forward.8} parent=0 // pred_region
    %v455 = vld [vmem:[#allocation2] sm:$0xff]
    %v456 = vld [vmem:[#allocation2 + $0x8] sm:$0xff]
    %v457 = vld [vmem:[#allocation2 + $0x10] sm:$0xff]
    %v458 = vld [vmem:[#allocation2 + $0x18] sm:$0xff]
    %v459 = vld [vmem:[#allocation2 + $0x20] sm:$0xff]
    %v460 = vld [vmem:[#allocation2 + $0x28] sm:$0xff]
    %v461 = vld [vmem:[#allocation2 + $0x30] sm:$0xff]
    %v462 = vld [vmem:[#allocation2 + $0x38] sm:$0xff]
    %v463 = vld [vmem:[#allocation2 + $0x40] sm:$0xff]
    %v464 = vld [vmem:[%s2] sm:$0x1]
    %v466 = vlaneseq
    %v467 = vshrl.u32 %v466, 7
    %v468 = vsub.s32 0, %v467
    %v469 = vrot.slane %v464, %v468
    %v471 = vmul.f32 %v455, %v469
    %v472 = vmul.f32 %v456, %v469
    %v473 = vmul.f32 %v457, %v469
    %v474 = vmul.f32 %v458, %v469
    %v475 = vmul.f32 %v459, %v469
    %v476 = vmul.f32 %v460, %v469
    %v477 = vmul.f32 %v461, %v469
    %v478 = vmul.f32 %v462, %v469
    %v479 = vmul.f32 %v463, %v469
    %v480 = vld [vmem:[%s3] sm:$0x1]
    %v482 = vlaneseq
    %v483 = vshrl.u32 %v482, 7
    %v484 = vsub.s32 0, %v483
    %v485 = vrot.slane %v480, %v484
    %v487 = vadd.f32 %v471, %v485
    %v488 = vadd.f32 %v472, %v485
    %v489 = vadd.f32 %v473, %v485
    %v490 = vadd.f32 %v474, %v485
    %v491 = vadd.f32 %v475, %v485
    %v492 = vadd.f32 %v476, %v485
    %v493 = vadd.f32 %v477, %v485
    %v494 = vadd.f32 %v478, %v485
    %v495 = vadd.f32 %v479, %v485
    %v496 = vmax.f32 %v487, 0.0
    %v497 = vmax.f32 %v488, 0.0
    %v498 = vmax.f32 %v489, 0.0
    %v499 = vmax.f32 %v490, 0.0
    %v500 = vmax.f32 %v491, 0.0
    %v501 = vmax.f32 %v492, 0.0
    %v502 = vmax.f32 %v493, 0.0
    %v503 = vmax.f32 %v494, 0.0
    %v504 = vmax.f32 %v495, 0.0
    %v505 = vpack.c.bf16 %v497, %v496
    %v506 = vpack.c.bf16 %v499, %v498
    %v507 = vpack.c.bf16 %v501, %v500
    %v508 = vpack.c.bf16 %v503, %v502
    %v509 = vpack.c.bf16 %v504, %v504
    %v515 = vunpack.c.l.b16 %v505
    %v516 = vunpack.c.h.b16 %v505
    %v517 = vunpack.c.l.b16 %v506
    %v518 = vunpack.c.h.b16 %v506
    %v519 = vunpack.c.l.b16 %v507
    %v520 = vunpack.c.h.b16 %v507
    %v521 = vunpack.c.l.b16 %v508
    %v522 = vunpack.c.h.b16 %v508
    %v523 = vunpack.c.l.b16 %v509
    %v524 = vpack.c.b16 %v515, %v515
    %v525 = vpack.c.b16 %v516, %v516
    %v526 = vpack.c.b16 %v517, %v517
    %v527 = vpack.c.b16 %v518, %v518
    %v528 = vpack.c.b16 %v519, %v519
    %v529 = vpack.c.b16 %v520, %v520
    %v530 = vpack.c.b16 %v521, %v521
    %v531 = vpack.c.b16 %v522, %v522
    %v532 = vpack.c.b16 %v523, %v523
    %vm542 = vcmask 388096
    %543 = vst.msk [vmem:[%s4] sm:$0xf] %vm542, %v524
    %544 = vst.msk [vmem:[%s4 + $0x4] sm:$0xf] %vm542, %v525
    %545 = vst.msk [vmem:[%s4 + $0x8] sm:$0xf] %vm542, %v526
    %546 = vst.msk [vmem:[%s4 + $0xc] sm:$0xf] %vm542, %v527
    %547 = vst.msk [vmem:[%s4 + $0x10] sm:$0xf] %vm542, %v528
    %548 = vst.msk [vmem:[%s4 + $0x14] sm:$0xf] %vm542, %v529
    %549 = vst.msk [vmem:[%s4 + $0x18] sm:$0xf] %vm542, %v530
    %550 = vst.msk [vmem:[%s4 + $0x1c] sm:$0xf] %vm542, %v531
    %551 = vst.msk [vmem:[%s4 + $0x20] sm:$0xf] %vm542, %v532
  $region25: #{pspnet_forward.8} parent=0 // pred_fallthru
    _
  // Predicated region
  $region26: #{pspnet_forward.8} parent=0 // pred_check
    _
  $region27: #{pspnet_forward.8} parent=0 // pred_check_branch
    %553 = sbr.rel (0) target = $region29
  $region28: #{pspnet_forward.8} parent=0 // pred_region
    _
  $region29: #{pspnet_forward.8} parent=0 // pred_fallthru
    _
  // Predicated region
  $region30: #{pspnet_forward.8} parent=0 // pred_check
    _
  $region31: #{pspnet_forward.8} parent=0 // pred_check_branch
    %555 = sbr.rel (0) target = $region33
  $region32: #{pspnet_forward.8} parent=0 // pred_region
    _
  $region33: #{pspnet_forward.8} parent=0 // pred_fallthru
    _

// kernel: pspnet_forward.9
$region0: #{pspnet_forward.9}
  #allocation0 [shape = 'u32[]', space=smem, size = 0x4, offset = 0x4, fixed_abs, tag = 'smem constant byte address 0x4 - core index']
  #allocation1 [shape = 'u32[144,128]{1,0:T(1,128)}', space=vmem, size = 0x12000, scoped, tag = 'internal scratch']
  #allocation2 [shape = 'f32[72,256]{1,0:T(8,128)}', space=vmem, size = 0x12000, scoped, tag = 'scratch operand']
  %s0 = inlined_call_operand.vmem [shape: bf16[72,96], index: 0, kind: input, shape index: {}]
  %s1 = inlined_call_operand.vmem [shape: bf16[96,512], index: 1, kind: input, shape index: {}]
  %s2 = inlined_call_operand.vmem [shape: f32[1,512], index: 2, kind: input, shape index: {}]
  %s3 = inlined_call_operand.vmem [shape: f32[1,512], index: 3, kind: input, shape index: {}]
  %s4 = inlined_call_operand.vmem [shape: bf16[72,512], index: 4, kind: output, shape index: {}]
  %s5 = sld [smem:[#allocation0]]
  $region129: #{pspnet_forward.9} parent=0
    _
  %s7 = ssub.s32 1, %s5
  %s8 = scalar_select 0, %s7, %s5
  $region1: #{pspnet_forward.9} parent=0
    #allocation3 [shape = 'u8[98304]{0}', space=vmem, size = 0x18000, scoped, tag = 'input window, operand 1']
    #allocation4 [shape = 'u8[73728]{0}', space=vmem, size = 0x12000, scoped, tag = 'output window, operand 0']
    loop: start=0, step=1, limit=4
    $region2: #{pspnet_forward.9} parent=1 // loop_pre_header
      _
    $region3: #{pspnet_forward.9} parent=1 // loop_header
      %s10 = sphi 0, %s14
      %p11 = scmp.ge.s32.totalorder %s10, 4
      %s17 = sphi 0, %s36
      %s18 = sphi 0, %s32
      %s19 = sphi 0, %s28
      %s20 = sphi 0, %s17
      %s21 = sphi 0, %s18
      %s22 = sphi 0, %s19
      %s23 = sphi 0, %s20
      %s24 = sphi 0, %s21
      %s25 = sphi 0, %s22
      %s41 = sphi 0, %s43
      %s44 = sphi 0, %s41
      %s45 = sphi 0, %s44
      %s61 = sphi 0, %s45
      %s69 = sphi 0, %s71
      %s72 = sphi 0, %s69
      %s73 = sphi 0, %s72
      %s89 = sphi 0, %s73
      %s95 = sphi 0, %s97
      %s98 = sphi 0, %s95
      %s99 = sphi 0, %s98
      %s115 = sphi 0, %s99
      %s121 = sphi 0, %s123
      %s124 = sphi 0, %s121
      %s125 = sphi 0, %s124
      %s141 = sphi 0, %s125
      %s149 = sphi 0, %s151
      %s152 = sphi 0, %s149
      %s153 = sphi 0, %s152
      %s169 = sphi 0, %s153
    $region4: #{pspnet_forward.9} parent=1 // loop_header_branch
      %13 = sbr.rel (%p11) target = $region8
    $region5: #{pspnet_forward.9} parent=1 // loop_body
      %s15 = ssub.s32 %s10, 1
      %s16 = ssub.s32 %s10, 2
      %s26 = sadd.s32 1, %s19
      %p27 = scmp.ge.s32.totalorder %s26, 1
      %s28 = scalar_select %p27, 0, %s26
      %s29 = sadd.s32 1, %s18
      %s30 = scalar_select %p27, %s29, %s18
      %p31 = scmp.ge.s32.totalorder %s30, 2
      %s32 = scalar_select %p31, 0, %s30
      %s33 = sadd.s32 1, %s17
      %s34 = scalar_select %p31, %s33, %s17
      %p35 = scmp.ge.s32.totalorder %s34, 1
      %s36 = scalar_select %p35, 0, %s34
      %s37 = ssub.s32 %s17, %s36
      %s38 = ssub.s32 %s19, %s28
      %s39 = sor.u32 %s37, %s38
      %p40 = scmp.eq.s32.totalorder %s39, 0
      %s42 = sadd.s32 %s41, 1
      %s43 = scalar_select %p40, %s41, %s42
      %p46 = pneg %p40
      %p47 = scmp.eq.s32.totalorder %s10, 1
      %p48 = por %p46, %p47
      %p49 = scmp.ne.s32.totalorder %s41, %s44
      %p50 = scmp.eq.s32.totalorder %s10, 0
      %p51 = por %p49, %p50
      %p52 = scmp.ne.s32.totalorder %s41, %s44
      %p53 = scmp.eq.s32.totalorder %s15, 1
      %p54 = por %p52, %p53
      %p55 = scmp.ne.s32.totalorder %s44, %s45
      %p56 = scmp.eq.s32.totalorder %s15, 0
      %p57 = por %p55, %p56
      %p58 = scmp.ne.s32.totalorder %s44, %s45
      %p59 = scmp.eq.s32.totalorder %s16, 1
      %p60 = por %p58, %p59
      %p62 = scmp.ne.s32.totalorder %s45, %s61
      %p63 = scmp.eq.s32.totalorder %s16, 0
      %p64 = por %p62, %p63
      %s65 = ssub.s32 %s19, %s28
      %s66 = ssub.s32 %s18, %s32
      %s67 = sor.u32 %s65, %s66
      %p68 = scmp.eq.s32.totalorder %s67, 0
      %s70 = sadd.s32 %s69, 1
      %s71 = scalar_select %p68, %s69, %s70
      %p74 = pneg %p68
      %p75 = scmp.eq.s32.totalorder %s10, 1
      %p76 = por %p74, %p75
      %p77 = scmp.ne.s32.totalorder %s69, %s72
      %p78 = scmp.eq.s32.totalorder %s10, 0
      %p79 = por %p77, %p78
      %p80 = scmp.ne.s32.totalorder %s69, %s72
      %p81 = scmp.eq.s32.totalorder %s15, 1
      %p82 = por %p80, %p81
      %p83 = scmp.ne.s32.totalorder %s72, %s73
      %p84 = scmp.eq.s32.totalorder %s15, 0
      %p85 = por %p83, %p84
      %p86 = scmp.ne.s32.totalorder %s72, %s73
      %p87 = scmp.eq.s32.totalorder %s16, 1
      %p88 = por %p86, %p87
      %p90 = scmp.ne.s32.totalorder %s73, %s89
      %p91 = scmp.eq.s32.totalorder %s16, 0
      %p92 = por %p90, %p91
      %s93 = ssub.s32 %s18, %s32
      %p94 = scmp.eq.s32.totalorder %s93, 0
      %s96 = sadd.s32 %s95, 1
      %s97 = scalar_select %p94, %s95, %s96
      %p100 = pneg %p94
      %p101 = scmp.eq.s32.totalorder %s10, 1
      %p102 = por %p100, %p101
      %p103 = scmp.ne.s32.totalorder %s95, %s98
      %p104 = scmp.eq.s32.totalorder %s10, 0
      %p105 = por %p103, %p104
      %p106 = scmp.ne.s32.totalorder %s95, %s98
      %p107 = scmp.eq.s32.totalorder %s15, 1
      %p108 = por %p106, %p107
      %p109 = scmp.ne.s32.totalorder %s98, %s99
      %p110 = scmp.eq.s32.totalorder %s15, 0
      %p111 = por %p109, %p110
      %p112 = scmp.ne.s32.totalorder %s98, %s99
      %p113 = scmp.eq.s32.totalorder %s16, 1
      %p114 = por %p112, %p113
      %p116 = scmp.ne.s32.totalorder %s99, %s115
      %p117 = scmp.eq.s32.totalorder %s16, 0
      %p118 = por %p116, %p117
      %s119 = ssub.s32 %s18, %s32
      %p120 = scmp.eq.s32.totalorder %s119, 0
      %s122 = sadd.s32 %s121, 1
      %s123 = scalar_select %p120, %s121, %s122
      %p126 = pneg %p120
      %p127 = scmp.eq.s32.totalorder %s10, 1
      %p128 = por %p126, %p127
      %p129 = scmp.ne.s32.totalorder %s121, %s124
      %p130 = scmp.eq.s32.totalorder %s10, 0
      %p131 = por %p129, %p130
      %p132 = scmp.ne.s32.totalorder %s121, %s124
      %p133 = scmp.eq.s32.totalorder %s15, 1
      %p134 = por %p132, %p133
      %p135 = scmp.ne.s32.totalorder %s124, %s125
      %p136 = scmp.eq.s32.totalorder %s15, 0
      %p137 = por %p135, %p136
      %p138 = scmp.ne.s32.totalorder %s124, %s125
      %p139 = scmp.eq.s32.totalorder %s16, 1
      %p140 = por %p138, %p139
      %p142 = scmp.ne.s32.totalorder %s125, %s141
      %p143 = scmp.eq.s32.totalorder %s16, 0
      %p144 = por %p142, %p143
      %s145 = ssub.s32 %s17, %s36
      %s146 = ssub.s32 %s18, %s32
      %s147 = sor.u32 %s145, %s146
      %p148 = scmp.eq.s32.totalorder %s147, 0
      %s150 = sadd.s32 %s149, 1
      %s151 = scalar_select %p148, %s149, %s150
      %p154 = pneg %p148
      %p155 = scmp.eq.s32.totalorder %s10, 1
      %p156 = por %p154, %p155
      %p157 = scmp.ne.s32.totalorder %s149, %s152
      %p158 = scmp.eq.s32.totalorder %s10, 0
      %p159 = por %p157, %p158
      %p160 = scmp.ne.s32.totalorder %s149, %s152
      %p161 = scmp.eq.s32.totalorder %s15, 1
      %p162 = por %p160, %p161
      %p163 = scmp.ne.s32.totalorder %s152, %s153
      %p164 = scmp.eq.s32.totalorder %s15, 0
      %p165 = por %p163, %p164
      %p166 = scmp.ne.s32.totalorder %s152, %s153
      %p167 = scmp.eq.s32.totalorder %s16, 1
      %p168 = por %p166, %p167
      %p170 = scmp.ne.s32.totalorder %s153, %s169
      %p171 = scmp.eq.s32.totalorder %s16, 0
      %p172 = por %p170, %p171
      %p173 = scmp.le.s32.totalorder 1, %s10
      %p174 = scmp.lt.s32.totalorder %s10, 3
      %p175 = pnand %p173, %p174
      %p176 = pneg %p175
      // Predicated region
      $region9: #{pspnet_forward.9} parent=5 // pred_check
        _
      $region10: #{pspnet_forward.9} parent=5 // pred_check_branch
        %178 = sbr.rel (%p175) target = $region12
      $region11: #{pspnet_forward.9} parent=5 // pred_region
        %s179 = ssub.s32 %s10, 1
        // Predicated region
        $region13: #{pspnet_forward.9} parent=11 // pred_check
          %p180 = pneg %p57
        $region14: #{pspnet_forward.9} parent=11 // pred_check_branch
          %182 = sbr.rel (%p180) target = $region16
        $region15: #{pspnet_forward.9} parent=11 // pred_region
          %s183 = smul.u32 9, %s20
          %p184 = scmp.lt.s32.totalorder %s183, 8
          %s185 = scalar_select %p184, %s183, 8
          %p186 = scmp.lt.s32.totalorder %s22, 0
          %s187 = scalar_select %p186, %s22, 0
          %s188 = sadd.s32 %s187, %s185
          %s189 = smul.addr %s188, 4
          %s190 = scalar_lea.vmem %s0, %s189
          %s191 = smul.u32 9, %s20
        $region16: #{pspnet_forward.9} parent=11 // pred_fallthru
          _
      $region12: #{pspnet_forward.9} parent=5 // pred_fallthru
        _
      %p192 = scmp.lt.s32.totalorder %s10, 2
      // Predicated region
      $region17: #{pspnet_forward.9} parent=5 // pred_check
        %p193 = pneg %p192
      $region18: #{pspnet_forward.9} parent=5 // pred_check_branch
        %195 = sbr.rel (%p193) target = $region20
      $region19: #{pspnet_forward.9} parent=5 // pred_region
        // Predicated region
        $region21: #{pspnet_forward.9} parent=19 // pred_check
          %p196 = pneg %p79
        $region22: #{pspnet_forward.9} parent=19 // pred_check_branch
          %198 = sbr.rel (%p196) target = $region24
        $region23: #{pspnet_forward.9} parent=19 // pred_region
          %s199 = sand.u32 %s69, 1
          %s200 = sand.u32 %s69, 1
          %s201 = smul.addr %s200, 96
          %s202 = scalar_lea.vmem [#allocation3], %s201
          %s203 = smul.u32 12, %s19
          %s204 = smul.u32 2, %s18
          %s205 = smul.addr %s203, 4
          %s206 = sadd.s32 %s204, %s205
          %s207 = smul.addr %s206, 4
          %s208 = scalar_lea.vmem %s1, %s207
          // Predicated region
          $region25: #{pspnet_forward.9} parent=23 // pred_check
            _
          $region26: #{pspnet_forward.9} parent=23 // pred_check_branch
            %210 = sbr.rel (0) target = $region28
          $region27: #{pspnet_forward.9} parent=23 // pred_region
            // Predicated region
            $region29: #{pspnet_forward.9} parent=27 // pred_check
              _
            $region30: #{pspnet_forward.9} parent=27 // pred_check_branch
              %212 = sbr.rel (0) target = $region32
            $region31: #{pspnet_forward.9} parent=27 // pred_region
              // Predicated region
              $region44: #{pspnet_forward.9} parent=31 // pred_check
                _
              $region45: #{pspnet_forward.9} parent=31 // pred_check_branch
                %249 = sbr.rel (0) target = $region47
              $region46: #{pspnet_forward.9} parent=31 // pred_region
                loop: start=0, step=1, limit=1
                $region48: #{pspnet_forward.9} parent=46 // loop_pre_header
                  _
                $region49: #{pspnet_forward.9} parent=46 // loop_header
                  %s251 = sphi 0, %s255
                  %p252 = scmp.ge.s32.totalorder %s251, 1
                  %s256 = sphi %s208, %s208
                  %s257 = sphi %s202, %s202
                $region50: #{pspnet_forward.9} parent=46 // loop_header_branch
                  %254 = sbr.rel (%p252) target = $region54
                $region51: #{pspnet_forward.9} parent=46 // loop_body
                  %v258 = vld [vmem:[%s256] sm:$0xff]
                  %259 = vst [vmem:[%s257] sm:$0xff] %v258
                  %v260 = vld [vmem:[%s256 + $0x10] sm:$0xff]
                  %261 = vst [vmem:[%s257 + $0x8] sm:$0xff] %v260
                  %v262 = vld [vmem:[%s256 + $0x20] sm:$0xff]
                  %263 = vst [vmem:[%s257 + $0x10] sm:$0xff] %v262
                  %v264 = vld [vmem:[%s256 + $0x30] sm:$0xff]
                  %265 = vst [vmem:[%s257 + $0x18] sm:$0xff] %v264
                  %v266 = vld [vmem:[%s256 + $0x40] sm:$0xff]
                  %267 = vst [vmem:[%s257 + $0x20] sm:$0xff] %v266
                  %v268 = vld [vmem:[%s256 + $0x50] sm:$0xff]
                  %269 = vst [vmem:[%s257 + $0x28] sm:$0xff] %v268
                  %v270 = vld [vmem:[%s256 + $0x60] sm:$0xff]
                  %271 = vst [vmem:[%s257 + $0x30] sm:$0xff] %v270
                  %v272 = vld [vmem:[%s256 + $0x70] sm:$0xff]
                  %273 = vst [vmem:[%s257 + $0x38] sm:$0xff] %v272
                  %v274 = vld [vmem:[%s256 + $0x80] sm:$0xff]
                  %275 = vst [vmem:[%s257 + $0x40] sm:$0xff] %v274
                  %v276 = vld [vmem:[%s256 + $0x90] sm:$0xff]
                  %277 = vst [vmem:[%s257 + $0x48] sm:$0xff] %v276
                  %v278 = vld [vmem:[%s256 + $0xa0] sm:$0xff]
                  %279 = vst [vmem:[%s257 + $0x50] sm:$0xff] %v278
                  %v280 = vld [vmem:[%s256 + $0xb0] sm:$0xff]
                  %281 = vst [vmem:[%s257 + $0x58] sm:$0xff] %v280
                $region52: #{pspnet_forward.9} parent=46 // loop_footer
                  %s255 = sadd.s32 1, %s251
                $region53: #{pspnet_forward.9} parent=46 // loop_footer_branch
                  %250 = sbr.rel target = $region49
                $region54: #{pspnet_forward.9} parent=46 // loop_exit
                  _
              $region47: #{pspnet_forward.9} parent=31 // pred_fallthru
                _
              // Predicated region
              $region55: #{pspnet_forward.9} parent=31 // pred_check
                _
              $region56: #{pspnet_forward.9} parent=31 // pred_check_branch
                %283 = sbr.rel target = $region58
              $region57: #{pspnet_forward.9} parent=31 // pred_region
                _
              $region58: #{pspnet_forward.9} parent=31 // pred_fallthru
                _
            $region32: #{pspnet_forward.9} parent=27 // pred_fallthru
              _
            // Predicated region
            $region33: #{pspnet_forward.9} parent=27 // pred_check
              _
            $region34: #{pspnet_forward.9} parent=27 // pred_check_branch
              %214 = sbr.rel target = $region36
            $region35: #{pspnet_forward.9} parent=27 // pred_region
              loop: start=0, step=1, limit=1
              $region37: #{pspnet_forward.9} parent=35 // loop_pre_header
                _
              $region38: #{pspnet_forward.9} parent=35 // loop_header
                %s217 = sphi 0, %s221
                %p218 = scmp.ge.s32.totalorder %s217, 1
                %s222 = sphi %s208, %s208
                %s223 = sphi %s202, %s202
              $region39: #{pspnet_forward.9} parent=35 // loop_header_branch
                %220 = sbr.rel (%p218) target = $region43
              $region40: #{pspnet_forward.9} parent=35 // loop_body
                %v224 = vld [vmem:[%s222] sm:$0xff]
                %225 = vst [vmem:[%s223] sm:$0xff] %v224
                %v226 = vld [vmem:[%s222 + $0x10] sm:$0xff]
                %227 = vst [vmem:[%s223 + $0x8] sm:$0xff] %v226
                %v228 = vld [vmem:[%s222 + $0x20] sm:$0xff]
                %229 = vst [vmem:[%s223 + $0x10] sm:$0xff] %v228
                %v230 = vld [vmem:[%s222 + $0x30] sm:$0xff]
                %231 = vst [vmem:[%s223 + $0x18] sm:$0xff] %v230
                %v232 = vld [vmem:[%s222 + $0x40] sm:$0xff]
                %233 = vst [vmem:[%s223 + $0x20] sm:$0xff] %v232
                %v234 = vld [vmem:[%s222 + $0x50] sm:$0xff]
                %235 = vst [vmem:[%s223 + $0x28] sm:$0xff] %v234
                %v236 = vld [vmem:[%s222 + $0x60] sm:$0xff]
                %237 = vst [vmem:[%s223 + $0x30] sm:$0xff] %v236
                %v238 = vld [vmem:[%s222 + $0x70] sm:$0xff]
                %239 = vst [vmem:[%s223 + $0x38] sm:$0xff] %v238
                %v240 = vld [vmem:[%s222 + $0x80] sm:$0xff]
                %241 = vst [vmem:[%s223 + $0x40] sm:$0xff] %v240
                %v242 = vld [vmem:[%s222 + $0x90] sm:$0xff]
                %243 = vst [vmem:[%s223 + $0x48] sm:$0xff] %v242
                %v244 = vld [vmem:[%s222 + $0xa0] sm:$0xff]
                %245 = vst [vmem:[%s223 + $0x50] sm:$0xff] %v244
                %v246 = vld [vmem:[%s222 + $0xb0] sm:$0xff]
                %247 = vst [vmem:[%s223 + $0x58] sm:$0xff] %v246
              $region41: #{pspnet_forward.9} parent=35 // loop_footer
                %s221 = sadd.s32 1, %s217
              $region42: #{pspnet_forward.9} parent=35 // loop_footer_branch
                %216 = sbr.rel target = $region38
              $region43: #{pspnet_forward.9} parent=35 // loop_exit
                _
            $region36: #{pspnet_forward.9} parent=27 // pred_fallthru
              _
          $region28: #{pspnet_forward.9} parent=23 // pred_fallthru
            _
          %284 = vnop
        $region24: #{pspnet_forward.9} parent=19 // pred_fallthru
          _
        // Predicated region
        $region59: #{pspnet_forward.9} parent=19 // pred_check
          %p285 = pneg %p105
        $region60: #{pspnet_forward.9} parent=19 // pred_check_branch
          %287 = sbr.rel (%p285) target = $region62
        $region61: #{pspnet_forward.9} parent=19 // pred_region
          %s288 = smul.u32 2, %s18
          %p289 = scmp.lt.s32.totalorder %s288, 3
          %s290 = scalar_select %p289, %s288, 3
          %s291 = scalar_lea.vmem %s2, %s290
          %s292 = smul.u32 2, %s18
        $region62: #{pspnet_forward.9} parent=19 // pred_fallthru
          _
        // Predicated region
        $region63: #{pspnet_forward.9} parent=19 // pred_check
          %p293 = pneg %p131
        $region64: #{pspnet_forward.9} parent=19 // pred_check_branch
          %295 = sbr.rel (%p293) target = $region66
        $region65: #{pspnet_forward.9} parent=19 // pred_region
          %s296 = smul.u32 2, %s18
          %p297 = scmp.lt.s32.totalorder %s296, 3
          %s298 = scalar_select %p297, %s296, 3
          %s299 = scalar_lea.vmem %s3, %s298
          %s300 = smul.u32 2, %s18
        $region66: #{pspnet_forward.9} parent=19 // pred_fallthru
          _
      $region20: #{pspnet_forward.9} parent=5 // pred_fallthru
        _
      %p301 = scmp.le.s32.totalorder 1, %s10
      %p302 = scmp.lt.s32.totalorder %s10, 3
      %p303 = pnand %p301, %p302
      %p304 = pneg %p303
      // Predicated region
      $region67: #{pspnet_forward.9} parent=5 // pred_check
        _
      $region68: #{pspnet_forward.9} parent=5 // pred_check_branch
        %306 = sbr.rel (%p303) target = $region70
      $region69: #{pspnet_forward.9} parent=5 // pred_region
        %s307 = ssub.s32 %s10, 1
        %s308 = sand.u32 %s72, 1
        %s309 = sand.u32 %s72, 1
        %s310 = smul.addr %s309, 96
        %s311 = scalar_lea.vmem [#allocation3], %s310
        // Predicated region
        $region71: #{pspnet_forward.9} parent=69 // pred_check
          %p312 = pneg %p85
        $region72: #{pspnet_forward.9} parent=69 // pred_check_branch
          %314 = sbr.rel (%p312) target = $region74
        $region73: #{pspnet_forward.9} parent=69 // pred_region
          _
        $region74: #{pspnet_forward.9} parent=69 // pred_fallthru
          _
        %s315 = smul.u32 9, %s20
        %p316 = scmp.lt.s32.totalorder %s315, 8
        %s317 = scalar_select %p316, %s315, 8
        %p318 = scmp.lt.s32.totalorder %s22, 0
        %s319 = scalar_select %p318, %s22, 0
        %s320 = sadd.s32 %s319, %s317
        %s321 = smul.addr %s320, 4
        %s322 = scalar_lea.vmem %s0, %s321
        %p323 = pneg %p57
        %p324 = pneg %p54
        %s325 = sand.u32 %s72, 1
        %s326 = sand.u32 %s72, 1
        %s327 = smul.addr %s326, 96
        %s328 = scalar_lea.vmem [#allocation3], %s327
        %p329 = pneg %p85
        %p330 = pneg %p82
        %s331 = smul.u32 2, %s21
        %p332 = scmp.lt.s32.totalorder %s331, 3
        %s333 = scalar_select %p332, %s331, 3
        %s334 = scalar_lea.vmem %s2, %s333
        %p335 = pneg %p111
        %p336 = pneg %p108
        %s337 = smul.u32 2, %s21
        %p338 = scmp.lt.s32.totalorder %s337, 3
        %s339 = scalar_select %p338, %s337, 3
        %s340 = scalar_lea.vmem %s3, %s339
        %p341 = pneg %p137
        %p342 = pneg %p134
        %p343 = pneg %p165
        %p344 = pneg %p162
        %s345 = sand.u32 %s152, 1
        %s346 = sand.u32 %s152, 1
        %s347 = smul.addr %s346, 72
        %s348 = scalar_lea.vmem [#allocation4], %s347
        %s349 = smul.u32 9, %s20
        %p350 = scmp.lt.s32.totalorder %s349, 8
        %s351 = scalar_select %p350, %s349, 8
        %p352 = scmp.lt.s32.totalorder %s22, 0
        %s353 = scalar_select %p352, %s22, 0
        %s354 = sadd.s32 %s353, %s351
        %s355 = smul.addr %s354, 4
        %s356 = scalar_lea.vmem %s0, %s355
        %s357 = smul.u32 9, %s20
        %s358 = smul.u32 12, %s22
        %s359 = smul.u32 2, %s21
        %s360 = smul.u32 2, %s21
        %p361 = scmp.lt.s32.totalorder %s360, 3
        %s362 = scalar_select %p361, %s360, 3
        %s363 = scalar_lea.vmem %s2, %s362
        %s364 = smul.u32 2, %s21
        %s365 = smul.u32 2, %s21
        %p366 = scmp.lt.s32.totalorder %s365, 3
        %s367 = scalar_select %p366, %s365, 3
        %s368 = scalar_lea.vmem %s3, %s367
        %s369 = smul.u32 2, %s21
        %s370 = smul.u32 9, %s20
        %s371 = smul.u32 2, %s21
        %p373 = scmp.eq.s32.totalorder %s22, 0
        // Predicated region
        $region75: #{pspnet_forward.9} parent=69 // pred_check
          %p374 = pneg %p373
        $region76: #{pspnet_forward.9} parent=69 // pred_check_branch
          %376 = sbr.rel (%p374) target = $region78
        $region77: #{pspnet_forward.9} parent=69 // pred_region
          %377 = vst [vmem:[#allocation2] sm:$0xff] 0.0
          %378 = vst [vmem:[#allocation2 + $0x8] sm:$0xff] 0.0
          %379 = vst [vmem:[#allocation2 + $0x10] sm:$0xff] 0.0
          %380 = vst [vmem:[#allocation2 + $0x18] sm:$0xff] 0.0
          %381 = vst [vmem:[#allocation2 + $0x20] sm:$0xff] 0.0
          %382 = vst [vmem:[#allocation2 + $0x28] sm:$0xff] 0.0
          %383 = vst [vmem:[#allocation2 + $0x30] sm:$0xff] 0.0
          %384 = vst [vmem:[#allocation2 + $0x38] sm:$0xff] 0.0
          %385 = vst [vmem:[#allocation2 + $0x40] sm:$0xff] 0.0
          %386 = vst [vmem:[#allocation2 + $0x48] sm:$0xff] 0.0
          %387 = vst [vmem:[#allocation2 + $0x50] sm:$0xff] 0.0
          %388 = vst [vmem:[#allocation2 + $0x58] sm:$0xff] 0.0
          %389 = vst [vmem:[#allocation2 + $0x60] sm:$0xff] 0.0
          %390 = vst [vmem:[#allocation2 + $0x68] sm:$0xff] 0.0
          %391 = vst [vmem:[#allocation2 + $0x70] sm:$0xff] 0.0
          %392 = vst [vmem:[#allocation2 + $0x78] sm:$0xff] 0.0
          %393 = vst [vmem:[#allocation2 + $0x80] sm:$0xff] 0.0
          %394 = vst [vmem:[#allocation2 + $0x88] sm:$0xff] 0.0
        $region78: #{pspnet_forward.9} parent=69 // pred_fallthru
          _
        %v395 = vld [vmem:[#allocation2] sm:$0xff]
        %v396 = vld [vmem:[#allocation2 + $0x8] sm:$0xff]
        %v397 = vld [vmem:[#allocation2 + $0x10] sm:$0xff]
        %v398 = vld [vmem:[#allocation2 + $0x18] sm:$0xff]
        %v399 = vld [vmem:[#allocation2 + $0x20] sm:$0xff]
        %v400 = vld [vmem:[#allocation2 + $0x28] sm:$0xff]
        %v401 = vld [vmem:[#allocation2 + $0x30] sm:$0xff]
        %v402 = vld [vmem:[#allocation2 + $0x38] sm:$0xff]
        %v403 = vld [vmem:[#allocation2 + $0x40] sm:$0xff]
        %v404 = vld [vmem:[#allocation2 + $0x48] sm:$0xff]
        %v405 = vld [vmem:[#allocation2 + $0x50] sm:$0xff]
        %v406 = vld [vmem:[#allocation2 + $0x58] sm:$0xff]
        %v407 = vld [vmem:[#allocation2 + $0x60] sm:$0xff]
        %v408 = vld [vmem:[#allocation2 + $0x68] sm:$0xff]
        %v409 = vld [vmem:[#allocation2 + $0x70] sm:$0xff]
        %v410 = vld [vmem:[#allocation2 + $0x78] sm:$0xff]
        %v411 = vld [vmem:[#allocation2 + $0x80] sm:$0xff]
        %v412 = vld [vmem:[#allocation2 + $0x88] sm:$0xff]
        %v413 = vld [vmem:[%s356] sm:$0xf]
        %v414 = vld [vmem:[%s356 + $0x4] sm:$0xf]
        %v415 = vld [vmem:[%s356 + $0x8] sm:$0xf]
        %v416 = vld [vmem:[%s356 + $0xc] sm:$0xf]
        %v417 = vld [vmem:[%s356 + $0x10] sm:$0xf]
        %v418 = vld [vmem:[%s356 + $0x14] sm:$0xf]
        %v419 = vld [vmem:[%s356 + $0x18] sm:$0xf]
        %v420 = vld [vmem:[%s356 + $0x1c] sm:$0xf]
        %v421 = vld [vmem:[%s356 + $0x20] sm:$0xf]
        %v422 = vld [vmem:[%s311] sm:$0xff]
        %v423 = vld [vmem:[%s311 + $0x8] sm:$0xff]
        %v424 = vld [vmem:[%s311 + $0x10] sm:$0xff]
        %v425 = vld [vmem:[%s311 + $0x18] sm:$0xff]
        %v426 = vld [vmem:[%s311 + $0x20] sm:$0xff]
        %v427 = vld [vmem:[%s311 + $0x28] sm:$0xff]
        %v428 = vld [vmem:[%s311 + $0x30] sm:$0xff]
        %v429 = vld [vmem:[%s311 + $0x38] sm:$0xff]
        %v430 = vld [vmem:[%s311 + $0x40] sm:$0xff]
        %v431 = vld [vmem:[%s311 + $0x48] sm:$0xff]
        %v432 = vld [vmem:[%s311 + $0x50] sm:$0xff]
        %v433 = vld [vmem:[%s311 + $0x58] sm:$0xff]
        %v443 = vunpack.c.l.b16 %v413
        %v444 = vunpack.c.l.b16 %v414
        %v445 = vunpack.c.l.b16 %v415
        %v446 = vunpack.c.l.b16 %v416
        %v447 = vunpack.c.l.b16 %v417
        %v448 = vunpack.c.l.b16 %v418
        %v449 = vunpack.c.l.b16 %v419
        %v450 = vunpack.c.l.b16 %v420
        %v451 = vunpack.c.l.b16 %v421
        %v452 = vpack.c.b16 %v444, %v443
        %v453 = vpack.c.b16 %v446, %v445
        %v454 = vpack.c.b16 %v448, %v447
        %v455 = vpack.c.b16 %v450, %v449
        %v456 = vpack.c.b16 %v451, %v451
        %v469 = vunpack.c.l.b16 %v422
        %v470 = vunpack.c.h.b16 %v422
        %v471 = vunpack.c.l.b16 %v423
        %v472 = vunpack.c.h.b16 %v423
        %v473 = vunpack.c.l.b16 %v424
        %v474 = vunpack.c.h.b16 %v424
        %v475 = vunpack.c.l.b16 %v425
        %v476 = vunpack.c.h.b16 %v425
        %v477 = vunpack.c.l.b16 %v426
        %v478 = vunpack.c.h.b16 %v426
        %v479 = vunpack.c.l.b16 %v427
        %v480 = vunpack.c.h.b16 %v427
        %v481 = vunpack.c.l.b16 %v428
        %v482 = vunpack.c.h.b16 %v428
        %v483 = vunpack.c.l.b16 %v429
        %v484 = vunpack.c.h.b16 %v429
        %v485 = vunpack.c.l.b16 %v430
        %v486 = vunpack.c.h.b16 %v430
        %v487 = vunpack.c.l.b16 %v431
        %v488 = vunpack.c.h.b16 %v431
        %v489 = vunpack.c.l.b16 %v432
        %v490 = vunpack.c.h.b16 %v432
        %v491 = vunpack.c.l.b16 %v433
        %v492 = vunpack.c.h.b16 %v433
        %v493 = vpack.c.b16 %v471, %v469
        %v494 = vpack.c.b16 %v472, %v470
        %v495 = vpack.c.b16 %v475, %v473
        %v496 = vpack.c.b16 %v476, %v474
        %v497 = vpack.c.b16 %v479, %v477
        %v498 = vpack.c.b16 %v480, %v478
        %v499 = vpack.c.b16 %v483, %v481
        %v500 = vpack.c.b16 %v484, %v482
        %v501 = vpack.c.b16 %v487, %v485
        %v502 = vpack.c.b16 %v488, %v486
        %v503 = vpack.c.b16 %v491, %v489
        %v504 = vpack.c.b16 %v492, %v490
        %vm517 = vcmask 785408
        %v519 = vsel %vm517, %v452, 0
        %v522 = vsel %vm517, %v453, 0
        %v525 = vsel %vm517, %v454, 0
        %v528 = vsel %vm517, %v455, 0
        %v531 = vsel %vm517, %v456, 0
        %533 = vmatprep.subr.bf16.mxu0 %v494
        %534 = vmatpush1.bf16.msra.mxu0 %v493
        %535 = vmatprep.subr.bf16.mxu0 %v496
        %536 = vmatpush1.bf16.msra.mxu0 %v495
        %537 = vmatprep.subr.bf16.mxu0 %v498
        %538 = vmatpush1.bf16.msra.mxu0 %v497
        %539 = vmatprep.subr.bf16.mxu0 %v500
        %540 = vmatpush1.bf16.msra.mxu0 %v499
        %541 = vmatprep.subr.bf16.mxu0 %v502
        %542 = vmatpush1.bf16.msra.mxu0 %v501
        %543 = vmatprep.subr.bf16.mxu0 %v504
        %544 = vmatpush1.bf16.msra.mxu0 %v503
        %545 = vmatprep.subr.bf16.mxu0 0
        %546 = vmatpush1.bf16.msra.mxu0 0
        %547 = vmatprep.subr.bf16.mxu0 0
        %548 = vmatpush1.bf16.msra.mxu0 0
        %549 = vmatprep.subr.bf16.mxu0 0
        %550 = vmatpush1.bf16.msra.mxu0 0
        %551 = vmatprep.subr.bf16.mxu0 0
        %552 = vmatpush1.bf16.msra.mxu0 0
        %553 = vmatprep.subr.bf16.mxu0 0
        %554 = vmatpush1.bf16.msra.mxu0 0
        %555 = vmatprep.subr.bf16.mxu0 0
        %556 = vmatpush1.bf16.msra.mxu0 0
        %557 = vmatprep.subr.bf16.mxu0 0
        %558 = vmatpush1.bf16.msra.mxu0 0
        %559 = vmatprep.subr.bf16.mxu0 0
        %560 = vmatpush1.bf16.msra.mxu0 0
        %561 = vmatprep.subr.bf16.mxu0 0
        %562 = vmatpush1.bf16.msra.mxu0 0
        %563 = vmatprep.subr.bf16.mxu0 0
        %564 = vmatpush1.bf16.msra.mxu0 0
        %565 = vmatprep.mubr.bf16.mxu0 0
        %566 = vmatmul.mubr.bf16.gmra.mrb[0].mxu0 %v519
        %v567 = vpop.f32.mrb[0].mxu0
        %v568 = vadd.f32 0.0, %v567
        %v569 = vpop.f32.mrb[0].mxu0
        %v570 = vadd.f32 0.0, %v569
        %v571 = vpop.f32.mrb[0].mxu0
        %v572 = vadd.f32 0.0, %v571
        %v573 = vpop.f32.mrb[0].mxu0
        %v574 = vadd.f32 0.0, %v573
        %575 = vmatprep.mubr.bf16.mxu0 0
        %576 = vmatmul.mubr.bf16.gmra.mrb[0].mxu0 %v522
        %v577 = vpop.f32.mrb[0].mxu0
        %v578 = vadd.f32 0.0, %v577
        %v579 = vpop.f32.mrb[0].mxu0
        %v580 = vadd.f32 0.0, %v579
        %v581 = vpop.f32.mrb[0].mxu0
        %v582 = vadd.f32 0.0, %v581
        %v583 = vpop.f32.mrb[0].mxu0
        %v584 = vadd.f32 0.0, %v583
        %585 = vmatprep.mubr.bf16.mxu0 0
        %586 = vmatmul.mubr.bf16.gmra.mrb[0].mxu0 %v525
        %v587 = vpop.f32.mrb[0].mxu0
        %v588 = vadd.f32 0.0, %v587
        %v589 = vpop.f32.mrb[0].mxu0
        %v590 = vadd.f32 0.0, %v589
        %v591 = vpop.f32.mrb[0].mxu0
        %v592 = vadd.f32 0.0, %v591
        %v593 = vpop.f32.mrb[0].mxu0
        %v594 = vadd.f32 0.0, %v593
        %595 = vmatprep.mubr.bf16.mxu0 0
        %596 = vmatmul.mubr.bf16.gmra.mrb[0].mxu0 %v528
        %v597 = vpop.f32.mrb[0].mxu0
        %v598 = vadd.f32 0.0, %v597
        %v599 = vpop.f32.mrb[0].mxu0
        %v600 = vadd.f32 0.0, %v599
        %v601 = vpop.f32.mrb[0].mxu0
        %v602 = vadd.f32 0.0, %v601
        %v603 = vpop.f32.mrb[0].mxu0
        %v604 = vadd.f32 0.0, %v603
        %605 = vmatprep.mubr.bf16.mxu0 0
        %606 = vmatmul.mubr.bf16.gmra.mrb[0].mxu0 %v531
        %v607 = vpop.f32.mrb[0].mxu0
        %v608 = vadd.f32 0.0, %v607
        %v609 = vpop.f32.mrb[0].mxu0
        %v610 = vadd.f32 0.0, %v609
        %v611 = vpop.f32.mrb[0].mxu0
        %v612 = vpop.f32.mrb[0].mxu0
        %613 = vdwg.mxu0
        %v614 = vadd.f32 %v395, %v568
        %v615 = vadd.f32 %v396, %v570
        %v616 = vadd.f32 %v397, %v572
        %v617 = vadd.f32 %v398, %v574
        %v618 = vadd.f32 %v399, %v578
        %v619 = vadd.f32 %v400, %v580
        %v620 = vadd.f32 %v401, %v582
        %v621 = vadd.f32 %v402, %v584
        %v622 = vadd.f32 %v403, %v588
        %v623 = vadd.f32 %v404, %v590
        %v624 = vadd.f32 %v405, %v592
        %v625 = vadd.f32 %v406, %v594
        %v626 = vadd.f32 %v407, %v598
        %v627 = vadd.f32 %v408, %v600
        %v628 = vadd.f32 %v409, %v602
        %v629 = vadd.f32 %v410, %v604
        %v630 = vadd.f32 %v411, %v608
        %v631 = vadd.f32 %v412, %v610
        %632 = vst [vmem:[#allocation2] sm:$0xff] %v614
        %633 = vst [vmem:[#allocation2 + $0x8] sm:$0xff] %v615
        %634 = vst [vmem:[#allocation2 + $0x10] sm:$0xff] %v616
        %635 = vst [vmem:[#allocation2 + $0x18] sm:$0xff] %v617
        %636 = vst [vmem:[#allocation2 + $0x20] sm:$0xff] %v618
        %637 = vst [vmem:[#allocation2 + $0x28] sm:$0xff] %v619
        %638 = vst [vmem:[#allocation2 + $0x30] sm:$0xff] %v620
        %639 = vst [vmem:[#allocation2 + $0x38] sm:$0xff] %v621
        %640 = vst [vmem:[#allocation2 + $0x40] sm:$0xff] %v622
        %641 = vst [vmem:[#allocation2 + $0x48] sm:$0xff] %v623
        %642 = vst [vmem:[#allocation2 + $0x50] sm:$0xff] %v624
        %643 = vst [vmem:[#allocation2 + $0x58] sm:$0xff] %v625
        %644 = vst [vmem:[#allocation2 + $0x60] sm:$0xff] %v626
        %645 = vst [vmem:[#allocation2 + $0x68] sm:$0xff] %v627
        %646 = vst [vmem:[#allocation2 + $0x70] sm:$0xff] %v628
        %647 = vst [vmem:[#allocation2 + $0x78] sm:$0xff] %v629
        %648 = vst [vmem:[#allocation2 + $0x80] sm:$0xff] %v630
        %649 = vst [vmem:[#allocation2 + $0x88] sm:$0xff] %v631
        // Predicated region
        $region79: #{pspnet_forward.9} parent=69 // pred_check
          %p650 = pneg %p373
        $region80: #{pspnet_forward.9} parent=69 // pred_check_branch
          %652 = sbr.rel (%p650) target = $region82
        $region81: #{pspnet_forward.9} parent=69 // pred_region
          %v653 = vld [vmem:[#allocation2] sm:$0xff]
          %v654 = vld [vmem:[#allocation2 + $0x8] sm:$0xff]
          %v655 = vld [vmem:[#allocation2 + $0x10] sm:$0xff]
          %v656 = vld [vmem:[#allocation2 + $0x18] sm:$0xff]
          %v657 = vld [vmem:[#allocation2 + $0x20] sm:$0xff]
          %v658 = vld [vmem:[#allocation2 + $0x28] sm:$0xff]
          %v659 = vld [vmem:[#allocation2 + $0x30] sm:$0xff]
          %v660 = vld [vmem:[#allocation2 + $0x38] sm:$0xff]
          %v661 = vld [vmem:[#allocation2 + $0x40] sm:$0xff]
          %v662 = vld [vmem:[#allocation2 + $0x48] sm:$0xff]
          %v663 = vld [vmem:[#allocation2 + $0x50] sm:$0xff]
          %v664 = vld [vmem:[#allocation2 + $0x58] sm:$0xff]
          %v665 = vld [vmem:[#allocation2 + $0x60] sm:$0xff]
          %v666 = vld [vmem:[#allocation2 + $0x68] sm:$0xff]
          %v667 = vld [vmem:[#allocation2 + $0x70] sm:$0xff]
          %v668 = vld [vmem:[#allocation2 + $0x78] sm:$0xff]
          %v669 = vld [vmem:[#allocation2 + $0x80] sm:$0xff]
          %v670 = vld [vmem:[#allocation2 + $0x88] sm:$0xff]
          %v671 = vld [vmem:[%s363] sm:$0x3]
          %v673 = vlaneseq
          %v674 = vshrl.u32 %v673, 7
          %v675 = vsub.s32 0, %v674
          %v676 = vrot.slane %v671, %v675
          %v677 = vlaneseq
          %v678 = vshrl.u32 %v677, 7
          %v679 = vsub.s32 1, %v678
          %v680 = vrot.slane %v671, %v679
          %v683 = vmul.f32 %v653, %v676
          %v684 = vmul.f32 %v654, %v680
          %v685 = vmul.f32 %v655, %v676
          %v686 = vmul.f32 %v656, %v680
          %v687 = vmul.f32 %v657, %v676
          %v688 = vmul.f32 %v658, %v680
          %v689 = vmul.f32 %v659, %v676
          %v690 = vmul.f32 %v660, %v680
          %v691 = vmul.f32 %v661, %v676
          %v692 = vmul.f32 %v662, %v680
          %v693 = vmul.f32 %v663, %v676
          %v694 = vmul.f32 %v664, %v680
          %v695 = vmul.f32 %v665, %v676
          %v696 = vmul.f32 %v666, %v680
          %v697 = vmul.f32 %v667, %v676
          %v698 = vmul.f32 %v668, %v680
          %v699 = vmul.f32 %v669, %v676
          %v700 = vmul.f32 %v670, %v680
          %v701 = vld [vmem:[%s368] sm:$0x3]
          %v703 = vlaneseq
          %v704 = vshrl.u32 %v703, 7
          %v705 = vsub.s32 0, %v704
          %v706 = vrot.slane %v701, %v705
          %v707 = vlaneseq
          %v708 = vshrl.u32 %v707, 7
          %v709 = vsub.s32 1, %v708
          %v710 = vrot.slane %v701, %v709
          %v713 = vadd.f32 %v683, %v706
          %v714 = vadd.f32 %v684, %v710
          %v715 = vadd.f32 %v685, %v706
          %v716 = vadd.f32 %v686, %v710
          %v717 = vadd.f32 %v687, %v706
          %v718 = vadd.f32 %v688, %v710
          %v719 = vadd.f32 %v689, %v706
          %v720 = vadd.f32 %v690, %v710
          %v721 = vadd.f32 %v691, %v706
          %v722 = vadd.f32 %v692, %v710
          %v723 = vadd.f32 %v693, %v706
          %v724 = vadd.f32 %v694, %v710
          %v725 = vadd.f32 %v695, %v706
          %v726 = vadd.f32 %v696, %v710
          %v727 = vadd.f32 %v697, %v706
          %v728 = vadd.f32 %v698, %v710
          %v729 = vadd.f32 %v699, %v706
          %v730 = vadd.f32 %v700, %v710
          %v731 = vmax.f32 %v713, 0.0
          %v732 = vmax.f32 %v714, 0.0
          %v733 = vmax.f32 %v715, 0.0
          %v734 = vmax.f32 %v716, 0.0
          %v735 = vmax.f32 %v717, 0.0
          %v736 = vmax.f32 %v718, 0.0
          %v737 = vmax.f32 %v719, 0.0
          %v738 = vmax.f32 %v720, 0.0
          %v739 = vmax.f32 %v721, 0.0
          %v740 = vmax.f32 %v722, 0.0
          %v741 = vmax.f32 %v723, 0.0
          %v742 = vmax.f32 %v724, 0.0
          %v743 = vmax.f32 %v725, 0.0
          %v744 = vmax.f32 %v726, 0.0
          %v745 = vmax.f32 %v727, 0.0
          %v746 = vmax.f32 %v728, 0.0
          %v747 = vmax.f32 %v729, 0.0
          %v748 = vmax.f32 %v730, 0.0
          %v749 = vpack.c.bf16 %v733, %v731
          %v750 = vpack.c.bf16 %v734, %v732
          %v751 = vpack.c.bf16 %v737, %v735
          %v752 = vpack.c.bf16 %v738, %v736
          %v753 = vpack.c.bf16 %v741, %v739
          %v754 = vpack.c.bf16 %v742, %v740
          %v755 = vpack.c.bf16 %v745, %v743
          %v756 = vpack.c.bf16 %v746, %v744
          %v757 = vpack.c.bf16 %v747, %v747
          %v758 = vpack.c.bf16 %v748, %v748
          %v769 = vunpack.c.l.b16 %v749
          %v770 = vunpack.c.l.b16 %v750
          %v771 = vunpack.c.h.b16 %v749
          %v772 = vunpack.c.h.b16 %v750
          %v773 = vunpack.c.l.b16 %v751
          %v774 = vunpack.c.l.b16 %v752
          %v775 = vunpack.c.h.b16 %v751
          %v776 = vunpack.c.h.b16 %v752
          %v777 = vunpack.c.l.b16 %v753
          %v778 = vunpack.c.l.b16 %v754
          %v779 = vunpack.c.h.b16 %v753
          %v780 = vunpack.c.h.b16 %v754
          %v781 = vunpack.c.l.b16 %v755
          %v782 = vunpack.c.l.b16 %v756
          %v783 = vunpack.c.h.b16 %v755
          %v784 = vunpack.c.h.b16 %v756
          %v785 = vunpack.c.l.b16 %v757
          %v786 = vunpack.c.l.b16 %v758
          %v787 = vpack.c.b16 %v770, %v769
          %v788 = vpack.c.b16 %v772, %v771
          %v789 = vpack.c.b16 %v774, %v773
          %v790 = vpack.c.b16 %v776, %v775
          %v791 = vpack.c.b16 %v778, %v777
          %v792 = vpack.c.b16 %v780, %v779
          %v793 = vpack.c.b16 %v782, %v781
          %v794 = vpack.c.b16 %v784, %v783
          %v795 = vpack.c.b16 %v786, %v785
          %805 = vst [vmem:[%s348] sm:$0xff] %v787
          %806 = vst [vmem:[%s348 + $0x8] sm:$0xff] %v788
          %807 = vst [vmem:[%s348 + $0x10] sm:$0xff] %v789
          %808 = vst [vmem:[%s348 + $0x18] sm:$0xff] %v790
          %809 = vst [vmem:[%s348 + $0x20] sm:$0xff] %v791
          %810 = vst [vmem:[%s348 + $0x28] sm:$0xff] %v792
          %811 = vst [vmem:[%s348 + $0x30] sm:$0xff] %v793
          %812 = vst [vmem:[%s348 + $0x38] sm:$0xff] %v794
          %813 = vst [vmem:[%s348 + $0x40] sm:$0xff] %v795
        $region82: #{pspnet_forward.9} parent=69 // pred_fallthru
          _
        %s814 = sand.u32 %s152, 1
        %s815 = sand.u32 %s152, 1
        %s816 = smul.addr %s815, 72
        %s817 = scalar_lea.vmem [#allocation4], %s816
        // Predicated region
        $region83: #{pspnet_forward.9} parent=69 // pred_check
          %p818 = pneg %p162
        $region84: #{pspnet_forward.9} parent=69 // pred_check_branch
          %820 = sbr.rel (%p818) target = $region86
        $region85: #{pspnet_forward.9} parent=69 // pred_region
          %s821 = smul.u32 9, %s20
          %s822 = smul.u32 2, %s21
          %s823 = smul.addr %s821, 4
          %s824 = sadd.s32 %s822, %s823
          %s825 = smul.addr %s824, 4
          %s826 = scalar_lea.vmem %s4, %s825
          // Predicated region
          $region87: #{pspnet_forward.9} parent=85 // pred_check
            _
          $region88: #{pspnet_forward.9} parent=85 // pred_check_branch
            %828 = sbr.rel (0) target = $region90
          $region89: #{pspnet_forward.9} parent=85 // pred_region
            // Predicated region
            $region91: #{pspnet_forward.9} parent=89 // pred_check
              _
            $region92: #{pspnet_forward.9} parent=89 // pred_check_branch
              %830 = sbr.rel (0) target = $region94
            $region93: #{pspnet_forward.9} parent=89 // pred_region
              // Predicated region
              $region106: #{pspnet_forward.9} parent=93 // pred_check
                _
              $region107: #{pspnet_forward.9} parent=93 // pred_check_branch
                %861 = sbr.rel (0) target = $region109
              $region108: #{pspnet_forward.9} parent=93 // pred_region
                loop: start=0, step=1, limit=1
                $region110: #{pspnet_forward.9} parent=108 // loop_pre_header
                  _
                $region111: #{pspnet_forward.9} parent=108 // loop_header
                  %s863 = sphi 0, %s867
                  %p864 = scmp.ge.s32.totalorder %s863, 1
                  %s868 = sphi %s817, %s817
                  %s869 = sphi %s826, %s826
                $region112: #{pspnet_forward.9} parent=108 // loop_header_branch
                  %866 = sbr.rel (%p864) target = $region116
                $region113: #{pspnet_forward.9} parent=108 // loop_body
                  %v870 = vld [vmem:[%s868] sm:$0xff]
                  %871 = vst [vmem:[%s869] sm:$0xff] %v870
                  %v872 = vld [vmem:[%s868 + $0x8] sm:$0xff]
                  %873 = vst [vmem:[%s869 + $0x10] sm:$0xff] %v872
                  %v874 = vld [vmem:[%s868 + $0x10] sm:$0xff]
                  %875 = vst [vmem:[%s869 + $0x20] sm:$0xff] %v874
                  %v876 = vld [vmem:[%s868 + $0x18] sm:$0xff]
                  %877 = vst [vmem:[%s869 + $0x30] sm:$0xff] %v876
                  %v878 = vld [vmem:[%s868 + $0x20] sm:$0xff]
                  %879 = vst [vmem:[%s869 + $0x40] sm:$0xff] %v878
                  %v880 = vld [vmem:[%s868 + $0x28] sm:$0xff]
                  %881 = vst [vmem:[%s869 + $0x50] sm:$0xff] %v880
                  %v882 = vld [vmem:[%s868 + $0x30] sm:$0xff]
                  %883 = vst [vmem:[%s869 + $0x60] sm:$0xff] %v882
                  %v884 = vld [vmem:[%s868 + $0x38] sm:$0xff]
                  %885 = vst [vmem:[%s869 + $0x70] sm:$0xff] %v884
                  %v886 = vld [vmem:[%s868 + $0x40] sm:$0xff]
                  %887 = vst [vmem:[%s869 + $0x80] sm:$0xff] %v886
                $region114: #{pspnet_forward.9} parent=108 // loop_footer
                  %s867 = sadd.s32 1, %s863
                $region115: #{pspnet_forward.9} parent=108 // loop_footer_branch
                  %862 = sbr.rel target = $region111
                $region116: #{pspnet_forward.9} parent=108 // loop_exit
                  _
              $region109: #{pspnet_forward.9} parent=93 // pred_fallthru
                _
              // Predicated region
              $region117: #{pspnet_forward.9} parent=93 // pred_check
                _
              $region118: #{pspnet_forward.9} parent=93 // pred_check_branch
                %889 = sbr.rel target = $region120
              $region119: #{pspnet_forward.9} parent=93 // pred_region
                _
              $region120: #{pspnet_forward.9} parent=93 // pred_fallthru
                _
            $region94: #{pspnet_forward.9} parent=89 // pred_fallthru
              _
            // Predicated region
            $region95: #{pspnet_forward.9} parent=89 // pred_check
              _
            $region96: #{pspnet_forward.9} parent=89 // pred_check_branch
              %832 = sbr.rel target = $region98
            $region97: #{pspnet_forward.9} parent=89 // pred_region
              loop: start=0, step=1, limit=1
              $region99: #{pspnet_forward.9} parent=97 // loop_pre_header
                _
              $region100: #{pspnet_forward.9} parent=97 // loop_header
                %s835 = sphi 0, %s839
                %p836 = scmp.ge.s32.totalorder %s835, 1
                %s840 = sphi %s817, %s817
                %s841 = sphi %s826, %s826
              $region101: #{pspnet_forward.9} parent=97 // loop_header_branch
                %838 = sbr.rel (%p836) target = $region105
              $region102: #{pspnet_forward.9} parent=97 // loop_body
                %v842 = vld [vmem:[%s840] sm:$0xff]
                %843 = vst [vmem:[%s841] sm:$0xff] %v842
                %v844 = vld [vmem:[%s840 + $0x8] sm:$0xff]
                %845 = vst [vmem:[%s841 + $0x10] sm:$0xff] %v844
                %v846 = vld [vmem:[%s840 + $0x10] sm:$0xff]
                %847 = vst [vmem:[%s841 + $0x20] sm:$0xff] %v846
                %v848 = vld [vmem:[%s840 + $0x18] sm:$0xff]
                %849 = vst [vmem:[%s841 + $0x30] sm:$0xff] %v848
                %v850 = vld [vmem:[%s840 + $0x20] sm:$0xff]
                %851 = vst [vmem:[%s841 + $0x40] sm:$0xff] %v850
                %v852 = vld [vmem:[%s840 + $0x28] sm:$0xff]
                %853 = vst [vmem:[%s841 + $0x50] sm:$0xff] %v852
                %v854 = vld [vmem:[%s840 + $0x30] sm:$0xff]
                %855 = vst [vmem:[%s841 + $0x60] sm:$0xff] %v854
                %v856 = vld [vmem:[%s840 + $0x38] sm:$0xff]
                %857 = vst [vmem:[%s841 + $0x70] sm:$0xff] %v856
                %v858 = vld [vmem:[%s840 + $0x40] sm:$0xff]
                %859 = vst [vmem:[%s841 + $0x80] sm:$0xff] %v858
              $region103: #{pspnet_forward.9} parent=97 // loop_footer
                %s839 = sadd.s32 1, %s835
              $region104: #{pspnet_forward.9} parent=97 // loop_footer_branch
                %834 = sbr.rel target = $region100
              $region105: #{pspnet_forward.9} parent=97 // loop_exit
                _
            $region98: #{pspnet_forward.9} parent=89 // pred_fallthru
              _
          $region90: #{pspnet_forward.9} parent=85 // pred_fallthru
            _
          %890 = vnop
        $region86: #{pspnet_forward.9} parent=69 // pred_fallthru
          _
      $region70: #{pspnet_forward.9} parent=5 // pred_fallthru
        _
      %p891 = scmp.le.s32.totalorder 2, %s10
      // Predicated region
      $region121: #{pspnet_forward.9} parent=5 // pred_check
        %p892 = pneg %p891
      $region122: #{pspnet_forward.9} parent=5 // pred_check_branch
        %894 = sbr.rel (%p892) target = $region124
      $region123: #{pspnet_forward.9} parent=5 // pred_region
        %s895 = ssub.s32 %s10, 2
        // Predicated region
        $region125: #{pspnet_forward.9} parent=123 // pred_check
          %p896 = pneg %p168
        $region126: #{pspnet_forward.9} parent=123 // pred_check_branch
          %898 = sbr.rel (%p896) target = $region128
        $region127: #{pspnet_forward.9} parent=123 // pred_region
          %s899 = sand.u32 %s153, 1
          %s900 = sand.u32 %s153, 1
          %s901 = smul.addr %s900, 72
          %s902 = scalar_lea.vmem [#allocation4], %s901
        $region128: #{pspnet_forward.9} parent=123 // pred_fallthru
          _
      $region124: #{pspnet_forward.9} parent=5 // pred_fallthru
        _
    $region6: #{pspnet_forward.9} parent=1 // loop_footer
      %s14 = sadd.s32 1, %s10
    $region7: #{pspnet_forward.9} parent=1 // loop_footer_branch
      %9 = sbr.rel target = $region3
    $region8: #{pspnet_forward.9} parent=1 // loop_exit
      _

// kernel: pspnet_forward.11
$region0: #{pspnet_forward.11}
  #allocation0 [shape = 'u32[]', space=smem, size = 0x4, offset = 0x4, fixed_abs, tag = 'smem constant byte address 0x4 - core index']
  #allocation1 [shape = 'u32[144,128]{1,0:T(1,128)}', space=vmem, size = 0x12000, scoped, tag = 'internal scratch']
  %s0 = inlined_call_operand.vmem [shape: f32[48,6], index: 0, kind: input, shape index: {}]
  %s1 = inlined_call_operand.hbm [shape: f32[6,48], index: 1, kind: input, shape index: {}]
  %s2 = inlined_call_operand.vmem [shape: f32[24,6,6], index: 2, kind: input, shape index: {}]
  %s3 = inlined_call_operand.hbm [shape: f32[24,48,48], index: 3, kind: output, shape index: {}]
  %s4 = sld [smem:[#allocation0]]
  $region49: #{pspnet_forward.11} parent=0
    _
  %s6 = ssub.s32 1, %s4
  %s7 = scalar_select 0, %s6, %s4
  $region1: #{pspnet_forward.11} parent=0
    #allocation2 [shape = 'u8[4096]{0}', space=vmem, size = 0x1000, scoped, tag = 'input window, operand 1, single buffered']
    #allocation3 [shape = 's32[2]{0}', space=sflag, size = 0x8, scoped, tag = 'scoped memory for pspnet_forward.11']
    #allocation4 [shape = 's32[2]{0}', space=sflag, size = 0x8, scoped, tag = 'scoped memory for pspnet_forward.11']
    #allocation5 [shape = 'u8[49152]{0}', space=vmem, size = 0xc000, scoped, tag = 'output window, operand 0']
    %8 = vsyncpa [#allocation3], 0
    %9 = vsyncpa [#allocation4], 0
    %s10 = scalar_lea.sflag [#allocation4], 1
    %11 = vsyncpa %s10, 0
    loop: start=0, step=1, limit=26
    $region2: #{pspnet_forward.11} parent=1 // loop_pre_header
      _
    $region3: #{pspnet_forward.11} parent=1 // loop_header
      %s13 = sphi 0, %s17
      %p14 = scmp.ge.s32.totalorder %s13, 26
      %s21 = sphi 0, %s21
      %s23 = sphi 0, %s21
      %s24 = sphi 0, %s23
      %s38 = sphi 0, %s24
      %s42 = sphi 0, %s42
      %s44 = sphi 0, %s42
      %s45 = sphi 0, %s44
      %s59 = sphi 0, %s45
      %s65 = sphi 0, %s67
      %s68 = sphi 0, %s65
      %s69 = sphi 0, %s68
      %s85 = sphi 0, %s69
      %s91 = sphi 0, %s93
      %s94 = sphi 0, %s91
      %s95 = sphi 0, %s94
      %s111 = sphi 0, %s95
    $region4: #{pspnet_forward.11} parent=1 // loop_header_branch
      %16 = sbr.rel (%p14) target = $region8
    $region5: #{pspnet_forward.11} parent=1 // loop_body
      %s18 = ssub.s32 %s13, 1
      %s19 = ssub.s32 %s13, 2
      %s20 = sadd.s32 %s13, 1
      %s22 = sadd.s32 %s21, 1
      %p25 = scmp.eq.s32.totalorder %s13, 23
      %p26 = scmp.ne.s32.totalorder %s21, %s23
      %p27 = scmp.eq.s32.totalorder %s13, 0
      %p28 = por %p26, %p27
      %p29 = scmp.ne.s32.totalorder %s21, %s23
      %p30 = scmp.eq.s32.totalorder %s18, 23
      %p31 = por %p29, %p30
      %p32 = scmp.ne.s32.totalorder %s23, %s24
      %p33 = scmp.eq.s32.totalorder %s18, 0
      %p34 = por %p32, %p33
      %p35 = scmp.ne.s32.totalorder %s23, %s24
      %p36 = scmp.eq.s32.totalorder %s19, 23
      %p37 = por %p35, %p36
      %p39 = scmp.ne.s32.totalorder %s24, %s38
      %p40 = scmp.eq.s32.totalorder %s19, 0
      %p41 = por %p39, %p40
      %s43 = sadd.s32 %s42, 1
      %p46 = scmp.eq.s32.totalorder %s13, 23
      %p47 = scmp.ne.s32.totalorder %s42, %s44
      %p48 = scmp.eq.s32.totalorder %s13, 0
      %p49 = por %p47, %p48
      %p50 = scmp.ne.s32.totalorder %s42, %s44
      %p51 = scmp.eq.s32.totalorder %s18, 23
      %p52 = por %p50, %p51
      %p53 = scmp.ne.s32.totalorder %s44, %s45
      %p54 = scmp.eq.s32.totalorder %s18, 0
      %p55 = por %p53, %p54
      %p56 = scmp.ne.s32.totalorder %s44, %s45
      %p57 = scmp.eq.s32.totalorder %s19, 23
      %p58 = por %p56, %p57
      %p60 = scmp.ne.s32.totalorder %s45, %s59
      %p61 = scmp.eq.s32.totalorder %s19, 0
      %p62 = por %p60, %p61
      %s63 = ssub.s32 %s13, %s20
      %p64 = scmp.eq.s32.totalorder %s63, 0
      %s66 = sadd.s32 %s65, 1
      %s67 = scalar_select %p64, %s65, %s66
      %p70 = pneg %p64
      %p71 = scmp.eq.s32.totalorder %s13, 23
      %p72 = por %p70, %p71
      %p73 = scmp.ne.s32.totalorder %s65, %s68
      %p74 = scmp.eq.s32.totalorder %s13, 0
      %p75 = por %p73, %p74
      %p76 = scmp.ne.s32.totalorder %s65, %s68
      %p77 = scmp.eq.s32.totalorder %s18, 23
      %p78 = por %p76, %p77
      %p79 = scmp.ne.s32.totalorder %s68, %s69
      %p80 = scmp.eq.s32.totalorder %s18, 0
      %p81 = por %p79, %p80
      %p82 = scmp.ne.s32.totalorder %s68, %s69
      %p83 = scmp.eq.s32.totalorder %s19, 23
      %p84 = por %p82, %p83
      %p86 = scmp.ne.s32.totalorder %s69, %s85
      %p87 = scmp.eq.s32.totalorder %s19, 0
      %p88 = por %p86, %p87
      %s89 = ssub.s32 %s13, %s20
      %p90 = scmp.eq.s32.totalorder %s89, 0
      %s92 = sadd.s32 %s91, 1
      %s93 = scalar_select %p90, %s91, %s92
      %p96 = pneg %p90
      %p97 = scmp.eq.s32.totalorder %s13, 23
      %p98 = por %p96, %p97
      %p99 = scmp.ne.s32.totalorder %s91, %s94
      %p100 = scmp.eq.s32.totalorder %s13, 0
      %p101 = por %p99, %p100
      %p102 = scmp.ne.s32.totalorder %s91, %s94
      %p103 = scmp.eq.s32.totalorder %s18, 23
      %p104 = por %p102, %p103
      %p105 = scmp.ne.s32.totalorder %s94, %s95
      %p106 = scmp.eq.s32.totalorder %s18, 0
      %p107 = por %p105, %p106
      %p108 = scmp.ne.s32.totalorder %s94, %s95
      %p109 = scmp.eq.s32.totalorder %s19, 23
      %p110 = por %p108, %p109
      %p112 = scmp.ne.s32.totalorder %s95, %s111
      %p113 = scmp.eq.s32.totalorder %s19, 0
      %p114 = por %p112, %p113
      %p115 = scmp.le.s32.totalorder 1, %s13
      %p116 = scmp.lt.s32.totalorder %s13, 25
      %p117 = pnand %p115, %p116
      %p118 = pneg %p117
      // Predicated region
      $region9: #{pspnet_forward.11} parent=5 // pred_check
        _
      $region10: #{pspnet_forward.11} parent=5 // pred_check_branch
        %120 = sbr.rel (%p117) target = $region12
      $region11: #{pspnet_forward.11} parent=5 // pred_region
        %s121 = ssub.s32 %s13, 1
        // Predicated region
        $region13: #{pspnet_forward.11} parent=11 // pred_check
          %p122 = pneg %p34
        $region14: #{pspnet_forward.11} parent=11 // pred_check_branch
          %124 = sbr.rel (%p122) target = $region16
        $region15: #{pspnet_forward.11} parent=11 // pred_region
          _
        $region16: #{pspnet_forward.11} parent=11 // pred_fallthru
          _
        // Predicated region
        $region17: #{pspnet_forward.11} parent=11 // pred_check
          %p125 = pneg %p55
        $region18: #{pspnet_forward.11} parent=11 // pred_check_branch
          %127 = sbr.rel (%p125) target = $region20
        $region19: #{pspnet_forward.11} parent=11 // pred_region
          %s129 = ssub.s32 128, 128
          %130 = vsyncadd [#allocation3], %s129
          %s132 = sshll.u32 [#allocation2], 4
          %s133 = int_to_ptr.vmem [resolvable:$true] %s132
          %135 = dma.hbm_to_vmem [thread:$0]  %s1, 128, %s133, [#allocation3]
        $region20: #{pspnet_forward.11} parent=11 // pred_fallthru
          _
      $region12: #{pspnet_forward.11} parent=5 // pred_fallthru
        _
      %p136 = scmp.lt.s32.totalorder %s13, 24
      // Predicated region
      $region21: #{pspnet_forward.11} parent=5 // pred_check
        %p137 = pneg %p136
      $region22: #{pspnet_forward.11} parent=5 // pred_check_branch
        %139 = sbr.rel (%p137) target = $region24
      $region23: #{pspnet_forward.11} parent=5 // pred_region
        // Predicated region
        $region25: #{pspnet_forward.11} parent=23 // pred_check
          %p140 = pneg %p75
        $region26: #{pspnet_forward.11} parent=23 // pred_check_branch
          %142 = sbr.rel (%p140) target = $region28
        $region27: #{pspnet_forward.11} parent=23 // pred_region
          %p143 = scmp.lt.s32.totalorder %s13, 23
          %s144 = scalar_select %p143, %s13, 23
          %s145 = smul.addr %s144, 8
          %s146 = scalar_lea.vmem %s2, %s145
        $region28: #{pspnet_forward.11} parent=23 // pred_fallthru
          _
      $region24: #{pspnet_forward.11} parent=5 // pred_fallthru
        _
      %p147 = scmp.le.s32.totalorder 1, %s13
      %p148 = scmp.lt.s32.totalorder %s13, 25
      %p149 = pnand %p147, %p148
      %p150 = pneg %p149
      // Predicated region
      $region29: #{pspnet_forward.11} parent=5 // pred_check
        _
      $region30: #{pspnet_forward.11} parent=5 // pred_check_branch
        %152 = sbr.rel (%p149) target = $region32
      $region31: #{pspnet_forward.11} parent=5 // pred_region
        %s153 = ssub.s32 %s13, 1
        // Predicated region
        $region33: #{pspnet_forward.11} parent=31 // pred_check
          %p154 = pneg %p55
        $region34: #{pspnet_forward.11} parent=31 // pred_check_branch
          %156 = sbr.rel (%p154) target = $region36
        $region35: #{pspnet_forward.11} parent=31 // pred_region
          %157 = dma.done [#allocation3], 128
        $region36: #{pspnet_forward.11} parent=31 // pred_fallthru
          _
        %p158 = pneg %p34
        %p159 = pneg %p31
        %p160 = pneg %p55
        %p161 = pneg %p52
        %p162 = scmp.lt.s32.totalorder %s18, 23
        %s163 = scalar_select %p162, %s18, 23
        %s164 = smul.addr %s163, 8
        %s165 = scalar_lea.vmem %s2, %s164
        %p166 = pneg %p81
        %p167 = pneg %p78
        %p168 = pneg %p107
        %p169 = pneg %p104
        %s170 = sand.u32 %s94, 1
        %s171 = scalar_lea.sflag [#allocation4], %s170
        %s172 = sand.u32 %s94, 1
        %s173 = smul.addr %s172, 48
        %s174 = scalar_lea.vmem [#allocation5], %s173
        %p175 = scmp.lt.s32.totalorder %s18, 23
        %s176 = scalar_select %p175, %s18, 23
        %s177 = smul.addr %s176, 8
        %s178 = scalar_lea.vmem %s2, %s177
        %v179 = vld [vmem:[%s178] sm:$0x3f]
        %v180 = vld [vmem:[#allocation2] sm:$0x3f]
        %vm181 = vcmask 48128
        %v183 = vsel %vm181, %v179, 0
        %vm185 = vcmask 1045504
        %v187 = vsel %vm185, %v180, 0
        %189 = vmatprep.subr.mxu0 0.0
        %190 = vmatpush1.msra.mxu0 %v187
        %191 = vmatprep.subr.mxu0 0.0
        %192 = vmatpush1.msra.mxu0 0.0
        %193 = vmatprep.subr.mxu0 0.0
        %194 = vmatpush1.msra.mxu0 0.0
        %195 = vmatprep.subr.mxu0 0.0
        %196 = vmatpush1.msra.mxu0 0.0
        %197 = vmatprep.subr.mxu0 0.0
        %198 = vmatpush1.msra.mxu0 0.0
        %199 = vmatprep.subr.mxu0 0.0
        %200 = vmatpush1.msra.mxu0 0.0
        %201 = vmatprep.subr.mxu0 0.0
        %202 = vmatpush1.msra.mxu0 0.0
        %203 = vmatprep.subr.mxu0 0.0
        %204 = vmatpush1.msra.mxu0 0.0
        %205 = vmatprep.subr.mxu0 0.0
        %206 = vmatpush1.msra.mxu0 0.0
        %207 = vmatprep.subr.mxu0 0.0
        %208 = vmatpush1.msra.mxu0 0.0
        %209 = vmatprep.subr.mxu0 0.0
        %210 = vmatpush1.msra.mxu0 0.0
        %211 = vmatprep.subr.mxu0 0.0
        %212 = vmatpush1.msra.mxu0 0.0
        %213 = vmatprep.subr.mxu0 0.0
        %214 = vmatpush1.msra.mxu0 0.0
        %215 = vmatprep.subr.mxu0 0.0
        %216 = vmatpush1.msra.mxu0 0.0
        %217 = vmatprep.subr.mxu0 0.0
        %218 = vmatpush1.msra.mxu0 0.0
        %219 = vmatprep.subr.mxu0 0.0
        %220 = vmatpush1.msra.mxu0 0.0
        %221 = vmatprep.subr.mxu0 0.0
        %222 = vmatpush1.msra.mxu0 0.0
        %223 = vmatprep.subr.mxu0 0.0
        %224 = vmatpush1.msra.mxu0 0.0
        %225 = vmatprep.subr.mxu0 0.0
        %226 = vmatpush1.msra.mxu0 0.0
        %227 = vmatprep.subr.mxu0 0.0
        %228 = vmatpush1.msra.mxu0 0.0
        %229 = vmatprep.subr.mxu0 0.0
        %230 = vmatpush1.msra.mxu0 0.0
        %231 = vmatprep.subr.mxu0 0.0
        %232 = vmatpush1.msra.mxu0 0.0
        %233 = vmatprep.subr.mxu0 0.0
        %234 = vmatpush1.msra.mxu0 0.0
        %235 = vmatprep.subr.mxu0 0.0
        %236 = vmatpush1.msra.mxu0 0.0
        %237 = vmatprep.subr.mxu0 0.0
        %238 = vmatpush1.msra.mxu0 0.0
        %239 = vmatprep.subr.mxu0 0.0
        %240 = vmatpush1.msra.mxu0 0.0
        %241 = vmatprep.subr.mxu0 0.0
        %242 = vmatpush1.msra.mxu0 0.0
        %243 = vmatprep.subr.mxu0 0.0
        %244 = vmatpush1.msra.mxu0 0.0
        %245 = vmatprep.subr.mxu0 0.0
        %246 = vmatpush1.msra.mxu0 0.0
        %247 = vmatprep.subr.mxu0 0.0
        %248 = vmatpush1.msra.mxu0 0.0
        %249 = vmatprep.subr.mxu0 0.0
        %250 = vmatpush1.msra.mxu0 0.0
        %251 = vmatprep.subr.mxu0 0.0
        %252 = vmatpush1.msra.mxu0 0.0
        %253 = vmatprep.mubr.f32.mxu0 0.0
        %254 = vmatmul.mubr.f32.gmra.mrb[0].mxu0 %v183
        %v255 = vpop.f32.mrb[0].mxu0
        %v256 = vadd.f32 0.0, %v255
        %v257 = vpop.f32.mrb[0].mxu0
        %258 = vdwg.mxu0
        %v259 = vld [vmem:[%s0] sm:$0xff]
        %v260 = vld [vmem:[%s0 + $0x8] sm:$0xff]
        %v261 = vld [vmem:[%s0 + $0x10] sm:$0xff]
        %v262 = vld [vmem:[%s0 + $0x18] sm:$0xff]
        %v263 = vld [vmem:[%s0 + $0x20] sm:$0xff]
        %v264 = vld [vmem:[%s0 + $0x28] sm:$0xff]
        %v266 = vsel %vm181, %v259, 0
        %v269 = vsel %vm181, %v260, 0
        %v272 = vsel %vm181, %v261, 0
        %v275 = vsel %vm181, %v262, 0
        %v278 = vsel %vm181, %v263, 0
        %v281 = vsel %vm181, %v264, 0
        %v284 = vsel %vm185, %v256, 0
        %286 = vmatprep.subr.mxu0 0.0
        %287 = vmatpush1.msra.mxu0 %v284
        %288 = vmatprep.subr.mxu0 0.0
        %289 = vmatpush1.msra.mxu0 0.0
        %290 = vmatprep.subr.mxu0 0.0
        %291 = vmatpush1.msra.mxu0 0.0
        %292 = vmatprep.subr.mxu0 0.0
        %293 = vmatpush1.msra.mxu0 0.0
        %294 = vmatprep.subr.mxu0 0.0
        %295 = vmatpush1.msra.mxu0 0.0
        %296 = vmatprep.subr.mxu0 0.0
        %297 = vmatpush1.msra.mxu0 0.0
        %298 = vmatprep.subr.mxu0 0.0
        %299 = vmatpush1.msra.mxu0 0.0
        %300 = vmatprep.subr.mxu0 0.0
        %301 = vmatpush1.msra.mxu0 0.0
        %302 = vmatprep.subr.mxu0 0.0
        %303 = vmatpush1.msra.mxu0 0.0
        %304 = vmatprep.subr.mxu0 0.0
        %305 = vmatpush1.msra.mxu0 0.0
        %306 = vmatprep.subr.mxu0 0.0
        %307 = vmatpush1.msra.mxu0 0.0
        %308 = vmatprep.subr.mxu0 0.0
        %309 = vmatpush1.msra.mxu0 0.0
        %310 = vmatprep.subr.mxu0 0.0
        %311 = vmatpush1.msra.mxu0 0.0
        %312 = vmatprep.subr.mxu0 0.0
        %313 = vmatpush1.msra.mxu0 0.0
        %314 = vmatprep.subr.mxu0 0.0
        %315 = vmatpush1.msra.mxu0 0.0
        %316 = vmatprep.subr.mxu0 0.0
        %317 = vmatpush1.msra.mxu0 0.0
        %318 = vmatprep.subr.mxu0 0.0
        %319 = vmatpush1.msra.mxu0 0.0
        %320 = vmatprep.subr.mxu0 0.0
        %321 = vmatpush1.msra.mxu0 0.0
        %322 = vmatprep.subr.mxu0 0.0
        %323 = vmatpush1.msra.mxu0 0.0
        %324 = vmatprep.subr.mxu0 0.0
        %325 = vmatpush1.msra.mxu0 0.0
        %326 = vmatprep.subr.mxu0 0.0
        %327 = vmatpush1.msra.mxu0 0.0
        %328 = vmatprep.subr.mxu0 0.0
        %329 = vmatpush1.msra.mxu0 0.0
        %330 = vmatprep.subr.mxu0 0.0
        %331 = vmatpush1.msra.mxu0 0.0
        %332 = vmatprep.subr.mxu0 0.0
        %333 = vmatpush1.msra.mxu0 0.0
        %334 = vmatprep.subr.mxu0 0.0
        %335 = vmatpush1.msra.mxu0 0.0
        %336 = vmatprep.subr.mxu0 0.0
        %337 = vmatpush1.msra.mxu0 0.0
        %338 = vmatprep.subr.mxu0 0.0
        %339 = vmatpush1.msra.mxu0 0.0
        %340 = vmatprep.subr.mxu0 0.0
        %341 = vmatpush1.msra.mxu0 0.0
        %342 = vmatprep.subr.mxu0 0.0
        %343 = vmatpush1.msra.mxu0 0.0
        %344 = vmatprep.subr.mxu0 0.0
        %345 = vmatpush1.msra.mxu0 0.0
        %346 = vmatprep.subr.mxu0 0.0
        %347 = vmatpush1.msra.mxu0 0.0
        %348 = vmatprep.subr.mxu0 0.0
        %349 = vmatpush1.msra.mxu0 0.0
        %350 = vmatprep.mubr.f32.mxu0 0.0
        %351 = vmatmul.mubr.f32.gmra.mrb[0].mxu0 %v266
        %v352 = vpop.f32.mrb[0].mxu0
        %v353 = vadd.f32 0.0, %v352
        %v354 = vpop.f32.mrb[0].mxu0
        %355 = vmatprep.mubr.f32.mxu0 0.0
        %356 = vmatmul.mubr.f32.gmra.mrb[0].mxu0 %v269
        %v357 = vpop.f32.mrb[0].mxu0
        %v358 = vadd.f32 0.0, %v357
        %v359 = vpop.f32.mrb[0].mxu0
        %360 = vmatprep.mubr.f32.mxu0 0.0
        %361 = vmatmul.mubr.f32.gmra.mrb[0].mxu0 %v272
        %v362 = vpop.f32.mrb[0].mxu0
        %v363 = vadd.f32 0.0, %v362
        %v364 = vpop.f32.mrb[0].mxu0
        %365 = vmatprep.mubr.f32.mxu0 0.0
        %366 = vmatmul.mubr.f32.gmra.mrb[0].mxu0 %v275
        %v367 = vpop.f32.mrb[0].mxu0
        %v368 = vadd.f32 0.0, %v367
        %v369 = vpop.f32.mrb[0].mxu0
        %370 = vmatprep.mubr.f32.mxu0 0.0
        %371 = vmatmul.mubr.f32.gmra.mrb[0].mxu0 %v278
        %v372 = vpop.f32.mrb[0].mxu0
        %v373 = vadd.f32 0.0, %v372
        %v374 = vpop.f32.mrb[0].mxu0
        %375 = vmatprep.mubr.f32.mxu0 0.0
        %376 = vmatmul.mubr.f32.gmra.mrb[0].mxu0 %v281
        %v377 = vpop.f32.mrb[0].mxu0
        %v378 = vadd.f32 0.0, %v377
        %v379 = vpop.f32.mrb[0].mxu0
        %380 = vdwg.mxu0
        %vm381 = vcmask 392192
        %382 = vst.msk [vmem:[%s174] sm:$0xff] %vm381, %v353
        %383 = vst.msk [vmem:[%s174 + $0x8] sm:$0xff] %vm381, %v358
        %384 = vst.msk [vmem:[%s174 + $0x10] sm:$0xff] %vm381, %v363
        %385 = vst.msk [vmem:[%s174 + $0x18] sm:$0xff] %vm381, %v368
        %386 = vst.msk [vmem:[%s174 + $0x20] sm:$0xff] %vm381, %v373
        %387 = vst.msk [vmem:[%s174 + $0x28] sm:$0xff] %vm381, %v378
        %s388 = sand.u32 %s94, 1
        %s389 = scalar_lea.sflag [#allocation4], %s388
        %s390 = sand.u32 %s94, 1
        %s391 = smul.addr %s390, 48
        %s392 = scalar_lea.vmem [#allocation5], %s391
        // Predicated region
        $region37: #{pspnet_forward.11} parent=31 // pred_check
          %p393 = pneg %p104
        $region38: #{pspnet_forward.11} parent=31 // pred_check_branch
          %395 = sbr.rel (%p393) target = $region40
        $region39: #{pspnet_forward.11} parent=31 // pred_region
          %s397 = ssub.s32 768, 768
          %398 = vsyncadd %s389, %s397
          %s399 = smul.addr %s18, 6
          %s400 = smul.addr %s399, 128
          %s401 = scalar_lea.hbm %s3, %s400
          %s402 = sshll.u32 %s392, 4
          %s403 = int_to_ptr.vmem [resolvable:$true] %s402
          %408 = dma.vmem_to_hbm [thread:$0]  %s403, 768, %s401, %s389, 128, 128, 8
        $region40: #{pspnet_forward.11} parent=31 // pred_fallthru
          _
      $region32: #{pspnet_forward.11} parent=5 // pred_fallthru
        _
      %p409 = scmp.le.s32.totalorder 2, %s13
      // Predicated region
      $region41: #{pspnet_forward.11} parent=5 // pred_check
        %p410 = pneg %p409
      $region42: #{pspnet_forward.11} parent=5 // pred_check_branch
        %412 = sbr.rel (%p410) target = $region44
      $region43: #{pspnet_forward.11} parent=5 // pred_region
        %s413 = ssub.s32 %s13, 2
        // Predicated region
        $region45: #{pspnet_forward.11} parent=43 // pred_check
          %p414 = pneg %p110
        $region46: #{pspnet_forward.11} parent=43 // pred_check_branch
          %416 = sbr.rel (%p414) target = $region48
        $region47: #{pspnet_forward.11} parent=43 // pred_region
          %s417 = sand.u32 %s95, 1
          %s418 = scalar_lea.sflag [#allocation4], %s417
          %s419 = sand.u32 %s95, 1
          %s420 = smul.addr %s419, 48
          %s421 = scalar_lea.vmem [#allocation5], %s420
          %422 = dma.done %s418, 768
        $region48: #{pspnet_forward.11} parent=43 // pred_fallthru
          _
      $region44: #{pspnet_forward.11} parent=5 // pred_fallthru
        _
    $region6: #{pspnet_forward.11} parent=1 // loop_footer
      %s17 = sadd.s32 1, %s13
    $region7: #{pspnet_forward.11} parent=1 // loop_footer_branch
      %12 = sbr.rel target = $region3
    $region8: #{pspnet_forward.11} parent=1 // loop_exit
      _
    %423 = vsyncpa [#allocation3], 1
    %s424 = scalar_lea.sflag [#allocation3], 1
    %425 = vsyncpa %s424, 1
    %426 = vsyncpa [#allocation4], 1
    %s427 = scalar_lea.sflag [#allocation4], 1
    %428 = vsyncpa %s427, 1

// kernel: pspnet_forward.10
$region0: #{pspnet_forward.10}
  #allocation0 [shape = 'u32[]', space=smem, size = 0x4, offset = 0x4, fixed_abs, tag = 'smem constant byte address 0x4 - core index']
  #allocation1 [shape = 'u32[144,128]{1,0:T(1,128)}', space=vmem, size = 0x12000, scoped, tag = 'internal scratch']
  %s0 = inlined_call_operand.vmem [shape: bf16[2,66,512], index: 0, kind: input, shape index: {}]
  %s1 = inlined_call_operand.vmem [shape: bf16[9,512,128], index: 1, kind: input, shape index: {}]
  %s2 = inlined_call_operand.vmem [shape: f32[1,128], index: 2, kind: input, shape index: {}]
  %s3 = inlined_call_operand.vmem [shape: f32[1,128], index: 3, kind: input, shape index: {}]
  %s4 = inlined_call_operand.vmem [shape: f32[2,48,128], index: 4, kind: output, shape index: {}]
  %s5 = sld [smem:[#allocation0]]
  $region49: #{pspnet_forward.10} parent=0
    _
  %s7 = ssub.s32 1, %s5
  %s8 = scalar_select 0, %s7, %s5
  loop: start=0, step=1, limit=4
  $region2: #{pspnet_forward.10} parent=0 // loop_pre_header
    _
  $region3: #{pspnet_forward.10} parent=0 // loop_header
    %s10 = sphi 0, %s14
    %p11 = scmp.ge.s32.totalorder %s10, 4
    %s20 = sphi 0, %s22
    %s23 = sphi 0, %s20
    %s24 = sphi 0, %s23
    %s40 = sphi 0, %s24
    %s44 = sphi 0, %s44
    %s46 = sphi 0, %s44
    %s47 = sphi 0, %s46
    %s61 = sphi 0, %s47
    %s65 = sphi 0, %s65
    %s67 = sphi 0, %s65
    %s68 = sphi 0, %s67
    %s82 = sphi 0, %s68
    %s86 = sphi 0, %s86
    %s88 = sphi 0, %s86
    %s89 = sphi 0, %s88
    %s103 = sphi 0, %s89
    %s109 = sphi 0, %s111
    %s112 = sphi 0, %s109
    %s113 = sphi 0, %s112
    %s129 = sphi 0, %s113
  $region4: #{pspnet_forward.10} parent=0 // loop_header_branch
    %13 = sbr.rel (%p11) target = $region8
  $region5: #{pspnet_forward.10} parent=0 // loop_body
    %s15 = ssub.s32 %s10, 1
    %s16 = ssub.s32 %s10, 2
    %s17 = sadd.s32 %s10, 1
    %s18 = ssub.s32 %s10, %s17
    %p19 = scmp.eq.s32.totalorder %s18, 0
    %s21 = sadd.s32 %s20, 1
    %s22 = scalar_select %p19, %s20, %s21
    %p25 = pneg %p19
    %p26 = scmp.eq.s32.totalorder %s10, 1
    %p27 = por %p25, %p26
    %p28 = scmp.ne.s32.totalorder %s20, %s23
    %p29 = scmp.eq.s32.totalorder %s10, 0
    %p30 = por %p28, %p29
    %p31 = scmp.ne.s32.totalorder %s20, %s23
    %p32 = scmp.eq.s32.totalorder %s15, 1
    %p33 = por %p31, %p32
    %p34 = scmp.ne.s32.totalorder %s23, %s24
    %p35 = scmp.eq.s32.totalorder %s15, 0
    %p36 = por %p34, %p35
    %p37 = scmp.ne.s32.totalorder %s23, %s24
    %p38 = scmp.eq.s32.totalorder %s16, 1
    %p39 = por %p37, %p38
    %p41 = scmp.ne.s32.totalorder %s24, %s40
    %p42 = scmp.eq.s32.totalorder %s16, 0
    %p43 = por %p41, %p42
    %s45 = sadd.s32 %s44, 1
    %p48 = scmp.eq.s32.totalorder %s10, 1
    %p49 = scmp.ne.s32.totalorder %s44, %s46
    %p50 = scmp.eq.s32.totalorder %s10, 0
    %p51 = por %p49, %p50
    %p52 = scmp.ne.s32.totalorder %s44, %s46
    %p53 = scmp.eq.s32.totalorder %s15, 1
    %p54 = por %p52, %p53
    %p55 = scmp.ne.s32.totalorder %s46, %s47
    %p56 = scmp.eq.s32.totalorder %s15, 0
    %p57 = por %p55, %p56
    %p58 = scmp.ne.s32.totalorder %s46, %s47
    %p59 = scmp.eq.s32.totalorder %s16, 1
    %p60 = por %p58, %p59
    %p62 = scmp.ne.s32.totalorder %s47, %s61
    %p63 = scmp.eq.s32.totalorder %s16, 0
    %p64 = por %p62, %p63
    %s66 = sadd.s32 %s65, 1
    %p69 = scmp.eq.s32.totalorder %s10, 1
    %p70 = scmp.ne.s32.totalorder %s65, %s67
    %p71 = scmp.eq.s32.totalorder %s10, 0
    %p72 = por %p70, %p71
    %p73 = scmp.ne.s32.totalorder %s65, %s67
    %p74 = scmp.eq.s32.totalorder %s15, 1
    %p75 = por %p73, %p74
    %p76 = scmp.ne.s32.totalorder %s67, %s68
    %p77 = scmp.eq.s32.totalorder %s15, 0
    %p78 = por %p76, %p77
    %p79 = scmp.ne.s32.totalorder %s67, %s68
    %p80 = scmp.eq.s32.totalorder %s16, 1
    %p81 = por %p79, %p80
    %p83 = scmp.ne.s32.totalorder %s68, %s82
    %p84 = scmp.eq.s32.totalorder %s16, 0
    %p85 = por %p83, %p84
    %s87 = sadd.s32 %s86, 1
    %p90 = scmp.eq.s32.totalorder %s10, 1
    %p91 = scmp.ne.s32.totalorder %s86, %s88
    %p92 = scmp.eq.s32.totalorder %s10, 0
    %p93 = por %p91, %p92
    %p94 = scmp.ne.s32.totalorder %s86, %s88
    %p95 = scmp.eq.s32.totalorder %s15, 1
    %p96 = por %p94, %p95
    %p97 = scmp.ne.s32.totalorder %s88, %s89
    %p98 = scmp.eq.s32.totalorder %s15, 0
    %p99 = por %p97, %p98
    %p100 = scmp.ne.s32.totalorder %s88, %s89
    %p101 = scmp.eq.s32.totalorder %s16, 1
    %p102 = por %p100, %p101
    %p104 = scmp.ne.s32.totalorder %s89, %s103
    %p105 = scmp.eq.s32.totalorder %s16, 0
    %p106 = por %p104, %p105
    %s107 = ssub.s32 %s10, %s17
    %p108 = scmp.eq.s32.totalorder %s107, 0
    %s110 = sadd.s32 %s109, 1
    %s111 = scalar_select %p108, %s109, %s110
    %p114 = pneg %p108
    %p115 = scmp.eq.s32.totalorder %s10, 1
    %p116 = por %p114, %p115
    %p117 = scmp.ne.s32.totalorder %s109, %s112
    %p118 = scmp.eq.s32.totalorder %s10, 0
    %p119 = por %p117, %p118
    %p120 = scmp.ne.s32.totalorder %s109, %s112
    %p121 = scmp.eq.s32.totalorder %s15, 1
    %p122 = por %p120, %p121
    %p123 = scmp.ne.s32.totalorder %s112, %s113
    %p124 = scmp.eq.s32.totalorder %s15, 0
    %p125 = por %p123, %p124
    %p126 = scmp.ne.s32.totalorder %s112, %s113
    %p127 = scmp.eq.s32.totalorder %s16, 1
    %p128 = por %p126, %p127
    %p130 = scmp.ne.s32.totalorder %s113, %s129
    %p131 = scmp.eq.s32.totalorder %s16, 0
    %p132 = por %p130, %p131
    %p133 = scmp.le.s32.totalorder 1, %s10
    %p134 = scmp.lt.s32.totalorder %s10, 3
    %p135 = pnand %p133, %p134
    %p136 = pneg %p135
    // Predicated region
    $region9: #{pspnet_forward.10} parent=5 // pred_check
      _
    $region10: #{pspnet_forward.10} parent=5 // pred_check_branch
      %138 = sbr.rel (%p135) target = $region12
    $region11: #{pspnet_forward.10} parent=5 // pred_region
      %s139 = ssub.s32 %s10, 1
      // Predicated region
      $region13: #{pspnet_forward.10} parent=11 // pred_check
        %p140 = pneg %p57
      $region14: #{pspnet_forward.10} parent=11 // pred_check_branch
        %142 = sbr.rel (%p140) target = $region16
      $region15: #{pspnet_forward.10} parent=11 // pred_region
        _
      $region16: #{pspnet_forward.10} parent=11 // pred_fallthru
        _
      // Predicated region
      $region17: #{pspnet_forward.10} parent=11 // pred_check
        %p143 = pneg %p78
      $region18: #{pspnet_forward.10} parent=11 // pred_check_branch
        %145 = sbr.rel (%p143) target = $region20
      $region19: #{pspnet_forward.10} parent=11 // pred_region
        _
      $region20: #{pspnet_forward.10} parent=11 // pred_fallthru
        _
      // Predicated region
      $region21: #{pspnet_forward.10} parent=11 // pred_check
        %p146 = pneg %p99
      $region22: #{pspnet_forward.10} parent=11 // pred_check_branch
        %148 = sbr.rel (%p146) target = $region24
      $region23: #{pspnet_forward.10} parent=11 // pred_region
        _
      $region24: #{pspnet_forward.10} parent=11 // pred_fallthru
        _
    $region12: #{pspnet_forward.10} parent=5 // pred_fallthru
      _
    %p149 = scmp.lt.s32.totalorder %s10, 2
    // Predicated region
    $region25: #{pspnet_forward.10} parent=5 // pred_check
      %p150 = pneg %p149
    $region26: #{pspnet_forward.10} parent=5 // pred_check_branch
      %152 = sbr.rel (%p150) target = $region28
    $region27: #{pspnet_forward.10} parent=5 // pred_region
      // Predicated region
      $region29: #{pspnet_forward.10} parent=27 // pred_check
        %p153 = pneg %p30
      $region30: #{pspnet_forward.10} parent=27 // pred_check_branch
        %155 = sbr.rel (%p153) target = $region32
      $region31: #{pspnet_forward.10} parent=27 // pred_region
        %p156 = scmp.lt.s32.totalorder %s10, 1
        %s157 = scalar_select %p156, %s10, 1
        %s158 = smul.addr %s157, 36
        %s159 = smul.addr %s158, 4
        %s160 = scalar_lea.vmem %s0, %s159
      $region32: #{pspnet_forward.10} parent=27 // pred_fallthru
        _
    $region28: #{pspnet_forward.10} parent=5 // pred_fallthru
      _
    %p161 = scmp.le.s32.totalorder 1, %s10
    %p162 = scmp.lt.s32.totalorder %s10, 3
    %p163 = pnand %p161, %p162
    %p164 = pneg %p163
    // Predicated region
    $region33: #{pspnet_forward.10} parent=5 // pred_check
      _
    $region34: #{pspnet_forward.10} parent=5 // pred_check_branch
      %166 = sbr.rel (%p163) target = $region36
    $region35: #{pspnet_forward.10} parent=5 // pred_region
      %s167 = ssub.s32 %s10, 1
      %p168 = scmp.lt.s32.totalorder %s15, 1
      %s169 = scalar_select %p168, %s15, 1
      %s170 = smul.addr %s169, 36
      %s171 = smul.addr %s170, 4
      %s172 = scalar_lea.vmem %s0, %s171
      %p173 = pneg %p36
      %p174 = pneg %p33
      %p175 = pneg %p57
      %p176 = pneg %p54
      %p177 = pneg %p78
      %p178 = pneg %p75
      %p179 = pneg %p99
      %p180 = pneg %p96
      %p181 = pneg %p125
      %p182 = pneg %p122
      %p183 = scmp.lt.s32.totalorder %s15, 1
      %s184 = scalar_select %p183, %s15, 1
      %s185 = smul.addr %s184, 6
      %s186 = smul.addr %s185, 8
      %s187 = scalar_lea.vmem %s4, %s186
      %p188 = scmp.lt.s32.totalorder %s15, 1
      %s189 = scalar_select %p188, %s15, 1
      %s190 = smul.addr %s189, 36
      %s191 = smul.addr %s190, 4
      %s192 = scalar_lea.vmem %s0, %s191
      %p193 = scmp.lt.s32.totalorder %s15, 1
      %s194 = scalar_select %p193, %s15, 1
      %s195 = smul.addr %s194, 6
      %s196 = smul.addr %s195, 8
      %s197 = scalar_lea.vmem %s4, %s196
      %v199 = vld [vmem:[%s192] sm:$0xff]
      %v200 = vld [vmem:[%s192 + $0x8] sm:$0xff]
      %v201 = vld [vmem:[%s192 + $0x10] sm:$0xff]
      %v202 = vld [vmem:[%s192 + $0x18] sm:$0xff]
      %v203 = vld [vmem:[%s192 + $0x20] sm:$0xff]
      %v204 = vld [vmem:[%s192 + $0x28] sm:$0xff]
      %v205 = vld [vmem:[%s192 + $0x30] sm:$0xff]
      %v206 = vld [vmem:[%s192 + $0x38] sm:$0xff]
      %v207 = vld [vmem:[%s192 + $0x40] sm:$0xff]
      %v208 = vld [vmem:[%s192 + $0x48] sm:$0xff]
      %v209 = vld [vmem:[%s192 + $0x50] sm:$0xff]
      %v210 = vld [vmem:[%s192 + $0x58] sm:$0xff]
      %v211 = vld [vmem:[%s192 + $0x60] sm:$0xff]
      %v212 = vld [vmem:[%s192 + $0x68] sm:$0xff]
      %v213 = vld [vmem:[%s192 + $0x70] sm:$0xff]
      %v214 = vld [vmem:[%s192 + $0x78] sm:$0xff]
      %v215 = vld [vmem:[%s192 + $0x80] sm:$0x11]
      %v216 = vld [vmem:[%s192 + $0x88] sm:$0x11]
      %v217 = vld [vmem:[%s1] sm:$0xf]
      %v218 = vld [vmem:[%s1 + $0x4] sm:$0xf]
      %v219 = vld [vmem:[%s1 + $0x8] sm:$0xf]
      %v220 = vld [vmem:[%s1 + $0xc] sm:$0xf]
      %v221 = vld [vmem:[%s1 + $0x10] sm:$0xf]
      %v222 = vld [vmem:[%s1 + $0x14] sm:$0xf]
      %v223 = vld [vmem:[%s1 + $0x18] sm:$0xf]
      %v224 = vld [vmem:[%s1 + $0x1c] sm:$0xf]
      %v225 = vld [vmem:[%s1 + $0x20] sm:$0xf]
      %v226 = vld [vmem:[%s1 + $0x24] sm:$0xf]
      %v227 = vld [vmem:[%s1 + $0x28] sm:$0xf]
      %v228 = vld [vmem:[%s1 + $0x2c] sm:$0xf]
      %v229 = vld [vmem:[%s1 + $0x30] sm:$0xf]
      %v230 = vld [vmem:[%s1 + $0x34] sm:$0xf]
      %v231 = vld [vmem:[%s1 + $0x38] sm:$0xf]
      %v232 = vld [vmem:[%s1 + $0x3c] sm:$0xf]
      %v233 = vld [vmem:[%s1 + $0x40] sm:$0xf]
      %v234 = vld [vmem:[%s1 + $0x44] sm:$0xf]
      %v235 = vld [vmem:[%s1 + $0x48] sm:$0xf]
      %v236 = vld [vmem:[%s1 + $0x4c] sm:$0xf]
      %v237 = vld [vmem:[%s1 + $0x50] sm:$0xf]
      %v238 = vld [vmem:[%s1 + $0x54] sm:$0xf]
      %v239 = vld [vmem:[%s1 + $0x58] sm:$0xf]
      %v240 = vld [vmem:[%s1 + $0x5c] sm:$0xf]
      %v241 = vld [vmem:[%s1 + $0x60] sm:$0xf]
      %v242 = vld [vmem:[%s1 + $0x64] sm:$0xf]
      %v243 = vld [vmem:[%s1 + $0x68] sm:$0xf]
      %v244 = vld [vmem:[%s1 + $0x6c] sm:$0xf]
      %v245 = vld [vmem:[%s1 + $0x70] sm:$0xf]
      %v246 = vld [vmem:[%s1 + $0x74] sm:$0xf]
      %v247 = vld [vmem:[%s1 + $0x78] sm:$0xf]
      %v248 = vld [vmem:[%s1 + $0x7c] sm:$0xf]
      %v249 = vld [vmem:[%s1 + $0x80] sm:$0xf]
      %v250 = vld [vmem:[%s1 + $0x84] sm:$0xf]
      %v251 = vld [vmem:[%s1 + $0x88] sm:$0xf]
      %v252 = vld [vmem:[%s1 + $0x8c] sm:$0xf]
      %v253 = vld [vmem:[%s1 + $0x90] sm:$0xf]
      %v254 = vld [vmem:[%s1 + $0x94] sm:$0xf]
      %v255 = vld [vmem:[%s1 + $0x98] sm:$0xf]
      %v256 = vld [vmem:[%s1 + $0x9c] sm:$0xf]
      %v257 = vld [vmem:[%s1 + $0xa0] sm:$0xf]
      %v258 = vld [vmem:[%s1 + $0xa4] sm:$0xf]
      %v259 = vld [vmem:[%s1 + $0xa8] sm:$0xf]
      %v260 = vld [vmem:[%s1 + $0xac] sm:$0xf]
      %v261 = vld [vmem:[%s1 + $0xb0] sm:$0xf]
      %v262 = vld [vmem:[%s1 + $0xb4] sm:$0xf]
      %v263 = vld [vmem:[%s1 + $0xb8] sm:$0xf]
      %v264 = vld [vmem:[%s1 + $0xbc] sm:$0xf]
      %v265 = vld [vmem:[%s1 + $0xc0] sm:$0xf]
      %v266 = vld [vmem:[%s1 + $0xc4] sm:$0xf]
      %v267 = vld [vmem:[%s1 + $0xc8] sm:$0xf]
      %v268 = vld [vmem:[%s1 + $0xcc] sm:$0xf]
      %v269 = vld [vmem:[%s1 + $0xd0] sm:$0xf]
      %v270 = vld [vmem:[%s1 + $0xd4] sm:$0xf]
      %v271 = vld [vmem:[%s1 + $0xd8] sm:$0xf]
      %v272 = vld [vmem:[%s1 + $0xdc] sm:$0xf]
      %v273 = vld [vmem:[%s1 + $0xe0] sm:$0xf]
      %v274 = vld [vmem:[%s1 + $0xe4] sm:$0xf]
      %v275 = vld [vmem:[%s1 + $0xe8] sm:$0xf]
      %v276 = vld [vmem:[%s1 + $0xec] sm:$0xf]
      %v277 = vld [vmem:[%s1 + $0xf0] sm:$0xf]
      %v278 = vld [vmem:[%s1 + $0xf4] sm:$0xf]
      %v279 = vld [vmem:[%s1 + $0xf8] sm:$0xf]
      %v280 = vld [vmem:[%s1 + $0xfc] sm:$0xf]
      %s281 = scalar_lea.vmem %s1, 256
      %v282 = vld [vmem:[%s281] sm:$0xf]
      %v283 = vld [vmem:[%s281 + $0x4] sm:$0xf]
      %v284 = vld [vmem:[%s281 + $0x8] sm:$0xf]
      %v285 = vld [vmem:[%s281 + $0xc] sm:$0xf]
      %v286 = vld [vmem:[%s281 + $0x10] sm:$0xf]
      %v287 = vld [vmem:[%s281 + $0x14] sm:$0xf]
      %v288 = vld [vmem:[%s281 + $0x18] sm:$0xf]
      %v289 = vld [vmem:[%s281 + $0x1c] sm:$0xf]
      %v290 = vld [vmem:[%s281 + $0x20] sm:$0xf]
      %v291 = vld [vmem:[%s281 + $0x24] sm:$0xf]
      %v292 = vld [vmem:[%s281 + $0x28] sm:$0xf]
      %v293 = vld [vmem:[%s281 + $0x2c] sm:$0xf]
      %v294 = vld [vmem:[%s281 + $0x30] sm:$0xf]
      %v295 = vld [vmem:[%s281 + $0x34] sm:$0xf]
      %v296 = vld [vmem:[%s281 + $0x38] sm:$0xf]
      %v297 = vld [vmem:[%s281 + $0x3c] sm:$0xf]
      %v298 = vld [vmem:[%s281 + $0x40] sm:$0xf]
      %v299 = vld [vmem:[%s281 + $0x44] sm:$0xf]
      %v300 = vld [vmem:[%s281 + $0x48] sm:$0xf]
      %v301 = vld [vmem:[%s281 + $0x4c] sm:$0xf]
      %v302 = vld [vmem:[%s281 + $0x50] sm:$0xf]
      %v303 = vld [vmem:[%s281 + $0x54] sm:$0xf]
      %v304 = vld [vmem:[%s281 + $0x58] sm:$0xf]
      %v305 = vld [vmem:[%s281 + $0x5c] sm:$0xf]
      %v306 = vld [vmem:[%s281 + $0x60] sm:$0xf]
      %v307 = vld [vmem:[%s281 + $0x64] sm:$0xf]
      %v308 = vld [vmem:[%s281 + $0x68] sm:$0xf]
      %v309 = vld [vmem:[%s281 + $0x6c] sm:$0xf]
      %v310 = vld [vmem:[%s281 + $0x70] sm:$0xf]
      %v311 = vld [vmem:[%s281 + $0x74] sm:$0xf]
      %v312 = vld [vmem:[%s281 + $0x78] sm:$0xf]
      %v313 = vld [vmem:[%s281 + $0x7c] sm:$0xf]
      %v314 = vld [vmem:[%s281 + $0x80] sm:$0xf]
      %v315 = vld [vmem:[%s281 + $0x84] sm:$0xf]
      %v316 = vld [vmem:[%s281 + $0x88] sm:$0xf]
      %v317 = vld [vmem:[%s281 + $0x8c] sm:$0xf]
      %v318 = vld [vmem:[%s281 + $0x90] sm:$0xf]
      %v319 = vld [vmem:[%s281 + $0x94] sm:$0xf]
      %v320 = vld [vmem:[%s281 + $0x98] sm:$0xf]
      %v321 = vld [vmem:[%s281 + $0x9c] sm:$0xf]
      %v322 = vld [vmem:[%s281 + $0xa0] sm:$0xf]
      %v323 = vld [vmem:[%s281 + $0xa4] sm:$0xf]
      %v324 = vld [vmem:[%s281 + $0xa8] sm:$0xf]
      %v325 = vld [vmem:[%s281 + $0xac] sm:$0xf]
      %v326 = vld [vmem:[%s281 + $0xb0] sm:$0xf]
      %v327 = vld [vmem:[%s281 + $0xb4] sm:$0xf]
      %v328 = vld [vmem:[%s281 + $0xb8] sm:$0xf]
      %v329 = vld [vmem:[%s281 + $0xbc] sm:$0xf]
      %v330 = vld [vmem:[%s281 + $0xc0] sm:$0xf]
      %v331 = vld [vmem:[%s281 + $0xc4] sm:$0xf]
      %v332 = vld [vmem:[%s281 + $0xc8] sm:$0xf]
      %v333 = vld [vmem:[%s281 + $0xcc] sm:$0xf]
      %v334 = vld [vmem:[%s281 + $0xd0] sm:$0xf]
      %v335 = vld [vmem:[%s281 + $0xd4] sm:$0xf]
      %v336 = vld [vmem:[%s281 + $0xd8] sm:$0xf]
      %v337 = vld [vmem:[%s281 + $0xdc] sm:$0xf]
      %v338 = vld [vmem:[%s281 + $0xe0] sm:$0xf]
      %v339 = vld [vmem:[%s281 + $0xe4] sm:$0xf]
      %v340 = vld [vmem:[%s281 + $0xe8] sm:$0xf]
      %v341 = vld [vmem:[%s281 + $0xec] sm:$0xf]
      %v342 = vld [vmem:[%s281 + $0xf0] sm:$0xf]
      %v343 = vld [vmem:[%s281 + $0xf4] sm:$0xf]
      %v344 = vld [vmem:[%s281 + $0xf8] sm:$0xf]
      %v345 = vld [vmem:[%s281 + $0xfc] sm:$0xf]
      %v360 = vunpack.c.l.b16 %v199
      %v361 = vunpack.c.h.b16 %v199
      %v362 = vunpack.c.l.b16 %v200
      %v363 = vunpack.c.h.b16 %v200
      %v364 = vunpack.c.l.b16 %v201
      %v365 = vunpack.c.h.b16 %v201
      %v366 = vunpack.c.l.b16 %v202
      %v367 = vunpack.c.h.b16 %v202
      %v368 = vunpack.c.l.b16 %v203
      %v369 = vunpack.c.h.b16 %v203
      %v370 = vunpack.c.l.b16 %v204
      %v371 = vunpack.c.h.b16 %v204
      %v372 = vunpack.c.l.b16 %v205
      %v373 = vunpack.c.h.b16 %v205
      %v374 = vunpack.c.l.b16 %v206
      %v375 = vunpack.c.h.b16 %v206
      %v376 = vunpack.c.l.b16 %v207
      %v377 = vunpack.c.h.b16 %v207
      %v378 = vunpack.c.l.b16 %v208
      %v379 = vunpack.c.h.b16 %v208
      %v380 = vunpack.c.l.b16 %v209
      %v381 = vunpack.c.h.b16 %v209
      %v382 = vunpack.c.l.b16 %v210
      %v383 = vunpack.c.h.b16 %v210
      %v384 = vunpack.c.l.b16 %v211
      %v385 = vunpack.c.h.b16 %v211
      %v386 = vunpack.c.l.b16 %v212
      %v387 = vunpack.c.h.b16 %v212
      %v388 = vpack.c.b16 %v364, %v360
      %v389 = vpack.c.b16 %v365, %v361
      %v390 = vpack.c.b16 %v366, %v362
      %v391 = vpack.c.b16 %v367, %v363
      %v392 = vpack.c.b16 %v372, %v368
      %v393 = vpack.c.b16 %v373, %v369
      %v394 = vpack.c.b16 %v374, %v370
      %v395 = vpack.c.b16 %v375, %v371
      %v396 = vpack.c.b16 %v380, %v376
      %v397 = vpack.c.b16 %v381, %v377
      %v398 = vpack.c.b16 %v382, %v378
      %v399 = vpack.c.b16 %v383, %v379
      %v400 = vpack.c.b16 %v384, %v384
      %v401 = vpack.c.b16 %v385, %v385
      %v402 = vpack.c.b16 %v386, %v386
      %v403 = vpack.c.b16 %v387, %v387
      %vm404 = vsmask.f32 7424
      %v406 = vshrl.u32 %v388, 16
      %v408 = vshll.u32 %v388, 16
      %v410 = vrot.slane %v408, 1
      %v411 = vor.u32 %v406, %v410
      %v413 = vshll.u32 %v392, 16
      %v415 = vrot.slane %v413, 1
      %v416 = vsel %vm404, %v411, %v415
      %v418 = vshrl.u32 %v389, 16
      %v420 = vshll.u32 %v389, 16
      %v422 = vrot.slane %v420, 1
      %v423 = vor.u32 %v418, %v422
      %v425 = vshll.u32 %v393, 16
      %v427 = vrot.slane %v425, 1
      %v428 = vsel %vm404, %v423, %v427
      %v430 = vshrl.u32 %v390, 16
      %v432 = vshll.u32 %v390, 16
      %v434 = vrot.slane %v432, 1
      %v435 = vor.u32 %v430, %v434
      %v437 = vshll.u32 %v394, 16
      %v439 = vrot.slane %v437, 1
      %v440 = vsel %vm404, %v435, %v439
      %v442 = vshrl.u32 %v391, 16
      %v444 = vshll.u32 %v391, 16
      %v446 = vrot.slane %v444, 1
      %v447 = vor.u32 %v442, %v446
      %v449 = vshll.u32 %v395, 16
      %v451 = vrot.slane %v449, 1
      %v452 = vsel %vm404, %v447, %v451
      %v453 = vshrl.u32 %v392, 16
      %v455 = vor.u32 %v453, %v415
      %v457 = vshll.u32 %v396, 16
      %v459 = vrot.slane %v457, 1
      %v460 = vsel %vm404, %v455, %v459
      %v461 = vshrl.u32 %v393, 16
      %v463 = vor.u32 %v461, %v427
      %v465 = vshll.u32 %v397, 16
      %v467 = vrot.slane %v465, 1
      %v468 = vsel %vm404, %v463, %v467
      %v469 = vshrl.u32 %v394, 16
      %v471 = vor.u32 %v469, %v439
      %v473 = vshll.u32 %v398, 16
      %v475 = vrot.slane %v473, 1
      %v476 = vsel %vm404, %v471, %v475
      %v477 = vshrl.u32 %v395, 16
      %v479 = vor.u32 %v477, %v451
      %v481 = vshll.u32 %v399, 16
      %v483 = vrot.slane %v481, 1
      %v484 = vsel %vm404, %v479, %v483
      %v485 = vshrl.u32 %v396, 16
      %v487 = vor.u32 %v485, %v459
      %v489 = vshll.u32 %v400, 16
      %v491 = vrot.slane %v489, 1
      %v492 = vsel %vm404, %v487, %v491
      %v493 = vshrl.u32 %v397, 16
      %v495 = vor.u32 %v493, %v467
      %v497 = vshll.u32 %v401, 16
      %v499 = vrot.slane %v497, 1
      %v500 = vsel %vm404, %v495, %v499
      %v501 = vshrl.u32 %v398, 16
      %v503 = vor.u32 %v501, %v475
      %v505 = vshll.u32 %v402, 16
      %v507 = vrot.slane %v505, 1
      %v508 = vsel %vm404, %v503, %v507
      %v509 = vshrl.u32 %v399, 16
      %v511 = vor.u32 %v509, %v483
      %v513 = vshll.u32 %v403, 16
      %v515 = vrot.slane %v513, 1
      %v516 = vsel %vm404, %v511, %v515
      %v593 = vunpack.c.l.b16 %v282
      %v594 = vunpack.c.l.b16 %v283
      %v595 = vunpack.c.l.b16 %v284
      %v596 = vunpack.c.l.b16 %v285
      %v597 = vunpack.c.l.b16 %v286
      %v598 = vunpack.c.l.b16 %v287
      %v599 = vunpack.c.l.b16 %v288
      %v600 = vunpack.c.l.b16 %v289
      %v601 = vunpack.c.l.b16 %v290
      %v602 = vunpack.c.l.b16 %v291
      %v603 = vunpack.c.l.b16 %v292
      %v604 = vunpack.c.l.b16 %v293
      %v605 = vunpack.c.l.b16 %v294
      %v606 = vunpack.c.l.b16 %v295
      %v607 = vunpack.c.l.b16 %v296
      %v608 = vunpack.c.l.b16 %v297
      %v609 = vunpack.c.l.b16 %v298
      %v610 = vunpack.c.l.b16 %v299
      %v611 = vunpack.c.l.b16 %v300
      %v612 = vunpack.c.l.b16 %v301
      %v613 = vunpack.c.l.b16 %v302
      %v614 = vunpack.c.l.b16 %v303
      %v615 = vunpack.c.l.b16 %v304
      %v616 = vunpack.c.l.b16 %v305
      %v617 = vunpack.c.l.b16 %v306
      %v618 = vunpack.c.l.b16 %v307
      %v619 = vunpack.c.l.b16 %v308
      %v620 = vunpack.c.l.b16 %v309
      %v621 = vunpack.c.l.b16 %v310
      %v622 = vunpack.c.l.b16 %v311
      %v623 = vunpack.c.l.b16 %v312
      %v624 = vunpack.c.l.b16 %v313
      %v625 = vunpack.c.l.b16 %v314
      %v626 = vunpack.c.l.b16 %v315
      %v627 = vunpack.c.l.b16 %v316
      %v628 = vunpack.c.l.b16 %v317
      %v629 = vunpack.c.l.b16 %v318
      %v630 = vunpack.c.l.b16 %v319
      %v631 = vunpack.c.l.b16 %v320
      %v632 = vunpack.c.l.b16 %v321
      %v633 = vunpack.c.l.b16 %v322
      %v634 = vunpack.c.l.b16 %v323
      %v635 = vunpack.c.l.b16 %v324
      %v636 = vunpack.c.l.b16 %v325
      %v637 = vunpack.c.l.b16 %v326
      %v638 = vunpack.c.l.b16 %v327
      %v639 = vunpack.c.l.b16 %v328
      %v640 = vunpack.c.l.b16 %v329
      %v641 = vunpack.c.l.b16 %v330
      %v642 = vunpack.c.l.b16 %v331
      %v643 = vunpack.c.l.b16 %v332
      %v644 = vunpack.c.l.b16 %v333
      %v645 = vunpack.c.l.b16 %v334
      %v646 = vunpack.c.l.b16 %v335
      %v647 = vunpack.c.l.b16 %v336
      %v648 = vunpack.c.l.b16 %v337
      %v649 = vunpack.c.l.b16 %v338
      %v650 = vunpack.c.l.b16 %v339
      %v651 = vunpack.c.l.b16 %v340
      %v652 = vunpack.c.l.b16 %v341
      %v653 = vunpack.c.l.b16 %v342
      %v654 = vunpack.c.l.b16 %v343
      %v655 = vunpack.c.l.b16 %v344
      %v656 = vunpack.c.l.b16 %v345
      %v657 = vpack.c.b16 %v594, %v593
      %v658 = vpack.c.b16 %v596, %v595
      %v659 = vpack.c.b16 %v598, %v597
      %v660 = vpack.c.b16 %v600, %v599
      %v661 = vpack.c.b16 %v602, %v601
      %v662 = vpack.c.b16 %v604, %v603
      %v663 = vpack.c.b16 %v606, %v605
      %v664 = vpack.c.b16 %v608, %v607
      %v665 = vpack.c.b16 %v610, %v609
      %v666 = vpack.c.b16 %v612, %v611
      %v667 = vpack.c.b16 %v614, %v613
      %v668 = vpack.c.b16 %v616, %v615
      %v669 = vpack.c.b16 %v618, %v617
      %v670 = vpack.c.b16 %v620, %v619
      %v671 = vpack.c.b16 %v622, %v621
      %v672 = vpack.c.b16 %v624, %v623
      %v673 = vpack.c.b16 %v626, %v625
      %v674 = vpack.c.b16 %v628, %v627
      %v675 = vpack.c.b16 %v630, %v629
      %v676 = vpack.c.b16 %v632, %v631
      %v677 = vpack.c.b16 %v634, %v633
      %v678 = vpack.c.b16 %v636, %v635
      %v679 = vpack.c.b16 %v638, %v637
      %v680 = vpack.c.b16 %v640, %v639
      %v681 = vpack.c.b16 %v642, %v641
      %v682 = vpack.c.b16 %v644, %v643
      %v683 = vpack.c.b16 %v646, %v645
      %v684 = vpack.c.b16 %v648, %v647
      %v685 = vpack.c.b16 %v650, %v649
      %v686 = vpack.c.b16 %v652, %v651
      %v687 = vpack.c.b16 %v654, %v653
      %v688 = vpack.c.b16 %v656, %v655
      %721 = vmatprep.subr.bf16.mxu0 0
      %722 = vmatpush1.bf16.msra.mxu0 %v657
      %723 = vmatprep.subr.bf16.mxu0 0
      %724 = vmatpush1.bf16.msra.mxu0 %v658
      %725 = vmatprep.subr.bf16.mxu0 0
      %726 = vmatpush1.bf16.msra.mxu0 %v659
      %727 = vmatprep.subr.bf16.mxu0 0
      %728 = vmatpush1.bf16.msra.mxu0 %v660
      %729 = vmatprep.subr.bf16.mxu0 0
      %730 = vmatpush1.bf16.msra.mxu0 %v661
      %731 = vmatprep.subr.bf16.mxu0 0
      %732 = vmatpush1.bf16.msra.mxu0 %v662
      %733 = vmatprep.subr.bf16.mxu0 0
      %734 = vmatpush1.bf16.msra.mxu0 %v663
      %735 = vmatprep.subr.bf16.mxu0 0
      %736 = vmatpush1.bf16.msra.mxu0 %v664
      %737 = vmatprep.subr.bf16.mxu0 0
      %738 = vmatpush1.bf16.msra.mxu0 %v665
      %739 = vmatprep.subr.bf16.mxu0 0
      %740 = vmatpush1.bf16.msra.mxu0 %v666
      %741 = vmatprep.subr.bf16.mxu0 0
      %742 = vmatpush1.bf16.msra.mxu0 %v667
      %743 = vmatprep.subr.bf16.mxu0 0
      %744 = vmatpush1.bf16.msra.mxu0 %v668
      %745 = vmatprep.subr.bf16.mxu0 0
      %746 = vmatpush1.bf16.msra.mxu0 %v669
      %747 = vmatprep.subr.bf16.mxu0 0
      %748 = vmatpush1.bf16.msra.mxu0 %v670
      %749 = vmatprep.subr.bf16.mxu0 0
      %750 = vmatpush1.bf16.msra.mxu0 %v671
      %751 = vmatprep.subr.bf16.mxu0 0
      %752 = vmatpush1.bf16.msra.mxu0 %v672
      %753 = vmatprep.mubr.bf16.mxu0 %v428
      %754 = vmatmul.mubr.bf16.gmra.mrb[0].mxu0 %v416
      %v755 = vpop.f32.mrb[0].mxu0
      %v756 = vadd.f32 0.0, %v755
      %v757 = vpop.f32.mrb[0].mxu0
      %v758 = vpop.f32.mrb[0].mxu0
      %v759 = vadd.f32 0.0, %v758
      %v760 = vpop.f32.mrb[0].mxu0
      %761 = vmatprep.mubr.bf16.mxu0 %v468
      %762 = vmatmul.mubr.bf16.gmra.mrb[0].mxu0 %v460
      %v763 = vpop.f32.mrb[0].mxu0
      %v764 = vadd.f32 0.0, %v763
      %v765 = vpop.f32.mrb[0].mxu0
      %v766 = vpop.f32.mrb[0].mxu0
      %v767 = vadd.f32 0.0, %v766
      %v768 = vpop.f32.mrb[0].mxu0
      %769 = vmatprep.mubr.bf16.mxu0 %v500
      %770 = vmatmul.mubr.bf16.gmra.mrb[0].mxu0 %v492
      %v771 = vpop.f32.mrb[0].mxu0
      %v772 = vadd.f32 0.0, %v771
      %v773 = vpop.f32.mrb[0].mxu0
      %v774 = vpop.f32.mrb[0].mxu0
      %v775 = vadd.f32 0.0, %v774
      %v776 = vpop.f32.mrb[0].mxu0
      %777 = vdwg.mxu0
      %778 = vmatprep.subr.bf16.mxu0 0
      %779 = vmatpush1.bf16.msra.mxu0 %v673
      %780 = vmatprep.subr.bf16.mxu0 0
      %781 = vmatpush1.bf16.msra.mxu0 %v674
      %782 = vmatprep.subr.bf16.mxu0 0
      %783 = vmatpush1.bf16.msra.mxu0 %v675
      %784 = vmatprep.subr.bf16.mxu0 0
      %785 = vmatpush1.bf16.msra.mxu0 %v676
      %786 = vmatprep.subr.bf16.mxu0 0
      %787 = vmatpush1.bf16.msra.mxu0 %v677
      %788 = vmatprep.subr.bf16.mxu0 0
      %789 = vmatpush1.bf16.msra.mxu0 %v678
      %790 = vmatprep.subr.bf16.mxu0 0
      %791 = vmatpush1.bf16.msra.mxu0 %v679
      %792 = vmatprep.subr.bf16.mxu0 0
      %793 = vmatpush1.bf16.msra.mxu0 %v680
      %794 = vmatprep.subr.bf16.mxu0 0
      %795 = vmatpush1.bf16.msra.mxu0 %v681
      %796 = vmatprep.subr.bf16.mxu0 0
      %797 = vmatpush1.bf16.msra.mxu0 %v682
      %798 = vmatprep.subr.bf16.mxu0 0
      %799 = vmatpush1.bf16.msra.mxu0 %v683
      %800 = vmatprep.subr.bf16.mxu0 0
      %801 = vmatpush1.bf16.msra.mxu0 %v684
      %802 = vmatprep.subr.bf16.mxu0 0
      %803 = vmatpush1.bf16.msra.mxu0 %v685
      %804 = vmatprep.subr.bf16.mxu0 0
      %805 = vmatpush1.bf16.msra.mxu0 %v686
      %806 = vmatprep.subr.bf16.mxu0 0
      %807 = vmatpush1.bf16.msra.mxu0 %v687
      %808 = vmatprep.subr.bf16.mxu0 0
      %809 = vmatpush1.bf16.msra.mxu0 %v688
      %810 = vmatprep.mubr.bf16.mxu0 %v452
      %811 = vmatmul.mubr.bf16.gmra.mrb[0].mxu0 %v440
      %v812 = vpop.f32.mrb[0].mxu0
      %v813 = vadd.f32 %v756, %v812
      %v814 = vpop.f32.mrb[0].mxu0
      %v815 = vpop.f32.mrb[0].mxu0
      %v816 = vadd.f32 %v759, %v815
      %v817 = vpop.f32.mrb[0].mxu0
      %818 = vmatprep.mubr.bf16.mxu0 %v484
      %819 = vmatmul.mubr.bf16.gmra.mrb[0].mxu0 %v476
      %v820 = vpop.f32.mrb[0].mxu0
      %v821 = vadd.f32 %v764, %v820
      %v822 = vpop.f32.mrb[0].mxu0
      %v823 = vpop.f32.mrb[0].mxu0
      %v824 = vadd.f32 %v767, %v823
      %v825 = vpop.f32.mrb[0].mxu0
      %826 = vmatprep.mubr.bf16.mxu0 %v516
      %827 = vmatmul.mubr.bf16.gmra.mrb[0].mxu0 %v508
      %v828 = vpop.f32.mrb[0].mxu0
      %v829 = vadd.f32 %v772, %v828
      %v830 = vpop.f32.mrb[0].mxu0
      %v831 = vpop.f32.mrb[0].mxu0
      %v832 = vadd.f32 %v775, %v831
      %v833 = vpop.f32.mrb[0].mxu0
      %834 = vdwg.mxu0
      %v911 = vunpack.c.l.b16 %v217
      %v912 = vunpack.c.l.b16 %v218
      %v913 = vunpack.c.l.b16 %v219
      %v914 = vunpack.c.l.b16 %v220
      %v915 = vunpack.c.l.b16 %v221
      %v916 = vunpack.c.l.b16 %v222
      %v917 = vunpack.c.l.b16 %v223
      %v918 = vunpack.c.l.b16 %v224
      %v919 = vunpack.c.l.b16 %v225
      %v920 = vunpack.c.l.b16 %v226
      %v921 = vunpack.c.l.b16 %v227
      %v922 = vunpack.c.l.b16 %v228
      %v923 = vunpack.c.l.b16 %v229
      %v924 = vunpack.c.l.b16 %v230
      %v925 = vunpack.c.l.b16 %v231
      %v926 = vunpack.c.l.b16 %v232
      %v927 = vunpack.c.l.b16 %v233
      %v928 = vunpack.c.l.b16 %v234
      %v929 = vunpack.c.l.b16 %v235
      %v930 = vunpack.c.l.b16 %v236
      %v931 = vunpack.c.l.b16 %v237
      %v932 = vunpack.c.l.b16 %v238
      %v933 = vunpack.c.l.b16 %v239
      %v934 = vunpack.c.l.b16 %v240
      %v935 = vunpack.c.l.b16 %v241
      %v936 = vunpack.c.l.b16 %v242
      %v937 = vunpack.c.l.b16 %v243
      %v938 = vunpack.c.l.b16 %v244
      %v939 = vunpack.c.l.b16 %v245
      %v940 = vunpack.c.l.b16 %v246
      %v941 = vunpack.c.l.b16 %v247
      %v942 = vunpack.c.l.b16 %v248
      %v943 = vunpack.c.l.b16 %v249
      %v944 = vunpack.c.l.b16 %v250
      %v945 = vunpack.c.l.b16 %v251
      %v946 = vunpack.c.l.b16 %v252
      %v947 = vunpack.c.l.b16 %v253
      %v948 = vunpack.c.l.b16 %v254
      %v949 = vunpack.c.l.b16 %v255
      %v950 = vunpack.c.l.b16 %v256
      %v951 = vunpack.c.l.b16 %v257
      %v952 = vunpack.c.l.b16 %v258
      %v953 = vunpack.c.l.b16 %v259
      %v954 = vunpack.c.l.b16 %v260
      %v955 = vunpack.c.l.b16 %v261
      %v956 = vunpack.c.l.b16 %v262
      %v957 = vunpack.c.l.b16 %v263
      %v958 = vunpack.c.l.b16 %v264
      %v959 = vunpack.c.l.b16 %v265
      %v960 = vunpack.c.l.b16 %v266
      %v961 = vunpack.c.l.b16 %v267
      %v962 = vunpack.c.l.b16 %v268
      %v963 = vunpack.c.l.b16 %v269
      %v964 = vunpack.c.l.b16 %v270
      %v965 = vunpack.c.l.b16 %v271
      %v966 = vunpack.c.l.b16 %v272
      %v967 = vunpack.c.l.b16 %v273
      %v968 = vunpack.c.l.b16 %v274
      %v969 = vunpack.c.l.b16 %v275
      %v970 = vunpack.c.l.b16 %v276
      %v971 = vunpack.c.l.b16 %v277
      %v972 = vunpack.c.l.b16 %v278
      %v973 = vunpack.c.l.b16 %v279
      %v974 = vunpack.c.l.b16 %v280
      %v975 = vpack.c.b16 %v912, %v911
      %v976 = vpack.c.b16 %v914, %v913
      %v977 = vpack.c.b16 %v916, %v915
      %v978 = vpack.c.b16 %v918, %v917
      %v979 = vpack.c.b16 %v920, %v919
      %v980 = vpack.c.b16 %v922, %v921
      %v981 = vpack.c.b16 %v924, %v923
      %v982 = vpack.c.b16 %v926, %v925
      %v983 = vpack.c.b16 %v928, %v927
      %v984 = vpack.c.b16 %v930, %v929
      %v985 = vpack.c.b16 %v932, %v931
      %v986 = vpack.c.b16 %v934, %v933
      %v987 = vpack.c.b16 %v936, %v935
      %v988 = vpack.c.b16 %v938, %v937
      %v989 = vpack.c.b16 %v940, %v939
      %v990 = vpack.c.b16 %v942, %v941
      %v991 = vpack.c.b16 %v944, %v943
      %v992 = vpack.c.b16 %v946, %v945
      %v993 = vpack.c.b16 %v948, %v947
      %v994 = vpack.c.b16 %v950, %v949
      %v995 = vpack.c.b16 %v952, %v951
      %v996 = vpack.c.b16 %v954, %v953
      %v997 = vpack.c.b16 %v956, %v955
      %v998 = vpack.c.b16 %v958, %v957
      %v999 = vpack.c.b16 %v960, %v959
      %v1000 = vpack.c.b16 %v962, %v961
      %v1001 = vpack.c.b16 %v964, %v963
      %v1002 = vpack.c.b16 %v966, %v965
      %v1003 = vpack.c.b16 %v968, %v967
      %v1004 = vpack.c.b16 %v970, %v969
      %v1005 = vpack.c.b16 %v972, %v971
      %v1006 = vpack.c.b16 %v974, %v973
      %1039 = vmatprep.subr.bf16.mxu0 0
      %1040 = vmatpush1.bf16.msra.mxu0 %v975
      %1041 = vmatprep.subr.bf16.mxu0 0
      %1042 = vmatpush1.bf16.msra.mxu0 %v976
      %1043 = vmatprep.subr.bf16.mxu0 0
      %1044 = vmatpush1.bf16.msra.mxu0 %v977
      %1045 = vmatprep.subr.bf16.mxu0 0
      %1046 = vmatpush1.bf16.msra.mxu0 %v978
      %1047 = vmatprep.subr.bf16.mxu0 0
      %1048 = vmatpush1.bf16.msra.mxu0 %v979
      %1049 = vmatprep.subr.bf16.mxu0 0
      %1050 = vmatpush1.bf16.msra.mxu0 %v980
      %1051 = vmatprep.subr.bf16.mxu0 0
      %1052 = vmatpush1.bf16.msra.mxu0 %v981
      %1053 = vmatprep.subr.bf16.mxu0 0
      %1054 = vmatpush1.bf16.msra.mxu0 %v982
      %1055 = vmatprep.subr.bf16.mxu0 0
      %1056 = vmatpush1.bf16.msra.mxu0 %v983
      %1057 = vmatprep.subr.bf16.mxu0 0
      %1058 = vmatpush1.bf16.msra.mxu0 %v984
      %1059 = vmatprep.subr.bf16.mxu0 0
      %1060 = vmatpush1.bf16.msra.mxu0 %v985
      %1061 = vmatprep.subr.bf16.mxu0 0
      %1062 = vmatpush1.bf16.msra.mxu0 %v986
      %1063 = vmatprep.subr.bf16.mxu0 0
      %1064 = vmatpush1.bf16.msra.mxu0 %v987
      %1065 = vmatprep.subr.bf16.mxu0 0
      %1066 = vmatpush1.bf16.msra.mxu0 %v988
      %1067 = vmatprep.subr.bf16.mxu0 0
      %1068 = vmatpush1.bf16.msra.mxu0 %v989
      %1069 = vmatprep.subr.bf16.mxu0 0
      %1070 = vmatpush1.bf16.msra.mxu0 %v990
      %1071 = vmatprep.mubr.bf16.mxu0 %v389
      %1072 = vmatmul.mubr.bf16.gmra.mrb[0].mxu0 %v388
      %v1073 = vpop.f32.mrb[0].mxu0
      %v1074 = vadd.f32 %v813, %v1073
      %v1075 = vpop.f32.mrb[0].mxu0
      %v1076 = vpop.f32.mrb[0].mxu0
      %v1077 = vadd.f32 %v816, %v1076
      %v1078 = vpop.f32.mrb[0].mxu0
      %1079 = vmatprep.mubr.bf16.mxu0 %v393
      %1080 = vmatmul.mubr.bf16.gmra.mrb[0].mxu0 %v392
      %v1081 = vpop.f32.mrb[0].mxu0
      %v1082 = vadd.f32 %v821, %v1081
      %v1083 = vpop.f32.mrb[0].mxu0
      %v1084 = vpop.f32.mrb[0].mxu0
      %v1085 = vadd.f32 %v824, %v1084
      %v1086 = vpop.f32.mrb[0].mxu0
      %1087 = vmatprep.mubr.bf16.mxu0 %v397
      %1088 = vmatmul.mubr.bf16.gmra.mrb[0].mxu0 %v396
      %v1089 = vpop.f32.mrb[0].mxu0
      %v1090 = vadd.f32 %v829, %v1089
      %v1091 = vpop.f32.mrb[0].mxu0
      %v1092 = vpop.f32.mrb[0].mxu0
      %v1093 = vadd.f32 %v832, %v1092
      %v1094 = vpop.f32.mrb[0].mxu0
      %1095 = vdwg.mxu0
      %1096 = vmatprep.subr.bf16.mxu0 0
      %1097 = vmatpush1.bf16.msra.mxu0 %v991
      %1098 = vmatprep.subr.bf16.mxu0 0
      %1099 = vmatpush1.bf16.msra.mxu0 %v992
      %1100 = vmatprep.subr.bf16.mxu0 0
      %1101 = vmatpush1.bf16.msra.mxu0 %v993
      %1102 = vmatprep.subr.bf16.mxu0 0
      %1103 = vmatpush1.bf16.msra.mxu0 %v994
      %1104 = vmatprep.subr.bf16.mxu0 0
      %1105 = vmatpush1.bf16.msra.mxu0 %v995
      %1106 = vmatprep.subr.bf16.mxu0 0
      %1107 = vmatpush1.bf16.msra.mxu0 %v996
      %1108 = vmatprep.subr.bf16.mxu0 0
      %1109 = vmatpush1.bf16.msra.mxu0 %v997
      %1110 = vmatprep.subr.bf16.mxu0 0
      %1111 = vmatpush1.bf16.msra.mxu0 %v998
      %1112 = vmatprep.subr.bf16.mxu0 0
      %1113 = vmatpush1.bf16.msra.mxu0 %v999
      %1114 = vmatprep.subr.bf16.mxu0 0
      %1115 = vmatpush1.bf16.msra.mxu0 %v1000
      %1116 = vmatprep.subr.bf16.mxu0 0
      %1117 = vmatpush1.bf16.msra.mxu0 %v1001
      %1118 = vmatprep.subr.bf16.mxu0 0
      %1119 = vmatpush1.bf16.msra.mxu0 %v1002
      %1120 = vmatprep.subr.bf16.mxu0 0
      %1121 = vmatpush1.bf16.msra.mxu0 %v1003
      %1122 = vmatprep.subr.bf16.mxu0 0
      %1123 = vmatpush1.bf16.msra.mxu0 %v1004
      %1124 = vmatprep.subr.bf16.mxu0 0
      %1125 = vmatpush1.bf16.msra.mxu0 %v1005
      %1126 = vmatprep.subr.bf16.mxu0 0
      %1127 = vmatpush1.bf16.msra.mxu0 %v1006
      %1128 = vmatprep.mubr.bf16.mxu0 %v391
      %1129 = vmatmul.mubr.bf16.gmra.mrb[0].mxu0 %v390
      %v1130 = vpop.f32.mrb[0].mxu0
      %v1131 = vadd.f32 %v1074, %v1130
      %v1132 = vpop.f32.mrb[0].mxu0
      %v1133 = vpop.f32.mrb[0].mxu0
      %v1134 = vadd.f32 %v1077, %v1133
      %v1135 = vpop.f32.mrb[0].mxu0
      %1136 = vmatprep.mubr.bf16.mxu0 %v395
      %1137 = vmatmul.mubr.bf16.gmra.mrb[0].mxu0 %v394
      %v1138 = vpop.f32.mrb[0].mxu0
      %v1139 = vadd.f32 %v1082, %v1138
      %v1140 = vpop.f32.mrb[0].mxu0
      %v1141 = vpop.f32.mrb[0].mxu0
      %v1142 = vadd.f32 %v1085, %v1141
      %v1143 = vpop.f32.mrb[0].mxu0
      %1144 = vmatprep.mubr.bf16.mxu0 %v399
      %1145 = vmatmul.mubr.bf16.gmra.mrb[0].mxu0 %v398
      %v1146 = vpop.f32.mrb[0].mxu0
      %v1147 = vadd.f32 %v1090, %v1146
      %v1148 = vpop.f32.mrb[0].mxu0
      %v1149 = vpop.f32.mrb[0].mxu0
      %v1150 = vadd.f32 %v1093, %v1149
      %v1151 = vpop.f32.mrb[0].mxu0
      %1152 = vdwg.mxu0
      %s1153 = scalar_lea.vmem %s1, 512
      %v1154 = vld [vmem:[%s1153] sm:$0xf]
      %v1155 = vld [vmem:[%s1153 + $0x4] sm:$0xf]
      %v1156 = vld [vmem:[%s1153 + $0x8] sm:$0xf]
      %v1157 = vld [vmem:[%s1153 + $0xc] sm:$0xf]
      %v1158 = vld [vmem:[%s1153 + $0x10] sm:$0xf]
      %v1159 = vld [vmem:[%s1153 + $0x14] sm:$0xf]
      %v1160 = vld [vmem:[%s1153 + $0x18] sm:$0xf]
      %v1161 = vld [vmem:[%s1153 + $0x1c] sm:$0xf]
      %v1162 = vld [vmem:[%s1153 + $0x20] sm:$0xf]
      %v1163 = vld [vmem:[%s1153 + $0x24] sm:$0xf]
      %v1164 = vld [vmem:[%s1153 + $0x28] sm:$0xf]
      %v1165 = vld [vmem:[%s1153 + $0x2c] sm:$0xf]
      %v1166 = vld [vmem:[%s1153 + $0x30] sm:$0xf]
      %v1167 = vld [vmem:[%s1153 + $0x34] sm:$0xf]
      %v1168 = vld [vmem:[%s1153 + $0x38] sm:$0xf]
      %v1169 = vld [vmem:[%s1153 + $0x3c] sm:$0xf]
      %v1170 = vld [vmem:[%s1153 + $0x40] sm:$0xf]
      %v1171 = vld [vmem:[%s1153 + $0x44] sm:$0xf]
      %v1172 = vld [vmem:[%s1153 + $0x48] sm:$0xf]
      %v1173 = vld [vmem:[%s1153 + $0x4c] sm:$0xf]
      %v1174 = vld [vmem:[%s1153 + $0x50] sm:$0xf]
      %v1175 = vld [vmem:[%s1153 + $0x54] sm:$0xf]
      %v1176 = vld [vmem:[%s1153 + $0x58] sm:$0xf]
      %v1177 = vld [vmem:[%s1153 + $0x5c] sm:$0xf]
      %v1178 = vld [vmem:[%s1153 + $0x60] sm:$0xf]
      %v1179 = vld [vmem:[%s1153 + $0x64] sm:$0xf]
      %v1180 = vld [vmem:[%s1153 + $0x68] sm:$0xf]
      %v1181 = vld [vmem:[%s1153 + $0x6c] sm:$0xf]
      %v1182 = vld [vmem:[%s1153 + $0x70] sm:$0xf]
      %v1183 = vld [vmem:[%s1153 + $0x74] sm:$0xf]
      %v1184 = vld [vmem:[%s1153 + $0x78] sm:$0xf]
      %v1185 = vld [vmem:[%s1153 + $0x7c] sm:$0xf]
      %v1186 = vld [vmem:[%s1153 + $0x80] sm:$0xf]
      %v1187 = vld [vmem:[%s1153 + $0x84] sm:$0xf]
      %v1188 = vld [vmem:[%s1153 + $0x88] sm:$0xf]
      %v1189 = vld [vmem:[%s1153 + $0x8c] sm:$0xf]
      %v1190 = vld [vmem:[%s1153 + $0x90] sm:$0xf]
      %v1191 = vld [vmem:[%s1153 + $0x94] sm:$0xf]
      %v1192 = vld [vmem:[%s1153 + $0x98] sm:$0xf]
      %v1193 = vld [vmem:[%s1153 + $0x9c] sm:$0xf]
      %v1194 = vld [vmem:[%s1153 + $0xa0] sm:$0xf]
      %v1195 = vld [vmem:[%s1153 + $0xa4] sm:$0xf]
      %v1196 = vld [vmem:[%s1153 + $0xa8] sm:$0xf]
      %v1197 = vld [vmem:[%s1153 + $0xac] sm:$0xf]
      %v1198 = vld [vmem:[%s1153 + $0xb0] sm:$0xf]
      %v1199 = vld [vmem:[%s1153 + $0xb4] sm:$0xf]
      %v1200 = vld [vmem:[%s1153 + $0xb8] sm:$0xf]
      %v1201 = vld [vmem:[%s1153 + $0xbc] sm:$0xf]
      %v1202 = vld [vmem:[%s1153 + $0xc0] sm:$0xf]
      %v1203 = vld [vmem:[%s1153 + $0xc4] sm:$0xf]
      %v1204 = vld [vmem:[%s1153 + $0xc8] sm:$0xf]
      %v1205 = vld [vmem:[%s1153 + $0xcc] sm:$0xf]
      %v1206 = vld [vmem:[%s1153 + $0xd0] sm:$0xf]
      %v1207 = vld [vmem:[%s1153 + $0xd4] sm:$0xf]
      %v1208 = vld [vmem:[%s1153 + $0xd8] sm:$0xf]
      %v1209 = vld [vmem:[%s1153 + $0xdc] sm:$0xf]
      %v1210 = vld [vmem:[%s1153 + $0xe0] sm:$0xf]
      %v1211 = vld [vmem:[%s1153 + $0xe4] sm:$0xf]
      %v1212 = vld [vmem:[%s1153 + $0xe8] sm:$0xf]
      %v1213 = vld [vmem:[%s1153 + $0xec] sm:$0xf]
      %v1214 = vld [vmem:[%s1153 + $0xf0] sm:$0xf]
      %v1215 = vld [vmem:[%s1153 + $0xf4] sm:$0xf]
      %v1216 = vld [vmem:[%s1153 + $0xf8] sm:$0xf]
      %v1217 = vld [vmem:[%s1153 + $0xfc] sm:$0xf]
      %vm1218 = vcmask 1046528
      %v1219 = vrot.slane %v388, 1
      %v1220 = vrot.slane %v392, 1
      %v1221 = vsel %vm1218, %v1219, %v1220
      %v1222 = vrot.slane %v389, 1
      %v1223 = vrot.slane %v393, 1
      %v1224 = vsel %vm1218, %v1222, %v1223
      %v1225 = vrot.slane %v390, 1
      %v1226 = vrot.slane %v394, 1
      %v1227 = vsel %vm1218, %v1225, %v1226
      %v1228 = vrot.slane %v391, 1
      %v1229 = vrot.slane %v395, 1
      %v1230 = vsel %vm1218, %v1228, %v1229
      %v1231 = vrot.slane %v396, 1
      %v1232 = vsel %vm1218, %v1220, %v1231
      %v1233 = vrot.slane %v397, 1
      %v1234 = vsel %vm1218, %v1223, %v1233
      %v1235 = vrot.slane %v398, 1
      %v1236 = vsel %vm1218, %v1226, %v1235
      %v1237 = vrot.slane %v399, 1
      %v1238 = vsel %vm1218, %v1229, %v1237
      %v1239 = vrot.slane %v400, 1
      %v1240 = vsel %vm1218, %v1231, %v1239
      %v1241 = vrot.slane %v401, 1
      %v1242 = vsel %vm1218, %v1233, %v1241
      %v1243 = vrot.slane %v402, 1
      %v1244 = vsel %vm1218, %v1235, %v1243
      %v1245 = vrot.slane %v403, 1
      %v1246 = vsel %vm1218, %v1237, %v1245
      %v1323 = vunpack.c.l.b16 %v1154
      %v1324 = vunpack.c.l.b16 %v1155
      %v1325 = vunpack.c.l.b16 %v1156
      %v1326 = vunpack.c.l.b16 %v1157
      %v1327 = vunpack.c.l.b16 %v1158
      %v1328 = vunpack.c.l.b16 %v1159
      %v1329 = vunpack.c.l.b16 %v1160
      %v1330 = vunpack.c.l.b16 %v1161
      %v1331 = vunpack.c.l.b16 %v1162
      %v1332 = vunpack.c.l.b16 %v1163
      %v1333 = vunpack.c.l.b16 %v1164
      %v1334 = vunpack.c.l.b16 %v1165
      %v1335 = vunpack.c.l.b16 %v1166
      %v1336 = vunpack.c.l.b16 %v1167
      %v1337 = vunpack.c.l.b16 %v1168
      %v1338 = vunpack.c.l.b16 %v1169
      %v1339 = vunpack.c.l.b16 %v1170
      %v1340 = vunpack.c.l.b16 %v1171
      %v1341 = vunpack.c.l.b16 %v1172
      %v1342 = vunpack.c.l.b16 %v1173
      %v1343 = vunpack.c.l.b16 %v1174
      %v1344 = vunpack.c.l.b16 %v1175
      %v1345 = vunpack.c.l.b16 %v1176
      %v1346 = vunpack.c.l.b16 %v1177
      %v1347 = vunpack.c.l.b16 %v1178
      %v1348 = vunpack.c.l.b16 %v1179
      %v1349 = vunpack.c.l.b16 %v1180
      %v1350 = vunpack.c.l.b16 %v1181
      %v1351 = vunpack.c.l.b16 %v1182
      %v1352 = vunpack.c.l.b16 %v1183
      %v1353 = vunpack.c.l.b16 %v1184
      %v1354 = vunpack.c.l.b16 %v1185
      %v1355 = vunpack.c.l.b16 %v1186
      %v1356 = vunpack.c.l.b16 %v1187
      %v1357 = vunpack.c.l.b16 %v1188
      %v1358 = vunpack.c.l.b16 %v1189
      %v1359 = vunpack.c.l.b16 %v1190
      %v1360 = vunpack.c.l.b16 %v1191
      %v1361 = vunpack.c.l.b16 %v1192
      %v1362 = vunpack.c.l.b16 %v1193
      %v1363 = vunpack.c.l.b16 %v1194
      %v1364 = vunpack.c.l.b16 %v1195
      %v1365 = vunpack.c.l.b16 %v1196
      %v1366 = vunpack.c.l.b16 %v1197
      %v1367 = vunpack.c.l.b16 %v1198
      %v1368 = vunpack.c.l.b16 %v1199
      %v1369 = vunpack.c.l.b16 %v1200
      %v1370 = vunpack.c.l.b16 %v1201
      %v1371 = vunpack.c.l.b16 %v1202
      %v1372 = vunpack.c.l.b16 %v1203
      %v1373 = vunpack.c.l.b16 %v1204
      %v1374 = vunpack.c.l.b16 %v1205
      %v1375 = vunpack.c.l.b16 %v1206
      %v1376 = vunpack.c.l.b16 %v1207
      %v1377 = vunpack.c.l.b16 %v1208
      %v1378 = vunpack.c.l.b16 %v1209
      %v1379 = vunpack.c.l.b16 %v1210
      %v1380 = vunpack.c.l.b16 %v1211
      %v1381 = vunpack.c.l.b16 %v1212
      %v1382 = vunpack.c.l.b16 %v1213
      %v1383 = vunpack.c.l.b16 %v1214
      %v1384 = vunpack.c.l.b16 %v1215
      %v1385 = vunpack.c.l.b16 %v1216
      %v1386 = vunpack.c.l.b16 %v1217
      %v1387 = vpack.c.b16 %v1324, %v1323
      %v1388 = vpack.c.b16 %v1326, %v1325
      %v1389 = vpack.c.b16 %v1328, %v1327
      %v1390 = vpack.c.b16 %v1330, %v1329
      %v1391 = vpack.c.b16 %v1332, %v1331
      %v1392 = vpack.c.b16 %v1334, %v1333
      %v1393 = vpack.c.b16 %v1336, %v1335
      %v1394 = vpack.c.b16 %v1338, %v1337
      %v1395 = vpack.c.b16 %v1340, %v1339
      %v1396 = vpack.c.b16 %v1342, %v1341
      %v1397 = vpack.c.b16 %v1344, %v1343
      %v1398 = vpack.c.b16 %v1346, %v1345
      %v1399 = vpack.c.b16 %v1348, %v1347
      %v1400 = vpack.c.b16 %v1350, %v1349
      %v1401 = vpack.c.b16 %v1352, %v1351
      %v1402 = vpack.c.b16 %v1354, %v1353
      %v1403 = vpack.c.b16 %v1356, %v1355
      %v1404 = vpack.c.b16 %v1358, %v1357
      %v1405 = vpack.c.b16 %v1360, %v1359
      %v1406 = vpack.c.b16 %v1362, %v1361
      %v1407 = vpack.c.b16 %v1364, %v1363
      %v1408 = vpack.c.b16 %v1366, %v1365
      %v1409 = vpack.c.b16 %v1368, %v1367
      %v1410 = vpack.c.b16 %v1370, %v1369
      %v1411 = vpack.c.b16 %v1372, %v1371
      %v1412 = vpack.c.b16 %v1374, %v1373
      %v1413 = vpack.c.b16 %v1376, %v1375
      %v1414 = vpack.c.b16 %v1378, %v1377
      %v1415 = vpack.c.b16 %v1380, %v1379
      %v1416 = vpack.c.b16 %v1382, %v1381
      %v1417 = vpack.c.b16 %v1384, %v1383
      %v1418 = vpack.c.b16 %v1386, %v1385
      %1451 = vmatprep.subr.bf16.mxu0 0
      %1452 = vmatpush1.bf16.msra.mxu0 %v1387
      %1453 = vmatprep.subr.bf16.mxu0 0
      %1454 = vmatpush1.bf16.msra.mxu0 %v1388
      %1455 = vmatprep.subr.bf16.mxu0 0
      %1456 = vmatpush1.bf16.msra.mxu0 %v1389
      %1457 = vmatprep.subr.bf16.mxu0 0
      %1458 = vmatpush1.bf16.msra.mxu0 %v1390
      %1459 = vmatprep.subr.bf16.mxu0 0
      %1460 = vmatpush1.bf16.msra.mxu0 %v1391
      %1461 = vmatprep.subr.bf16.mxu0 0
      %1462 = vmatpush1.bf16.msra.mxu0 %v1392
      %1463 = vmatprep.subr.bf16.mxu0 0
      %1464 = vmatpush1.bf16.msra.mxu0 %v1393
      %1465 = vmatprep.subr.bf16.mxu0 0
      %1466 = vmatpush1.bf16.msra.mxu0 %v1394
      %1467 = vmatprep.subr.bf16.mxu0 0
      %1468 = vmatpush1.bf16.msra.mxu0 %v1395
      %1469 = vmatprep.subr.bf16.mxu0 0
      %1470 = vmatpush1.bf16.msra.mxu0 %v1396
      %1471 = vmatprep.subr.bf16.mxu0 0
      %1472 = vmatpush1.bf16.msra.mxu0 %v1397
      %1473 = vmatprep.subr.bf16.mxu0 0
      %1474 = vmatpush1.bf16.msra.mxu0 %v1398
      %1475 = vmatprep.subr.bf16.mxu0 0
      %1476 = vmatpush1.bf16.msra.mxu0 %v1399
      %1477 = vmatprep.subr.bf16.mxu0 0
      %1478 = vmatpush1.bf16.msra.mxu0 %v1400
      %1479 = vmatprep.subr.bf16.mxu0 0
      %1480 = vmatpush1.bf16.msra.mxu0 %v1401
      %1481 = vmatprep.subr.bf16.mxu0 0
      %1482 = vmatpush1.bf16.msra.mxu0 %v1402
      %1483 = vmatprep.mubr.bf16.mxu0 %v1224
      %1484 = vmatmul.mubr.bf16.gmra.mrb[0].mxu0 %v1221
      %v1485 = vpop.f32.mrb[0].mxu0
      %v1486 = vadd.f32 0.0, %v1485
      %v1487 = vpop.f32.mrb[0].mxu0
      %v1488 = vpop.f32.mrb[0].mxu0
      %v1489 = vadd.f32 0.0, %v1488
      %v1490 = vpop.f32.mrb[0].mxu0
      %1491 = vmatprep.mubr.bf16.mxu0 %v1234
      %1492 = vmatmul.mubr.bf16.gmra.mrb[0].mxu0 %v1232
      %v1493 = vpop.f32.mrb[0].mxu0
      %v1494 = vadd.f32 0.0, %v1493
      %v1495 = vpop.f32.mrb[0].mxu0
      %v1496 = vpop.f32.mrb[0].mxu0
      %v1497 = vadd.f32 0.0, %v1496
      %v1498 = vpop.f32.mrb[0].mxu0
      %1499 = vmatprep.mubr.bf16.mxu0 %v1242
      %1500 = vmatmul.mubr.bf16.gmra.mrb[0].mxu0 %v1240
      %v1501 = vpop.f32.mrb[0].mxu0
      %v1502 = vadd.f32 0.0, %v1501
      %v1503 = vpop.f32.mrb[0].mxu0
      %v1504 = vpop.f32.mrb[0].mxu0
      %v1505 = vadd.f32 0.0, %v1504
      %v1506 = vpop.f32.mrb[0].mxu0
      %1507 = vdwg.mxu0
      %1508 = vmatprep.subr.bf16.mxu0 0
      %1509 = vmatpush1.bf16.msra.mxu0 %v1403
      %1510 = vmatprep.subr.bf16.mxu0 0
      %1511 = vmatpush1.bf16.msra.mxu0 %v1404
      %1512 = vmatprep.subr.bf16.mxu0 0
      %1513 = vmatpush1.bf16.msra.mxu0 %v1405
      %1514 = vmatprep.subr.bf16.mxu0 0
      %1515 = vmatpush1.bf16.msra.mxu0 %v1406
      %1516 = vmatprep.subr.bf16.mxu0 0
      %1517 = vmatpush1.bf16.msra.mxu0 %v1407
      %1518 = vmatprep.subr.bf16.mxu0 0
      %1519 = vmatpush1.bf16.msra.mxu0 %v1408
      %1520 = vmatprep.subr.bf16.mxu0 0
      %1521 = vmatpush1.bf16.msra.mxu0 %v1409
      %1522 = vmatprep.subr.bf16.mxu0 0
      %1523 = vmatpush1.bf16.msra.mxu0 %v1410
      %1524 = vmatprep.subr.bf16.mxu0 0
      %1525 = vmatpush1.bf16.msra.mxu0 %v1411
      %1526 = vmatprep.subr.bf16.mxu0 0
      %1527 = vmatpush1.bf16.msra.mxu0 %v1412
      %1528 = vmatprep.subr.bf16.mxu0 0
      %1529 = vmatpush1.bf16.msra.mxu0 %v1413
      %1530 = vmatprep.subr.bf16.mxu0 0
      %1531 = vmatpush1.bf16.msra.mxu0 %v1414
      %1532 = vmatprep.subr.bf16.mxu0 0
      %1533 = vmatpush1.bf16.msra.mxu0 %v1415
      %1534 = vmatprep.subr.bf16.mxu0 0
      %1535 = vmatpush1.bf16.msra.mxu0 %v1416
      %1536 = vmatprep.subr.bf16.mxu0 0
      %1537 = vmatpush1.bf16.msra.mxu0 %v1417
      %1538 = vmatprep.subr.bf16.mxu0 0
      %1539 = vmatpush1.bf16.msra.mxu0 %v1418
      %1540 = vmatprep.mubr.bf16.mxu0 %v1230
      %1541 = vmatmul.mubr.bf16.gmra.mrb[0].mxu0 %v1227
      %v1542 = vpop.f32.mrb[0].mxu0
      %v1543 = vadd.f32 %v1486, %v1542
      %v1544 = vpop.f32.mrb[0].mxu0
      %v1545 = vpop.f32.mrb[0].mxu0
      %v1546 = vadd.f32 %v1489, %v1545
      %v1547 = vpop.f32.mrb[0].mxu0
      %1548 = vmatprep.mubr.bf16.mxu0 %v1238
      %1549 = vmatmul.mubr.bf16.gmra.mrb[0].mxu0 %v1236
      %v1550 = vpop.f32.mrb[0].mxu0
      %v1551 = vadd.f32 %v1494, %v1550
      %v1552 = vpop.f32.mrb[0].mxu0
      %v1553 = vpop.f32.mrb[0].mxu0
      %v1554 = vadd.f32 %v1497, %v1553
      %v1555 = vpop.f32.mrb[0].mxu0
      %1556 = vmatprep.mubr.bf16.mxu0 %v1246
      %1557 = vmatmul.mubr.bf16.gmra.mrb[0].mxu0 %v1244
      %v1558 = vpop.f32.mrb[0].mxu0
      %v1559 = vadd.f32 %v1502, %v1558
      %v1560 = vpop.f32.mrb[0].mxu0
      %v1561 = vpop.f32.mrb[0].mxu0
      %v1562 = vadd.f32 %v1505, %v1561
      %v1563 = vpop.f32.mrb[0].mxu0
      %1564 = vdwg.mxu0
      %v1565 = vadd.f32 %v1131, %v1543
      %v1566 = vadd.f32 %v1134, %v1546
      %v1567 = vadd.f32 %v1139, %v1551
      %v1568 = vadd.f32 %v1142, %v1554
      %v1569 = vadd.f32 %v1147, %v1559
      %v1570 = vadd.f32 %v1150, %v1562
      %s1571 = scalar_lea.vmem %s1, 768
      %v1572 = vld [vmem:[%s1571] sm:$0xf]
      %v1573 = vld [vmem:[%s1571 + $0x4] sm:$0xf]
      %v1574 = vld [vmem:[%s1571 + $0x8] sm:$0xf]
      %v1575 = vld [vmem:[%s1571 + $0xc] sm:$0xf]
      %v1576 = vld [vmem:[%s1571 + $0x10] sm:$0xf]
      %v1577 = vld [vmem:[%s1571 + $0x14] sm:$0xf]
      %v1578 = vld [vmem:[%s1571 + $0x18] sm:$0xf]
      %v1579 = vld [vmem:[%s1571 + $0x1c] sm:$0xf]
      %v1580 = vld [vmem:[%s1571 + $0x20] sm:$0xf]
      %v1581 = vld [vmem:[%s1571 + $0x24] sm:$0xf]
      %v1582 = vld [vmem:[%s1571 + $0x28] sm:$0xf]
      %v1583 = vld [vmem:[%s1571 + $0x2c] sm:$0xf]
      %v1584 = vld [vmem:[%s1571 + $0x30] sm:$0xf]
      %v1585 = vld [vmem:[%s1571 + $0x34] sm:$0xf]
      %v1586 = vld [vmem:[%s1571 + $0x38] sm:$0xf]
      %v1587 = vld [vmem:[%s1571 + $0x3c] sm:$0xf]
      %v1588 = vld [vmem:[%s1571 + $0x40] sm:$0xf]
      %v1589 = vld [vmem:[%s1571 + $0x44] sm:$0xf]
      %v1590 = vld [vmem:[%s1571 + $0x48] sm:$0xf]
      %v1591 = vld [vmem:[%s1571 + $0x4c] sm:$0xf]
      %v1592 = vld [vmem:[%s1571 + $0x50] sm:$0xf]
      %v1593 = vld [vmem:[%s1571 + $0x54] sm:$0xf]
      %v1594 = vld [vmem:[%s1571 + $0x58] sm:$0xf]
      %v1595 = vld [vmem:[%s1571 + $0x5c] sm:$0xf]
      %v1596 = vld [vmem:[%s1571 + $0x60] sm:$0xf]
      %v1597 = vld [vmem:[%s1571 + $0x64] sm:$0xf]
      %v1598 = vld [vmem:[%s1571 + $0x68] sm:$0xf]
      %v1599 = vld [vmem:[%s1571 + $0x6c] sm:$0xf]
      %v1600 = vld [vmem:[%s1571 + $0x70] sm:$0xf]
      %v1601 = vld [vmem:[%s1571 + $0x74] sm:$0xf]
      %v1602 = vld [vmem:[%s1571 + $0x78] sm:$0xf]
      %v1603 = vld [vmem:[%s1571 + $0x7c] sm:$0xf]
      %v1604 = vld [vmem:[%s1571 + $0x80] sm:$0xf]
      %v1605 = vld [vmem:[%s1571 + $0x84] sm:$0xf]
      %v1606 = vld [vmem:[%s1571 + $0x88] sm:$0xf]
      %v1607 = vld [vmem:[%s1571 + $0x8c] sm:$0xf]
      %v1608 = vld [vmem:[%s1571 + $0x90] sm:$0xf]
      %v1609 = vld [vmem:[%s1571 + $0x94] sm:$0xf]
      %v1610 = vld [vmem:[%s1571 + $0x98] sm:$0xf]
      %v1611 = vld [vmem:[%s1571 + $0x9c] sm:$0xf]
      %v1612 = vld [vmem:[%s1571 + $0xa0] sm:$0xf]
      %v1613 = vld [vmem:[%s1571 + $0xa4] sm:$0xf]
      %v1614 = vld [vmem:[%s1571 + $0xa8] sm:$0xf]
      %v1615 = vld [vmem:[%s1571 + $0xac] sm:$0xf]
      %v1616 = vld [vmem:[%s1571 + $0xb0] sm:$0xf]
      %v1617 = vld [vmem:[%s1571 + $0xb4] sm:$0xf]
      %v1618 = vld [vmem:[%s1571 + $0xb8] sm:$0xf]
      %v1619 = vld [vmem:[%s1571 + $0xbc] sm:$0xf]
      %v1620 = vld [vmem:[%s1571 + $0xc0] sm:$0xf]
      %v1621 = vld [vmem:[%s1571 + $0xc4] sm:$0xf]
      %v1622 = vld [vmem:[%s1571 + $0xc8] sm:$0xf]
      %v1623 = vld [vmem:[%s1571 + $0xcc] sm:$0xf]
      %v1624 = vld [vmem:[%s1571 + $0xd0] sm:$0xf]
      %v1625 = vld [vmem:[%s1571 + $0xd4] sm:$0xf]
      %v1626 = vld [vmem:[%s1571 + $0xd8] sm:$0xf]
      %v1627 = vld [vmem:[%s1571 + $0xdc] sm:$0xf]
      %v1628 = vld [vmem:[%s1571 + $0xe0] sm:$0xf]
      %v1629 = vld [vmem:[%s1571 + $0xe4] sm:$0xf]
      %v1630 = vld [vmem:[%s1571 + $0xe8] sm:$0xf]
      %v1631 = vld [vmem:[%s1571 + $0xec] sm:$0xf]
      %v1632 = vld [vmem:[%s1571 + $0xf0] sm:$0xf]
      %v1633 = vld [vmem:[%s1571 + $0xf4] sm:$0xf]
      %v1634 = vld [vmem:[%s1571 + $0xf8] sm:$0xf]
      %v1635 = vld [vmem:[%s1571 + $0xfc] sm:$0xf]
      %v1636 = vpack.c.b16 %v368, %v364
      %v1637 = vpack.c.b16 %v369, %v365
      %v1638 = vpack.c.b16 %v370, %v366
      %v1639 = vpack.c.b16 %v371, %v367
      %v1640 = vpack.c.b16 %v376, %v372
      %v1641 = vpack.c.b16 %v377, %v373
      %v1642 = vpack.c.b16 %v378, %v374
      %v1643 = vpack.c.b16 %v379, %v375
      %v1644 = vpack.c.b16 %v384, %v380
      %v1645 = vpack.c.b16 %v385, %v381
      %v1646 = vpack.c.b16 %v386, %v382
      %v1647 = vpack.c.b16 %v387, %v383
      %v1724 = vunpack.c.l.b16 %v1572
      %v1725 = vunpack.c.l.b16 %v1573
      %v1726 = vunpack.c.l.b16 %v1574
      %v1727 = vunpack.c.l.b16 %v1575
      %v1728 = vunpack.c.l.b16 %v1576
      %v1729 = vunpack.c.l.b16 %v1577
      %v1730 = vunpack.c.l.b16 %v1578
      %v1731 = vunpack.c.l.b16 %v1579
      %v1732 = vunpack.c.l.b16 %v1580
      %v1733 = vunpack.c.l.b16 %v1581
      %v1734 = vunpack.c.l.b16 %v1582
      %v1735 = vunpack.c.l.b16 %v1583
      %v1736 = vunpack.c.l.b16 %v1584
      %v1737 = vunpack.c.l.b16 %v1585
      %v1738 = vunpack.c.l.b16 %v1586
      %v1739 = vunpack.c.l.b16 %v1587
      %v1740 = vunpack.c.l.b16 %v1588
      %v1741 = vunpack.c.l.b16 %v1589
      %v1742 = vunpack.c.l.b16 %v1590
      %v1743 = vunpack.c.l.b16 %v1591
      %v1744 = vunpack.c.l.b16 %v1592
      %v1745 = vunpack.c.l.b16 %v1593
      %v1746 = vunpack.c.l.b16 %v1594
      %v1747 = vunpack.c.l.b16 %v1595
      %v1748 = vunpack.c.l.b16 %v1596
      %v1749 = vunpack.c.l.b16 %v1597
      %v1750 = vunpack.c.l.b16 %v1598
      %v1751 = vunpack.c.l.b16 %v1599
      %v1752 = vunpack.c.l.b16 %v1600
      %v1753 = vunpack.c.l.b16 %v1601
      %v1754 = vunpack.c.l.b16 %v1602
      %v1755 = vunpack.c.l.b16 %v1603
      %v1756 = vunpack.c.l.b16 %v1604
      %v1757 = vunpack.c.l.b16 %v1605
      %v1758 = vunpack.c.l.b16 %v1606
      %v1759 = vunpack.c.l.b16 %v1607
      %v1760 = vunpack.c.l.b16 %v1608
      %v1761 = vunpack.c.l.b16 %v1609
      %v1762 = vunpack.c.l.b16 %v1610
      %v1763 = vunpack.c.l.b16 %v1611
      %v1764 = vunpack.c.l.b16 %v1612
      %v1765 = vunpack.c.l.b16 %v1613
      %v1766 = vunpack.c.l.b16 %v1614
      %v1767 = vunpack.c.l.b16 %v1615
      %v1768 = vunpack.c.l.b16 %v1616
      %v1769 = vunpack.c.l.b16 %v1617
      %v1770 = vunpack.c.l.b16 %v1618
      %v1771 = vunpack.c.l.b16 %v1619
      %v1772 = vunpack.c.l.b16 %v1620
      %v1773 = vunpack.c.l.b16 %v1621
      %v1774 = vunpack.c.l.b16 %v1622
      %v1775 = vunpack.c.l.b16 %v1623
      %v1776 = vunpack.c.l.b16 %v1624
      %v1777 = vunpack.c.l.b16 %v1625
      %v1778 = vunpack.c.l.b16 %v1626
      %v1779 = vunpack.c.l.b16 %v1627
      %v1780 = vunpack.c.l.b16 %v1628
      %v1781 = vunpack.c.l.b16 %v1629
      %v1782 = vunpack.c.l.b16 %v1630
      %v1783 = vunpack.c.l.b16 %v1631
      %v1784 = vunpack.c.l.b16 %v1632
      %v1785 = vunpack.c.l.b16 %v1633
      %v1786 = vunpack.c.l.b16 %v1634
      %v1787 = vunpack.c.l.b16 %v1635
      %v1788 = vpack.c.b16 %v1725, %v1724
      %v1789 = vpack.c.b16 %v1727, %v1726
      %v1790 = vpack.c.b16 %v1729, %v1728
      %v1791 = vpack.c.b16 %v1731, %v1730
      %v1792 = vpack.c.b16 %v1733, %v1732
      %v1793 = vpack.c.b16 %v1735, %v1734
      %v1794 = vpack.c.b16 %v1737, %v1736
      %v1795 = vpack.c.b16 %v1739, %v1738
      %v1796 = vpack.c.b16 %v1741, %v1740
      %v1797 = vpack.c.b16 %v1743, %v1742
      %v1798 = vpack.c.b16 %v1745, %v1744
      %v1799 = vpack.c.b16 %v1747, %v1746
      %v1800 = vpack.c.b16 %v1749, %v1748
      %v1801 = vpack.c.b16 %v1751, %v1750
      %v1802 = vpack.c.b16 %v1753, %v1752
      %v1803 = vpack.c.b16 %v1755, %v1754
      %v1804 = vpack.c.b16 %v1757, %v1756
      %v1805 = vpack.c.b16 %v1759, %v1758
      %v1806 = vpack.c.b16 %v1761, %v1760
      %v1807 = vpack.c.b16 %v1763, %v1762
      %v1808 = vpack.c.b16 %v1765, %v1764
      %v1809 = vpack.c.b16 %v1767, %v1766
      %v1810 = vpack.c.b16 %v1769, %v1768
      %v1811 = vpack.c.b16 %v1771, %v1770
      %v1812 = vpack.c.b16 %v1773, %v1772
      %v1813 = vpack.c.b16 %v1775, %v1774
      %v1814 = vpack.c.b16 %v1777, %v1776
      %v1815 = vpack.c.b16 %v1779, %v1778
      %v1816 = vpack.c.b16 %v1781, %v1780
      %v1817 = vpack.c.b16 %v1783, %v1782
      %v1818 = vpack.c.b16 %v1785, %v1784
      %v1819 = vpack.c.b16 %v1787, %v1786
      %1852 = vmatprep.subr.bf16.mxu0 0
      %1853 = vmatpush1.bf16.msra.mxu0 %v1788
      %1854 = vmatprep.subr.bf16.mxu0 0
      %1855 = vmatpush1.bf16.msra.mxu0 %v1789
      %1856 = vmatprep.subr.bf16.mxu0 0
      %1857 = vmatpush1.bf16.msra.mxu0 %v1790
      %1858 = vmatprep.subr.bf16.mxu0 0
      %1859 = vmatpush1.bf16.msra.mxu0 %v1791
      %1860 = vmatprep.subr.bf16.mxu0 0
      %1861 = vmatpush1.bf16.msra.mxu0 %v1792
      %1862 = vmatprep.subr.bf16.mxu0 0
      %1863 = vmatpush1.bf16.msra.mxu0 %v1793
      %1864 = vmatprep.subr.bf16.mxu0 0
      %1865 = vmatpush1.bf16.msra.mxu0 %v1794
      %1866 = vmatprep.subr.bf16.mxu0 0
      %1867 = vmatpush1.bf16.msra.mxu0 %v1795
      %1868 = vmatprep.subr.bf16.mxu0 0
      %1869 = vmatpush1.bf16.msra.mxu0 %v1796
      %1870 = vmatprep.subr.bf16.mxu0 0
      %1871 = vmatpush1.bf16.msra.mxu0 %v1797
      %1872 = vmatprep.subr.bf16.mxu0 0
      %1873 = vmatpush1.bf16.msra.mxu0 %v1798
      %1874 = vmatprep.subr.bf16.mxu0 0
      %1875 = vmatpush1.bf16.msra.mxu0 %v1799
      %1876 = vmatprep.subr.bf16.mxu0 0
      %1877 = vmatpush1.bf16.msra.mxu0 %v1800
      %1878 = vmatprep.subr.bf16.mxu0 0
      %1879 = vmatpush1.bf16.msra.mxu0 %v1801
      %1880 = vmatprep.subr.bf16.mxu0 0
      %1881 = vmatpush1.bf16.msra.mxu0 %v1802
      %1882 = vmatprep.subr.bf16.mxu0 0
      %1883 = vmatpush1.bf16.msra.mxu0 %v1803
      %1884 = vmatprep.mubr.bf16.mxu0 %v1637
      %1885 = vmatmul.mubr.bf16.gmra.mrb[0].mxu0 %v1636
      %v1886 = vpop.f32.mrb[0].mxu0
      %v1887 = vadd.f32 0.0, %v1886
      %v1888 = vpop.f32.mrb[0].mxu0
      %v1889 = vpop.f32.mrb[0].mxu0
      %v1890 = vadd.f32 0.0, %v1889
      %v1891 = vpop.f32.mrb[0].mxu0
      %1892 = vmatprep.mubr.bf16.mxu0 %v1641
      %1893 = vmatmul.mubr.bf16.gmra.mrb[0].mxu0 %v1640
      %v1894 = vpop.f32.mrb[0].mxu0
      %v1895 = vadd.f32 0.0, %v1894
      %v1896 = vpop.f32.mrb[0].mxu0
      %v1897 = vpop.f32.mrb[0].mxu0
      %v1898 = vadd.f32 0.0, %v1897
      %v1899 = vpop.f32.mrb[0].mxu0
      %1900 = vmatprep.mubr.bf16.mxu0 %v1645
      %1901 = vmatmul.mubr.bf16.gmra.mrb[0].mxu0 %v1644
      %v1902 = vpop.f32.mrb[0].mxu0
      %v1903 = vadd.f32 0.0, %v1902
      %v1904 = vpop.f32.mrb[0].mxu0
      %v1905 = vpop.f32.mrb[0].mxu0
      %v1906 = vadd.f32 0.0, %v1905
      %v1907 = vpop.f32.mrb[0].mxu0
      %1908 = vdwg.mxu0
      %1909 = vmatprep.subr.bf16.mxu0 0
      %1910 = vmatpush1.bf16.msra.mxu0 %v1804
      %1911 = vmatprep.subr.bf16.mxu0 0
      %1912 = vmatpush1.bf16.msra.mxu0 %v1805
      %1913 = vmatprep.subr.bf16.mxu0 0
      %1914 = vmatpush1.bf16.msra.mxu0 %v1806
      %1915 = vmatprep.subr.bf16.mxu0 0
      %1916 = vmatpush1.bf16.msra.mxu0 %v1807
      %1917 = vmatprep.subr.bf16.mxu0 0
      %1918 = vmatpush1.bf16.msra.mxu0 %v1808
      %1919 = vmatprep.subr.bf16.mxu0 0
      %1920 = vmatpush1.bf16.msra.mxu0 %v1809
      %1921 = vmatprep.subr.bf16.mxu0 0
      %1922 = vmatpush1.bf16.msra.mxu0 %v1810
      %1923 = vmatprep.subr.bf16.mxu0 0
      %1924 = vmatpush1.bf16.msra.mxu0 %v1811
      %1925 = vmatprep.subr.bf16.mxu0 0
      %1926 = vmatpush1.bf16.msra.mxu0 %v1812
      %1927 = vmatprep.subr.bf16.mxu0 0
      %1928 = vmatpush1.bf16.msra.mxu0 %v1813
      %1929 = vmatprep.subr.bf16.mxu0 0
      %1930 = vmatpush1.bf16.msra.mxu0 %v1814
      %1931 = vmatprep.subr.bf16.mxu0 0
      %1932 = vmatpush1.bf16.msra.mxu0 %v1815
      %1933 = vmatprep.subr.bf16.mxu0 0
      %1934 = vmatpush1.bf16.msra.mxu0 %v1816
      %1935 = vmatprep.subr.bf16.mxu0 0
      %1936 = vmatpush1.bf16.msra.mxu0 %v1817
      %1937 = vmatprep.subr.bf16.mxu0 0
      %1938 = vmatpush1.bf16.msra.mxu0 %v1818
      %1939 = vmatprep.subr.bf16.mxu0 0
      %1940 = vmatpush1.bf16.msra.mxu0 %v1819
      %1941 = vmatprep.mubr.bf16.mxu0 %v1639
      %1942 = vmatmul.mubr.bf16.gmra.mrb[0].mxu0 %v1638
      %v1943 = vpop.f32.mrb[0].mxu0
      %v1944 = vadd.f32 %v1887, %v1943
      %v1945 = vpop.f32.mrb[0].mxu0
      %v1946 = vpop.f32.mrb[0].mxu0
      %v1947 = vadd.f32 %v1890, %v1946
      %v1948 = vpop.f32.mrb[0].mxu0
      %1949 = vmatprep.mubr.bf16.mxu0 %v1643
      %1950 = vmatmul.mubr.bf16.gmra.mrb[0].mxu0 %v1642
      %v1951 = vpop.f32.mrb[0].mxu0
      %v1952 = vadd.f32 %v1895, %v1951
      %v1953 = vpop.f32.mrb[0].mxu0
      %v1954 = vpop.f32.mrb[0].mxu0
      %v1955 = vadd.f32 %v1898, %v1954
      %v1956 = vpop.f32.mrb[0].mxu0
      %1957 = vmatprep.mubr.bf16.mxu0 %v1647
      %1958 = vmatmul.mubr.bf16.gmra.mrb[0].mxu0 %v1646
      %v1959 = vpop.f32.mrb[0].mxu0
      %v1960 = vadd.f32 %v1903, %v1959
      %v1961 = vpop.f32.mrb[0].mxu0
      %v1962 = vpop.f32.mrb[0].mxu0
      %v1963 = vadd.f32 %v1906, %v1962
      %v1964 = vpop.f32.mrb[0].mxu0
      %1965 = vdwg.mxu0
      %v1966 = vadd.f32 %v1565, %v1944
      %v1967 = vadd.f32 %v1566, %v1947
      %v1968 = vadd.f32 %v1567, %v1952
      %v1969 = vadd.f32 %v1568, %v1955
      %v1970 = vadd.f32 %v1569, %v1960
      %v1971 = vadd.f32 %v1570, %v1963
      %s1972 = scalar_lea.vmem %s1, 1024
      %v1973 = vld [vmem:[%s1972] sm:$0xf]
      %v1974 = vld [vmem:[%s1972 + $0x4] sm:$0xf]
      %v1975 = vld [vmem:[%s1972 + $0x8] sm:$0xf]
      %v1976 = vld [vmem:[%s1972 + $0xc] sm:$0xf]
      %v1977 = vld [vmem:[%s1972 + $0x10] sm:$0xf]
      %v1978 = vld [vmem:[%s1972 + $0x14] sm:$0xf]
      %v1979 = vld [vmem:[%s1972 + $0x18] sm:$0xf]
      %v1980 = vld [vmem:[%s1972 + $0x1c] sm:$0xf]
      %v1981 = vld [vmem:[%s1972 + $0x20] sm:$0xf]
      %v1982 = vld [vmem:[%s1972 + $0x24] sm:$0xf]
      %v1983 = vld [vmem:[%s1972 + $0x28] sm:$0xf]
      %v1984 = vld [vmem:[%s1972 + $0x2c] sm:$0xf]
      %v1985 = vld [vmem:[%s1972 + $0x30] sm:$0xf]
      %v1986 = vld [vmem:[%s1972 + $0x34] sm:$0xf]
      %v1987 = vld [vmem:[%s1972 + $0x38] sm:$0xf]
      %v1988 = vld [vmem:[%s1972 + $0x3c] sm:$0xf]
      %v1989 = vld [vmem:[%s1972 + $0x40] sm:$0xf]
      %v1990 = vld [vmem:[%s1972 + $0x44] sm:$0xf]
      %v1991 = vld [vmem:[%s1972 + $0x48] sm:$0xf]
      %v1992 = vld [vmem:[%s1972 + $0x4c] sm:$0xf]
      %v1993 = vld [vmem:[%s1972 + $0x50] sm:$0xf]
      %v1994 = vld [vmem:[%s1972 + $0x54] sm:$0xf]
      %v1995 = vld [vmem:[%s1972 + $0x58] sm:$0xf]
      %v1996 = vld [vmem:[%s1972 + $0x5c] sm:$0xf]
      %v1997 = vld [vmem:[%s1972 + $0x60] sm:$0xf]
      %v1998 = vld [vmem:[%s1972 + $0x64] sm:$0xf]
      %v1999 = vld [vmem:[%s1972 + $0x68] sm:$0xf]
      %v2000 = vld [vmem:[%s1972 + $0x6c] sm:$0xf]
      %v2001 = vld [vmem:[%s1972 + $0x70] sm:$0xf]
      %v2002 = vld [vmem:[%s1972 + $0x74] sm:$0xf]
      %v2003 = vld [vmem:[%s1972 + $0x78] sm:$0xf]
      %v2004 = vld [vmem:[%s1972 + $0x7c] sm:$0xf]
      %v2005 = vld [vmem:[%s1972 + $0x80] sm:$0xf]
      %v2006 = vld [vmem:[%s1972 + $0x84] sm:$0xf]
      %v2007 = vld [vmem:[%s1972 + $0x88] sm:$0xf]
      %v2008 = vld [vmem:[%s1972 + $0x8c] sm:$0xf]
      %v2009 = vld [vmem:[%s1972 + $0x90] sm:$0xf]
      %v2010 = vld [vmem:[%s1972 + $0x94] sm:$0xf]
      %v2011 = vld [vmem:[%s1972 + $0x98] sm:$0xf]
      %v2012 = vld [vmem:[%s1972 + $0x9c] sm:$0xf]
      %v2013 = vld [vmem:[%s1972 + $0xa0] sm:$0xf]
      %v2014 = vld [vmem:[%s1972 + $0xa4] sm:$0xf]
      %v2015 = vld [vmem:[%s1972 + $0xa8] sm:$0xf]
      %v2016 = vld [vmem:[%s1972 + $0xac] sm:$0xf]
      %v2017 = vld [vmem:[%s1972 + $0xb0] sm:$0xf]
      %v2018 = vld [vmem:[%s1972 + $0xb4] sm:$0xf]
      %v2019 = vld [vmem:[%s1972 + $0xb8] sm:$0xf]
      %v2020 = vld [vmem:[%s1972 + $0xbc] sm:$0xf]
      %v2021 = vld [vmem:[%s1972 + $0xc0] sm:$0xf]
      %v2022 = vld [vmem:[%s1972 + $0xc4] sm:$0xf]
      %v2023 = vld [vmem:[%s1972 + $0xc8] sm:$0xf]
      %v2024 = vld [vmem:[%s1972 + $0xcc] sm:$0xf]
      %v2025 = vld [vmem:[%s1972 + $0xd0] sm:$0xf]
      %v2026 = vld [vmem:[%s1972 + $0xd4] sm:$0xf]
      %v2027 = vld [vmem:[%s1972 + $0xd8] sm:$0xf]
      %v2028 = vld [vmem:[%s1972 + $0xdc] sm:$0xf]
      %v2029 = vld [vmem:[%s1972 + $0xe0] sm:$0xf]
      %v2030 = vld [vmem:[%s1972 + $0xe4] sm:$0xf]
      %v2031 = vld [vmem:[%s1972 + $0xe8] sm:$0xf]
      %v2032 = vld [vmem:[%s1972 + $0xec] sm:$0xf]
      %v2033 = vld [vmem:[%s1972 + $0xf0] sm:$0xf]
      %v2034 = vld [vmem:[%s1972 + $0xf4] sm:$0xf]
      %v2035 = vld [vmem:[%s1972 + $0xf8] sm:$0xf]
      %v2036 = vld [vmem:[%s1972 + $0xfc] sm:$0xf]
      %v2039 = vunpack.c.l.b16 %v213
      %v2040 = vunpack.c.h.b16 %v213
      %v2041 = vunpack.c.l.b16 %v214
      %v2042 = vunpack.c.h.b16 %v214
      %v2043 = vpack.c.b16 %v2039, %v2039
      %v2044 = vpack.c.b16 %v2040, %v2040
      %v2045 = vpack.c.b16 %v2041, %v2041
      %v2046 = vpack.c.b16 %v2042, %v2042
      %v2048 = vshrl.u32 %v1636, 16
      %v2050 = vshll.u32 %v1636, 16
      %v2052 = vrot.slane %v2050, 1
      %v2053 = vor.u32 %v2048, %v2052
      %v2055 = vshll.u32 %v1640, 16
      %v2057 = vrot.slane %v2055, 1
      %v2058 = vsel %vm404, %v2053, %v2057
      %v2060 = vshrl.u32 %v1637, 16
      %v2062 = vshll.u32 %v1637, 16
      %v2064 = vrot.slane %v2062, 1
      %v2065 = vor.u32 %v2060, %v2064
      %v2067 = vshll.u32 %v1641, 16
      %v2069 = vrot.slane %v2067, 1
      %v2070 = vsel %vm404, %v2065, %v2069
      %v2072 = vshrl.u32 %v1638, 16
      %v2074 = vshll.u32 %v1638, 16
      %v2076 = vrot.slane %v2074, 1
      %v2077 = vor.u32 %v2072, %v2076
      %v2079 = vshll.u32 %v1642, 16
      %v2081 = vrot.slane %v2079, 1
      %v2082 = vsel %vm404, %v2077, %v2081
      %v2084 = vshrl.u32 %v1639, 16
      %v2086 = vshll.u32 %v1639, 16
      %v2088 = vrot.slane %v2086, 1
      %v2089 = vor.u32 %v2084, %v2088
      %v2091 = vshll.u32 %v1643, 16
      %v2093 = vrot.slane %v2091, 1
      %v2094 = vsel %vm404, %v2089, %v2093
      %v2095 = vshrl.u32 %v1640, 16
      %v2097 = vor.u32 %v2095, %v2057
      %v2099 = vshll.u32 %v1644, 16
      %v2101 = vrot.slane %v2099, 1
      %v2102 = vsel %vm404, %v2097, %v2101
      %v2103 = vshrl.u32 %v1641, 16
      %v2105 = vor.u32 %v2103, %v2069
      %v2107 = vshll.u32 %v1645, 16
      %v2109 = vrot.slane %v2107, 1
      %v2110 = vsel %vm404, %v2105, %v2109
      %v2111 = vshrl.u32 %v1642, 16
      %v2113 = vor.u32 %v2111, %v2081
      %v2115 = vshll.u32 %v1646, 16
      %v2117 = vrot.slane %v2115, 1
      %v2118 = vsel %vm404, %v2113, %v2117
      %v2119 = vshrl.u32 %v1643, 16
      %v2121 = vor.u32 %v2119, %v2093
      %v2123 = vshll.u32 %v1647, 16
      %v2125 = vrot.slane %v2123, 1
      %v2126 = vsel %vm404, %v2121, %v2125
      %v2127 = vshrl.u32 %v1644, 16
      %v2129 = vor.u32 %v2127, %v2101
      %v2131 = vshll.u32 %v2043, 16
      %v2133 = vrot.slane %v2131, 1
      %v2134 = vsel %vm404, %v2129, %v2133
      %v2135 = vshrl.u32 %v1645, 16
      %v2137 = vor.u32 %v2135, %v2109
      %v2139 = vshll.u32 %v2044, 16
      %v2141 = vrot.slane %v2139, 1
      %v2142 = vsel %vm404, %v2137, %v2141
      %v2143 = vshrl.u32 %v1646, 16
      %v2145 = vor.u32 %v2143, %v2117
      %v2147 = vshll.u32 %v2045, 16
      %v2149 = vrot.slane %v2147, 1
      %v2150 = vsel %vm404, %v2145, %v2149
      %v2151 = vshrl.u32 %v1647, 16
      %v2153 = vor.u32 %v2151, %v2125
      %v2155 = vshll.u32 %v2046, 16
      %v2157 = vrot.slane %v2155, 1
      %v2158 = vsel %vm404, %v2153, %v2157
      %v2235 = vunpack.c.l.b16 %v1973
      %v2236 = vunpack.c.l.b16 %v1974
      %v2237 = vunpack.c.l.b16 %v1975
      %v2238 = vunpack.c.l.b16 %v1976
      %v2239 = vunpack.c.l.b16 %v1977
      %v2240 = vunpack.c.l.b16 %v1978
      %v2241 = vunpack.c.l.b16 %v1979
      %v2242 = vunpack.c.l.b16 %v1980
      %v2243 = vunpack.c.l.b16 %v1981
      %v2244 = vunpack.c.l.b16 %v1982
      %v2245 = vunpack.c.l.b16 %v1983
      %v2246 = vunpack.c.l.b16 %v1984
      %v2247 = vunpack.c.l.b16 %v1985
      %v2248 = vunpack.c.l.b16 %v1986
      %v2249 = vunpack.c.l.b16 %v1987
      %v2250 = vunpack.c.l.b16 %v1988
      %v2251 = vunpack.c.l.b16 %v1989
      %v2252 = vunpack.c.l.b16 %v1990
      %v2253 = vunpack.c.l.b16 %v1991
      %v2254 = vunpack.c.l.b16 %v1992
      %v2255 = vunpack.c.l.b16 %v1993
      %v2256 = vunpack.c.l.b16 %v1994
      %v2257 = vunpack.c.l.b16 %v1995
      %v2258 = vunpack.c.l.b16 %v1996
      %v2259 = vunpack.c.l.b16 %v1997
      %v2260 = vunpack.c.l.b16 %v1998
      %v2261 = vunpack.c.l.b16 %v1999
      %v2262 = vunpack.c.l.b16 %v2000
      %v2263 = vunpack.c.l.b16 %v2001
      %v2264 = vunpack.c.l.b16 %v2002
      %v2265 = vunpack.c.l.b16 %v2003
      %v2266 = vunpack.c.l.b16 %v2004
      %v2267 = vunpack.c.l.b16 %v2005
      %v2268 = vunpack.c.l.b16 %v2006
      %v2269 = vunpack.c.l.b16 %v2007
      %v2270 = vunpack.c.l.b16 %v2008
      %v2271 = vunpack.c.l.b16 %v2009
      %v2272 = vunpack.c.l.b16 %v2010
      %v2273 = vunpack.c.l.b16 %v2011
      %v2274 = vunpack.c.l.b16 %v2012
      %v2275 = vunpack.c.l.b16 %v2013
      %v2276 = vunpack.c.l.b16 %v2014
      %v2277 = vunpack.c.l.b16 %v2015
      %v2278 = vunpack.c.l.b16 %v2016
      %v2279 = vunpack.c.l.b16 %v2017
      %v2280 = vunpack.c.l.b16 %v2018
      %v2281 = vunpack.c.l.b16 %v2019
      %v2282 = vunpack.c.l.b16 %v2020
      %v2283 = vunpack.c.l.b16 %v2021
      %v2284 = vunpack.c.l.b16 %v2022
      %v2285 = vunpack.c.l.b16 %v2023
      %v2286 = vunpack.c.l.b16 %v2024
      %v2287 = vunpack.c.l.b16 %v2025
      %v2288 = vunpack.c.l.b16 %v2026
      %v2289 = vunpack.c.l.b16 %v2027
      %v2290 = vunpack.c.l.b16 %v2028
      %v2291 = vunpack.c.l.b16 %v2029
      %v2292 = vunpack.c.l.b16 %v2030
      %v2293 = vunpack.c.l.b16 %v2031
      %v2294 = vunpack.c.l.b16 %v2032
      %v2295 = vunpack.c.l.b16 %v2033
      %v2296 = vunpack.c.l.b16 %v2034
      %v2297 = vunpack.c.l.b16 %v2035
      %v2298 = vunpack.c.l.b16 %v2036
      %v2299 = vpack.c.b16 %v2236, %v2235
      %v2300 = vpack.c.b16 %v2238, %v2237
      %v2301 = vpack.c.b16 %v2240, %v2239
      %v2302 = vpack.c.b16 %v2242, %v2241
      %v2303 = vpack.c.b16 %v2244, %v2243
      %v2304 = vpack.c.b16 %v2246, %v2245
      %v2305 = vpack.c.b16 %v2248, %v2247
      %v2306 = vpack.c.b16 %v2250, %v2249
      %v2307 = vpack.c.b16 %v2252, %v2251
      %v2308 = vpack.c.b16 %v2254, %v2253
      %v2309 = vpack.c.b16 %v2256, %v2255
      %v2310 = vpack.c.b16 %v2258, %v2257
      %v2311 = vpack.c.b16 %v2260, %v2259
      %v2312 = vpack.c.b16 %v2262, %v2261
      %v2313 = vpack.c.b16 %v2264, %v2263
      %v2314 = vpack.c.b16 %v2266, %v2265
      %v2315 = vpack.c.b16 %v2268, %v2267
      %v2316 = vpack.c.b16 %v2270, %v2269
      %v2317 = vpack.c.b16 %v2272, %v2271
      %v2318 = vpack.c.b16 %v2274, %v2273
      %v2319 = vpack.c.b16 %v2276, %v2275
      %v2320 = vpack.c.b16 %v2278, %v2277
      %v2321 = vpack.c.b16 %v2280, %v2279
      %v2322 = vpack.c.b16 %v2282, %v2281
      %v2323 = vpack.c.b16 %v2284, %v2283
      %v2324 = vpack.c.b16 %v2286, %v2285
      %v2325 = vpack.c.b16 %v2288, %v2287
      %v2326 = vpack.c.b16 %v2290, %v2289
      %v2327 = vpack.c.b16 %v2292, %v2291
      %v2328 = vpack.c.b16 %v2294, %v2293
      %v2329 = vpack.c.b16 %v2296, %v2295
      %v2330 = vpack.c.b16 %v2298, %v2297
      %2363 = vmatprep.subr.bf16.mxu0 0
      %2364 = vmatpush1.bf16.msra.mxu0 %v2299
      %2365 = vmatprep.subr.bf16.mxu0 0
      %2366 = vmatpush1.bf16.msra.mxu0 %v2300
      %2367 = vmatprep.subr.bf16.mxu0 0
      %2368 = vmatpush1.bf16.msra.mxu0 %v2301
      %2369 = vmatprep.subr.bf16.mxu0 0
      %2370 = vmatpush1.bf16.msra.mxu0 %v2302
      %2371 = vmatprep.subr.bf16.mxu0 0
      %2372 = vmatpush1.bf16.msra.mxu0 %v2303
      %2373 = vmatprep.subr.bf16.mxu0 0
      %2374 = vmatpush1.bf16.msra.mxu0 %v2304
      %2375 = vmatprep.subr.bf16.mxu0 0
      %2376 = vmatpush1.bf16.msra.mxu0 %v2305
      %2377 = vmatprep.subr.bf16.mxu0 0
      %2378 = vmatpush1.bf16.msra.mxu0 %v2306
      %2379 = vmatprep.subr.bf16.mxu0 0
      %2380 = vmatpush1.bf16.msra.mxu0 %v2307
      %2381 = vmatprep.subr.bf16.mxu0 0
      %2382 = vmatpush1.bf16.msra.mxu0 %v2308
      %2383 = vmatprep.subr.bf16.mxu0 0
      %2384 = vmatpush1.bf16.msra.mxu0 %v2309
      %2385 = vmatprep.subr.bf16.mxu0 0
      %2386 = vmatpush1.bf16.msra.mxu0 %v2310
      %2387 = vmatprep.subr.bf16.mxu0 0
      %2388 = vmatpush1.bf16.msra.mxu0 %v2311
      %2389 = vmatprep.subr.bf16.mxu0 0
      %2390 = vmatpush1.bf16.msra.mxu0 %v2312
      %2391 = vmatprep.subr.bf16.mxu0 0
      %2392 = vmatpush1.bf16.msra.mxu0 %v2313
      %2393 = vmatprep.subr.bf16.mxu0 0
      %2394 = vmatpush1.bf16.msra.mxu0 %v2314
      %2395 = vmatprep.mubr.bf16.mxu0 %v2070
      %2396 = vmatmul.mubr.bf16.gmra.mrb[0].mxu0 %v2058
      %v2397 = vpop.f32.mrb[0].mxu0
      %v2398 = vadd.f32 0.0, %v2397
      %v2399 = vpop.f32.mrb[0].mxu0
      %v2400 = vpop.f32.mrb[0].mxu0
      %v2401 = vadd.f32 0.0, %v2400
      %v2402 = vpop.f32.mrb[0].mxu0
      %2403 = vmatprep.mubr.bf16.mxu0 %v2110
      %2404 = vmatmul.mubr.bf16.gmra.mrb[0].mxu0 %v2102
      %v2405 = vpop.f32.mrb[0].mxu0
      %v2406 = vadd.f32 0.0, %v2405
      %v2407 = vpop.f32.mrb[0].mxu0
      %v2408 = vpop.f32.mrb[0].mxu0
      %v2409 = vadd.f32 0.0, %v2408
      %v2410 = vpop.f32.mrb[0].mxu0
      %2411 = vmatprep.mubr.bf16.mxu0 %v2142
      %2412 = vmatmul.mubr.bf16.gmra.mrb[0].mxu0 %v2134
      %v2413 = vpop.f32.mrb[0].mxu0
      %v2414 = vadd.f32 0.0, %v2413
      %v2415 = vpop.f32.mrb[0].mxu0
      %v2416 = vpop.f32.mrb[0].mxu0
      %v2417 = vadd.f32 0.0, %v2416
      %v2418 = vpop.f32.mrb[0].mxu0
      %2419 = vdwg.mxu0
      %2420 = vmatprep.subr.bf16.mxu0 0
      %2421 = vmatpush1.bf16.msra.mxu0 %v2315
      %2422 = vmatprep.subr.bf16.mxu0 0
      %2423 = vmatpush1.bf16.msra.mxu0 %v2316
      %2424 = vmatprep.subr.bf16.mxu0 0
      %2425 = vmatpush1.bf16.msra.mxu0 %v2317
      %2426 = vmatprep.subr.bf16.mxu0 0
      %2427 = vmatpush1.bf16.msra.mxu0 %v2318
      %2428 = vmatprep.subr.bf16.mxu0 0
      %2429 = vmatpush1.bf16.msra.mxu0 %v2319
      %2430 = vmatprep.subr.bf16.mxu0 0
      %2431 = vmatpush1.bf16.msra.mxu0 %v2320
      %2432 = vmatprep.subr.bf16.mxu0 0
      %2433 = vmatpush1.bf16.msra.mxu0 %v2321
      %2434 = vmatprep.subr.bf16.mxu0 0
      %2435 = vmatpush1.bf16.msra.mxu0 %v2322
      %2436 = vmatprep.subr.bf16.mxu0 0
      %2437 = vmatpush1.bf16.msra.mxu0 %v2323
      %2438 = vmatprep.subr.bf16.mxu0 0
      %2439 = vmatpush1.bf16.msra.mxu0 %v2324
      %2440 = vmatprep.subr.bf16.mxu0 0
      %2441 = vmatpush1.bf16.msra.mxu0 %v2325
      %2442 = vmatprep.subr.bf16.mxu0 0
      %2443 = vmatpush1.bf16.msra.mxu0 %v2326
      %2444 = vmatprep.subr.bf16.mxu0 0
      %2445 = vmatpush1.bf16.msra.mxu0 %v2327
      %2446 = vmatprep.subr.bf16.mxu0 0
      %2447 = vmatpush1.bf16.msra.mxu0 %v2328
      %2448 = vmatprep.subr.bf16.mxu0 0
      %2449 = vmatpush1.bf16.msra.mxu0 %v2329
      %2450 = vmatprep.subr.bf16.mxu0 0
      %2451 = vmatpush1.bf16.msra.mxu0 %v2330
      %2452 = vmatprep.mubr.bf16.mxu0 %v2094
      %2453 = vmatmul.mubr.bf16.gmra.mrb[0].mxu0 %v2082
      %v2454 = vpop.f32.mrb[0].mxu0
      %v2455 = vadd.f32 %v2398, %v2454
      %v2456 = vpop.f32.mrb[0].mxu0
      %v2457 = vpop.f32.mrb[0].mxu0
      %v2458 = vadd.f32 %v2401, %v2457
      %v2459 = vpop.f32.mrb[0].mxu0
      %2460 = vmatprep.mubr.bf16.mxu0 %v2126
      %2461 = vmatmul.mubr.bf16.gmra.mrb[0].mxu0 %v2118
      %v2462 = vpop.f32.mrb[0].mxu0
      %v2463 = vadd.f32 %v2406, %v2462
      %v2464 = vpop.f32.mrb[0].mxu0
      %v2465 = vpop.f32.mrb[0].mxu0
      %v2466 = vadd.f32 %v2409, %v2465
      %v2467 = vpop.f32.mrb[0].mxu0
      %2468 = vmatprep.mubr.bf16.mxu0 %v2158
      %2469 = vmatmul.mubr.bf16.gmra.mrb[0].mxu0 %v2150
      %v2470 = vpop.f32.mrb[0].mxu0
      %v2471 = vadd.f32 %v2414, %v2470
      %v2472 = vpop.f32.mrb[0].mxu0
      %v2473 = vpop.f32.mrb[0].mxu0
      %v2474 = vadd.f32 %v2417, %v2473
      %v2475 = vpop.f32.mrb[0].mxu0
      %2476 = vdwg.mxu0
      %v2477 = vadd.f32 %v1966, %v2455
      %v2478 = vadd.f32 %v1967, %v2458
      %v2479 = vadd.f32 %v1968, %v2463
      %v2480 = vadd.f32 %v1969, %v2466
      %v2481 = vadd.f32 %v1970, %v2471
      %v2482 = vadd.f32 %v1971, %v2474
      %s2483 = scalar_lea.vmem %s1, 1280
      %v2484 = vld [vmem:[%s2483] sm:$0xf]
      %v2485 = vld [vmem:[%s2483 + $0x4] sm:$0xf]
      %v2486 = vld [vmem:[%s2483 + $0x8] sm:$0xf]
      %v2487 = vld [vmem:[%s2483 + $0xc] sm:$0xf]
      %v2488 = vld [vmem:[%s2483 + $0x10] sm:$0xf]
      %v2489 = vld [vmem:[%s2483 + $0x14] sm:$0xf]
      %v2490 = vld [vmem:[%s2483 + $0x18] sm:$0xf]
      %v2491 = vld [vmem:[%s2483 + $0x1c] sm:$0xf]
      %v2492 = vld [vmem:[%s2483 + $0x20] sm:$0xf]
      %v2493 = vld [vmem:[%s2483 + $0x24] sm:$0xf]
      %v2494 = vld [vmem:[%s2483 + $0x28] sm:$0xf]
      %v2495 = vld [vmem:[%s2483 + $0x2c] sm:$0xf]
      %v2496 = vld [vmem:[%s2483 + $0x30] sm:$0xf]
      %v2497 = vld [vmem:[%s2483 + $0x34] sm:$0xf]
      %v2498 = vld [vmem:[%s2483 + $0x38] sm:$0xf]
      %v2499 = vld [vmem:[%s2483 + $0x3c] sm:$0xf]
      %v2500 = vld [vmem:[%s2483 + $0x40] sm:$0xf]
      %v2501 = vld [vmem:[%s2483 + $0x44] sm:$0xf]
      %v2502 = vld [vmem:[%s2483 + $0x48] sm:$0xf]
      %v2503 = vld [vmem:[%s2483 + $0x4c] sm:$0xf]
      %v2504 = vld [vmem:[%s2483 + $0x50] sm:$0xf]
      %v2505 = vld [vmem:[%s2483 + $0x54] sm:$0xf]
      %v2506 = vld [vmem:[%s2483 + $0x58] sm:$0xf]
      %v2507 = vld [vmem:[%s2483 + $0x5c] sm:$0xf]
      %v2508 = vld [vmem:[%s2483 + $0x60] sm:$0xf]
      %v2509 = vld [vmem:[%s2483 + $0x64] sm:$0xf]
      %v2510 = vld [vmem:[%s2483 + $0x68] sm:$0xf]
      %v2511 = vld [vmem:[%s2483 + $0x6c] sm:$0xf]
      %v2512 = vld [vmem:[%s2483 + $0x70] sm:$0xf]
      %v2513 = vld [vmem:[%s2483 + $0x74] sm:$0xf]
      %v2514 = vld [vmem:[%s2483 + $0x78] sm:$0xf]
      %v2515 = vld [vmem:[%s2483 + $0x7c] sm:$0xf]
      %v2516 = vld [vmem:[%s2483 + $0x80] sm:$0xf]
      %v2517 = vld [vmem:[%s2483 + $0x84] sm:$0xf]
      %v2518 = vld [vmem:[%s2483 + $0x88] sm:$0xf]
      %v2519 = vld [vmem:[%s2483 + $0x8c] sm:$0xf]
      %v2520 = vld [vmem:[%s2483 + $0x90] sm:$0xf]
      %v2521 = vld [vmem:[%s2483 + $0x94] sm:$0xf]
      %v2522 = vld [vmem:[%s2483 + $0x98] sm:$0xf]
      %v2523 = vld [vmem:[%s2483 + $0x9c] sm:$0xf]
      %v2524 = vld [vmem:[%s2483 + $0xa0] sm:$0xf]
      %v2525 = vld [vmem:[%s2483 + $0xa4] sm:$0xf]
      %v2526 = vld [vmem:[%s2483 + $0xa8] sm:$0xf]
      %v2527 = vld [vmem:[%s2483 + $0xac] sm:$0xf]
      %v2528 = vld [vmem:[%s2483 + $0xb0] sm:$0xf]
      %v2529 = vld [vmem:[%s2483 + $0xb4] sm:$0xf]
      %v2530 = vld [vmem:[%s2483 + $0xb8] sm:$0xf]
      %v2531 = vld [vmem:[%s2483 + $0xbc] sm:$0xf]
      %v2532 = vld [vmem:[%s2483 + $0xc0] sm:$0xf]
      %v2533 = vld [vmem:[%s2483 + $0xc4] sm:$0xf]
      %v2534 = vld [vmem:[%s2483 + $0xc8] sm:$0xf]
      %v2535 = vld [vmem:[%s2483 + $0xcc] sm:$0xf]
      %v2536 = vld [vmem:[%s2483 + $0xd0] sm:$0xf]
      %v2537 = vld [vmem:[%s2483 + $0xd4] sm:$0xf]
      %v2538 = vld [vmem:[%s2483 + $0xd8] sm:$0xf]
      %v2539 = vld [vmem:[%s2483 + $0xdc] sm:$0xf]
      %v2540 = vld [vmem:[%s2483 + $0xe0] sm:$0xf]
      %v2541 = vld [vmem:[%s2483 + $0xe4] sm:$0xf]
      %v2542 = vld [vmem:[%s2483 + $0xe8] sm:$0xf]
      %v2543 = vld [vmem:[%s2483 + $0xec] sm:$0xf]
      %v2544 = vld [vmem:[%s2483 + $0xf0] sm:$0xf]
      %v2545 = vld [vmem:[%s2483 + $0xf4] sm:$0xf]
      %v2546 = vld [vmem:[%s2483 + $0xf8] sm:$0xf]
      %v2547 = vld [vmem:[%s2483 + $0xfc] sm:$0xf]
      %v2548 = vrot.slane %v1636, 1
      %v2549 = vrot.slane %v1640, 1
      %v2550 = vsel %vm1218, %v2548, %v2549
      %v2551 = vrot.slane %v1637, 1
      %v2552 = vrot.slane %v1641, 1
      %v2553 = vsel %vm1218, %v2551, %v2552
      %v2554 = vrot.slane %v1638, 1
      %v2555 = vrot.slane %v1642, 1
      %v2556 = vsel %vm1218, %v2554, %v2555
      %v2557 = vrot.slane %v1639, 1
      %v2558 = vrot.slane %v1643, 1
      %v2559 = vsel %vm1218, %v2557, %v2558
      %v2560 = vrot.slane %v1644, 1
      %v2561 = vsel %vm1218, %v2549, %v2560
      %v2562 = vrot.slane %v1645, 1
      %v2563 = vsel %vm1218, %v2552, %v2562
      %v2564 = vrot.slane %v1646, 1
      %v2565 = vsel %vm1218, %v2555, %v2564
      %v2566 = vrot.slane %v1647, 1
      %v2567 = vsel %vm1218, %v2558, %v2566
      %v2568 = vrot.slane %v2043, 1
      %v2569 = vsel %vm1218, %v2560, %v2568
      %v2570 = vrot.slane %v2044, 1
      %v2571 = vsel %vm1218, %v2562, %v2570
      %v2572 = vrot.slane %v2045, 1
      %v2573 = vsel %vm1218, %v2564, %v2572
      %v2574 = vrot.slane %v2046, 1
      %v2575 = vsel %vm1218, %v2566, %v2574
      %v2652 = vunpack.c.l.b16 %v2484
      %v2653 = vunpack.c.l.b16 %v2485
      %v2654 = vunpack.c.l.b16 %v2486
      %v2655 = vunpack.c.l.b16 %v2487
      %v2656 = vunpack.c.l.b16 %v2488
      %v2657 = vunpack.c.l.b16 %v2489
      %v2658 = vunpack.c.l.b16 %v2490
      %v2659 = vunpack.c.l.b16 %v2491
      %v2660 = vunpack.c.l.b16 %v2492
      %v2661 = vunpack.c.l.b16 %v2493
      %v2662 = vunpack.c.l.b16 %v2494
      %v2663 = vunpack.c.l.b16 %v2495
      %v2664 = vunpack.c.l.b16 %v2496
      %v2665 = vunpack.c.l.b16 %v2497
      %v2666 = vunpack.c.l.b16 %v2498
      %v2667 = vunpack.c.l.b16 %v2499
      %v2668 = vunpack.c.l.b16 %v2500
      %v2669 = vunpack.c.l.b16 %v2501
      %v2670 = vunpack.c.l.b16 %v2502
      %v2671 = vunpack.c.l.b16 %v2503
      %v2672 = vunpack.c.l.b16 %v2504
      %v2673 = vunpack.c.l.b16 %v2505
      %v2674 = vunpack.c.l.b16 %v2506
      %v2675 = vunpack.c.l.b16 %v2507
      %v2676 = vunpack.c.l.b16 %v2508
      %v2677 = vunpack.c.l.b16 %v2509
      %v2678 = vunpack.c.l.b16 %v2510
      %v2679 = vunpack.c.l.b16 %v2511
      %v2680 = vunpack.c.l.b16 %v2512
      %v2681 = vunpack.c.l.b16 %v2513
      %v2682 = vunpack.c.l.b16 %v2514
      %v2683 = vunpack.c.l.b16 %v2515
      %v2684 = vunpack.c.l.b16 %v2516
      %v2685 = vunpack.c.l.b16 %v2517
      %v2686 = vunpack.c.l.b16 %v2518
      %v2687 = vunpack.c.l.b16 %v2519
      %v2688 = vunpack.c.l.b16 %v2520
      %v2689 = vunpack.c.l.b16 %v2521
      %v2690 = vunpack.c.l.b16 %v2522
      %v2691 = vunpack.c.l.b16 %v2523
      %v2692 = vunpack.c.l.b16 %v2524
      %v2693 = vunpack.c.l.b16 %v2525
      %v2694 = vunpack.c.l.b16 %v2526
      %v2695 = vunpack.c.l.b16 %v2527
      %v2696 = vunpack.c.l.b16 %v2528
      %v2697 = vunpack.c.l.b16 %v2529
      %v2698 = vunpack.c.l.b16 %v2530
      %v2699 = vunpack.c.l.b16 %v2531
      %v2700 = vunpack.c.l.b16 %v2532
      %v2701 = vunpack.c.l.b16 %v2533
      %v2702 = vunpack.c.l.b16 %v2534
      %v2703 = vunpack.c.l.b16 %v2535
      %v2704 = vunpack.c.l.b16 %v2536
      %v2705 = vunpack.c.l.b16 %v2537
      %v2706 = vunpack.c.l.b16 %v2538
      %v2707 = vunpack.c.l.b16 %v2539
      %v2708 = vunpack.c.l.b16 %v2540
      %v2709 = vunpack.c.l.b16 %v2541
      %v2710 = vunpack.c.l.b16 %v2542
      %v2711 = vunpack.c.l.b16 %v2543
      %v2712 = vunpack.c.l.b16 %v2544
      %v2713 = vunpack.c.l.b16 %v2545
      %v2714 = vunpack.c.l.b16 %v2546
      %v2715 = vunpack.c.l.b16 %v2547
      %v2716 = vpack.c.b16 %v2653, %v2652
      %v2717 = vpack.c.b16 %v2655, %v2654
      %v2718 = vpack.c.b16 %v2657, %v2656
      %v2719 = vpack.c.b16 %v2659, %v2658
      %v2720 = vpack.c.b16 %v2661, %v2660
      %v2721 = vpack.c.b16 %v2663, %v2662
      %v2722 = vpack.c.b16 %v2665, %v2664
      %v2723 = vpack.c.b16 %v2667, %v2666
      %v2724 = vpack.c.b16 %v2669, %v2668
      %v2725 = vpack.c.b16 %v2671, %v2670
      %v2726 = vpack.c.b16 %v2673, %v2672
      %v2727 = vpack.c.b16 %v2675, %v2674
      %v2728 = vpack.c.b16 %v2677, %v2676
      %v2729 = vpack.c.b16 %v2679, %v2678
      %v2730 = vpack.c.b16 %v2681, %v2680
      %v2731 = vpack.c.b16 %v2683, %v2682
      %v2732 = vpack.c.b16 %v2685, %v2684
      %v2733 = vpack.c.b16 %v2687, %v2686
      %v2734 = vpack.c.b16 %v2689, %v2688
      %v2735 = vpack.c.b16 %v2691, %v2690
      %v2736 = vpack.c.b16 %v2693, %v2692
      %v2737 = vpack.c.b16 %v2695, %v2694
      %v2738 = vpack.c.b16 %v2697, %v2696
      %v2739 = vpack.c.b16 %v2699, %v2698
      %v2740 = vpack.c.b16 %v2701, %v2700
      %v2741 = vpack.c.b16 %v2703, %v2702
      %v2742 = vpack.c.b16 %v2705, %v2704
      %v2743 = vpack.c.b16 %v2707, %v2706
      %v2744 = vpack.c.b16 %v2709, %v2708
      %v2745 = vpack.c.b16 %v2711, %v2710
      %v2746 = vpack.c.b16 %v2713, %v2712
      %v2747 = vpack.c.b16 %v2715, %v2714
      %2780 = vmatprep.subr.bf16.mxu0 0
      %2781 = vmatpush1.bf16.msra.mxu0 %v2716
      %2782 = vmatprep.subr.bf16.mxu0 0
      %2783 = vmatpush1.bf16.msra.mxu0 %v2717
      %2784 = vmatprep.subr.bf16.mxu0 0
      %2785 = vmatpush1.bf16.msra.mxu0 %v2718
      %2786 = vmatprep.subr.bf16.mxu0 0
      %2787 = vmatpush1.bf16.msra.mxu0 %v2719
      %2788 = vmatprep.subr.bf16.mxu0 0
      %2789 = vmatpush1.bf16.msra.mxu0 %v2720
      %2790 = vmatprep.subr.bf16.mxu0 0
      %2791 = vmatpush1.bf16.msra.mxu0 %v2721
      %2792 = vmatprep.subr.bf16.mxu0 0
      %2793 = vmatpush1.bf16.msra.mxu0 %v2722
      %2794 = vmatprep.subr.bf16.mxu0 0
      %2795 = vmatpush1.bf16.msra.mxu0 %v2723
      %2796 = vmatprep.subr.bf16.mxu0 0
      %2797 = vmatpush1.bf16.msra.mxu0 %v2724
      %2798 = vmatprep.subr.bf16.mxu0 0
      %2799 = vmatpush1.bf16.msra.mxu0 %v2725
      %2800 = vmatprep.subr.bf16.mxu0 0
      %2801 = vmatpush1.bf16.msra.mxu0 %v2726
      %2802 = vmatprep.subr.bf16.mxu0 0
      %2803 = vmatpush1.bf16.msra.mxu0 %v2727
      %2804 = vmatprep.subr.bf16.mxu0 0
      %2805 = vmatpush1.bf16.msra.mxu0 %v2728
      %2806 = vmatprep.subr.bf16.mxu0 0
      %2807 = vmatpush1.bf16.msra.mxu0 %v2729
      %2808 = vmatprep.subr.bf16.mxu0 0
      %2809 = vmatpush1.bf16.msra.mxu0 %v2730
      %2810 = vmatprep.subr.bf16.mxu0 0
      %2811 = vmatpush1.bf16.msra.mxu0 %v2731
      %2812 = vmatprep.mubr.bf16.mxu0 %v2553
      %2813 = vmatmul.mubr.bf16.gmra.mrb[0].mxu0 %v2550
      %v2814 = vpop.f32.mrb[0].mxu0
      %v2815 = vadd.f32 0.0, %v2814
      %v2816 = vpop.f32.mrb[0].mxu0
      %v2817 = vpop.f32.mrb[0].mxu0
      %v2818 = vadd.f32 0.0, %v2817
      %v2819 = vpop.f32.mrb[0].mxu0
      %2820 = vmatprep.mubr.bf16.mxu0 %v2563
      %2821 = vmatmul.mubr.bf16.gmra.mrb[0].mxu0 %v2561
      %v2822 = vpop.f32.mrb[0].mxu0
      %v2823 = vadd.f32 0.0, %v2822
      %v2824 = vpop.f32.mrb[0].mxu0
      %v2825 = vpop.f32.mrb[0].mxu0
      %v2826 = vadd.f32 0.0, %v2825
      %v2827 = vpop.f32.mrb[0].mxu0
      %2828 = vmatprep.mubr.bf16.mxu0 %v2571
      %2829 = vmatmul.mubr.bf16.gmra.mrb[0].mxu0 %v2569
      %v2830 = vpop.f32.mrb[0].mxu0
      %v2831 = vadd.f32 0.0, %v2830
      %v2832 = vpop.f32.mrb[0].mxu0
      %v2833 = vpop.f32.mrb[0].mxu0
      %v2834 = vadd.f32 0.0, %v2833
      %v2835 = vpop.f32.mrb[0].mxu0
      %2836 = vdwg.mxu0
      %2837 = vmatprep.subr.bf16.mxu0 0
      %2838 = vmatpush1.bf16.msra.mxu0 %v2732
      %2839 = vmatprep.subr.bf16.mxu0 0
      %2840 = vmatpush1.bf16.msra.mxu0 %v2733
      %2841 = vmatprep.subr.bf16.mxu0 0
      %2842 = vmatpush1.bf16.msra.mxu0 %v2734
      %2843 = vmatprep.subr.bf16.mxu0 0
      %2844 = vmatpush1.bf16.msra.mxu0 %v2735
      %2845 = vmatprep.subr.bf16.mxu0 0
      %2846 = vmatpush1.bf16.msra.mxu0 %v2736
      %2847 = vmatprep.subr.bf16.mxu0 0
      %2848 = vmatpush1.bf16.msra.mxu0 %v2737
      %2849 = vmatprep.subr.bf16.mxu0 0
      %2850 = vmatpush1.bf16.msra.mxu0 %v2738
      %2851 = vmatprep.subr.bf16.mxu0 0
      %2852 = vmatpush1.bf16.msra.mxu0 %v2739
      %2853 = vmatprep.subr.bf16.mxu0 0
      %2854 = vmatpush1.bf16.msra.mxu0 %v2740
      %2855 = vmatprep.subr.bf16.mxu0 0
      %2856 = vmatpush1.bf16.msra.mxu0 %v2741
      %2857 = vmatprep.subr.bf16.mxu0 0
      %2858 = vmatpush1.bf16.msra.mxu0 %v2742
      %2859 = vmatprep.subr.bf16.mxu0 0
      %2860 = vmatpush1.bf16.msra.mxu0 %v2743
      %2861 = vmatprep.subr.bf16.mxu0 0
      %2862 = vmatpush1.bf16.msra.mxu0 %v2744
      %2863 = vmatprep.subr.bf16.mxu0 0
      %2864 = vmatpush1.bf16.msra.mxu0 %v2745
      %2865 = vmatprep.subr.bf16.mxu0 0
      %2866 = vmatpush1.bf16.msra.mxu0 %v2746
      %2867 = vmatprep.subr.bf16.mxu0 0
      %2868 = vmatpush1.bf16.msra.mxu0 %v2747
      %2869 = vmatprep.mubr.bf16.mxu0 %v2559
      %2870 = vmatmul.mubr.bf16.gmra.mrb[0].mxu0 %v2556
      %v2871 = vpop.f32.mrb[0].mxu0
      %v2872 = vadd.f32 %v2815, %v2871
      %v2873 = vpop.f32.mrb[0].mxu0
      %v2874 = vpop.f32.mrb[0].mxu0
      %v2875 = vadd.f32 %v2818, %v2874
      %v2876 = vpop.f32.mrb[0].mxu0
      %2877 = vmatprep.mubr.bf16.mxu0 %v2567
      %2878 = vmatmul.mubr.bf16.gmra.mrb[0].mxu0 %v2565
      %v2879 = vpop.f32.mrb[0].mxu0
      %v2880 = vadd.f32 %v2823, %v2879
      %v2881 = vpop.f32.mrb[0].mxu0
      %v2882 = vpop.f32.mrb[0].mxu0
      %v2883 = vadd.f32 %v2826, %v2882
      %v2884 = vpop.f32.mrb[0].mxu0
      %2885 = vmatprep.mubr.bf16.mxu0 %v2575
      %2886 = vmatmul.mubr.bf16.gmra.mrb[0].mxu0 %v2573
      %v2887 = vpop.f32.mrb[0].mxu0
      %v2888 = vadd.f32 %v2831, %v2887
      %v2889 = vpop.f32.mrb[0].mxu0
      %v2890 = vpop.f32.mrb[0].mxu0
      %v2891 = vadd.f32 %v2834, %v2890
      %v2892 = vpop.f32.mrb[0].mxu0
      %2893 = vdwg.mxu0
      %v2894 = vadd.f32 %v2477, %v2872
      %v2895 = vadd.f32 %v2478, %v2875
      %v2896 = vadd.f32 %v2479, %v2880
      %v2897 = vadd.f32 %v2480, %v2883
      %v2898 = vadd.f32 %v2481, %v2888
      %v2899 = vadd.f32 %v2482, %v2891
      %s2900 = scalar_lea.vmem %s1, 1536
      %v2901 = vld [vmem:[%s2900] sm:$0xf]
      %v2902 = vld [vmem:[%s2900 + $0x4] sm:$0xf]
      %v2903 = vld [vmem:[%s2900 + $0x8] sm:$0xf]
      %v2904 = vld [vmem:[%s2900 + $0xc] sm:$0xf]
      %v2905 = vld [vmem:[%s2900 + $0x10] sm:$0xf]
      %v2906 = vld [vmem:[%s2900 + $0x14] sm:$0xf]
      %v2907 = vld [vmem:[%s2900 + $0x18] sm:$0xf]
      %v2908 = vld [vmem:[%s2900 + $0x1c] sm:$0xf]
      %v2909 = vld [vmem:[%s2900 + $0x20] sm:$0xf]
      %v2910 = vld [vmem:[%s2900 + $0x24] sm:$0xf]
      %v2911 = vld [vmem:[%s2900 + $0x28] sm:$0xf]
      %v2912 = vld [vmem:[%s2900 + $0x2c] sm:$0xf]
      %v2913 = vld [vmem:[%s2900 + $0x30] sm:$0xf]
      %v2914 = vld [vmem:[%s2900 + $0x34] sm:$0xf]
      %v2915 = vld [vmem:[%s2900 + $0x38] sm:$0xf]
      %v2916 = vld [vmem:[%s2900 + $0x3c] sm:$0xf]
      %v2917 = vld [vmem:[%s2900 + $0x40] sm:$0xf]
      %v2918 = vld [vmem:[%s2900 + $0x44] sm:$0xf]
      %v2919 = vld [vmem:[%s2900 + $0x48] sm:$0xf]
      %v2920 = vld [vmem:[%s2900 + $0x4c] sm:$0xf]
      %v2921 = vld [vmem:[%s2900 + $0x50] sm:$0xf]
      %v2922 = vld [vmem:[%s2900 + $0x54] sm:$0xf]
      %v2923 = vld [vmem:[%s2900 + $0x58] sm:$0xf]
      %v2924 = vld [vmem:[%s2900 + $0x5c] sm:$0xf]
      %v2925 = vld [vmem:[%s2900 + $0x60] sm:$0xf]
      %v2926 = vld [vmem:[%s2900 + $0x64] sm:$0xf]
      %v2927 = vld [vmem:[%s2900 + $0x68] sm:$0xf]
      %v2928 = vld [vmem:[%s2900 + $0x6c] sm:$0xf]
      %v2929 = vld [vmem:[%s2900 + $0x70] sm:$0xf]
      %v2930 = vld [vmem:[%s2900 + $0x74] sm:$0xf]
      %v2931 = vld [vmem:[%s2900 + $0x78] sm:$0xf]
      %v2932 = vld [vmem:[%s2900 + $0x7c] sm:$0xf]
      %v2933 = vld [vmem:[%s2900 + $0x80] sm:$0xf]
      %v2934 = vld [vmem:[%s2900 + $0x84] sm:$0xf]
      %v2935 = vld [vmem:[%s2900 + $0x88] sm:$0xf]
      %v2936 = vld [vmem:[%s2900 + $0x8c] sm:$0xf]
      %v2937 = vld [vmem:[%s2900 + $0x90] sm:$0xf]
      %v2938 = vld [vmem:[%s2900 + $0x94] sm:$0xf]
      %v2939 = vld [vmem:[%s2900 + $0x98] sm:$0xf]
      %v2940 = vld [vmem:[%s2900 + $0x9c] sm:$0xf]
      %v2941 = vld [vmem:[%s2900 + $0xa0] sm:$0xf]
      %v2942 = vld [vmem:[%s2900 + $0xa4] sm:$0xf]
      %v2943 = vld [vmem:[%s2900 + $0xa8] sm:$0xf]
      %v2944 = vld [vmem:[%s2900 + $0xac] sm:$0xf]
      %v2945 = vld [vmem:[%s2900 + $0xb0] sm:$0xf]
      %v2946 = vld [vmem:[%s2900 + $0xb4] sm:$0xf]
      %v2947 = vld [vmem:[%s2900 + $0xb8] sm:$0xf]
      %v2948 = vld [vmem:[%s2900 + $0xbc] sm:$0xf]
      %v2949 = vld [vmem:[%s2900 + $0xc0] sm:$0xf]
      %v2950 = vld [vmem:[%s2900 + $0xc4] sm:$0xf]
      %v2951 = vld [vmem:[%s2900 + $0xc8] sm:$0xf]
      %v2952 = vld [vmem:[%s2900 + $0xcc] sm:$0xf]
      %v2953 = vld [vmem:[%s2900 + $0xd0] sm:$0xf]
      %v2954 = vld [vmem:[%s2900 + $0xd4] sm:$0xf]
      %v2955 = vld [vmem:[%s2900 + $0xd8] sm:$0xf]
      %v2956 = vld [vmem:[%s2900 + $0xdc] sm:$0xf]
      %v2957 = vld [vmem:[%s2900 + $0xe0] sm:$0xf]
      %v2958 = vld [vmem:[%s2900 + $0xe4] sm:$0xf]
      %v2959 = vld [vmem:[%s2900 + $0xe8] sm:$0xf]
      %v2960 = vld [vmem:[%s2900 + $0xec] sm:$0xf]
      %v2961 = vld [vmem:[%s2900 + $0xf0] sm:$0xf]
      %v2962 = vld [vmem:[%s2900 + $0xf4] sm:$0xf]
      %v2963 = vld [vmem:[%s2900 + $0xf8] sm:$0xf]
      %v2964 = vld [vmem:[%s2900 + $0xfc] sm:$0xf]
      %v2965 = vpack.c.b16 %v2039, %v384
      %v2966 = vpack.c.b16 %v2040, %v385
      %v2967 = vpack.c.b16 %v2041, %v386
      %v2968 = vpack.c.b16 %v2042, %v387
      %v3037 = vunpack.c.l.b16 %v2901
      %v3038 = vunpack.c.l.b16 %v2902
      %v3039 = vunpack.c.l.b16 %v2903
      %v3040 = vunpack.c.l.b16 %v2904
      %v3041 = vunpack.c.l.b16 %v2905
      %v3042 = vunpack.c.l.b16 %v2906
      %v3043 = vunpack.c.l.b16 %v2907
      %v3044 = vunpack.c.l.b16 %v2908
      %v3045 = vunpack.c.l.b16 %v2909
      %v3046 = vunpack.c.l.b16 %v2910
      %v3047 = vunpack.c.l.b16 %v2911
      %v3048 = vunpack.c.l.b16 %v2912
      %v3049 = vunpack.c.l.b16 %v2913
      %v3050 = vunpack.c.l.b16 %v2914
      %v3051 = vunpack.c.l.b16 %v2915
      %v3052 = vunpack.c.l.b16 %v2916
      %v3053 = vunpack.c.l.b16 %v2917
      %v3054 = vunpack.c.l.b16 %v2918
      %v3055 = vunpack.c.l.b16 %v2919
      %v3056 = vunpack.c.l.b16 %v2920
      %v3057 = vunpack.c.l.b16 %v2921
      %v3058 = vunpack.c.l.b16 %v2922
      %v3059 = vunpack.c.l.b16 %v2923
      %v3060 = vunpack.c.l.b16 %v2924
      %v3061 = vunpack.c.l.b16 %v2925
      %v3062 = vunpack.c.l.b16 %v2926
      %v3063 = vunpack.c.l.b16 %v2927
      %v3064 = vunpack.c.l.b16 %v2928
      %v3065 = vunpack.c.l.b16 %v2929
      %v3066 = vunpack.c.l.b16 %v2930
      %v3067 = vunpack.c.l.b16 %v2931
      %v3068 = vunpack.c.l.b16 %v2932
      %v3069 = vunpack.c.l.b16 %v2933
      %v3070 = vunpack.c.l.b16 %v2934
      %v3071 = vunpack.c.l.b16 %v2935
      %v3072 = vunpack.c.l.b16 %v2936
      %v3073 = vunpack.c.l.b16 %v2937
      %v3074 = vunpack.c.l.b16 %v2938
      %v3075 = vunpack.c.l.b16 %v2939
      %v3076 = vunpack.c.l.b16 %v2940
      %v3077 = vunpack.c.l.b16 %v2941
      %v3078 = vunpack.c.l.b16 %v2942
      %v3079 = vunpack.c.l.b16 %v2943
      %v3080 = vunpack.c.l.b16 %v2944
      %v3081 = vunpack.c.l.b16 %v2945
      %v3082 = vunpack.c.l.b16 %v2946
      %v3083 = vunpack.c.l.b16 %v2947
      %v3084 = vunpack.c.l.b16 %v2948
      %v3085 = vunpack.c.l.b16 %v2949
      %v3086 = vunpack.c.l.b16 %v2950
      %v3087 = vunpack.c.l.b16 %v2951
      %v3088 = vunpack.c.l.b16 %v2952
      %v3089 = vunpack.c.l.b16 %v2953
      %v3090 = vunpack.c.l.b16 %v2954
      %v3091 = vunpack.c.l.b16 %v2955
      %v3092 = vunpack.c.l.b16 %v2956
      %v3093 = vunpack.c.l.b16 %v2957
      %v3094 = vunpack.c.l.b16 %v2958
      %v3095 = vunpack.c.l.b16 %v2959
      %v3096 = vunpack.c.l.b16 %v2960
      %v3097 = vunpack.c.l.b16 %v2961
      %v3098 = vunpack.c.l.b16 %v2962
      %v3099 = vunpack.c.l.b16 %v2963
      %v3100 = vunpack.c.l.b16 %v2964
      %v3101 = vpack.c.b16 %v3038, %v3037
      %v3102 = vpack.c.b16 %v3040, %v3039
      %v3103 = vpack.c.b16 %v3042, %v3041
      %v3104 = vpack.c.b16 %v3044, %v3043
      %v3105 = vpack.c.b16 %v3046, %v3045
      %v3106 = vpack.c.b16 %v3048, %v3047
      %v3107 = vpack.c.b16 %v3050, %v3049
      %v3108 = vpack.c.b16 %v3052, %v3051
      %v3109 = vpack.c.b16 %v3054, %v3053
      %v3110 = vpack.c.b16 %v3056, %v3055
      %v3111 = vpack.c.b16 %v3058, %v3057
      %v3112 = vpack.c.b16 %v3060, %v3059
      %v3113 = vpack.c.b16 %v3062, %v3061
      %v3114 = vpack.c.b16 %v3064, %v3063
      %v3115 = vpack.c.b16 %v3066, %v3065
      %v3116 = vpack.c.b16 %v3068, %v3067
      %v3117 = vpack.c.b16 %v3070, %v3069
      %v3118 = vpack.c.b16 %v3072, %v3071
      %v3119 = vpack.c.b16 %v3074, %v3073
      %v3120 = vpack.c.b16 %v3076, %v3075
      %v3121 = vpack.c.b16 %v3078, %v3077
      %v3122 = vpack.c.b16 %v3080, %v3079
      %v3123 = vpack.c.b16 %v3082, %v3081
      %v3124 = vpack.c.b16 %v3084, %v3083
      %v3125 = vpack.c.b16 %v3086, %v3085
      %v3126 = vpack.c.b16 %v3088, %v3087
      %v3127 = vpack.c.b16 %v3090, %v3089
      %v3128 = vpack.c.b16 %v3092, %v3091
      %v3129 = vpack.c.b16 %v3094, %v3093
      %v3130 = vpack.c.b16 %v3096, %v3095
      %v3131 = vpack.c.b16 %v3098, %v3097
      %v3132 = vpack.c.b16 %v3100, %v3099
      %3165 = vmatprep.subr.bf16.mxu0 0
      %3166 = vmatpush1.bf16.msra.mxu0 %v3101
      %3167 = vmatprep.subr.bf16.mxu0 0
      %3168 = vmatpush1.bf16.msra.mxu0 %v3102
      %3169 = vmatprep.subr.bf16.mxu0 0
      %3170 = vmatpush1.bf16.msra.mxu0 %v3103
      %3171 = vmatprep.subr.bf16.mxu0 0
      %3172 = vmatpush1.bf16.msra.mxu0 %v3104
      %3173 = vmatprep.subr.bf16.mxu0 0
      %3174 = vmatpush1.bf16.msra.mxu0 %v3105
      %3175 = vmatprep.subr.bf16.mxu0 0
      %3176 = vmatpush1.bf16.msra.mxu0 %v3106
      %3177 = vmatprep.subr.bf16.mxu0 0
      %3178 = vmatpush1.bf16.msra.mxu0 %v3107
      %3179 = vmatprep.subr.bf16.mxu0 0
      %3180 = vmatpush1.bf16.msra.mxu0 %v3108
      %3181 = vmatprep.subr.bf16.mxu0 0
      %3182 = vmatpush1.bf16.msra.mxu0 %v3109
      %3183 = vmatprep.subr.bf16.mxu0 0
      %3184 = vmatpush1.bf16.msra.mxu0 %v3110
      %3185 = vmatprep.subr.bf16.mxu0 0
      %3186 = vmatpush1.bf16.msra.mxu0 %v3111
      %3187 = vmatprep.subr.bf16.mxu0 0
      %3188 = vmatpush1.bf16.msra.mxu0 %v3112
      %3189 = vmatprep.subr.bf16.mxu0 0
      %3190 = vmatpush1.bf16.msra.mxu0 %v3113
      %3191 = vmatprep.subr.bf16.mxu0 0
      %3192 = vmatpush1.bf16.msra.mxu0 %v3114
      %3193 = vmatprep.subr.bf16.mxu0 0
      %3194 = vmatpush1.bf16.msra.mxu0 %v3115
      %3195 = vmatprep.subr.bf16.mxu0 0
      %3196 = vmatpush1.bf16.msra.mxu0 %v3116
      %3197 = vmatprep.mubr.bf16.mxu0 %v393
      %3198 = vmatmul.mubr.bf16.gmra.mrb[0].mxu0 %v392
      %v3199 = vpop.f32.mrb[0].mxu0
      %v3200 = vadd.f32 0.0, %v3199
      %v3201 = vpop.f32.mrb[0].mxu0
      %v3202 = vpop.f32.mrb[0].mxu0
      %v3203 = vadd.f32 0.0, %v3202
      %v3204 = vpop.f32.mrb[0].mxu0
      %3205 = vmatprep.mubr.bf16.mxu0 %v397
      %3206 = vmatmul.mubr.bf16.gmra.mrb[0].mxu0 %v396
      %v3207 = vpop.f32.mrb[0].mxu0
      %v3208 = vadd.f32 0.0, %v3207
      %v3209 = vpop.f32.mrb[0].mxu0
      %v3210 = vpop.f32.mrb[0].mxu0
      %v3211 = vadd.f32 0.0, %v3210
      %v3212 = vpop.f32.mrb[0].mxu0
      %3213 = vmatprep.mubr.bf16.mxu0 %v2966
      %3214 = vmatmul.mubr.bf16.gmra.mrb[0].mxu0 %v2965
      %v3215 = vpop.f32.mrb[0].mxu0
      %v3216 = vadd.f32 0.0, %v3215
      %v3217 = vpop.f32.mrb[0].mxu0
      %v3218 = vpop.f32.mrb[0].mxu0
      %v3219 = vadd.f32 0.0, %v3218
      %v3220 = vpop.f32.mrb[0].mxu0
      %3221 = vdwg.mxu0
      %3222 = vmatprep.subr.bf16.mxu0 0
      %3223 = vmatpush1.bf16.msra.mxu0 %v3117
      %3224 = vmatprep.subr.bf16.mxu0 0
      %3225 = vmatpush1.bf16.msra.mxu0 %v3118
      %3226 = vmatprep.subr.bf16.mxu0 0
      %3227 = vmatpush1.bf16.msra.mxu0 %v3119
      %3228 = vmatprep.subr.bf16.mxu0 0
      %3229 = vmatpush1.bf16.msra.mxu0 %v3120
      %3230 = vmatprep.subr.bf16.mxu0 0
      %3231 = vmatpush1.bf16.msra.mxu0 %v3121
      %3232 = vmatprep.subr.bf16.mxu0 0
      %3233 = vmatpush1.bf16.msra.mxu0 %v3122
      %3234 = vmatprep.subr.bf16.mxu0 0
      %3235 = vmatpush1.bf16.msra.mxu0 %v3123
      %3236 = vmatprep.subr.bf16.mxu0 0
      %3237 = vmatpush1.bf16.msra.mxu0 %v3124
      %3238 = vmatprep.subr.bf16.mxu0 0
      %3239 = vmatpush1.bf16.msra.mxu0 %v3125
      %3240 = vmatprep.subr.bf16.mxu0 0
      %3241 = vmatpush1.bf16.msra.mxu0 %v3126
      %3242 = vmatprep.subr.bf16.mxu0 0
      %3243 = vmatpush1.bf16.msra.mxu0 %v3127
      %3244 = vmatprep.subr.bf16.mxu0 0
      %3245 = vmatpush1.bf16.msra.mxu0 %v3128
      %3246 = vmatprep.subr.bf16.mxu0 0
      %3247 = vmatpush1.bf16.msra.mxu0 %v3129
      %3248 = vmatprep.subr.bf16.mxu0 0
      %3249 = vmatpush1.bf16.msra.mxu0 %v3130
      %3250 = vmatprep.subr.bf16.mxu0 0
      %3251 = vmatpush1.bf16.msra.mxu0 %v3131
      %3252 = vmatprep.subr.bf16.mxu0 0
      %3253 = vmatpush1.bf16.msra.mxu0 %v3132
      %3254 = vmatprep.mubr.bf16.mxu0 %v395
      %3255 = vmatmul.mubr.bf16.gmra.mrb[0].mxu0 %v394
      %v3256 = vpop.f32.mrb[0].mxu0
      %v3257 = vadd.f32 %v3200, %v3256
      %v3258 = vpop.f32.mrb[0].mxu0
      %v3259 = vpop.f32.mrb[0].mxu0
      %v3260 = vadd.f32 %v3203, %v3259
      %v3261 = vpop.f32.mrb[0].mxu0
      %3262 = vmatprep.mubr.bf16.mxu0 %v399
      %3263 = vmatmul.mubr.bf16.gmra.mrb[0].mxu0 %v398
      %v3264 = vpop.f32.mrb[0].mxu0
      %v3265 = vadd.f32 %v3208, %v3264
      %v3266 = vpop.f32.mrb[0].mxu0
      %v3267 = vpop.f32.mrb[0].mxu0
      %v3268 = vadd.f32 %v3211, %v3267
      %v3269 = vpop.f32.mrb[0].mxu0
      %3270 = vmatprep.mubr.bf16.mxu0 %v2968
      %3271 = vmatmul.mubr.bf16.gmra.mrb[0].mxu0 %v2967
      %v3272 = vpop.f32.mrb[0].mxu0
      %v3273 = vadd.f32 %v3216, %v3272
      %v3274 = vpop.f32.mrb[0].mxu0
      %v3275 = vpop.f32.mrb[0].mxu0
      %v3276 = vadd.f32 %v3219, %v3275
      %v3277 = vpop.f32.mrb[0].mxu0
      %3278 = vdwg.mxu0
      %v3279 = vadd.f32 %v2894, %v3257
      %v3280 = vadd.f32 %v2895, %v3260
      %v3281 = vadd.f32 %v2896, %v3265
      %v3282 = vadd.f32 %v2897, %v3268
      %v3283 = vadd.f32 %v2898, %v3273
      %v3284 = vadd.f32 %v2899, %v3276
      %s3285 = scalar_lea.vmem %s1, 1792
      %v3286 = vld [vmem:[%s3285] sm:$0xf]
      %v3287 = vld [vmem:[%s3285 + $0x4] sm:$0xf]
      %v3288 = vld [vmem:[%s3285 + $0x8] sm:$0xf]
      %v3289 = vld [vmem:[%s3285 + $0xc] sm:$0xf]
      %v3290 = vld [vmem:[%s3285 + $0x10] sm:$0xf]
      %v3291 = vld [vmem:[%s3285 + $0x14] sm:$0xf]
      %v3292 = vld [vmem:[%s3285 + $0x18] sm:$0xf]
      %v3293 = vld [vmem:[%s3285 + $0x1c] sm:$0xf]
      %v3294 = vld [vmem:[%s3285 + $0x20] sm:$0xf]
      %v3295 = vld [vmem:[%s3285 + $0x24] sm:$0xf]
      %v3296 = vld [vmem:[%s3285 + $0x28] sm:$0xf]
      %v3297 = vld [vmem:[%s3285 + $0x2c] sm:$0xf]
      %v3298 = vld [vmem:[%s3285 + $0x30] sm:$0xf]
      %v3299 = vld [vmem:[%s3285 + $0x34] sm:$0xf]
      %v3300 = vld [vmem:[%s3285 + $0x38] sm:$0xf]
      %v3301 = vld [vmem:[%s3285 + $0x3c] sm:$0xf]
      %v3302 = vld [vmem:[%s3285 + $0x40] sm:$0xf]
      %v3303 = vld [vmem:[%s3285 + $0x44] sm:$0xf]
      %v3304 = vld [vmem:[%s3285 + $0x48] sm:$0xf]
      %v3305 = vld [vmem:[%s3285 + $0x4c] sm:$0xf]
      %v3306 = vld [vmem:[%s3285 + $0x50] sm:$0xf]
      %v3307 = vld [vmem:[%s3285 + $0x54] sm:$0xf]
      %v3308 = vld [vmem:[%s3285 + $0x58] sm:$0xf]
      %v3309 = vld [vmem:[%s3285 + $0x5c] sm:$0xf]
      %v3310 = vld [vmem:[%s3285 + $0x60] sm:$0xf]
      %v3311 = vld [vmem:[%s3285 + $0x64] sm:$0xf]
      %v3312 = vld [vmem:[%s3285 + $0x68] sm:$0xf]
      %v3313 = vld [vmem:[%s3285 + $0x6c] sm:$0xf]
      %v3314 = vld [vmem:[%s3285 + $0x70] sm:$0xf]
      %v3315 = vld [vmem:[%s3285 + $0x74] sm:$0xf]
      %v3316 = vld [vmem:[%s3285 + $0x78] sm:$0xf]
      %v3317 = vld [vmem:[%s3285 + $0x7c] sm:$0xf]
      %v3318 = vld [vmem:[%s3285 + $0x80] sm:$0xf]
      %v3319 = vld [vmem:[%s3285 + $0x84] sm:$0xf]
      %v3320 = vld [vmem:[%s3285 + $0x88] sm:$0xf]
      %v3321 = vld [vmem:[%s3285 + $0x8c] sm:$0xf]
      %v3322 = vld [vmem:[%s3285 + $0x90] sm:$0xf]
      %v3323 = vld [vmem:[%s3285 + $0x94] sm:$0xf]
      %v3324 = vld [vmem:[%s3285 + $0x98] sm:$0xf]
      %v3325 = vld [vmem:[%s3285 + $0x9c] sm:$0xf]
      %v3326 = vld [vmem:[%s3285 + $0xa0] sm:$0xf]
      %v3327 = vld [vmem:[%s3285 + $0xa4] sm:$0xf]
      %v3328 = vld [vmem:[%s3285 + $0xa8] sm:$0xf]
      %v3329 = vld [vmem:[%s3285 + $0xac] sm:$0xf]
      %v3330 = vld [vmem:[%s3285 + $0xb0] sm:$0xf]
      %v3331 = vld [vmem:[%s3285 + $0xb4] sm:$0xf]
      %v3332 = vld [vmem:[%s3285 + $0xb8] sm:$0xf]
      %v3333 = vld [vmem:[%s3285 + $0xbc] sm:$0xf]
      %v3334 = vld [vmem:[%s3285 + $0xc0] sm:$0xf]
      %v3335 = vld [vmem:[%s3285 + $0xc4] sm:$0xf]
      %v3336 = vld [vmem:[%s3285 + $0xc8] sm:$0xf]
      %v3337 = vld [vmem:[%s3285 + $0xcc] sm:$0xf]
      %v3338 = vld [vmem:[%s3285 + $0xd0] sm:$0xf]
      %v3339 = vld [vmem:[%s3285 + $0xd4] sm:$0xf]
      %v3340 = vld [vmem:[%s3285 + $0xd8] sm:$0xf]
      %v3341 = vld [vmem:[%s3285 + $0xdc] sm:$0xf]
      %v3342 = vld [vmem:[%s3285 + $0xe0] sm:$0xf]
      %v3343 = vld [vmem:[%s3285 + $0xe4] sm:$0xf]
      %v3344 = vld [vmem:[%s3285 + $0xe8] sm:$0xf]
      %v3345 = vld [vmem:[%s3285 + $0xec] sm:$0xf]
      %v3346 = vld [vmem:[%s3285 + $0xf0] sm:$0xf]
      %v3347 = vld [vmem:[%s3285 + $0xf4] sm:$0xf]
      %v3348 = vld [vmem:[%s3285 + $0xf8] sm:$0xf]
      %v3349 = vld [vmem:[%s3285 + $0xfc] sm:$0xf]
      %v3352 = vunpack.c.l.b16 %v215
      %v3353 = vunpack.c.h.b16 %v215
      %v3354 = vunpack.c.l.b16 %v216
      %v3355 = vunpack.c.h.b16 %v216
      %v3356 = vpack.c.b16 %v3352, %v3352
      %v3357 = vpack.c.b16 %v3353, %v3353
      %v3358 = vpack.c.b16 %v3354, %v3354
      %v3359 = vpack.c.b16 %v3355, %v3355
      %v3361 = vshll.u32 %v2965, 16
      %v3363 = vrot.slane %v3361, 1
      %v3364 = vsel %vm404, %v487, %v3363
      %v3366 = vshll.u32 %v2966, 16
      %v3368 = vrot.slane %v3366, 1
      %v3369 = vsel %vm404, %v495, %v3368
      %v3371 = vshll.u32 %v2967, 16
      %v3373 = vrot.slane %v3371, 1
      %v3374 = vsel %vm404, %v503, %v3373
      %v3376 = vshll.u32 %v2968, 16
      %v3378 = vrot.slane %v3376, 1
      %v3379 = vsel %vm404, %v511, %v3378
      %v3380 = vshrl.u32 %v2965, 16
      %v3382 = vor.u32 %v3380, %v3363
      %v3384 = vshll.u32 %v3356, 16
      %v3386 = vrot.slane %v3384, 1
      %v3387 = vsel %vm404, %v3382, %v3386
      %v3388 = vshrl.u32 %v2966, 16
      %v3390 = vor.u32 %v3388, %v3368
      %v3392 = vshll.u32 %v3357, 16
      %v3394 = vrot.slane %v3392, 1
      %v3395 = vsel %vm404, %v3390, %v3394
      %v3396 = vshrl.u32 %v2967, 16
      %v3398 = vor.u32 %v3396, %v3373
      %v3400 = vshll.u32 %v3358, 16
      %v3402 = vrot.slane %v3400, 1
      %v3403 = vsel %vm404, %v3398, %v3402
      %v3404 = vshrl.u32 %v2968, 16
      %v3406 = vor.u32 %v3404, %v3378
      %v3408 = vshll.u32 %v3359, 16
      %v3410 = vrot.slane %v3408, 1
      %v3411 = vsel %vm404, %v3406, %v3410
      %v3484 = vunpack.c.l.b16 %v3286
      %v3485 = vunpack.c.l.b16 %v3287
      %v3486 = vunpack.c.l.b16 %v3288
      %v3487 = vunpack.c.l.b16 %v3289
      %v3488 = vunpack.c.l.b16 %v3290
      %v3489 = vunpack.c.l.b16 %v3291
      %v3490 = vunpack.c.l.b16 %v3292
      %v3491 = vunpack.c.l.b16 %v3293
      %v3492 = vunpack.c.l.b16 %v3294
      %v3493 = vunpack.c.l.b16 %v3295
      %v3494 = vunpack.c.l.b16 %v3296
      %v3495 = vunpack.c.l.b16 %v3297
      %v3496 = vunpack.c.l.b16 %v3298
      %v3497 = vunpack.c.l.b16 %v3299
      %v3498 = vunpack.c.l.b16 %v3300
      %v3499 = vunpack.c.l.b16 %v3301
      %v3500 = vunpack.c.l.b16 %v3302
      %v3501 = vunpack.c.l.b16 %v3303
      %v3502 = vunpack.c.l.b16 %v3304
      %v3503 = vunpack.c.l.b16 %v3305
      %v3504 = vunpack.c.l.b16 %v3306
      %v3505 = vunpack.c.l.b16 %v3307
      %v3506 = vunpack.c.l.b16 %v3308
      %v3507 = vunpack.c.l.b16 %v3309
      %v3508 = vunpack.c.l.b16 %v3310
      %v3509 = vunpack.c.l.b16 %v3311
      %v3510 = vunpack.c.l.b16 %v3312
      %v3511 = vunpack.c.l.b16 %v3313
      %v3512 = vunpack.c.l.b16 %v3314
      %v3513 = vunpack.c.l.b16 %v3315
      %v3514 = vunpack.c.l.b16 %v3316
      %v3515 = vunpack.c.l.b16 %v3317
      %v3516 = vunpack.c.l.b16 %v3318
      %v3517 = vunpack.c.l.b16 %v3319
      %v3518 = vunpack.c.l.b16 %v3320
      %v3519 = vunpack.c.l.b16 %v3321
      %v3520 = vunpack.c.l.b16 %v3322
      %v3521 = vunpack.c.l.b16 %v3323
      %v3522 = vunpack.c.l.b16 %v3324
      %v3523 = vunpack.c.l.b16 %v3325
      %v3524 = vunpack.c.l.b16 %v3326
      %v3525 = vunpack.c.l.b16 %v3327
      %v3526 = vunpack.c.l.b16 %v3328
      %v3527 = vunpack.c.l.b16 %v3329
      %v3528 = vunpack.c.l.b16 %v3330
      %v3529 = vunpack.c.l.b16 %v3331
      %v3530 = vunpack.c.l.b16 %v3332
      %v3531 = vunpack.c.l.b16 %v3333
      %v3532 = vunpack.c.l.b16 %v3334
      %v3533 = vunpack.c.l.b16 %v3335
      %v3534 = vunpack.c.l.b16 %v3336
      %v3535 = vunpack.c.l.b16 %v3337
      %v3536 = vunpack.c.l.b16 %v3338
      %v3537 = vunpack.c.l.b16 %v3339
      %v3538 = vunpack.c.l.b16 %v3340
      %v3539 = vunpack.c.l.b16 %v3341
      %v3540 = vunpack.c.l.b16 %v3342
      %v3541 = vunpack.c.l.b16 %v3343
      %v3542 = vunpack.c.l.b16 %v3344
      %v3543 = vunpack.c.l.b16 %v3345
      %v3544 = vunpack.c.l.b16 %v3346
      %v3545 = vunpack.c.l.b16 %v3347
      %v3546 = vunpack.c.l.b16 %v3348
      %v3547 = vunpack.c.l.b16 %v3349
      %v3548 = vpack.c.b16 %v3485, %v3484
      %v3549 = vpack.c.b16 %v3487, %v3486
      %v3550 = vpack.c.b16 %v3489, %v3488
      %v3551 = vpack.c.b16 %v3491, %v3490
      %v3552 = vpack.c.b16 %v3493, %v3492
      %v3553 = vpack.c.b16 %v3495, %v3494
      %v3554 = vpack.c.b16 %v3497, %v3496
      %v3555 = vpack.c.b16 %v3499, %v3498
      %v3556 = vpack.c.b16 %v3501, %v3500
      %v3557 = vpack.c.b16 %v3503, %v3502
      %v3558 = vpack.c.b16 %v3505, %v3504
      %v3559 = vpack.c.b16 %v3507, %v3506
      %v3560 = vpack.c.b16 %v3509, %v3508
      %v3561 = vpack.c.b16 %v3511, %v3510
      %v3562 = vpack.c.b16 %v3513, %v3512
      %v3563 = vpack.c.b16 %v3515, %v3514
      %v3564 = vpack.c.b16 %v3517, %v3516
      %v3565 = vpack.c.b16 %v3519, %v3518
      %v3566 = vpack.c.b16 %v3521, %v3520
      %v3567 = vpack.c.b16 %v3523, %v3522
      %v3568 = vpack.c.b16 %v3525, %v3524
      %v3569 = vpack.c.b16 %v3527, %v3526
      %v3570 = vpack.c.b16 %v3529, %v3528
      %v3571 = vpack.c.b16 %v3531, %v3530
      %v3572 = vpack.c.b16 %v3533, %v3532
      %v3573 = vpack.c.b16 %v3535, %v3534
      %v3574 = vpack.c.b16 %v3537, %v3536
      %v3575 = vpack.c.b16 %v3539, %v3538
      %v3576 = vpack.c.b16 %v3541, %v3540
      %v3577 = vpack.c.b16 %v3543, %v3542
      %v3578 = vpack.c.b16 %v3545, %v3544
      %v3579 = vpack.c.b16 %v3547, %v3546
      %3612 = vmatprep.subr.bf16.mxu0 0
      %3613 = vmatpush1.bf16.msra.mxu0 %v3548
      %3614 = vmatprep.subr.bf16.mxu0 0
      %3615 = vmatpush1.bf16.msra.mxu0 %v3549
      %3616 = vmatprep.subr.bf16.mxu0 0
      %3617 = vmatpush1.bf16.msra.mxu0 %v3550
      %3618 = vmatprep.subr.bf16.mxu0 0
      %3619 = vmatpush1.bf16.msra.mxu0 %v3551
      %3620 = vmatprep.subr.bf16.mxu0 0
      %3621 = vmatpush1.bf16.msra.mxu0 %v3552
      %3622 = vmatprep.subr.bf16.mxu0 0
      %3623 = vmatpush1.bf16.msra.mxu0 %v3553
      %3624 = vmatprep.subr.bf16.mxu0 0
      %3625 = vmatpush1.bf16.msra.mxu0 %v3554
      %3626 = vmatprep.subr.bf16.mxu0 0
      %3627 = vmatpush1.bf16.msra.mxu0 %v3555
      %3628 = vmatprep.subr.bf16.mxu0 0
      %3629 = vmatpush1.bf16.msra.mxu0 %v3556
      %3630 = vmatprep.subr.bf16.mxu0 0
      %3631 = vmatpush1.bf16.msra.mxu0 %v3557
      %3632 = vmatprep.subr.bf16.mxu0 0
      %3633 = vmatpush1.bf16.msra.mxu0 %v3558
      %3634 = vmatprep.subr.bf16.mxu0 0
      %3635 = vmatpush1.bf16.msra.mxu0 %v3559
      %3636 = vmatprep.subr.bf16.mxu0 0
      %3637 = vmatpush1.bf16.msra.mxu0 %v3560
      %3638 = vmatprep.subr.bf16.mxu0 0
      %3639 = vmatpush1.bf16.msra.mxu0 %v3561
      %3640 = vmatprep.subr.bf16.mxu0 0
      %3641 = vmatpush1.bf16.msra.mxu0 %v3562
      %3642 = vmatprep.subr.bf16.mxu0 0
      %3643 = vmatpush1.bf16.msra.mxu0 %v3563
      %3644 = vmatprep.mubr.bf16.mxu0 %v468
      %3645 = vmatmul.mubr.bf16.gmra.mrb[0].mxu0 %v460
      %v3646 = vpop.f32.mrb[0].mxu0
      %v3647 = vadd.f32 0.0, %v3646
      %v3648 = vpop.f32.mrb[0].mxu0
      %v3649 = vpop.f32.mrb[0].mxu0
      %v3650 = vadd.f32 0.0, %v3649
      %v3651 = vpop.f32.mrb[0].mxu0
      %3652 = vmatprep.mubr.bf16.mxu0 %v3369
      %3653 = vmatmul.mubr.bf16.gmra.mrb[0].mxu0 %v3364
      %v3654 = vpop.f32.mrb[0].mxu0
      %v3655 = vadd.f32 0.0, %v3654
      %v3656 = vpop.f32.mrb[0].mxu0
      %v3657 = vpop.f32.mrb[0].mxu0
      %v3658 = vadd.f32 0.0, %v3657
      %v3659 = vpop.f32.mrb[0].mxu0
      %3660 = vmatprep.mubr.bf16.mxu0 %v3395
      %3661 = vmatmul.mubr.bf16.gmra.mrb[0].mxu0 %v3387
      %v3662 = vpop.f32.mrb[0].mxu0
      %v3663 = vadd.f32 0.0, %v3662
      %v3664 = vpop.f32.mrb[0].mxu0
      %v3665 = vpop.f32.mrb[0].mxu0
      %v3666 = vadd.f32 0.0, %v3665
      %v3667 = vpop.f32.mrb[0].mxu0
      %3668 = vdwg.mxu0
      %3669 = vmatprep.subr.bf16.mxu0 0
      %3670 = vmatpush1.bf16.msra.mxu0 %v3564
      %3671 = vmatprep.subr.bf16.mxu0 0
      %3672 = vmatpush1.bf16.msra.mxu0 %v3565
      %3673 = vmatprep.subr.bf16.mxu0 0
      %3674 = vmatpush1.bf16.msra.mxu0 %v3566
      %3675 = vmatprep.subr.bf16.mxu0 0
      %3676 = vmatpush1.bf16.msra.mxu0 %v3567
      %3677 = vmatprep.subr.bf16.mxu0 0
      %3678 = vmatpush1.bf16.msra.mxu0 %v3568
      %3679 = vmatprep.subr.bf16.mxu0 0
      %3680 = vmatpush1.bf16.msra.mxu0 %v3569
      %3681 = vmatprep.subr.bf16.mxu0 0
      %3682 = vmatpush1.bf16.msra.mxu0 %v3570
      %3683 = vmatprep.subr.bf16.mxu0 0
      %3684 = vmatpush1.bf16.msra.mxu0 %v3571
      %3685 = vmatprep.subr.bf16.mxu0 0
      %3686 = vmatpush1.bf16.msra.mxu0 %v3572
      %3687 = vmatprep.subr.bf16.mxu0 0
      %3688 = vmatpush1.bf16.msra.mxu0 %v3573
      %3689 = vmatprep.subr.bf16.mxu0 0
      %3690 = vmatpush1.bf16.msra.mxu0 %v3574
      %3691 = vmatprep.subr.bf16.mxu0 0
      %3692 = vmatpush1.bf16.msra.mxu0 %v3575
      %3693 = vmatprep.subr.bf16.mxu0 0
      %3694 = vmatpush1.bf16.msra.mxu0 %v3576
      %3695 = vmatprep.subr.bf16.mxu0 0
      %3696 = vmatpush1.bf16.msra.mxu0 %v3577
      %3697 = vmatprep.subr.bf16.mxu0 0
      %3698 = vmatpush1.bf16.msra.mxu0 %v3578
      %3699 = vmatprep.subr.bf16.mxu0 0
      %3700 = vmatpush1.bf16.msra.mxu0 %v3579
      %3701 = vmatprep.mubr.bf16.mxu0 %v484
      %3702 = vmatmul.mubr.bf16.gmra.mrb[0].mxu0 %v476
      %v3703 = vpop.f32.mrb[0].mxu0
      %v3704 = vadd.f32 %v3647, %v3703
      %v3705 = vpop.f32.mrb[0].mxu0
      %v3706 = vpop.f32.mrb[0].mxu0
      %v3707 = vadd.f32 %v3650, %v3706
      %v3708 = vpop.f32.mrb[0].mxu0
      %3709 = vmatprep.mubr.bf16.mxu0 %v3379
      %3710 = vmatmul.mubr.bf16.gmra.mrb[0].mxu0 %v3374
      %v3711 = vpop.f32.mrb[0].mxu0
      %v3712 = vadd.f32 %v3655, %v3711
      %v3713 = vpop.f32.mrb[0].mxu0
      %v3714 = vpop.f32.mrb[0].mxu0
      %v3715 = vadd.f32 %v3658, %v3714
      %v3716 = vpop.f32.mrb[0].mxu0
      %3717 = vmatprep.mubr.bf16.mxu0 %v3411
      %3718 = vmatmul.mubr.bf16.gmra.mrb[0].mxu0 %v3403
      %v3719 = vpop.f32.mrb[0].mxu0
      %v3720 = vadd.f32 %v3663, %v3719
      %v3721 = vpop.f32.mrb[0].mxu0
      %v3722 = vpop.f32.mrb[0].mxu0
      %v3723 = vadd.f32 %v3666, %v3722
      %v3724 = vpop.f32.mrb[0].mxu0
      %3725 = vdwg.mxu0
      %v3726 = vadd.f32 %v3279, %v3704
      %v3727 = vadd.f32 %v3280, %v3707
      %v3728 = vadd.f32 %v3281, %v3712
      %v3729 = vadd.f32 %v3282, %v3715
      %v3730 = vadd.f32 %v3283, %v3720
      %v3731 = vadd.f32 %v3284, %v3723
      %s3732 = scalar_lea.vmem %s1, 2048
      %v3733 = vld [vmem:[%s3732] sm:$0xf]
      %v3734 = vld [vmem:[%s3732 + $0x4] sm:$0xf]
      %v3735 = vld [vmem:[%s3732 + $0x8] sm:$0xf]
      %v3736 = vld [vmem:[%s3732 + $0xc] sm:$0xf]
      %v3737 = vld [vmem:[%s3732 + $0x10] sm:$0xf]
      %v3738 = vld [vmem:[%s3732 + $0x14] sm:$0xf]
      %v3739 = vld [vmem:[%s3732 + $0x18] sm:$0xf]
      %v3740 = vld [vmem:[%s3732 + $0x1c] sm:$0xf]
      %v3741 = vld [vmem:[%s3732 + $0x20] sm:$0xf]
      %v3742 = vld [vmem:[%s3732 + $0x24] sm:$0xf]
      %v3743 = vld [vmem:[%s3732 + $0x28] sm:$0xf]
      %v3744 = vld [vmem:[%s3732 + $0x2c] sm:$0xf]
      %v3745 = vld [vmem:[%s3732 + $0x30] sm:$0xf]
      %v3746 = vld [vmem:[%s3732 + $0x34] sm:$0xf]
      %v3747 = vld [vmem:[%s3732 + $0x38] sm:$0xf]
      %v3748 = vld [vmem:[%s3732 + $0x3c] sm:$0xf]
      %v3749 = vld [vmem:[%s3732 + $0x40] sm:$0xf]
      %v3750 = vld [vmem:[%s3732 + $0x44] sm:$0xf]
      %v3751 = vld [vmem:[%s3732 + $0x48] sm:$0xf]
      %v3752 = vld [vmem:[%s3732 + $0x4c] sm:$0xf]
      %v3753 = vld [vmem:[%s3732 + $0x50] sm:$0xf]
      %v3754 = vld [vmem:[%s3732 + $0x54] sm:$0xf]
      %v3755 = vld [vmem:[%s3732 + $0x58] sm:$0xf]
      %v3756 = vld [vmem:[%s3732 + $0x5c] sm:$0xf]
      %v3757 = vld [vmem:[%s3732 + $0x60] sm:$0xf]
      %v3758 = vld [vmem:[%s3732 + $0x64] sm:$0xf]
      %v3759 = vld [vmem:[%s3732 + $0x68] sm:$0xf]
      %v3760 = vld [vmem:[%s3732 + $0x6c] sm:$0xf]
      %v3761 = vld [vmem:[%s3732 + $0x70] sm:$0xf]
      %v3762 = vld [vmem:[%s3732 + $0x74] sm:$0xf]
      %v3763 = vld [vmem:[%s3732 + $0x78] sm:$0xf]
      %v3764 = vld [vmem:[%s3732 + $0x7c] sm:$0xf]
      %v3765 = vld [vmem:[%s3732 + $0x80] sm:$0xf]
      %v3766 = vld [vmem:[%s3732 + $0x84] sm:$0xf]
      %v3767 = vld [vmem:[%s3732 + $0x88] sm:$0xf]
      %v3768 = vld [vmem:[%s3732 + $0x8c] sm:$0xf]
      %v3769 = vld [vmem:[%s3732 + $0x90] sm:$0xf]
      %v3770 = vld [vmem:[%s3732 + $0x94] sm:$0xf]
      %v3771 = vld [vmem:[%s3732 + $0x98] sm:$0xf]
      %v3772 = vld [vmem:[%s3732 + $0x9c] sm:$0xf]
      %v3773 = vld [vmem:[%s3732 + $0xa0] sm:$0xf]
      %v3774 = vld [vmem:[%s3732 + $0xa4] sm:$0xf]
      %v3775 = vld [vmem:[%s3732 + $0xa8] sm:$0xf]
      %v3776 = vld [vmem:[%s3732 + $0xac] sm:$0xf]
      %v3777 = vld [vmem:[%s3732 + $0xb0] sm:$0xf]
      %v3778 = vld [vmem:[%s3732 + $0xb4] sm:$0xf]
      %v3779 = vld [vmem:[%s3732 + $0xb8] sm:$0xf]
      %v3780 = vld [vmem:[%s3732 + $0xbc] sm:$0xf]
      %v3781 = vld [vmem:[%s3732 + $0xc0] sm:$0xf]
      %v3782 = vld [vmem:[%s3732 + $0xc4] sm:$0xf]
      %v3783 = vld [vmem:[%s3732 + $0xc8] sm:$0xf]
      %v3784 = vld [vmem:[%s3732 + $0xcc] sm:$0xf]
      %v3785 = vld [vmem:[%s3732 + $0xd0] sm:$0xf]
      %v3786 = vld [vmem:[%s3732 + $0xd4] sm:$0xf]
      %v3787 = vld [vmem:[%s3732 + $0xd8] sm:$0xf]
      %v3788 = vld [vmem:[%s3732 + $0xdc] sm:$0xf]
      %v3789 = vld [vmem:[%s3732 + $0xe0] sm:$0xf]
      %v3790 = vld [vmem:[%s3732 + $0xe4] sm:$0xf]
      %v3791 = vld [vmem:[%s3732 + $0xe8] sm:$0xf]
      %v3792 = vld [vmem:[%s3732 + $0xec] sm:$0xf]
      %v3793 = vld [vmem:[%s3732 + $0xf0] sm:$0xf]
      %v3794 = vld [vmem:[%s3732 + $0xf4] sm:$0xf]
      %v3795 = vld [vmem:[%s3732 + $0xf8] sm:$0xf]
      %v3796 = vld [vmem:[%s3732 + $0xfc] sm:$0xf]
      %v3797 = vrot.slane %v2965, 1
      %v3798 = vsel %vm1218, %v1231, %v3797
      %v3799 = vrot.slane %v2966, 1
      %v3800 = vsel %vm1218, %v1233, %v3799
      %v3801 = vrot.slane %v2967, 1
      %v3802 = vsel %vm1218, %v1235, %v3801
      %v3803 = vrot.slane %v2968, 1
      %v3804 = vsel %vm1218, %v1237, %v3803
      %v3805 = vrot.slane %v3356, 1
      %v3806 = vsel %vm1218, %v3797, %v3805
      %v3807 = vrot.slane %v3357, 1
      %v3808 = vsel %vm1218, %v3799, %v3807
      %v3809 = vrot.slane %v3358, 1
      %v3810 = vsel %vm1218, %v3801, %v3809
      %v3811 = vrot.slane %v3359, 1
      %v3812 = vsel %vm1218, %v3803, %v3811
      %v3885 = vunpack.c.l.b16 %v3733
      %v3886 = vunpack.c.l.b16 %v3734
      %v3887 = vunpack.c.l.b16 %v3735
      %v3888 = vunpack.c.l.b16 %v3736
      %v3889 = vunpack.c.l.b16 %v3737
      %v3890 = vunpack.c.l.b16 %v3738
      %v3891 = vunpack.c.l.b16 %v3739
      %v3892 = vunpack.c.l.b16 %v3740
      %v3893 = vunpack.c.l.b16 %v3741
      %v3894 = vunpack.c.l.b16 %v3742
      %v3895 = vunpack.c.l.b16 %v3743
      %v3896 = vunpack.c.l.b16 %v3744
      %v3897 = vunpack.c.l.b16 %v3745
      %v3898 = vunpack.c.l.b16 %v3746
      %v3899 = vunpack.c.l.b16 %v3747
      %v3900 = vunpack.c.l.b16 %v3748
      %v3901 = vunpack.c.l.b16 %v3749
      %v3902 = vunpack.c.l.b16 %v3750
      %v3903 = vunpack.c.l.b16 %v3751
      %v3904 = vunpack.c.l.b16 %v3752
      %v3905 = vunpack.c.l.b16 %v3753
      %v3906 = vunpack.c.l.b16 %v3754
      %v3907 = vunpack.c.l.b16 %v3755
      %v3908 = vunpack.c.l.b16 %v3756
      %v3909 = vunpack.c.l.b16 %v3757
      %v3910 = vunpack.c.l.b16 %v3758
      %v3911 = vunpack.c.l.b16 %v3759
      %v3912 = vunpack.c.l.b16 %v3760
      %v3913 = vunpack.c.l.b16 %v3761
      %v3914 = vunpack.c.l.b16 %v3762
      %v3915 = vunpack.c.l.b16 %v3763
      %v3916 = vunpack.c.l.b16 %v3764
      %v3917 = vunpack.c.l.b16 %v3765
      %v3918 = vunpack.c.l.b16 %v3766
      %v3919 = vunpack.c.l.b16 %v3767
      %v3920 = vunpack.c.l.b16 %v3768
      %v3921 = vunpack.c.l.b16 %v3769
      %v3922 = vunpack.c.l.b16 %v3770
      %v3923 = vunpack.c.l.b16 %v3771
      %v3924 = vunpack.c.l.b16 %v3772
      %v3925 = vunpack.c.l.b16 %v3773
      %v3926 = vunpack.c.l.b16 %v3774
      %v3927 = vunpack.c.l.b16 %v3775
      %v3928 = vunpack.c.l.b16 %v3776
      %v3929 = vunpack.c.l.b16 %v3777
      %v3930 = vunpack.c.l.b16 %v3778
      %v3931 = vunpack.c.l.b16 %v3779
      %v3932 = vunpack.c.l.b16 %v3780
      %v3933 = vunpack.c.l.b16 %v3781
      %v3934 = vunpack.c.l.b16 %v3782
      %v3935 = vunpack.c.l.b16 %v3783
      %v3936 = vunpack.c.l.b16 %v3784
      %v3937 = vunpack.c.l.b16 %v3785
      %v3938 = vunpack.c.l.b16 %v3786
      %v3939 = vunpack.c.l.b16 %v3787
      %v3940 = vunpack.c.l.b16 %v3788
      %v3941 = vunpack.c.l.b16 %v3789
      %v3942 = vunpack.c.l.b16 %v3790
      %v3943 = vunpack.c.l.b16 %v3791
      %v3944 = vunpack.c.l.b16 %v3792
      %v3945 = vunpack.c.l.b16 %v3793
      %v3946 = vunpack.c.l.b16 %v3794
      %v3947 = vunpack.c.l.b16 %v3795
      %v3948 = vunpack.c.l.b16 %v3796
      %v3949 = vpack.c.b16 %v3886, %v3885
      %v3950 = vpack.c.b16 %v3888, %v3887
      %v3951 = vpack.c.b16 %v3890, %v3889
      %v3952 = vpack.c.b16 %v3892, %v3891
      %v3953 = vpack.c.b16 %v3894, %v3893
      %v3954 = vpack.c.b16 %v3896, %v3895
      %v3955 = vpack.c.b16 %v3898, %v3897
      %v3956 = vpack.c.b16 %v3900, %v3899
      %v3957 = vpack.c.b16 %v3902, %v3901
      %v3958 = vpack.c.b16 %v3904, %v3903
      %v3959 = vpack.c.b16 %v3906, %v3905
      %v3960 = vpack.c.b16 %v3908, %v3907
      %v3961 = vpack.c.b16 %v3910, %v3909
      %v3962 = vpack.c.b16 %v3912, %v3911
      %v3963 = vpack.c.b16 %v3914, %v3913
      %v3964 = vpack.c.b16 %v3916, %v3915
      %v3965 = vpack.c.b16 %v3918, %v3917
      %v3966 = vpack.c.b16 %v3920, %v3919
      %v3967 = vpack.c.b16 %v3922, %v3921
      %v3968 = vpack.c.b16 %v3924, %v3923
      %v3969 = vpack.c.b16 %v3926, %v3925
      %v3970 = vpack.c.b16 %v3928, %v3927
      %v3971 = vpack.c.b16 %v3930, %v3929
      %v3972 = vpack.c.b16 %v3932, %v3931
      %v3973 = vpack.c.b16 %v3934, %v3933
      %v3974 = vpack.c.b16 %v3936, %v3935
      %v3975 = vpack.c.b16 %v3938, %v3937
      %v3976 = vpack.c.b16 %v3940, %v3939
      %v3977 = vpack.c.b16 %v3942, %v3941
      %v3978 = vpack.c.b16 %v3944, %v3943
      %v3979 = vpack.c.b16 %v3946, %v3945
      %v3980 = vpack.c.b16 %v3948, %v3947
      %4013 = vmatprep.subr.bf16.mxu0 0
      %4014 = vmatpush1.bf16.msra.mxu0 %v3949
      %4015 = vmatprep.subr.bf16.mxu0 0
      %4016 = vmatpush1.bf16.msra.mxu0 %v3950
      %4017 = vmatprep.subr.bf16.mxu0 0
      %4018 = vmatpush1.bf16.msra.mxu0 %v3951
      %4019 = vmatprep.subr.bf16.mxu0 0
      %4020 = vmatpush1.bf16.msra.mxu0 %v3952
      %4021 = vmatprep.subr.bf16.mxu0 0
      %4022 = vmatpush1.bf16.msra.mxu0 %v3953
      %4023 = vmatprep.subr.bf16.mxu0 0
      %4024 = vmatpush1.bf16.msra.mxu0 %v3954
      %4025 = vmatprep.subr.bf16.mxu0 0
      %4026 = vmatpush1.bf16.msra.mxu0 %v3955
      %4027 = vmatprep.subr.bf16.mxu0 0
      %4028 = vmatpush1.bf16.msra.mxu0 %v3956
      %4029 = vmatprep.subr.bf16.mxu0 0
      %4030 = vmatpush1.bf16.msra.mxu0 %v3957
      %4031 = vmatprep.subr.bf16.mxu0 0
      %4032 = vmatpush1.bf16.msra.mxu0 %v3958
      %4033 = vmatprep.subr.bf16.mxu0 0
      %4034 = vmatpush1.bf16.msra.mxu0 %v3959
      %4035 = vmatprep.subr.bf16.mxu0 0
      %4036 = vmatpush1.bf16.msra.mxu0 %v3960
      %4037 = vmatprep.subr.bf16.mxu0 0
      %4038 = vmatpush1.bf16.msra.mxu0 %v3961
      %4039 = vmatprep.subr.bf16.mxu0 0
      %4040 = vmatpush1.bf16.msra.mxu0 %v3962
      %4041 = vmatprep.subr.bf16.mxu0 0
      %4042 = vmatpush1.bf16.msra.mxu0 %v3963
      %4043 = vmatprep.subr.bf16.mxu0 0
      %4044 = vmatpush1.bf16.msra.mxu0 %v3964
      %4045 = vmatprep.mubr.bf16.mxu0 %v1234
      %4046 = vmatmul.mubr.bf16.gmra.mrb[0].mxu0 %v1232
      %v4047 = vpop.f32.mrb[0].mxu0
      %v4048 = vadd.f32 0.0, %v4047
      %v4049 = vpop.f32.mrb[0].mxu0
      %v4050 = vpop.f32.mrb[0].mxu0
      %v4051 = vadd.f32 0.0, %v4050
      %v4052 = vpop.f32.mrb[0].mxu0
      %4053 = vmatprep.mubr.bf16.mxu0 %v3800
      %4054 = vmatmul.mubr.bf16.gmra.mrb[0].mxu0 %v3798
      %v4055 = vpop.f32.mrb[0].mxu0
      %v4056 = vadd.f32 0.0, %v4055
      %v4057 = vpop.f32.mrb[0].mxu0
      %v4058 = vpop.f32.mrb[0].mxu0
      %v4059 = vadd.f32 0.0, %v4058
      %v4060 = vpop.f32.mrb[0].mxu0
      %4061 = vmatprep.mubr.bf16.mxu0 %v3808
      %4062 = vmatmul.mubr.bf16.gmra.mrb[0].mxu0 %v3806
      %v4063 = vpop.f32.mrb[0].mxu0
      %v4064 = vadd.f32 0.0, %v4063
      %v4065 = vpop.f32.mrb[0].mxu0
      %v4066 = vpop.f32.mrb[0].mxu0
      %v4067 = vadd.f32 0.0, %v4066
      %v4068 = vpop.f32.mrb[0].mxu0
      %4069 = vdwg.mxu0
      %4070 = vmatprep.subr.bf16.mxu0 0
      %4071 = vmatpush1.bf16.msra.mxu0 %v3965
      %4072 = vmatprep.subr.bf16.mxu0 0
      %4073 = vmatpush1.bf16.msra.mxu0 %v3966
      %4074 = vmatprep.subr.bf16.mxu0 0
      %4075 = vmatpush1.bf16.msra.mxu0 %v3967
      %4076 = vmatprep.subr.bf16.mxu0 0
      %4077 = vmatpush1.bf16.msra.mxu0 %v3968
      %4078 = vmatprep.subr.bf16.mxu0 0
      %4079 = vmatpush1.bf16.msra.mxu0 %v3969
      %4080 = vmatprep.subr.bf16.mxu0 0
      %4081 = vmatpush1.bf16.msra.mxu0 %v3970
      %4082 = vmatprep.subr.bf16.mxu0 0
      %4083 = vmatpush1.bf16.msra.mxu0 %v3971
      %4084 = vmatprep.subr.bf16.mxu0 0
      %4085 = vmatpush1.bf16.msra.mxu0 %v3972
      %4086 = vmatprep.subr.bf16.mxu0 0
      %4087 = vmatpush1.bf16.msra.mxu0 %v3973
      %4088 = vmatprep.subr.bf16.mxu0 0
      %4089 = vmatpush1.bf16.msra.mxu0 %v3974
      %4090 = vmatprep.subr.bf16.mxu0 0
      %4091 = vmatpush1.bf16.msra.mxu0 %v3975
      %4092 = vmatprep.subr.bf16.mxu0 0
      %4093 = vmatpush1.bf16.msra.mxu0 %v3976
      %4094 = vmatprep.subr.bf16.mxu0 0
      %4095 = vmatpush1.bf16.msra.mxu0 %v3977
      %4096 = vmatprep.subr.bf16.mxu0 0
      %4097 = vmatpush1.bf16.msra.mxu0 %v3978
      %4098 = vmatprep.subr.bf16.mxu0 0
      %4099 = vmatpush1.bf16.msra.mxu0 %v3979
      %4100 = vmatprep.subr.bf16.mxu0 0
      %4101 = vmatpush1.bf16.msra.mxu0 %v3980
      %4102 = vmatprep.mubr.bf16.mxu0 %v1238
      %4103 = vmatmul.mubr.bf16.gmra.mrb[0].mxu0 %v1236
      %v4104 = vpop.f32.mrb[0].mxu0
      %v4105 = vadd.f32 %v4048, %v4104
      %v4106 = vpop.f32.mrb[0].mxu0
      %v4107 = vpop.f32.mrb[0].mxu0
      %v4108 = vadd.f32 %v4051, %v4107
      %v4109 = vpop.f32.mrb[0].mxu0
      %4110 = vmatprep.mubr.bf16.mxu0 %v3804
      %4111 = vmatmul.mubr.bf16.gmra.mrb[0].mxu0 %v3802
      %v4112 = vpop.f32.mrb[0].mxu0
      %v4113 = vadd.f32 %v4056, %v4112
      %v4114 = vpop.f32.mrb[0].mxu0
      %v4115 = vpop.f32.mrb[0].mxu0
      %v4116 = vadd.f32 %v4059, %v4115
      %v4117 = vpop.f32.mrb[0].mxu0
      %4118 = vmatprep.mubr.bf16.mxu0 %v3812
      %4119 = vmatmul.mubr.bf16.gmra.mrb[0].mxu0 %v3810
      %v4120 = vpop.f32.mrb[0].mxu0
      %v4121 = vadd.f32 %v4064, %v4120
      %v4122 = vpop.f32.mrb[0].mxu0
      %v4123 = vpop.f32.mrb[0].mxu0
      %v4124 = vadd.f32 %v4067, %v4123
      %v4125 = vpop.f32.mrb[0].mxu0
      %4126 = vdwg.mxu0
      %v4127 = vadd.f32 %v3726, %v4105
      %v4128 = vadd.f32 %v3727, %v4108
      %v4129 = vadd.f32 %v3728, %v4113
      %v4130 = vadd.f32 %v3729, %v4116
      %v4131 = vadd.f32 %v3730, %v4121
      %v4132 = vadd.f32 %v3731, %v4124
      %v4133 = vld [vmem:[%s2] sm:$0x1]
      %v4135 = vlaneseq
      %v4136 = vshrl.u32 %v4135, 7
      %v4137 = vsub.s32 0, %v4136
      %v4138 = vrot.slane %v4133, %v4137
      %v4140 = vmul.f32 %v4127, %v4138
      %v4141 = vmul.f32 %v4128, %v4138
      %v4142 = vmul.f32 %v4129, %v4138
      %v4143 = vmul.f32 %v4130, %v4138
      %v4144 = vmul.f32 %v4131, %v4138
      %v4145 = vmul.f32 %v4132, %v4138
      %v4146 = vld [vmem:[%s3] sm:$0x1]
      %v4148 = vlaneseq
      %v4149 = vshrl.u32 %v4148, 7
      %v4150 = vsub.s32 0, %v4149
      %v4151 = vrot.slane %v4146, %v4150
      %v4153 = vadd.f32 %v4140, %v4151
      %v4154 = vadd.f32 %v4141, %v4151
      %v4155 = vadd.f32 %v4142, %v4151
      %v4156 = vadd.f32 %v4143, %v4151
      %v4157 = vadd.f32 %v4144, %v4151
      %v4158 = vadd.f32 %v4145, %v4151
      %4159 = vst [vmem:[%s197] sm:$0xff] %v4153
      %4160 = vst [vmem:[%s197 + $0x8] sm:$0xff] %v4154
      %4161 = vst [vmem:[%s197 + $0x10] sm:$0xff] %v4155
      %4162 = vst [vmem:[%s197 + $0x18] sm:$0xff] %v4156
      %4163 = vst [vmem:[%s197 + $0x20] sm:$0xff] %v4157
      %4164 = vst [vmem:[%s197 + $0x28] sm:$0xff] %v4158
      %p4165 = scmp.lt.s32.totalorder %s15, 1
      %s4166 = scalar_select %p4165, %s15, 1
      %s4167 = smul.addr %s4166, 6
      %s4168 = smul.addr %s4167, 8
      %s4169 = scalar_lea.vmem %s4, %s4168
      // Predicated region
      $region37: #{pspnet_forward.10} parent=35 // pred_check
        %p4170 = pneg %p122
      $region38: #{pspnet_forward.10} parent=35 // pred_check_branch
        %4172 = sbr.rel (%p4170) target = $region40
      $region39: #{pspnet_forward.10} parent=35 // pred_region
        _
      $region40: #{pspnet_forward.10} parent=35 // pred_fallthru
        _
    $region36: #{pspnet_forward.10} parent=5 // pred_fallthru
      _
    %p4173 = scmp.le.s32.totalorder 2, %s10
    // Predicated region
    $region41: #{pspnet_forward.10} parent=5 // pred_check
      %p4174 = pneg %p4173
    $region42: #{pspnet_forward.10} parent=5 // pred_check_branch
      %4176 = sbr.rel (%p4174) target = $region44
    $region43: #{pspnet_forward.10} parent=5 // pred_region
      %s4177 = ssub.s32 %s10, 2
      // Predicated region
      $region45: #{pspnet_forward.10} parent=43 // pred_check
        %p4178 = pneg %p128
      $region46: #{pspnet_forward.10} parent=43 // pred_check_branch
        %4180 = sbr.rel (%p4178) target = $region48
      $region47: #{pspnet_forward.10} parent=43 // pred_region
        %p4181 = scmp.lt.s32.totalorder %s16, 1
        %s4182 = scalar_select %p4181, %s16, 1
        %s4183 = smul.addr %s4182, 6
        %s4184 = smul.addr %s4183, 8
        %s4185 = scalar_lea.vmem %s4, %s4184
      $region48: #{pspnet_forward.10} parent=43 // pred_fallthru
        _
    $region44: #{pspnet_forward.10} parent=5 // pred_fallthru
      _
  $region6: #{pspnet_forward.10} parent=0 // loop_footer
    %s14 = sadd.s32 1, %s10
  $region7: #{pspnet_forward.10} parent=0 // loop_footer_branch
    %9 = sbr.rel target = $region3
  $region8: #{pspnet_forward.10} parent=0 // loop_exit
    _

</llo_original>
